<compile_context>
chip_gen: v5e
topology: v5e:2x2
jax: 0.10.0
libtpu: 0.0.40
codegen_flags: <defaults>
</compile_context>

<pallas_src>
import functools

import jax
import jax.numpy as jnp
from jax.experimental import pallas as pl
from jax.experimental.pallas import tpu as pltpu


def _vmem_budget_bytes():
    """Generation-aware scoped-VMEM budget (~3/4 of physical, capped)."""
    try:
        cap = pltpu.get_tpu_info().vmem_capacity_bytes
    except Exception:
        cap = 64 << 20                      # conservative fallback (v7x-sized)
    return int(min(cap * 3 // 4, 96 << 20))


def _bilstm_mlp_kernel(x_ref, lens_ref,
                       wif_ref, whf_ref, bf_ref,
                       wib_ref, whb_ref, bb_ref,
                       w1f_ref, w1b_ref, b1_ref,
                       w2_ref, b2_ref,
                       o_ref,
                       *, seq_len, batch_tile):
    """Fused bidirectional LSTM + MLP head for one batch tile.

    x_ref      : (TB, T, H)   f32   batch-first embeddings tile
    lens_ref   : (TB, 1)      int32 valid lengths
    w{i,h}{f,b}: (H, 4H)      bf16  gate weights (PyTorch gate order i, f, g, o)
    b{f,b}     : (1, 4H)      f32   combined bias (b_ih + b_hh)
    w1f / w1b  : (H, H)       bf16  fwd / bwd halves of Linear(2H->H) weight
    b1         : (1, H)       f32
    w2         : (H, OUTP)    bf16  Linear(H->out) weight, lanes padded to 128
    b2         : (1, OUTP)    f32
    o_ref      : (TB, T, OUTP) f32  fused MLP output (lane-dense)
    """
    T, TB = seq_len, batch_tile
    H = wif_ref.shape[0]
    OUTP = w2_ref.shape[1]

    lens = lens_ref[...]                                        # (TB, 1) int32

    # ---- hoisted input projection: one big MXU matmul per direction, held in
    #      bf16 (halves the largest live VMEM buffer), fully off the serial
    #      recurrence path -----------------------------------------------------
    x = x_ref[...].astype(jnp.bfloat16)                         # (TB, T, H)
    x2 = x.reshape(TB * T, H)                                   # free leading merge
    gxf = (jnp.dot(x2, wif_ref[...], preferred_element_type=jnp.float32)
           + bf_ref[...]).reshape(TB, T, 4 * H).astype(jnp.bfloat16)
    gxb = (jnp.dot(x2, wib_ref[...], preferred_element_type=jnp.float32)
           + bb_ref[...]).reshape(TB, T, 4 * H).astype(jnp.bfloat16)

    def lstm_cell(pre, c):
        # NOTE: at H >= 128 these gate slices are lane-aligned and free; at the
        # demo H=32 they cost a few XLU shuffles per step (off the MXU path).
        i = jax.nn.sigmoid(pre[:, 0 * H:1 * H])
        f = jax.nn.sigmoid(pre[:, 1 * H:2 * H])
        g = jnp.tanh(pre[:, 2 * H:3 * H])
        o = jax.nn.sigmoid(pre[:, 3 * H:4 * H])
        c_new = f * c + i * g
        h_new = o * jnp.tanh(c_new)
        return h_new, c_new

    zeros = jnp.zeros((TB, H), jnp.float32)
    h_f, c_f = zeros, zeros
    h_b, c_b = zeros, zeros
    hf_steps = [None] * T
    hb_steps = [None] * T

    # ---- interleaved fwd/bwd recurrence, fully unrolled (T static, small) ----
    # Only the state-freeze select stays in the loop; output masking is hoisted
    # into a single pass below.
    for s in range(T):
        tf = s
        tb = T - 1 - s

        pre_f = gxf[:, tf, :] + jnp.dot(h_f.astype(jnp.bfloat16), whf_ref[...],
                                        preferred_element_type=jnp.float32)
        hf_new, cf_new = lstm_cell(pre_f, c_f)
        vf = tf < lens                                          # (TB, 1) bool
        h_f = jnp.where(vf, hf_new, h_f)
        c_f = jnp.where(vf, cf_new, c_f)
        hf_steps[tf] = hf_new                                   # unmasked

        # backward direction starts updating at t = lens-1 (packed reverse pass)
        pre_b = gxb[:, tb, :] + jnp.dot(h_b.astype(jnp.bfloat16), whb_ref[...],
                                        preferred_element_type=jnp.float32)
        hb_new, cb_new = lstm_cell(pre_b, c_b)
        vb = tb < lens
        h_b = jnp.where(vb, hb_new, h_b)
        c_b = jnp.where(vb, cb_new, c_b)
        hb_steps[tb] = hb_new                                   # unmasked

    outf = jnp.stack(hf_steps, axis=1)                          # (TB, T, H)
    outb = jnp.stack(hb_steps, axis=1)

    # ---- single vectorized masking pass (pad_packed_sequence semantics:
    #      zero output at t >= lens[b]) ---------------------------------------
    t_iota = jax.lax.broadcasted_iota(jnp.int32, (TB, T, 1), 1)
    valid = t_iota < lens[:, None, :]                           # (TB, T, 1)
    outf2 = jnp.where(valid, outf, 0.0).reshape(TB * T, H).astype(jnp.bfloat16)
    outb2 = jnp.where(valid, outb, 0.0).reshape(TB * T, H).astype(jnp.bfloat16)

    # ---- fused MLP epilogue: Linear(2H->H) (split W1) -> ReLU -> Linear ------
    # Runs while the LSTM outputs are still in VMEM; no concat / transpose /
    # HBM round trips; output block is batch-first so no final transpose either.
    h1 = (jnp.dot(outf2, w1f_ref[...], preferred_element_type=jnp.float32)
          + jnp.dot(outb2, w1b_ref[...], preferred_element_type=jnp.float32)
          + b1_ref[...])
    h1 = jnp.maximum(h1, 0.0)
    mlp = (jnp.dot(h1.astype(jnp.bfloat16), w2_ref[...],
                   preferred_element_type=jnp.float32)
           + b2_ref[...])                                       # (TB*T, OUTP)
    o_ref[...] = mlp.reshape(TB, T, OUTP).astype(o_ref.dtype)


def prepare_params(params):
    """One-time parameter prep (outside the jitted forward): bf16 weight casts,
    W1 split into fwd/bwd halves, W2/b2 padded to 128 output lanes.

    NOTE: weights here are stored as (in, out); real PyTorch checkpoints store
    nn.Linear / nn.LSTM weights as (out, in) and must be transposed when loaded.
    """
    H = params["w_ih_f"].shape[0]
    out_dim = params["w2"].shape[1]
    out_pad = ((out_dim + 127) // 128) * 128
    bf16 = lambda a: jnp.asarray(a, jnp.bfloat16)
    f32 = lambda a: jnp.asarray(a, jnp.float32)
    return {
        "w_ih_f": bf16(params["w_ih_f"]), "w_hh_f": bf16(params["w_hh_f"]),
        "b_f": f32(params["b_f"]),
        "w_ih_b": bf16(params["w_ih_b"]), "w_hh_b": bf16(params["w_hh_b"]),
        "b_b": f32(params["b_b"]),
        "w1f": bf16(params["w1"][:H, :]), "w1b": bf16(params["w1"][H:, :]),
        "b1": f32(params["b1"]),
        "w2": bf16(jnp.pad(params["w2"], ((0, 0), (0, out_pad - out_dim)))),
        "b2": jnp.pad(f32(params["b2"]), ((0, 0), (0, out_pad - out_dim))),
    }


@functools.partial(jax.jit, static_argnames=("out_dim", "batch_tile"))
def rnn_forward(embeddings, lens, prepped, *, out_dim, batch_tile=8):
    """embeddings: (B, T, H) float32, lens: (B,) int32 -> (B, T, out_dim)."""
    embeddings = embeddings.astype(jnp.float32)
    B, T, H = embeddings.shape
    out_pad = prepped["w2"].shape[1]
    TB = batch_tile
    B_pad = ((B + TB - 1) // TB) * TB

    if B_pad != B:
        x = jnp.pad(embeddings, ((0, B_pad - B), (0, 0), (0, 0)))
        lens_p = jnp.pad(lens.astype(jnp.int32), (0, B_pad - B))
    else:
        x = embeddings
        lens_p = lens.astype(jnp.int32)
    lens2d = lens_p.reshape(B_pad, 1)

    def full(shape):
        # Full-array block with a constant index map -> DMA'd once, stays in VMEM.
        return pl.BlockSpec(shape, lambda b, _s=shape: (0,) * len(_s))

    kernel = functools.partial(_bilstm_mlp_kernel, seq_len=T, batch_tile=TB)

    out_padded = pl.pallas_call(
        kernel,
        out_shape=jax.ShapeDtypeStruct((B_pad, T, out_pad), jnp.float32),
        grid=(B_pad // TB,),
        in_specs=[
            pl.BlockSpec((TB, T, H), lambda b: (b, 0, 0)),      # embeddings tile
            pl.BlockSpec((TB, 1), lambda b: (b, 0)),            # lens tile
            full((H, 4 * H)), full((H, 4 * H)), full((1, 4 * H)),   # fwd LSTM
            full((H, 4 * H)), full((H, 4 * H)), full((1, 4 * H)),   # bwd LSTM
            full((H, H)), full((H, H)), full((1, H)),               # Linear(2H->H)
            full((H, out_pad)), full((1, out_pad)),                 # Linear(H->out)
        ],
        out_specs=pl.BlockSpec((TB, T, out_pad), lambda b: (b, 0, 0)),
        compiler_params=pltpu.CompilerParams(
            dimension_semantics=("parallel",),          # batch tiles -> v7x megacore
            vmem_limit_bytes=_vmem_budget_bytes(),
        ),
    )(x, lens2d,
      prepped["w_ih_f"], prepped["w_hh_f"], prepped["b_f"],
      prepped["w_ih_b"], prepped["w_hh_b"], prepped["b_b"],
      prepped["w1f"], prepped["w1b"], prepped["b1"],
      prepped["w2"], prepped["b2"])

    return out_padded[:B, :, :out_dim]                  # (B, T, out_dim)


if __name__ == "__main__":
    B, T, H, OUT = 12, 8, 32, 8          # B=12 -> B_pad=16: exercises 2 grid tiles + padding

    key = jax.random.PRNGKey(0)
    keys = jax.random.split(key, 13)

    k_lstm = 1.0 / float(jnp.sqrt(H))
    k_lin1 = 1.0 / float(jnp.sqrt(2 * H))
    k_lin2 = 1.0 / float(jnp.sqrt(H))

    def u(kk, shape, scale):
        return jax.random.uniform(kk, shape, jnp.float32, -scale, scale)

    # Deterministic, PyTorch-style uniform init (LSTM gate order i, f, g, o).
    params = {
        "w_ih_f": u(keys[0], (H, 4 * H), k_lstm),
        "w_hh_f": u(keys[1], (H, 4 * H), k_lstm),
        "b_f":    u(keys[2], (1, 4 * H), k_lstm) + u(keys[3], (1, 4 * H), k_lstm),
        "w_ih_b": u(keys[4], (H, 4 * H), k_lstm),
        "w_hh_b": u(keys[5], (H, 4 * H), k_lstm),
        "b_b":    u(keys[6], (1, 4 * H), k_lstm) + u(keys[7], (1, 4 * H), k_lstm),
        "w1":     u(keys[8], (2 * H, H), k_lin1),
        "b1":     u(keys[9], (1, H), k_lin1),
        "w2":     u(keys[10], (H, OUT), k_lin2),
        "b2":     u(keys[11], (1, OUT), k_lin2),
    }
    prepped = prepare_params(params)      # one-time bf16 cast / split / pad

    embeddings = jax.random.normal(keys[12], (B, T, H), jnp.float32)
    lens = jnp.array([7, 5, 3, 6, 8, 1, 4, 2, 7, 5, 8, 3], dtype=jnp.int32)

    out = rnn_forward(embeddings, lens, prepped, out_dim=OUT, batch_tile=8)

    # pad_packed_sequence pads only up to max(lens); match the PyTorch output shape.
    t_max = int(jnp.max(lens))
    out = out[:, :t_max, :]
    out = jax.block_until_ready(out)

    assert out.shape == (B, t_max, OUT), out.shape
    assert bool(jnp.all(jnp.isfinite(out)))
    print("KERNEL_OK")
</pallas_src>

<mosaic_0001>
module attributes {stable_mosaic.version = 11 : i64} {
  func.func @_bilstm_mlp_kernel(%arg0: i32, %arg1: memref<8x8x32xf32, #tpu.memory_space<vmem>>, %arg2: memref<8x1xi32, #tpu.memory_space<vmem>>, %arg3: memref<32x128xbf16, #tpu.memory_space<vmem>>, %arg4: memref<32x128xbf16, #tpu.memory_space<vmem>>, %arg5: memref<1x128xf32, #tpu.memory_space<vmem>>, %arg6: memref<32x128xbf16, #tpu.memory_space<vmem>>, %arg7: memref<32x128xbf16, #tpu.memory_space<vmem>>, %arg8: memref<1x128xf32, #tpu.memory_space<vmem>>, %arg9: memref<32x32xbf16, #tpu.memory_space<vmem>>, %arg10: memref<32x32xbf16, #tpu.memory_space<vmem>>, %arg11: memref<1x32xf32, #tpu.memory_space<vmem>>, %arg12: memref<32x128xbf16, #tpu.memory_space<vmem>>, %arg13: memref<1x128xf32, #tpu.memory_space<vmem>>, %arg14: memref<8x8x128xf32, #tpu.memory_space<vmem>>) attributes {dimension_semantics = [#tpu.dimension_semantics<parallel>], iteration_bounds = array<i64: 2>, scalar_prefetch = 0 : i64, scratch_operands = 0 : i64, tpu.core_type = #tpu.core_type<tc>, window_params = [{transform_indices = @transform_0, window_bounds = array<i64: 8, 8, 32>}, {transform_indices = @transform_1, window_bounds = array<i64: 8, 1>}, {pipeline_mode = #tpu.pipeline_mode<synchronous>, transform_indices = @transform_2, window_bounds = array<i64: 32, 128>}, {pipeline_mode = #tpu.pipeline_mode<synchronous>, transform_indices = @transform_3, window_bounds = array<i64: 32, 128>}, {pipeline_mode = #tpu.pipeline_mode<synchronous>, transform_indices = @transform_4, window_bounds = array<i64: 1, 128>}, {pipeline_mode = #tpu.pipeline_mode<synchronous>, transform_indices = @transform_5, window_bounds = array<i64: 32, 128>}, {pipeline_mode = #tpu.pipeline_mode<synchronous>, transform_indices = @transform_6, window_bounds = array<i64: 32, 128>}, {pipeline_mode = #tpu.pipeline_mode<synchronous>, transform_indices = @transform_7, window_bounds = array<i64: 1, 128>}, {pipeline_mode = #tpu.pipeline_mode<synchronous>, transform_indices = @transform_8, window_bounds = array<i64: 32, 32>}, {pipeline_mode = #tpu.pipeline_mode<synchronous>, transform_indices = @transform_9, window_bounds = array<i64: 32, 32>}, {pipeline_mode = #tpu.pipeline_mode<synchronous>, transform_indices = @transform_10, window_bounds = array<i64: 1, 32>}, {pipeline_mode = #tpu.pipeline_mode<synchronous>, transform_indices = @transform_11, window_bounds = array<i64: 32, 128>}, {pipeline_mode = #tpu.pipeline_mode<synchronous>, transform_indices = @transform_12, window_bounds = array<i64: 1, 128>}, {transform_indices = @transform_13, window_bounds = array<i64: 8, 8, 128>}]} {
    %c0 = arith.constant 0 : index
    %c0_0 = arith.constant 0 : index
    %0 = vector.load %arg2[%c0, %c0_0] : memref<8x1xi32, #tpu.memory_space<vmem>>, vector<8x1xi32>
    %c0_1 = arith.constant 0 : index
    %c0_2 = arith.constant 0 : index
    %c0_3 = arith.constant 0 : index
    %1 = vector.load %arg1[%c0_1, %c0_2, %c0_3] : memref<8x8x32xf32, #tpu.memory_space<vmem>>, vector<8x8x32xf32>
    %2 = arith.truncf %1 : vector<8x8x32xf32> to vector<8x8x32xbf16>
    %3 = vector.shape_cast %2 : vector<8x8x32xbf16> to vector<64x32xbf16>
    %c0_4 = arith.constant 0 : index
    %c0_5 = arith.constant 0 : index
    %4 = vector.load %arg3[%c0_4, %c0_5] : memref<32x128xbf16, #tpu.memory_space<vmem>>, vector<32x128xbf16>
    %cst = arith.constant dense<0.000000e+00> : vector<64x128xf32>
    %5 = tpu.matmul %3, %4, %cst {dimension_numbers = #tpu.dot_dimension_numbers<[1], [0], [0], [1], [0, 0, 1, 1], [], []>} : vector<64x32xbf16>, vector<32x128xbf16>, vector<64x128xf32> -> vector<64x128xf32>
    %c0_6 = arith.constant 0 : index
    %c0_7 = arith.constant 0 : index
    %6 = vector.load %arg5[%c0_6, %c0_7] : memref<1x128xf32, #tpu.memory_space<vmem>>, vector<1x128xf32>
    %7 = vector.broadcast %6 : vector<1x128xf32> to vector<64x128xf32>
    %8 = arith.addf %5, %7 : vector<64x128xf32>
    %9 = vector.shape_cast %8 : vector<64x128xf32> to vector<8x8x128xf32>
    %10 = arith.truncf %9 : vector<8x8x128xf32> to vector<8x8x128xbf16>
    %c0_8 = arith.constant 0 : index
    %c0_9 = arith.constant 0 : index
    %11 = vector.load %arg6[%c0_8, %c0_9] : memref<32x128xbf16, #tpu.memory_space<vmem>>, vector<32x128xbf16>
    %cst_10 = arith.constant dense<0.000000e+00> : vector<64x128xf32>
    %12 = tpu.matmul %3, %11, %cst_10 {dimension_numbers = #tpu.dot_dimension_numbers<[1], [0], [0], [1], [0, 0, 1, 1], [], []>} : vector<64x32xbf16>, vector<32x128xbf16>, vector<64x128xf32> -> vector<64x128xf32>
    %c0_11 = arith.constant 0 : index
    %c0_12 = arith.constant 0 : index
    %13 = vector.load %arg8[%c0_11, %c0_12] : memref<1x128xf32, #tpu.memory_space<vmem>>, vector<1x128xf32>
    %14 = vector.broadcast %13 : vector<1x128xf32> to vector<64x128xf32>
    %15 = arith.addf %12, %14 : vector<64x128xf32>
    %16 = vector.shape_cast %15 : vector<64x128xf32> to vector<8x8x128xf32>
    %17 = arith.truncf %16 : vector<8x8x128xf32> to vector<8x8x128xbf16>
    %cst_13 = arith.constant 0.000000e+00 : f32
    %18 = vector.broadcast %cst_13 : f32 to vector<8x32xf32>
    %19 = vector.extract_strided_slice %10 {offsets = [0, 0, 0], sizes = [8, 1, 128], strides = [1, 1, 1]} : vector<8x8x128xbf16> to vector<8x1x128xbf16>
    %20 = vector.shape_cast %19 : vector<8x1x128xbf16> to vector<8x128xbf16>
    %21 = arith.truncf %18 : vector<8x32xf32> to vector<8x32xbf16>
    %c0_14 = arith.constant 0 : index
    %c0_15 = arith.constant 0 : index
    %22 = vector.load %arg4[%c0_14, %c0_15] : memref<32x128xbf16, #tpu.memory_space<vmem>>, vector<32x128xbf16>
    %cst_16 = arith.constant dense<0.000000e+00> : vector<8x128xf32>
    %23 = tpu.matmul %21, %22, %cst_16 {dimension_numbers = #tpu.dot_dimension_numbers<[1], [0], [0], [1], [0, 0, 1, 1], [], []>} : vector<8x32xbf16>, vector<32x128xbf16>, vector<8x128xf32> -> vector<8x128xf32>
    %24 = arith.extf %20 : vector<8x128xbf16> to vector<8x128xf32>
    %25 = arith.addf %24, %23 : vector<8x128xf32>
    %26 = vector.extract_strided_slice %25 {offsets = [0, 0], sizes = [8, 32], strides = [1, 1]} : vector<8x128xf32> to vector<8x32xf32>
    %27 = arith.negf %26 : vector<8x32xf32>
    %28 = math.exp %27 : vector<8x32xf32>
    %cst_17 = arith.constant 1.000000e+00 : f32
    %29 = vector.broadcast %cst_17 : f32 to vector<8x32xf32>
    %30 = arith.addf %29, %28 : vector<8x32xf32>
    %31 = arith.divf %29, %30 : vector<8x32xf32>
    %32 = vector.extract_strided_slice %25 {offsets = [0, 32], sizes = [8, 32], strides = [1, 1]} : vector<8x128xf32> to vector<8x32xf32>
    %33 = arith.negf %32 : vector<8x32xf32>
    %34 = math.exp %33 : vector<8x32xf32>
    %cst_18 = arith.constant 1.000000e+00 : f32
    %35 = vector.broadcast %cst_18 : f32 to vector<8x32xf32>
    %36 = arith.addf %35, %34 : vector<8x32xf32>
    %37 = arith.divf %35, %36 : vector<8x32xf32>
    %38 = vector.extract_strided_slice %25 {offsets = [0, 64], sizes = [8, 32], strides = [1, 1]} : vector<8x128xf32> to vector<8x32xf32>
    %39 = math.tanh %38 : vector<8x32xf32>
    %40 = vector.extract_strided_slice %25 {offsets = [0, 96], sizes = [8, 32], strides = [1, 1]} : vector<8x128xf32> to vector<8x32xf32>
    %41 = arith.negf %40 : vector<8x32xf32>
    %42 = math.exp %41 : vector<8x32xf32>
    %cst_19 = arith.constant 1.000000e+00 : f32
    %43 = vector.broadcast %cst_19 : f32 to vector<8x32xf32>
    %44 = arith.addf %43, %42 : vector<8x32xf32>
    %45 = arith.divf %43, %44 : vector<8x32xf32>
    %46 = arith.mulf %37, %18 : vector<8x32xf32>
    %47 = arith.mulf %31, %39 : vector<8x32xf32>
    %48 = arith.addf %46, %47 : vector<8x32xf32>
    %49 = math.tanh %48 : vector<8x32xf32>
    %50 = arith.mulf %45, %49 : vector<8x32xf32>
    %c0_i32 = arith.constant 0 : i32
    %51 = vector.broadcast %c0_i32 : i32 to vector<8x1xi32>
    %52 = arith.cmpi sgt, %0, %51 : vector<8x1xi32>
    %53 = vector.shape_cast %52 : vector<8x1xi1> to vector<8x1xi1>
    %54 = vector.broadcast %53 : vector<8x1xi1> to vector<8x32xi1>
    %55 = arith.select %54, %50, %18 : vector<8x32xi1>, vector<8x32xf32>
    %56 = vector.shape_cast %52 : vector<8x1xi1> to vector<8x1xi1>
    %57 = vector.broadcast %56 : vector<8x1xi1> to vector<8x32xi1>
    %58 = arith.select %57, %48, %18 : vector<8x32xi1>, vector<8x32xf32>
    %59 = vector.extract_strided_slice %17 {offsets = [0, 7, 0], sizes = [8, 1, 128], strides = [1, 1, 1]} : vector<8x8x128xbf16> to vector<8x1x128xbf16>
    %60 = vector.shape_cast %59 : vector<8x1x128xbf16> to vector<8x128xbf16>
    %61 = arith.truncf %18 : vector<8x32xf32> to vector<8x32xbf16>
    %c0_20 = arith.constant 0 : index
    %c0_21 = arith.constant 0 : index
    %62 = vector.load %arg7[%c0_20, %c0_21] : memref<32x128xbf16, #tpu.memory_space<vmem>>, vector<32x128xbf16>
    %cst_22 = arith.constant dense<0.000000e+00> : vector<8x128xf32>
    %63 = tpu.matmul %61, %62, %cst_22 {dimension_numbers = #tpu.dot_dimension_numbers<[1], [0], [0], [1], [0, 0, 1, 1], [], []>} : vector<8x32xbf16>, vector<32x128xbf16>, vector<8x128xf32> -> vector<8x128xf32>
    %64 = arith.extf %60 : vector<8x128xbf16> to vector<8x128xf32>
    %65 = arith.addf %64, %63 : vector<8x128xf32>
    %66 = vector.extract_strided_slice %65 {offsets = [0, 0], sizes = [8, 32], strides = [1, 1]} : vector<8x128xf32> to vector<8x32xf32>
    %67 = arith.negf %66 : vector<8x32xf32>
    %68 = math.exp %67 : vector<8x32xf32>
    %cst_23 = arith.constant 1.000000e+00 : f32
    %69 = vector.broadcast %cst_23 : f32 to vector<8x32xf32>
    %70 = arith.addf %69, %68 : vector<8x32xf32>
    %71 = arith.divf %69, %70 : vector<8x32xf32>
    %72 = vector.extract_strided_slice %65 {offsets = [0, 32], sizes = [8, 32], strides = [1, 1]} : vector<8x128xf32> to vector<8x32xf32>
    %73 = arith.negf %72 : vector<8x32xf32>
    %74 = math.exp %73 : vector<8x32xf32>
    %cst_24 = arith.constant 1.000000e+00 : f32
    %75 = vector.broadcast %cst_24 : f32 to vector<8x32xf32>
    %76 = arith.addf %75, %74 : vector<8x32xf32>
    %77 = arith.divf %75, %76 : vector<8x32xf32>
    %78 = vector.extract_strided_slice %65 {offsets = [0, 64], sizes = [8, 32], strides = [1, 1]} : vector<8x128xf32> to vector<8x32xf32>
    %79 = math.tanh %78 : vector<8x32xf32>
    %80 = vector.extract_strided_slice %65 {offsets = [0, 96], sizes = [8, 32], strides = [1, 1]} : vector<8x128xf32> to vector<8x32xf32>
    %81 = arith.negf %80 : vector<8x32xf32>
    %82 = math.exp %81 : vector<8x32xf32>
    %cst_25 = arith.constant 1.000000e+00 : f32
    %83 = vector.broadcast %cst_25 : f32 to vector<8x32xf32>
    %84 = arith.addf %83, %82 : vector<8x32xf32>
    %85 = arith.divf %83, %84 : vector<8x32xf32>
    %86 = arith.mulf %77, %18 : vector<8x32xf32>
    %87 = arith.mulf %71, %79 : vector<8x32xf32>
    %88 = arith.addf %86, %87 : vector<8x32xf32>
    %89 = math.tanh %88 : vector<8x32xf32>
    %90 = arith.mulf %85, %89 : vector<8x32xf32>
    %c7_i32 = arith.constant 7 : i32
    %91 = vector.broadcast %c7_i32 : i32 to vector<8x1xi32>
    %92 = arith.cmpi sgt, %0, %91 : vector<8x1xi32>
    %93 = vector.shape_cast %92 : vector<8x1xi1> to vector<8x1xi1>
    %94 = vector.broadcast %93 : vector<8x1xi1> to vector<8x32xi1>
    %95 = arith.select %94, %90, %18 : vector<8x32xi1>, vector<8x32xf32>
    %96 = vector.shape_cast %92 : vector<8x1xi1> to vector<8x1xi1>
    %97 = vector.broadcast %96 : vector<8x1xi1> to vector<8x32xi1>
    %98 = arith.select %97, %88, %18 : vector<8x32xi1>, vector<8x32xf32>
    %99 = vector.extract_strided_slice %10 {offsets = [0, 1, 0], sizes = [8, 1, 128], strides = [1, 1, 1]} : vector<8x8x128xbf16> to vector<8x1x128xbf16>
    %100 = vector.shape_cast %99 : vector<8x1x128xbf16> to vector<8x128xbf16>
    %101 = arith.truncf %55 : vector<8x32xf32> to vector<8x32xbf16>
    %c0_26 = arith.constant 0 : index
    %c0_27 = arith.constant 0 : index
    %102 = vector.load %arg4[%c0_26, %c0_27] : memref<32x128xbf16, #tpu.memory_space<vmem>>, vector<32x128xbf16>
    %cst_28 = arith.constant dense<0.000000e+00> : vector<8x128xf32>
    %103 = tpu.matmul %101, %102, %cst_28 {dimension_numbers = #tpu.dot_dimension_numbers<[1], [0], [0], [1], [0, 0, 1, 1], [], []>} : vector<8x32xbf16>, vector<32x128xbf16>, vector<8x128xf32> -> vector<8x128xf32>
    %104 = arith.extf %100 : vector<8x128xbf16> to vector<8x128xf32>
    %105 = arith.addf %104, %103 : vector<8x128xf32>
    %106 = vector.extract_strided_slice %105 {offsets = [0, 0], sizes = [8, 32], strides = [1, 1]} : vector<8x128xf32> to vector<8x32xf32>
    %107 = arith.negf %106 : vector<8x32xf32>
    %108 = math.exp %107 : vector<8x32xf32>
    %cst_29 = arith.constant 1.000000e+00 : f32
    %109 = vector.broadcast %cst_29 : f32 to vector<8x32xf32>
    %110 = arith.addf %109, %108 : vector<8x32xf32>
    %111 = arith.divf %109, %110 : vector<8x32xf32>
    %112 = vector.extract_strided_slice %105 {offsets = [0, 32], sizes = [8, 32], strides = [1, 1]} : vector<8x128xf32> to vector<8x32xf32>
    %113 = arith.negf %112 : vector<8x32xf32>
    %114 = math.exp %113 : vector<8x32xf32>
    %cst_30 = arith.constant 1.000000e+00 : f32
    %115 = vector.broadcast %cst_30 : f32 to vector<8x32xf32>
    %116 = arith.addf %115, %114 : vector<8x32xf32>
    %117 = arith.divf %115, %116 : vector<8x32xf32>
    %118 = vector.extract_strided_slice %105 {offsets = [0, 64], sizes = [8, 32], strides = [1, 1]} : vector<8x128xf32> to vector<8x32xf32>
    %119 = math.tanh %118 : vector<8x32xf32>
    %120 = vector.extract_strided_slice %105 {offsets = [0, 96], sizes = [8, 32], strides = [1, 1]} : vector<8x128xf32> to vector<8x32xf32>
    %121 = arith.negf %120 : vector<8x32xf32>
    %122 = math.exp %121 : vector<8x32xf32>
    %cst_31 = arith.constant 1.000000e+00 : f32
    %123 = vector.broadcast %cst_31 : f32 to vector<8x32xf32>
    %124 = arith.addf %123, %122 : vector<8x32xf32>
    %125 = arith.divf %123, %124 : vector<8x32xf32>
    %126 = arith.mulf %117, %58 : vector<8x32xf32>
    %127 = arith.mulf %111, %119 : vector<8x32xf32>
    %128 = arith.addf %126, %127 : vector<8x32xf32>
    %129 = math.tanh %128 : vector<8x32xf32>
    %130 = arith.mulf %125, %129 : vector<8x32xf32>
    %c1_i32 = arith.constant 1 : i32
    %131 = vector.broadcast %c1_i32 : i32 to vector<8x1xi32>
    %132 = arith.cmpi sgt, %0, %131 : vector<8x1xi32>
    %133 = vector.shape_cast %132 : vector<8x1xi1> to vector<8x1xi1>
    %134 = vector.broadcast %133 : vector<8x1xi1> to vector<8x32xi1>
    %135 = arith.select %134, %130, %55 : vector<8x32xi1>, vector<8x32xf32>
    %136 = vector.shape_cast %132 : vector<8x1xi1> to vector<8x1xi1>
    %137 = vector.broadcast %136 : vector<8x1xi1> to vector<8x32xi1>
    %138 = arith.select %137, %128, %58 : vector<8x32xi1>, vector<8x32xf32>
    %139 = vector.extract_strided_slice %17 {offsets = [0, 6, 0], sizes = [8, 1, 128], strides = [1, 1, 1]} : vector<8x8x128xbf16> to vector<8x1x128xbf16>
    %140 = vector.shape_cast %139 : vector<8x1x128xbf16> to vector<8x128xbf16>
    %141 = arith.truncf %95 : vector<8x32xf32> to vector<8x32xbf16>
    %c0_32 = arith.constant 0 : index
    %c0_33 = arith.constant 0 : index
    %142 = vector.load %arg7[%c0_32, %c0_33] : memref<32x128xbf16, #tpu.memory_space<vmem>>, vector<32x128xbf16>
    %cst_34 = arith.constant dense<0.000000e+00> : vector<8x128xf32>
    %143 = tpu.matmul %141, %142, %cst_34 {dimension_numbers = #tpu.dot_dimension_numbers<[1], [0], [0], [1], [0, 0, 1, 1], [], []>} : vector<8x32xbf16>, vector<32x128xbf16>, vector<8x128xf32> -> vector<8x128xf32>
    %144 = arith.extf %140 : vector<8x128xbf16> to vector<8x128xf32>
    %145 = arith.addf %144, %143 : vector<8x128xf32>
    %146 = vector.extract_strided_slice %145 {offsets = [0, 0], sizes = [8, 32], strides = [1, 1]} : vector<8x128xf32> to vector<8x32xf32>
    %147 = arith.negf %146 : vector<8x32xf32>
    %148 = math.exp %147 : vector<8x32xf32>
    %cst_35 = arith.constant 1.000000e+00 : f32
    %149 = vector.broadcast %cst_35 : f32 to vector<8x32xf32>
    %150 = arith.addf %149, %148 : vector<8x32xf32>
    %151 = arith.divf %149, %150 : vector<8x32xf32>
    %152 = vector.extract_strided_slice %145 {offsets = [0, 32], sizes = [8, 32], strides = [1, 1]} : vector<8x128xf32> to vector<8x32xf32>
    %153 = arith.negf %152 : vector<8x32xf32>
    %154 = math.exp %153 : vector<8x32xf32>
    %cst_36 = arith.constant 1.000000e+00 : f32
    %155 = vector.broadcast %cst_36 : f32 to vector<8x32xf32>
    %156 = arith.addf %155, %154 : vector<8x32xf32>
    %157 = arith.divf %155, %156 : vector<8x32xf32>
    %158 = vector.extract_strided_slice %145 {offsets = [0, 64], sizes = [8, 32], strides = [1, 1]} : vector<8x128xf32> to vector<8x32xf32>
    %159 = math.tanh %158 : vector<8x32xf32>
    %160 = vector.extract_strided_slice %145 {offsets = [0, 96], sizes = [8, 32], strides = [1, 1]} : vector<8x128xf32> to vector<8x32xf32>
    %161 = arith.negf %160 : vector<8x32xf32>
    %162 = math.exp %161 : vector<8x32xf32>
    %cst_37 = arith.constant 1.000000e+00 : f32
    %163 = vector.broadcast %cst_37 : f32 to vector<8x32xf32>
    %164 = arith.addf %163, %162 : vector<8x32xf32>
    %165 = arith.divf %163, %164 : vector<8x32xf32>
    %166 = arith.mulf %157, %98 : vector<8x32xf32>
    %167 = arith.mulf %151, %159 : vector<8x32xf32>
    %168 = arith.addf %166, %167 : vector<8x32xf32>
    %169 = math.tanh %168 : vector<8x32xf32>
    %170 = arith.mulf %165, %169 : vector<8x32xf32>
    %c6_i32 = arith.constant 6 : i32
    %171 = vector.broadcast %c6_i32 : i32 to vector<8x1xi32>
    %172 = arith.cmpi sgt, %0, %171 : vector<8x1xi32>
    %173 = vector.shape_cast %172 : vector<8x1xi1> to vector<8x1xi1>
    %174 = vector.broadcast %173 : vector<8x1xi1> to vector<8x32xi1>
    %175 = arith.select %174, %170, %95 : vector<8x32xi1>, vector<8x32xf32>
    %176 = vector.shape_cast %172 : vector<8x1xi1> to vector<8x1xi1>
    %177 = vector.broadcast %176 : vector<8x1xi1> to vector<8x32xi1>
    %178 = arith.select %177, %168, %98 : vector<8x32xi1>, vector<8x32xf32>
    %179 = vector.extract_strided_slice %10 {offsets = [0, 2, 0], sizes = [8, 1, 128], strides = [1, 1, 1]} : vector<8x8x128xbf16> to vector<8x1x128xbf16>
    %180 = vector.shape_cast %179 : vector<8x1x128xbf16> to vector<8x128xbf16>
    %181 = arith.truncf %135 : vector<8x32xf32> to vector<8x32xbf16>
    %c0_38 = arith.constant 0 : index
    %c0_39 = arith.constant 0 : index
    %182 = vector.load %arg4[%c0_38, %c0_39] : memref<32x128xbf16, #tpu.memory_space<vmem>>, vector<32x128xbf16>
    %cst_40 = arith.constant dense<0.000000e+00> : vector<8x128xf32>
    %183 = tpu.matmul %181, %182, %cst_40 {dimension_numbers = #tpu.dot_dimension_numbers<[1], [0], [0], [1], [0, 0, 1, 1], [], []>} : vector<8x32xbf16>, vector<32x128xbf16>, vector<8x128xf32> -> vector<8x128xf32>
    %184 = arith.extf %180 : vector<8x128xbf16> to vector<8x128xf32>
    %185 = arith.addf %184, %183 : vector<8x128xf32>
    %186 = vector.extract_strided_slice %185 {offsets = [0, 0], sizes = [8, 32], strides = [1, 1]} : vector<8x128xf32> to vector<8x32xf32>
    %187 = arith.negf %186 : vector<8x32xf32>
    %188 = math.exp %187 : vector<8x32xf32>
    %cst_41 = arith.constant 1.000000e+00 : f32
    %189 = vector.broadcast %cst_41 : f32 to vector<8x32xf32>
    %190 = arith.addf %189, %188 : vector<8x32xf32>
    %191 = arith.divf %189, %190 : vector<8x32xf32>
    %192 = vector.extract_strided_slice %185 {offsets = [0, 32], sizes = [8, 32], strides = [1, 1]} : vector<8x128xf32> to vector<8x32xf32>
    %193 = arith.negf %192 : vector<8x32xf32>
    %194 = math.exp %193 : vector<8x32xf32>
    %cst_42 = arith.constant 1.000000e+00 : f32
    %195 = vector.broadcast %cst_42 : f32 to vector<8x32xf32>
    %196 = arith.addf %195, %194 : vector<8x32xf32>
    %197 = arith.divf %195, %196 : vector<8x32xf32>
    %198 = vector.extract_strided_slice %185 {offsets = [0, 64], sizes = [8, 32], strides = [1, 1]} : vector<8x128xf32> to vector<8x32xf32>
    %199 = math.tanh %198 : vector<8x32xf32>
    %200 = vector.extract_strided_slice %185 {offsets = [0, 96], sizes = [8, 32], strides = [1, 1]} : vector<8x128xf32> to vector<8x32xf32>
    %201 = arith.negf %200 : vector<8x32xf32>
    %202 = math.exp %201 : vector<8x32xf32>
    %cst_43 = arith.constant 1.000000e+00 : f32
    %203 = vector.broadcast %cst_43 : f32 to vector<8x32xf32>
    %204 = arith.addf %203, %202 : vector<8x32xf32>
    %205 = arith.divf %203, %204 : vector<8x32xf32>
    %206 = arith.mulf %197, %138 : vector<8x32xf32>
    %207 = arith.mulf %191, %199 : vector<8x32xf32>
    %208 = arith.addf %206, %207 : vector<8x32xf32>
    %209 = math.tanh %208 : vector<8x32xf32>
    %210 = arith.mulf %205, %209 : vector<8x32xf32>
    %c2_i32 = arith.constant 2 : i32
    %211 = vector.broadcast %c2_i32 : i32 to vector<8x1xi32>
    %212 = arith.cmpi sgt, %0, %211 : vector<8x1xi32>
    %213 = vector.shape_cast %212 : vector<8x1xi1> to vector<8x1xi1>
    %214 = vector.broadcast %213 : vector<8x1xi1> to vector<8x32xi1>
    %215 = arith.select %214, %210, %135 : vector<8x32xi1>, vector<8x32xf32>
    %216 = vector.shape_cast %212 : vector<8x1xi1> to vector<8x1xi1>
    %217 = vector.broadcast %216 : vector<8x1xi1> to vector<8x32xi1>
    %218 = arith.select %217, %208, %138 : vector<8x32xi1>, vector<8x32xf32>
    %219 = vector.extract_strided_slice %17 {offsets = [0, 5, 0], sizes = [8, 1, 128], strides = [1, 1, 1]} : vector<8x8x128xbf16> to vector<8x1x128xbf16>
    %220 = vector.shape_cast %219 : vector<8x1x128xbf16> to vector<8x128xbf16>
    %221 = arith.truncf %175 : vector<8x32xf32> to vector<8x32xbf16>
    %c0_44 = arith.constant 0 : index
    %c0_45 = arith.constant 0 : index
    %222 = vector.load %arg7[%c0_44, %c0_45] : memref<32x128xbf16, #tpu.memory_space<vmem>>, vector<32x128xbf16>
    %cst_46 = arith.constant dense<0.000000e+00> : vector<8x128xf32>
    %223 = tpu.matmul %221, %222, %cst_46 {dimension_numbers = #tpu.dot_dimension_numbers<[1], [0], [0], [1], [0, 0, 1, 1], [], []>} : vector<8x32xbf16>, vector<32x128xbf16>, vector<8x128xf32> -> vector<8x128xf32>
    %224 = arith.extf %220 : vector<8x128xbf16> to vector<8x128xf32>
    %225 = arith.addf %224, %223 : vector<8x128xf32>
    %226 = vector.extract_strided_slice %225 {offsets = [0, 0], sizes = [8, 32], strides = [1, 1]} : vector<8x128xf32> to vector<8x32xf32>
    %227 = arith.negf %226 : vector<8x32xf32>
    %228 = math.exp %227 : vector<8x32xf32>
    %cst_47 = arith.constant 1.000000e+00 : f32
    %229 = vector.broadcast %cst_47 : f32 to vector<8x32xf32>
    %230 = arith.addf %229, %228 : vector<8x32xf32>
    %231 = arith.divf %229, %230 : vector<8x32xf32>
    %232 = vector.extract_strided_slice %225 {offsets = [0, 32], sizes = [8, 32], strides = [1, 1]} : vector<8x128xf32> to vector<8x32xf32>
    %233 = arith.negf %232 : vector<8x32xf32>
    %234 = math.exp %233 : vector<8x32xf32>
    %cst_48 = arith.constant 1.000000e+00 : f32
    %235 = vector.broadcast %cst_48 : f32 to vector<8x32xf32>
    %236 = arith.addf %235, %234 : vector<8x32xf32>
    %237 = arith.divf %235, %236 : vector<8x32xf32>
    %238 = vector.extract_strided_slice %225 {offsets = [0, 64], sizes = [8, 32], strides = [1, 1]} : vector<8x128xf32> to vector<8x32xf32>
    %239 = math.tanh %238 : vector<8x32xf32>
    %240 = vector.extract_strided_slice %225 {offsets = [0, 96], sizes = [8, 32], strides = [1, 1]} : vector<8x128xf32> to vector<8x32xf32>
    %241 = arith.negf %240 : vector<8x32xf32>
    %242 = math.exp %241 : vector<8x32xf32>
    %cst_49 = arith.constant 1.000000e+00 : f32
    %243 = vector.broadcast %cst_49 : f32 to vector<8x32xf32>
    %244 = arith.addf %243, %242 : vector<8x32xf32>
    %245 = arith.divf %243, %244 : vector<8x32xf32>
    %246 = arith.mulf %237, %178 : vector<8x32xf32>
    %247 = arith.mulf %231, %239 : vector<8x32xf32>
    %248 = arith.addf %246, %247 : vector<8x32xf32>
    %249 = math.tanh %248 : vector<8x32xf32>
    %250 = arith.mulf %245, %249 : vector<8x32xf32>
    %c5_i32 = arith.constant 5 : i32
    %251 = vector.broadcast %c5_i32 : i32 to vector<8x1xi32>
    %252 = arith.cmpi sgt, %0, %251 : vector<8x1xi32>
    %253 = vector.shape_cast %252 : vector<8x1xi1> to vector<8x1xi1>
    %254 = vector.broadcast %253 : vector<8x1xi1> to vector<8x32xi1>
    %255 = arith.select %254, %250, %175 : vector<8x32xi1>, vector<8x32xf32>
    %256 = vector.shape_cast %252 : vector<8x1xi1> to vector<8x1xi1>
    %257 = vector.broadcast %256 : vector<8x1xi1> to vector<8x32xi1>
    %258 = arith.select %257, %248, %178 : vector<8x32xi1>, vector<8x32xf32>
    %259 = vector.extract_strided_slice %10 {offsets = [0, 3, 0], sizes = [8, 1, 128], strides = [1, 1, 1]} : vector<8x8x128xbf16> to vector<8x1x128xbf16>
    %260 = vector.shape_cast %259 : vector<8x1x128xbf16> to vector<8x128xbf16>
    %261 = arith.truncf %215 : vector<8x32xf32> to vector<8x32xbf16>
    %c0_50 = arith.constant 0 : index
    %c0_51 = arith.constant 0 : index
    %262 = vector.load %arg4[%c0_50, %c0_51] : memref<32x128xbf16, #tpu.memory_space<vmem>>, vector<32x128xbf16>
    %cst_52 = arith.constant dense<0.000000e+00> : vector<8x128xf32>
    %263 = tpu.matmul %261, %262, %cst_52 {dimension_numbers = #tpu.dot_dimension_numbers<[1], [0], [0], [1], [0, 0, 1, 1], [], []>} : vector<8x32xbf16>, vector<32x128xbf16>, vector<8x128xf32> -> vector<8x128xf32>
    %264 = arith.extf %260 : vector<8x128xbf16> to vector<8x128xf32>
    %265 = arith.addf %264, %263 : vector<8x128xf32>
    %266 = vector.extract_strided_slice %265 {offsets = [0, 0], sizes = [8, 32], strides = [1, 1]} : vector<8x128xf32> to vector<8x32xf32>
    %267 = arith.negf %266 : vector<8x32xf32>
    %268 = math.exp %267 : vector<8x32xf32>
    %cst_53 = arith.constant 1.000000e+00 : f32
    %269 = vector.broadcast %cst_53 : f32 to vector<8x32xf32>
    %270 = arith.addf %269, %268 : vector<8x32xf32>
    %271 = arith.divf %269, %270 : vector<8x32xf32>
    %272 = vector.extract_strided_slice %265 {offsets = [0, 32], sizes = [8, 32], strides = [1, 1]} : vector<8x128xf32> to vector<8x32xf32>
    %273 = arith.negf %272 : vector<8x32xf32>
    %274 = math.exp %273 : vector<8x32xf32>
    %cst_54 = arith.constant 1.000000e+00 : f32
    %275 = vector.broadcast %cst_54 : f32 to vector<8x32xf32>
    %276 = arith.addf %275, %274 : vector<8x32xf32>
    %277 = arith.divf %275, %276 : vector<8x32xf32>
    %278 = vector.extract_strided_slice %265 {offsets = [0, 64], sizes = [8, 32], strides = [1, 1]} : vector<8x128xf32> to vector<8x32xf32>
    %279 = math.tanh %278 : vector<8x32xf32>
    %280 = vector.extract_strided_slice %265 {offsets = [0, 96], sizes = [8, 32], strides = [1, 1]} : vector<8x128xf32> to vector<8x32xf32>
    %281 = arith.negf %280 : vector<8x32xf32>
    %282 = math.exp %281 : vector<8x32xf32>
    %cst_55 = arith.constant 1.000000e+00 : f32
    %283 = vector.broadcast %cst_55 : f32 to vector<8x32xf32>
    %284 = arith.addf %283, %282 : vector<8x32xf32>
    %285 = arith.divf %283, %284 : vector<8x32xf32>
    %286 = arith.mulf %277, %218 : vector<8x32xf32>
    %287 = arith.mulf %271, %279 : vector<8x32xf32>
    %288 = arith.addf %286, %287 : vector<8x32xf32>
    %289 = math.tanh %288 : vector<8x32xf32>
    %290 = arith.mulf %285, %289 : vector<8x32xf32>
    %c3_i32 = arith.constant 3 : i32
    %291 = vector.broadcast %c3_i32 : i32 to vector<8x1xi32>
    %292 = arith.cmpi sgt, %0, %291 : vector<8x1xi32>
    %293 = vector.shape_cast %292 : vector<8x1xi1> to vector<8x1xi1>
    %294 = vector.broadcast %293 : vector<8x1xi1> to vector<8x32xi1>
    %295 = arith.select %294, %290, %215 : vector<8x32xi1>, vector<8x32xf32>
    %296 = vector.shape_cast %292 : vector<8x1xi1> to vector<8x1xi1>
    %297 = vector.broadcast %296 : vector<8x1xi1> to vector<8x32xi1>
    %298 = arith.select %297, %288, %218 : vector<8x32xi1>, vector<8x32xf32>
    %299 = vector.extract_strided_slice %17 {offsets = [0, 4, 0], sizes = [8, 1, 128], strides = [1, 1, 1]} : vector<8x8x128xbf16> to vector<8x1x128xbf16>
    %300 = vector.shape_cast %299 : vector<8x1x128xbf16> to vector<8x128xbf16>
    %301 = arith.truncf %255 : vector<8x32xf32> to vector<8x32xbf16>
    %c0_56 = arith.constant 0 : index
    %c0_57 = arith.constant 0 : index
    %302 = vector.load %arg7[%c0_56, %c0_57] : memref<32x128xbf16, #tpu.memory_space<vmem>>, vector<32x128xbf16>
    %cst_58 = arith.constant dense<0.000000e+00> : vector<8x128xf32>
    %303 = tpu.matmul %301, %302, %cst_58 {dimension_numbers = #tpu.dot_dimension_numbers<[1], [0], [0], [1], [0, 0, 1, 1], [], []>} : vector<8x32xbf16>, vector<32x128xbf16>, vector<8x128xf32> -> vector<8x128xf32>
    %304 = arith.extf %300 : vector<8x128xbf16> to vector<8x128xf32>
    %305 = arith.addf %304, %303 : vector<8x128xf32>
    %306 = vector.extract_strided_slice %305 {offsets = [0, 0], sizes = [8, 32], strides = [1, 1]} : vector<8x128xf32> to vector<8x32xf32>
    %307 = arith.negf %306 : vector<8x32xf32>
    %308 = math.exp %307 : vector<8x32xf32>
    %cst_59 = arith.constant 1.000000e+00 : f32
    %309 = vector.broadcast %cst_59 : f32 to vector<8x32xf32>
    %310 = arith.addf %309, %308 : vector<8x32xf32>
    %311 = arith.divf %309, %310 : vector<8x32xf32>
    %312 = vector.extract_strided_slice %305 {offsets = [0, 32], sizes = [8, 32], strides = [1, 1]} : vector<8x128xf32> to vector<8x32xf32>
    %313 = arith.negf %312 : vector<8x32xf32>
    %314 = math.exp %313 : vector<8x32xf32>
    %cst_60 = arith.constant 1.000000e+00 : f32
    %315 = vector.broadcast %cst_60 : f32 to vector<8x32xf32>
    %316 = arith.addf %315, %314 : vector<8x32xf32>
    %317 = arith.divf %315, %316 : vector<8x32xf32>
    %318 = vector.extract_strided_slice %305 {offsets = [0, 64], sizes = [8, 32], strides = [1, 1]} : vector<8x128xf32> to vector<8x32xf32>
    %319 = math.tanh %318 : vector<8x32xf32>
    %320 = vector.extract_strided_slice %305 {offsets = [0, 96], sizes = [8, 32], strides = [1, 1]} : vector<8x128xf32> to vector<8x32xf32>
    %321 = arith.negf %320 : vector<8x32xf32>
    %322 = math.exp %321 : vector<8x32xf32>
    %cst_61 = arith.constant 1.000000e+00 : f32
    %323 = vector.broadcast %cst_61 : f32 to vector<8x32xf32>
    %324 = arith.addf %323, %322 : vector<8x32xf32>
    %325 = arith.divf %323, %324 : vector<8x32xf32>
    %326 = arith.mulf %317, %258 : vector<8x32xf32>
    %327 = arith.mulf %311, %319 : vector<8x32xf32>
    %328 = arith.addf %326, %327 : vector<8x32xf32>
    %329 = math.tanh %328 : vector<8x32xf32>
    %330 = arith.mulf %325, %329 : vector<8x32xf32>
    %c4_i32 = arith.constant 4 : i32
    %331 = vector.broadcast %c4_i32 : i32 to vector<8x1xi32>
    %332 = arith.cmpi sgt, %0, %331 : vector<8x1xi32>
    %333 = vector.shape_cast %332 : vector<8x1xi1> to vector<8x1xi1>
    %334 = vector.broadcast %333 : vector<8x1xi1> to vector<8x32xi1>
    %335 = arith.select %334, %330, %255 : vector<8x32xi1>, vector<8x32xf32>
    %336 = vector.shape_cast %332 : vector<8x1xi1> to vector<8x1xi1>
    %337 = vector.broadcast %336 : vector<8x1xi1> to vector<8x32xi1>
    %338 = arith.select %337, %328, %258 : vector<8x32xi1>, vector<8x32xf32>
    %339 = vector.extract_strided_slice %10 {offsets = [0, 4, 0], sizes = [8, 1, 128], strides = [1, 1, 1]} : vector<8x8x128xbf16> to vector<8x1x128xbf16>
    %340 = vector.shape_cast %339 : vector<8x1x128xbf16> to vector<8x128xbf16>
    %341 = arith.truncf %295 : vector<8x32xf32> to vector<8x32xbf16>
    %c0_62 = arith.constant 0 : index
    %c0_63 = arith.constant 0 : index
    %342 = vector.load %arg4[%c0_62, %c0_63] : memref<32x128xbf16, #tpu.memory_space<vmem>>, vector<32x128xbf16>
    %cst_64 = arith.constant dense<0.000000e+00> : vector<8x128xf32>
    %343 = tpu.matmul %341, %342, %cst_64 {dimension_numbers = #tpu.dot_dimension_numbers<[1], [0], [0], [1], [0, 0, 1, 1], [], []>} : vector<8x32xbf16>, vector<32x128xbf16>, vector<8x128xf32> -> vector<8x128xf32>
    %344 = arith.extf %340 : vector<8x128xbf16> to vector<8x128xf32>
    %345 = arith.addf %344, %343 : vector<8x128xf32>
    %346 = vector.extract_strided_slice %345 {offsets = [0, 0], sizes = [8, 32], strides = [1, 1]} : vector<8x128xf32> to vector<8x32xf32>
    %347 = arith.negf %346 : vector<8x32xf32>
    %348 = math.exp %347 : vector<8x32xf32>
    %cst_65 = arith.constant 1.000000e+00 : f32
    %349 = vector.broadcast %cst_65 : f32 to vector<8x32xf32>
    %350 = arith.addf %349, %348 : vector<8x32xf32>
    %351 = arith.divf %349, %350 : vector<8x32xf32>
    %352 = vector.extract_strided_slice %345 {offsets = [0, 32], sizes = [8, 32], strides = [1, 1]} : vector<8x128xf32> to vector<8x32xf32>
    %353 = arith.negf %352 : vector<8x32xf32>
    %354 = math.exp %353 : vector<8x32xf32>
    %cst_66 = arith.constant 1.000000e+00 : f32
    %355 = vector.broadcast %cst_66 : f32 to vector<8x32xf32>
    %356 = arith.addf %355, %354 : vector<8x32xf32>
    %357 = arith.divf %355, %356 : vector<8x32xf32>
    %358 = vector.extract_strided_slice %345 {offsets = [0, 64], sizes = [8, 32], strides = [1, 1]} : vector<8x128xf32> to vector<8x32xf32>
    %359 = math.tanh %358 : vector<8x32xf32>
    %360 = vector.extract_strided_slice %345 {offsets = [0, 96], sizes = [8, 32], strides = [1, 1]} : vector<8x128xf32> to vector<8x32xf32>
    %361 = arith.negf %360 : vector<8x32xf32>
    %362 = math.exp %361 : vector<8x32xf32>
    %cst_67 = arith.constant 1.000000e+00 : f32
    %363 = vector.broadcast %cst_67 : f32 to vector<8x32xf32>
    %364 = arith.addf %363, %362 : vector<8x32xf32>
    %365 = arith.divf %363, %364 : vector<8x32xf32>
    %366 = arith.mulf %357, %298 : vector<8x32xf32>
    %367 = arith.mulf %351, %359 : vector<8x32xf32>
    %368 = arith.addf %366, %367 : vector<8x32xf32>
    %369 = math.tanh %368 : vector<8x32xf32>
    %370 = arith.mulf %365, %369 : vector<8x32xf32>
    %c4_i32_68 = arith.constant 4 : i32
    %371 = vector.broadcast %c4_i32_68 : i32 to vector<8x1xi32>
    %372 = arith.cmpi sgt, %0, %371 : vector<8x1xi32>
    %373 = vector.shape_cast %372 : vector<8x1xi1> to vector<8x1xi1>
    %374 = vector.broadcast %373 : vector<8x1xi1> to vector<8x32xi1>
    %375 = arith.select %374, %370, %295 : vector<8x32xi1>, vector<8x32xf32>
    %376 = vector.shape_cast %372 : vector<8x1xi1> to vector<8x1xi1>
    %377 = vector.broadcast %376 : vector<8x1xi1> to vector<8x32xi1>
    %378 = arith.select %377, %368, %298 : vector<8x32xi1>, vector<8x32xf32>
    %379 = vector.extract_strided_slice %17 {offsets = [0, 3, 0], sizes = [8, 1, 128], strides = [1, 1, 1]} : vector<8x8x128xbf16> to vector<8x1x128xbf16>
    %380 = vector.shape_cast %379 : vector<8x1x128xbf16> to vector<8x128xbf16>
    %381 = arith.truncf %335 : vector<8x32xf32> to vector<8x32xbf16>
    %c0_69 = arith.constant 0 : index
    %c0_70 = arith.constant 0 : index
    %382 = vector.load %arg7[%c0_69, %c0_70] : memref<32x128xbf16, #tpu.memory_space<vmem>>, vector<32x128xbf16>
    %cst_71 = arith.constant dense<0.000000e+00> : vector<8x128xf32>
    %383 = tpu.matmul %381, %382, %cst_71 {dimension_numbers = #tpu.dot_dimension_numbers<[1], [0], [0], [1], [0, 0, 1, 1], [], []>} : vector<8x32xbf16>, vector<32x128xbf16>, vector<8x128xf32> -> vector<8x128xf32>
    %384 = arith.extf %380 : vector<8x128xbf16> to vector<8x128xf32>
    %385 = arith.addf %384, %383 : vector<8x128xf32>
    %386 = vector.extract_strided_slice %385 {offsets = [0, 0], sizes = [8, 32], strides = [1, 1]} : vector<8x128xf32> to vector<8x32xf32>
    %387 = arith.negf %386 : vector<8x32xf32>
    %388 = math.exp %387 : vector<8x32xf32>
    %cst_72 = arith.constant 1.000000e+00 : f32
    %389 = vector.broadcast %cst_72 : f32 to vector<8x32xf32>
    %390 = arith.addf %389, %388 : vector<8x32xf32>
    %391 = arith.divf %389, %390 : vector<8x32xf32>
    %392 = vector.extract_strided_slice %385 {offsets = [0, 32], sizes = [8, 32], strides = [1, 1]} : vector<8x128xf32> to vector<8x32xf32>
    %393 = arith.negf %392 : vector<8x32xf32>
    %394 = math.exp %393 : vector<8x32xf32>
    %cst_73 = arith.constant 1.000000e+00 : f32
    %395 = vector.broadcast %cst_73 : f32 to vector<8x32xf32>
    %396 = arith.addf %395, %394 : vector<8x32xf32>
    %397 = arith.divf %395, %396 : vector<8x32xf32>
    %398 = vector.extract_strided_slice %385 {offsets = [0, 64], sizes = [8, 32], strides = [1, 1]} : vector<8x128xf32> to vector<8x32xf32>
    %399 = math.tanh %398 : vector<8x32xf32>
    %400 = vector.extract_strided_slice %385 {offsets = [0, 96], sizes = [8, 32], strides = [1, 1]} : vector<8x128xf32> to vector<8x32xf32>
    %401 = arith.negf %400 : vector<8x32xf32>
    %402 = math.exp %401 : vector<8x32xf32>
    %cst_74 = arith.constant 1.000000e+00 : f32
    %403 = vector.broadcast %cst_74 : f32 to vector<8x32xf32>
    %404 = arith.addf %403, %402 : vector<8x32xf32>
    %405 = arith.divf %403, %404 : vector<8x32xf32>
    %406 = arith.mulf %397, %338 : vector<8x32xf32>
    %407 = arith.mulf %391, %399 : vector<8x32xf32>
    %408 = arith.addf %406, %407 : vector<8x32xf32>
    %409 = math.tanh %408 : vector<8x32xf32>
    %410 = arith.mulf %405, %409 : vector<8x32xf32>
    %c3_i32_75 = arith.constant 3 : i32
    %411 = vector.broadcast %c3_i32_75 : i32 to vector<8x1xi32>
    %412 = arith.cmpi sgt, %0, %411 : vector<8x1xi32>
    %413 = vector.shape_cast %412 : vector<8x1xi1> to vector<8x1xi1>
    %414 = vector.broadcast %413 : vector<8x1xi1> to vector<8x32xi1>
    %415 = arith.select %414, %410, %335 : vector<8x32xi1>, vector<8x32xf32>
    %416 = vector.shape_cast %412 : vector<8x1xi1> to vector<8x1xi1>
    %417 = vector.broadcast %416 : vector<8x1xi1> to vector<8x32xi1>
    %418 = arith.select %417, %408, %338 : vector<8x32xi1>, vector<8x32xf32>
    %419 = vector.extract_strided_slice %10 {offsets = [0, 5, 0], sizes = [8, 1, 128], strides = [1, 1, 1]} : vector<8x8x128xbf16> to vector<8x1x128xbf16>
    %420 = vector.shape_cast %419 : vector<8x1x128xbf16> to vector<8x128xbf16>
    %421 = arith.truncf %375 : vector<8x32xf32> to vector<8x32xbf16>
    %c0_76 = arith.constant 0 : index
    %c0_77 = arith.constant 0 : index
    %422 = vector.load %arg4[%c0_76, %c0_77] : memref<32x128xbf16, #tpu.memory_space<vmem>>, vector<32x128xbf16>
    %cst_78 = arith.constant dense<0.000000e+00> : vector<8x128xf32>
    %423 = tpu.matmul %421, %422, %cst_78 {dimension_numbers = #tpu.dot_dimension_numbers<[1], [0], [0], [1], [0, 0, 1, 1], [], []>} : vector<8x32xbf16>, vector<32x128xbf16>, vector<8x128xf32> -> vector<8x128xf32>
    %424 = arith.extf %420 : vector<8x128xbf16> to vector<8x128xf32>
    %425 = arith.addf %424, %423 : vector<8x128xf32>
    %426 = vector.extract_strided_slice %425 {offsets = [0, 0], sizes = [8, 32], strides = [1, 1]} : vector<8x128xf32> to vector<8x32xf32>
    %427 = arith.negf %426 : vector<8x32xf32>
    %428 = math.exp %427 : vector<8x32xf32>
    %cst_79 = arith.constant 1.000000e+00 : f32
    %429 = vector.broadcast %cst_79 : f32 to vector<8x32xf32>
    %430 = arith.addf %429, %428 : vector<8x32xf32>
    %431 = arith.divf %429, %430 : vector<8x32xf32>
    %432 = vector.extract_strided_slice %425 {offsets = [0, 32], sizes = [8, 32], strides = [1, 1]} : vector<8x128xf32> to vector<8x32xf32>
    %433 = arith.negf %432 : vector<8x32xf32>
    %434 = math.exp %433 : vector<8x32xf32>
    %cst_80 = arith.constant 1.000000e+00 : f32
    %435 = vector.broadcast %cst_80 : f32 to vector<8x32xf32>
    %436 = arith.addf %435, %434 : vector<8x32xf32>
    %437 = arith.divf %435, %436 : vector<8x32xf32>
    %438 = vector.extract_strided_slice %425 {offsets = [0, 64], sizes = [8, 32], strides = [1, 1]} : vector<8x128xf32> to vector<8x32xf32>
    %439 = math.tanh %438 : vector<8x32xf32>
    %440 = vector.extract_strided_slice %425 {offsets = [0, 96], sizes = [8, 32], strides = [1, 1]} : vector<8x128xf32> to vector<8x32xf32>
    %441 = arith.negf %440 : vector<8x32xf32>
    %442 = math.exp %441 : vector<8x32xf32>
    %cst_81 = arith.constant 1.000000e+00 : f32
    %443 = vector.broadcast %cst_81 : f32 to vector<8x32xf32>
    %444 = arith.addf %443, %442 : vector<8x32xf32>
    %445 = arith.divf %443, %444 : vector<8x32xf32>
    %446 = arith.mulf %437, %378 : vector<8x32xf32>
    %447 = arith.mulf %431, %439 : vector<8x32xf32>
    %448 = arith.addf %446, %447 : vector<8x32xf32>
    %449 = math.tanh %448 : vector<8x32xf32>
    %450 = arith.mulf %445, %449 : vector<8x32xf32>
    %c5_i32_82 = arith.constant 5 : i32
    %451 = vector.broadcast %c5_i32_82 : i32 to vector<8x1xi32>
    %452 = arith.cmpi sgt, %0, %451 : vector<8x1xi32>
    %453 = vector.shape_cast %452 : vector<8x1xi1> to vector<8x1xi1>
    %454 = vector.broadcast %453 : vector<8x1xi1> to vector<8x32xi1>
    %455 = arith.select %454, %450, %375 : vector<8x32xi1>, vector<8x32xf32>
    %456 = vector.shape_cast %452 : vector<8x1xi1> to vector<8x1xi1>
    %457 = vector.broadcast %456 : vector<8x1xi1> to vector<8x32xi1>
    %458 = arith.select %457, %448, %378 : vector<8x32xi1>, vector<8x32xf32>
    %459 = vector.extract_strided_slice %17 {offsets = [0, 2, 0], sizes = [8, 1, 128], strides = [1, 1, 1]} : vector<8x8x128xbf16> to vector<8x1x128xbf16>
    %460 = vector.shape_cast %459 : vector<8x1x128xbf16> to vector<8x128xbf16>
    %461 = arith.truncf %415 : vector<8x32xf32> to vector<8x32xbf16>
    %c0_83 = arith.constant 0 : index
    %c0_84 = arith.constant 0 : index
    %462 = vector.load %arg7[%c0_83, %c0_84] : memref<32x128xbf16, #tpu.memory_space<vmem>>, vector<32x128xbf16>
    %cst_85 = arith.constant dense<0.000000e+00> : vector<8x128xf32>
    %463 = tpu.matmul %461, %462, %cst_85 {dimension_numbers = #tpu.dot_dimension_numbers<[1], [0], [0], [1], [0, 0, 1, 1], [], []>} : vector<8x32xbf16>, vector<32x128xbf16>, vector<8x128xf32> -> vector<8x128xf32>
    %464 = arith.extf %460 : vector<8x128xbf16> to vector<8x128xf32>
    %465 = arith.addf %464, %463 : vector<8x128xf32>
    %466 = vector.extract_strided_slice %465 {offsets = [0, 0], sizes = [8, 32], strides = [1, 1]} : vector<8x128xf32> to vector<8x32xf32>
    %467 = arith.negf %466 : vector<8x32xf32>
    %468 = math.exp %467 : vector<8x32xf32>
    %cst_86 = arith.constant 1.000000e+00 : f32
    %469 = vector.broadcast %cst_86 : f32 to vector<8x32xf32>
    %470 = arith.addf %469, %468 : vector<8x32xf32>
    %471 = arith.divf %469, %470 : vector<8x32xf32>
    %472 = vector.extract_strided_slice %465 {offsets = [0, 32], sizes = [8, 32], strides = [1, 1]} : vector<8x128xf32> to vector<8x32xf32>
    %473 = arith.negf %472 : vector<8x32xf32>
    %474 = math.exp %473 : vector<8x32xf32>
    %cst_87 = arith.constant 1.000000e+00 : f32
    %475 = vector.broadcast %cst_87 : f32 to vector<8x32xf32>
    %476 = arith.addf %475, %474 : vector<8x32xf32>
    %477 = arith.divf %475, %476 : vector<8x32xf32>
    %478 = vector.extract_strided_slice %465 {offsets = [0, 64], sizes = [8, 32], strides = [1, 1]} : vector<8x128xf32> to vector<8x32xf32>
    %479 = math.tanh %478 : vector<8x32xf32>
    %480 = vector.extract_strided_slice %465 {offsets = [0, 96], sizes = [8, 32], strides = [1, 1]} : vector<8x128xf32> to vector<8x32xf32>
    %481 = arith.negf %480 : vector<8x32xf32>
    %482 = math.exp %481 : vector<8x32xf32>
    %cst_88 = arith.constant 1.000000e+00 : f32
    %483 = vector.broadcast %cst_88 : f32 to vector<8x32xf32>
    %484 = arith.addf %483, %482 : vector<8x32xf32>
    %485 = arith.divf %483, %484 : vector<8x32xf32>
    %486 = arith.mulf %477, %418 : vector<8x32xf32>
    %487 = arith.mulf %471, %479 : vector<8x32xf32>
    %488 = arith.addf %486, %487 : vector<8x32xf32>
    %489 = math.tanh %488 : vector<8x32xf32>
    %490 = arith.mulf %485, %489 : vector<8x32xf32>
    %c2_i32_89 = arith.constant 2 : i32
    %491 = vector.broadcast %c2_i32_89 : i32 to vector<8x1xi32>
    %492 = arith.cmpi sgt, %0, %491 : vector<8x1xi32>
    %493 = vector.shape_cast %492 : vector<8x1xi1> to vector<8x1xi1>
    %494 = vector.broadcast %493 : vector<8x1xi1> to vector<8x32xi1>
    %495 = arith.select %494, %490, %415 : vector<8x32xi1>, vector<8x32xf32>
    %496 = vector.shape_cast %492 : vector<8x1xi1> to vector<8x1xi1>
    %497 = vector.broadcast %496 : vector<8x1xi1> to vector<8x32xi1>
    %498 = arith.select %497, %488, %418 : vector<8x32xi1>, vector<8x32xf32>
    %499 = vector.extract_strided_slice %10 {offsets = [0, 6, 0], sizes = [8, 1, 128], strides = [1, 1, 1]} : vector<8x8x128xbf16> to vector<8x1x128xbf16>
    %500 = vector.shape_cast %499 : vector<8x1x128xbf16> to vector<8x128xbf16>
    %501 = arith.truncf %455 : vector<8x32xf32> to vector<8x32xbf16>
    %c0_90 = arith.constant 0 : index
    %c0_91 = arith.constant 0 : index
    %502 = vector.load %arg4[%c0_90, %c0_91] : memref<32x128xbf16, #tpu.memory_space<vmem>>, vector<32x128xbf16>
    %cst_92 = arith.constant dense<0.000000e+00> : vector<8x128xf32>
    %503 = tpu.matmul %501, %502, %cst_92 {dimension_numbers = #tpu.dot_dimension_numbers<[1], [0], [0], [1], [0, 0, 1, 1], [], []>} : vector<8x32xbf16>, vector<32x128xbf16>, vector<8x128xf32> -> vector<8x128xf32>
    %504 = arith.extf %500 : vector<8x128xbf16> to vector<8x128xf32>
    %505 = arith.addf %504, %503 : vector<8x128xf32>
    %506 = vector.extract_strided_slice %505 {offsets = [0, 0], sizes = [8, 32], strides = [1, 1]} : vector<8x128xf32> to vector<8x32xf32>
    %507 = arith.negf %506 : vector<8x32xf32>
    %508 = math.exp %507 : vector<8x32xf32>
    %cst_93 = arith.constant 1.000000e+00 : f32
    %509 = vector.broadcast %cst_93 : f32 to vector<8x32xf32>
    %510 = arith.addf %509, %508 : vector<8x32xf32>
    %511 = arith.divf %509, %510 : vector<8x32xf32>
    %512 = vector.extract_strided_slice %505 {offsets = [0, 32], sizes = [8, 32], strides = [1, 1]} : vector<8x128xf32> to vector<8x32xf32>
    %513 = arith.negf %512 : vector<8x32xf32>
    %514 = math.exp %513 : vector<8x32xf32>
    %cst_94 = arith.constant 1.000000e+00 : f32
    %515 = vector.broadcast %cst_94 : f32 to vector<8x32xf32>
    %516 = arith.addf %515, %514 : vector<8x32xf32>
    %517 = arith.divf %515, %516 : vector<8x32xf32>
    %518 = vector.extract_strided_slice %505 {offsets = [0, 64], sizes = [8, 32], strides = [1, 1]} : vector<8x128xf32> to vector<8x32xf32>
    %519 = math.tanh %518 : vector<8x32xf32>
    %520 = vector.extract_strided_slice %505 {offsets = [0, 96], sizes = [8, 32], strides = [1, 1]} : vector<8x128xf32> to vector<8x32xf32>
    %521 = arith.negf %520 : vector<8x32xf32>
    %522 = math.exp %521 : vector<8x32xf32>
    %cst_95 = arith.constant 1.000000e+00 : f32
    %523 = vector.broadcast %cst_95 : f32 to vector<8x32xf32>
    %524 = arith.addf %523, %522 : vector<8x32xf32>
    %525 = arith.divf %523, %524 : vector<8x32xf32>
    %526 = arith.mulf %517, %458 : vector<8x32xf32>
    %527 = arith.mulf %511, %519 : vector<8x32xf32>
    %528 = arith.addf %526, %527 : vector<8x32xf32>
    %529 = math.tanh %528 : vector<8x32xf32>
    %530 = arith.mulf %525, %529 : vector<8x32xf32>
    %c6_i32_96 = arith.constant 6 : i32
    %531 = vector.broadcast %c6_i32_96 : i32 to vector<8x1xi32>
    %532 = arith.cmpi sgt, %0, %531 : vector<8x1xi32>
    %533 = vector.shape_cast %532 : vector<8x1xi1> to vector<8x1xi1>
    %534 = vector.broadcast %533 : vector<8x1xi1> to vector<8x32xi1>
    %535 = arith.select %534, %530, %455 : vector<8x32xi1>, vector<8x32xf32>
    %536 = vector.shape_cast %532 : vector<8x1xi1> to vector<8x1xi1>
    %537 = vector.broadcast %536 : vector<8x1xi1> to vector<8x32xi1>
    %538 = arith.select %537, %528, %458 : vector<8x32xi1>, vector<8x32xf32>
    %539 = vector.extract_strided_slice %17 {offsets = [0, 1, 0], sizes = [8, 1, 128], strides = [1, 1, 1]} : vector<8x8x128xbf16> to vector<8x1x128xbf16>
    %540 = vector.shape_cast %539 : vector<8x1x128xbf16> to vector<8x128xbf16>
    %541 = arith.truncf %495 : vector<8x32xf32> to vector<8x32xbf16>
    %c0_97 = arith.constant 0 : index
    %c0_98 = arith.constant 0 : index
    %542 = vector.load %arg7[%c0_97, %c0_98] : memref<32x128xbf16, #tpu.memory_space<vmem>>, vector<32x128xbf16>
    %cst_99 = arith.constant dense<0.000000e+00> : vector<8x128xf32>
    %543 = tpu.matmul %541, %542, %cst_99 {dimension_numbers = #tpu.dot_dimension_numbers<[1], [0], [0], [1], [0, 0, 1, 1], [], []>} : vector<8x32xbf16>, vector<32x128xbf16>, vector<8x128xf32> -> vector<8x128xf32>
    %544 = arith.extf %540 : vector<8x128xbf16> to vector<8x128xf32>
    %545 = arith.addf %544, %543 : vector<8x128xf32>
    %546 = vector.extract_strided_slice %545 {offsets = [0, 0], sizes = [8, 32], strides = [1, 1]} : vector<8x128xf32> to vector<8x32xf32>
    %547 = arith.negf %546 : vector<8x32xf32>
    %548 = math.exp %547 : vector<8x32xf32>
    %cst_100 = arith.constant 1.000000e+00 : f32
    %549 = vector.broadcast %cst_100 : f32 to vector<8x32xf32>
    %550 = arith.addf %549, %548 : vector<8x32xf32>
    %551 = arith.divf %549, %550 : vector<8x32xf32>
    %552 = vector.extract_strided_slice %545 {offsets = [0, 32], sizes = [8, 32], strides = [1, 1]} : vector<8x128xf32> to vector<8x32xf32>
    %553 = arith.negf %552 : vector<8x32xf32>
    %554 = math.exp %553 : vector<8x32xf32>
    %cst_101 = arith.constant 1.000000e+00 : f32
    %555 = vector.broadcast %cst_101 : f32 to vector<8x32xf32>
    %556 = arith.addf %555, %554 : vector<8x32xf32>
    %557 = arith.divf %555, %556 : vector<8x32xf32>
    %558 = vector.extract_strided_slice %545 {offsets = [0, 64], sizes = [8, 32], strides = [1, 1]} : vector<8x128xf32> to vector<8x32xf32>
    %559 = math.tanh %558 : vector<8x32xf32>
    %560 = vector.extract_strided_slice %545 {offsets = [0, 96], sizes = [8, 32], strides = [1, 1]} : vector<8x128xf32> to vector<8x32xf32>
    %561 = arith.negf %560 : vector<8x32xf32>
    %562 = math.exp %561 : vector<8x32xf32>
    %cst_102 = arith.constant 1.000000e+00 : f32
    %563 = vector.broadcast %cst_102 : f32 to vector<8x32xf32>
    %564 = arith.addf %563, %562 : vector<8x32xf32>
    %565 = arith.divf %563, %564 : vector<8x32xf32>
    %566 = arith.mulf %557, %498 : vector<8x32xf32>
    %567 = arith.mulf %551, %559 : vector<8x32xf32>
    %568 = arith.addf %566, %567 : vector<8x32xf32>
    %569 = math.tanh %568 : vector<8x32xf32>
    %570 = arith.mulf %565, %569 : vector<8x32xf32>
    %c1_i32_103 = arith.constant 1 : i32
    %571 = vector.broadcast %c1_i32_103 : i32 to vector<8x1xi32>
    %572 = arith.cmpi sgt, %0, %571 : vector<8x1xi32>
    %573 = vector.shape_cast %572 : vector<8x1xi1> to vector<8x1xi1>
    %574 = vector.broadcast %573 : vector<8x1xi1> to vector<8x32xi1>
    %575 = arith.select %574, %570, %495 : vector<8x32xi1>, vector<8x32xf32>
    %576 = vector.shape_cast %572 : vector<8x1xi1> to vector<8x1xi1>
    %577 = vector.broadcast %576 : vector<8x1xi1> to vector<8x32xi1>
    %578 = arith.select %577, %568, %498 : vector<8x32xi1>, vector<8x32xf32>
    %579 = vector.extract_strided_slice %10 {offsets = [0, 7, 0], sizes = [8, 1, 128], strides = [1, 1, 1]} : vector<8x8x128xbf16> to vector<8x1x128xbf16>
    %580 = vector.shape_cast %579 : vector<8x1x128xbf16> to vector<8x128xbf16>
    %581 = arith.truncf %535 : vector<8x32xf32> to vector<8x32xbf16>
    %c0_104 = arith.constant 0 : index
    %c0_105 = arith.constant 0 : index
    %582 = vector.load %arg4[%c0_104, %c0_105] : memref<32x128xbf16, #tpu.memory_space<vmem>>, vector<32x128xbf16>
    %cst_106 = arith.constant dense<0.000000e+00> : vector<8x128xf32>
    %583 = tpu.matmul %581, %582, %cst_106 {dimension_numbers = #tpu.dot_dimension_numbers<[1], [0], [0], [1], [0, 0, 1, 1], [], []>} : vector<8x32xbf16>, vector<32x128xbf16>, vector<8x128xf32> -> vector<8x128xf32>
    %584 = arith.extf %580 : vector<8x128xbf16> to vector<8x128xf32>
    %585 = arith.addf %584, %583 : vector<8x128xf32>
    %586 = vector.extract_strided_slice %585 {offsets = [0, 0], sizes = [8, 32], strides = [1, 1]} : vector<8x128xf32> to vector<8x32xf32>
    %587 = arith.negf %586 : vector<8x32xf32>
    %588 = math.exp %587 : vector<8x32xf32>
    %cst_107 = arith.constant 1.000000e+00 : f32
    %589 = vector.broadcast %cst_107 : f32 to vector<8x32xf32>
    %590 = arith.addf %589, %588 : vector<8x32xf32>
    %591 = arith.divf %589, %590 : vector<8x32xf32>
    %592 = vector.extract_strided_slice %585 {offsets = [0, 32], sizes = [8, 32], strides = [1, 1]} : vector<8x128xf32> to vector<8x32xf32>
    %593 = arith.negf %592 : vector<8x32xf32>
    %594 = math.exp %593 : vector<8x32xf32>
    %cst_108 = arith.constant 1.000000e+00 : f32
    %595 = vector.broadcast %cst_108 : f32 to vector<8x32xf32>
    %596 = arith.addf %595, %594 : vector<8x32xf32>
    %597 = arith.divf %595, %596 : vector<8x32xf32>
    %598 = vector.extract_strided_slice %585 {offsets = [0, 64], sizes = [8, 32], strides = [1, 1]} : vector<8x128xf32> to vector<8x32xf32>
    %599 = math.tanh %598 : vector<8x32xf32>
    %600 = vector.extract_strided_slice %585 {offsets = [0, 96], sizes = [8, 32], strides = [1, 1]} : vector<8x128xf32> to vector<8x32xf32>
    %601 = arith.negf %600 : vector<8x32xf32>
    %602 = math.exp %601 : vector<8x32xf32>
    %cst_109 = arith.constant 1.000000e+00 : f32
    %603 = vector.broadcast %cst_109 : f32 to vector<8x32xf32>
    %604 = arith.addf %603, %602 : vector<8x32xf32>
    %605 = arith.divf %603, %604 : vector<8x32xf32>
    %606 = arith.mulf %597, %538 : vector<8x32xf32>
    %607 = arith.mulf %591, %599 : vector<8x32xf32>
    %608 = arith.addf %606, %607 : vector<8x32xf32>
    %609 = math.tanh %608 : vector<8x32xf32>
    %610 = arith.mulf %605, %609 : vector<8x32xf32>
    %611 = vector.extract_strided_slice %17 {offsets = [0, 0, 0], sizes = [8, 1, 128], strides = [1, 1, 1]} : vector<8x8x128xbf16> to vector<8x1x128xbf16>
    %612 = vector.shape_cast %611 : vector<8x1x128xbf16> to vector<8x128xbf16>
    %613 = arith.truncf %575 : vector<8x32xf32> to vector<8x32xbf16>
    %c0_110 = arith.constant 0 : index
    %c0_111 = arith.constant 0 : index
    %614 = vector.load %arg7[%c0_110, %c0_111] : memref<32x128xbf16, #tpu.memory_space<vmem>>, vector<32x128xbf16>
    %cst_112 = arith.constant dense<0.000000e+00> : vector<8x128xf32>
    %615 = tpu.matmul %613, %614, %cst_112 {dimension_numbers = #tpu.dot_dimension_numbers<[1], [0], [0], [1], [0, 0, 1, 1], [], []>} : vector<8x32xbf16>, vector<32x128xbf16>, vector<8x128xf32> -> vector<8x128xf32>
    %616 = arith.extf %612 : vector<8x128xbf16> to vector<8x128xf32>
    %617 = arith.addf %616, %615 : vector<8x128xf32>
    %618 = vector.extract_strided_slice %617 {offsets = [0, 0], sizes = [8, 32], strides = [1, 1]} : vector<8x128xf32> to vector<8x32xf32>
    %619 = arith.negf %618 : vector<8x32xf32>
    %620 = math.exp %619 : vector<8x32xf32>
    %cst_113 = arith.constant 1.000000e+00 : f32
    %621 = vector.broadcast %cst_113 : f32 to vector<8x32xf32>
    %622 = arith.addf %621, %620 : vector<8x32xf32>
    %623 = arith.divf %621, %622 : vector<8x32xf32>
    %624 = vector.extract_strided_slice %617 {offsets = [0, 32], sizes = [8, 32], strides = [1, 1]} : vector<8x128xf32> to vector<8x32xf32>
    %625 = arith.negf %624 : vector<8x32xf32>
    %626 = math.exp %625 : vector<8x32xf32>
    %cst_114 = arith.constant 1.000000e+00 : f32
    %627 = vector.broadcast %cst_114 : f32 to vector<8x32xf32>
    %628 = arith.addf %627, %626 : vector<8x32xf32>
    %629 = arith.divf %627, %628 : vector<8x32xf32>
    %630 = vector.extract_strided_slice %617 {offsets = [0, 64], sizes = [8, 32], strides = [1, 1]} : vector<8x128xf32> to vector<8x32xf32>
    %631 = math.tanh %630 : vector<8x32xf32>
    %632 = vector.extract_strided_slice %617 {offsets = [0, 96], sizes = [8, 32], strides = [1, 1]} : vector<8x128xf32> to vector<8x32xf32>
    %633 = arith.negf %632 : vector<8x32xf32>
    %634 = math.exp %633 : vector<8x32xf32>
    %cst_115 = arith.constant 1.000000e+00 : f32
    %635 = vector.broadcast %cst_115 : f32 to vector<8x32xf32>
    %636 = arith.addf %635, %634 : vector<8x32xf32>
    %637 = arith.divf %635, %636 : vector<8x32xf32>
    %638 = arith.mulf %629, %578 : vector<8x32xf32>
    %639 = arith.mulf %623, %631 : vector<8x32xf32>
    %640 = arith.addf %638, %639 : vector<8x32xf32>
    %641 = math.tanh %640 : vector<8x32xf32>
    %642 = arith.mulf %637, %641 : vector<8x32xf32>
    %643 = vector.shape_cast %50 : vector<8x32xf32> to vector<8x1x32xf32>
    %644 = vector.shape_cast %130 : vector<8x32xf32> to vector<8x1x32xf32>
    %645 = vector.shape_cast %210 : vector<8x32xf32> to vector<8x1x32xf32>
    %646 = vector.shape_cast %290 : vector<8x32xf32> to vector<8x1x32xf32>
    %647 = vector.shape_cast %370 : vector<8x32xf32> to vector<8x1x32xf32>
    %648 = vector.shape_cast %450 : vector<8x32xf32> to vector<8x1x32xf32>
    %649 = vector.shape_cast %530 : vector<8x32xf32> to vector<8x1x32xf32>
    %650 = vector.shape_cast %610 : vector<8x32xf32> to vector<8x1x32xf32>
    %651 = tpu.concatenate %643, %644, %645, %646, %647, %648, %649, %650 in 1 : vector<8x1x32xf32>, vector<8x1x32xf32>, vector<8x1x32xf32>, vector<8x1x32xf32>, vector<8x1x32xf32>, vector<8x1x32xf32>, vector<8x1x32xf32>, vector<8x1x32xf32> -> vector<8x8x32xf32>
    %652 = vector.shape_cast %642 : vector<8x32xf32> to vector<8x1x32xf32>
    %653 = vector.shape_cast %570 : vector<8x32xf32> to vector<8x1x32xf32>
    %654 = vector.shape_cast %490 : vector<8x32xf32> to vector<8x1x32xf32>
    %655 = vector.shape_cast %410 : vector<8x32xf32> to vector<8x1x32xf32>
    %656 = vector.shape_cast %330 : vector<8x32xf32> to vector<8x1x32xf32>
    %657 = vector.shape_cast %250 : vector<8x32xf32> to vector<8x1x32xf32>
    %658 = vector.shape_cast %170 : vector<8x32xf32> to vector<8x1x32xf32>
    %659 = vector.shape_cast %90 : vector<8x32xf32> to vector<8x1x32xf32>
    %660 = tpu.concatenate %652, %653, %654, %655, %656, %657, %658, %659 in 1 : vector<8x1x32xf32>, vector<8x1x32xf32>, vector<8x1x32xf32>, vector<8x1x32xf32>, vector<8x1x32xf32>, vector<8x1x32xf32>, vector<8x1x32xf32>, vector<8x1x32xf32> -> vector<8x8x32xf32>
    %661 = tpu.iota {dimensions = array<i32: 1>} : vector<8x8x1xi32>
    %662 = vector.shape_cast %0 : vector<8x1xi32> to vector<8x1x1xi32>
    %663 = vector.broadcast %662 : vector<8x1x1xi32> to vector<8x8x1xi32>
    %664 = arith.cmpi slt, %661, %663 : vector<8x8x1xi32>
    %cst_116 = arith.constant 0.000000e+00 : f32
    %665 = vector.shape_cast %664 : vector<8x8x1xi1> to vector<8x8x1xi1>
    %666 = vector.broadcast %665 : vector<8x8x1xi1> to vector<8x8x32xi1>
    %667 = vector.broadcast %cst_116 : f32 to vector<8x8x32xf32>
    %668 = arith.select %666, %651, %667 : vector<8x8x32xi1>, vector<8x8x32xf32>
    %669 = vector.shape_cast %668 : vector<8x8x32xf32> to vector<64x32xf32>
    %670 = arith.truncf %669 : vector<64x32xf32> to vector<64x32xbf16>
    %cst_117 = arith.constant 0.000000e+00 : f32
    %671 = vector.shape_cast %664 : vector<8x8x1xi1> to vector<8x8x1xi1>
    %672 = vector.broadcast %671 : vector<8x8x1xi1> to vector<8x8x32xi1>
    %673 = vector.broadcast %cst_117 : f32 to vector<8x8x32xf32>
    %674 = arith.select %672, %660, %673 : vector<8x8x32xi1>, vector<8x8x32xf32>
    %675 = vector.shape_cast %674 : vector<8x8x32xf32> to vector<64x32xf32>
    %676 = arith.truncf %675 : vector<64x32xf32> to vector<64x32xbf16>
    %c0_118 = arith.constant 0 : index
    %c0_119 = arith.constant 0 : index
    %677 = vector.load %arg9[%c0_118, %c0_119] : memref<32x32xbf16, #tpu.memory_space<vmem>>, vector<32x32xbf16>
    %cst_120 = arith.constant dense<0.000000e+00> : vector<64x32xf32>
    %678 = tpu.matmul %670, %677, %cst_120 {dimension_numbers = #tpu.dot_dimension_numbers<[1], [0], [0], [1], [0, 0, 1, 1], [], []>} : vector<64x32xbf16>, vector<32x32xbf16>, vector<64x32xf32> -> vector<64x32xf32>
    %c0_121 = arith.constant 0 : index
    %c0_122 = arith.constant 0 : index
    %679 = vector.load %arg10[%c0_121, %c0_122] : memref<32x32xbf16, #tpu.memory_space<vmem>>, vector<32x32xbf16>
    %cst_123 = arith.constant dense<0.000000e+00> : vector<64x32xf32>
    %680 = tpu.matmul %676, %679, %cst_123 {dimension_numbers = #tpu.dot_dimension_numbers<[1], [0], [0], [1], [0, 0, 1, 1], [], []>} : vector<64x32xbf16>, vector<32x32xbf16>, vector<64x32xf32> -> vector<64x32xf32>
    %681 = arith.addf %678, %680 : vector<64x32xf32>
    %c0_124 = arith.constant 0 : index
    %c0_125 = arith.constant 0 : index
    %682 = vector.load %arg11[%c0_124, %c0_125] : memref<1x32xf32, #tpu.memory_space<vmem>>, vector<1x32xf32>
    %683 = vector.broadcast %682 : vector<1x32xf32> to vector<64x32xf32>
    %684 = arith.addf %681, %683 : vector<64x32xf32>
    %cst_126 = arith.constant 0.000000e+00 : f32
    %685 = vector.broadcast %cst_126 : f32 to vector<64x32xf32>
    %686 = arith.maximumf %684, %685 : vector<64x32xf32>
    %687 = arith.truncf %686 : vector<64x32xf32> to vector<64x32xbf16>
    %c0_127 = arith.constant 0 : index
    %c0_128 = arith.constant 0 : index
    %688 = vector.load %arg12[%c0_127, %c0_128] : memref<32x128xbf16, #tpu.memory_space<vmem>>, vector<32x128xbf16>
    %cst_129 = arith.constant dense<0.000000e+00> : vector<64x128xf32>
    %689 = tpu.matmul %687, %688, %cst_129 {dimension_numbers = #tpu.dot_dimension_numbers<[1], [0], [0], [1], [0, 0, 1, 1], [], []>} : vector<64x32xbf16>, vector<32x128xbf16>, vector<64x128xf32> -> vector<64x128xf32>
    %c0_130 = arith.constant 0 : index
    %c0_131 = arith.constant 0 : index
    %690 = vector.load %arg13[%c0_130, %c0_131] : memref<1x128xf32, #tpu.memory_space<vmem>>, vector<1x128xf32>
    %691 = vector.broadcast %690 : vector<1x128xf32> to vector<64x128xf32>
    %692 = arith.addf %689, %691 : vector<64x128xf32>
    %693 = vector.shape_cast %692 : vector<64x128xf32> to vector<8x8x128xf32>
    %c0_132 = arith.constant 0 : index
    %c0_133 = arith.constant 0 : index
    %c0_134 = arith.constant 0 : index
    %694 = vector.load %arg14[%c0_132, %c0_133, %c0_134] : memref<8x8x128xf32, #tpu.memory_space<vmem>>, vector<8x8x128xf32>
    tpu.vector_store %arg14[%c0_132, %c0_133, %c0_134], %693 {strides = array<i32>} : memref<8x8x128xf32, #tpu.memory_space<vmem>>, vector<8x8x128xf32>,
    return
  }
  func.func @transform_0(%arg0: i32) -> (i32, i32, i32) {
    %c0_i32 = arith.constant 0 : i32
    %c0_i32_0 = arith.constant 0 : i32
    %c0_i32_1 = arith.constant 0 : i32
    return %arg0, %c0_i32, %c0_i32_0 : i32, i32, i32
  }
  func.func @transform_1(%arg0: i32) -> (i32, i32) {
    %c0_i32 = arith.constant 0 : i32
    %c0_i32_0 = arith.constant 0 : i32
    return %arg0, %c0_i32 : i32, i32
  }
  func.func @transform_2(%arg0: i32) -> (i32, i32) {
    %c0_i32 = arith.constant 0 : i32
    %c0_i32_0 = arith.constant 0 : i32
    %c0_i32_1 = arith.constant 0 : i32
    return %c0_i32, %c0_i32_0 : i32, i32
  }
  func.func @transform_3(%arg0: i32) -> (i32, i32) {
    %c0_i32 = arith.constant 0 : i32
    %c0_i32_0 = arith.constant 0 : i32
    %c0_i32_1 = arith.constant 0 : i32
    return %c0_i32, %c0_i32_0 : i32, i32
  }
  func.func @transform_4(%arg0: i32) -> (i32, i32) {
    %c0_i32 = arith.constant 0 : i32
    %c0_i32_0 = arith.constant 0 : i32
    %c0_i32_1 = arith.constant 0 : i32
    return %c0_i32, %c0_i32_0 : i32, i32
  }
  func.func @transform_5(%arg0: i32) -> (i32, i32) {
    %c0_i32 = arith.constant 0 : i32
    %c0_i32_0 = arith.constant 0 : i32
    %c0_i32_1 = arith.constant 0 : i32
    return %c0_i32, %c0_i32_0 : i32, i32
  }
  func.func @transform_6(%arg0: i32) -> (i32, i32) {
    %c0_i32 = arith.constant 0 : i32
    %c0_i32_0 = arith.constant 0 : i32
    %c0_i32_1 = arith.constant 0 : i32
    return %c0_i32, %c0_i32_0 : i32, i32
  }
  func.func @transform_7(%arg0: i32) -> (i32, i32) {
    %c0_i32 = arith.constant 0 : i32
    %c0_i32_0 = arith.constant 0 : i32
    %c0_i32_1 = arith.constant 0 : i32
    return %c0_i32, %c0_i32_0 : i32, i32
  }
  func.func @transform_8(%arg0: i32) -> (i32, i32) {
    %c0_i32 = arith.constant 0 : i32
    %c0_i32_0 = arith.constant 0 : i32
    %c0_i32_1 = arith.constant 0 : i32
    return %c0_i32, %c0_i32_0 : i32, i32
  }
  func.func @transform_9(%arg0: i32) -> (i32, i32) {
    %c0_i32 = arith.constant 0 : i32
    %c0_i32_0 = arith.constant 0 : i32
    %c0_i32_1 = arith.constant 0 : i32
    return %c0_i32, %c0_i32_0 : i32, i32
  }
  func.func @transform_10(%arg0: i32) -> (i32, i32) {
    %c0_i32 = arith.constant 0 : i32
    %c0_i32_0 = arith.constant 0 : i32
    %c0_i32_1 = arith.constant 0 : i32
    return %c0_i32, %c0_i32_0 : i32, i32
  }
  func.func @transform_11(%arg0: i32) -> (i32, i32) {
    %c0_i32 = arith.constant 0 : i32
    %c0_i32_0 = arith.constant 0 : i32
    %c0_i32_1 = arith.constant 0 : i32
    return %c0_i32, %c0_i32_0 : i32, i32
  }
  func.func @transform_12(%arg0: i32) -> (i32, i32) {
    %c0_i32 = arith.constant 0 : i32
    %c0_i32_0 = arith.constant 0 : i32
    %c0_i32_1 = arith.constant 0 : i32
    return %c0_i32, %c0_i32_0 : i32, i32
  }
  func.func @transform_13(%arg0: i32) -> (i32, i32, i32) {
    %c0_i32 = arith.constant 0 : i32
    %c0_i32_0 = arith.constant 0 : i32
    %c0_i32_1 = arith.constant 0 : i32
    return %arg0, %c0_i32, %c0_i32_0 : i32, i32, i32
  }
}

</mosaic_0001>

<llo_original>
// kernel: rnn_forward.1
$region0: #{rnn_forward.1}
  #allocation0 [shape = 'u32[]', space=smem, size = 0x4, offset = 0x4, fixed_abs, tag = 'smem constant byte address 0x4 - core index']
  #allocation1 [shape = 'u32[72,128]{1,0:T(1,128)}', space=vmem, size = 0x9000, scoped, tag = 'internal scratch']
  %s0 = inlined_call_operand.vmem [shape: f32[16,8,32], index: 0, kind: input, shape index: {}]
  %s1 = inlined_call_operand.vmem [shape: s32[16,1], index: 1, kind: input, shape index: {}]
  %s2 = inlined_call_operand.vmem [shape: bf16[32,128], index: 2, kind: input, shape index: {}]
  %s3 = inlined_call_operand.vmem [shape: bf16[32,128], index: 3, kind: input, shape index: {}]
  %s4 = inlined_call_operand.vmem [shape: f32[1,128], index: 4, kind: input, shape index: {}]
  %s5 = inlined_call_operand.vmem [shape: bf16[32,128], index: 5, kind: input, shape index: {}]
  %s6 = inlined_call_operand.vmem [shape: bf16[32,128], index: 6, kind: input, shape index: {}]
  %s7 = inlined_call_operand.vmem [shape: f32[1,128], index: 7, kind: input, shape index: {}]
  %s8 = inlined_call_operand.vmem [shape: bf16[32,32], index: 8, kind: input, shape index: {}]
  %s9 = inlined_call_operand.vmem [shape: bf16[32,32], index: 9, kind: input, shape index: {}]
  %s10 = inlined_call_operand.vmem [shape: f32[1,32], index: 10, kind: input, shape index: {}]
  %s11 = inlined_call_operand.vmem [shape: bf16[32,128], index: 11, kind: input, shape index: {}]
  %s12 = inlined_call_operand.vmem [shape: f32[1,128], index: 12, kind: input, shape index: {}]
  %s13 = inlined_call_operand.vmem [shape: f32[16,8,128], index: 13, kind: output, shape index: {}]
  %s14 = sld [smem:[#allocation0]]
  $region85: #{rnn_forward.1} parent=0
    _
  %s16 = ssub.s32 1, %s14
  %s17 = scalar_select 0, %s16, %s14
  loop: start=0, step=1, limit=4
  $region2: #{rnn_forward.1} parent=0 // loop_pre_header
    _
  $region3: #{rnn_forward.1} parent=0 // loop_header
    %s19 = sphi 0, %s23
    %p20 = scmp.ge.s32.totalorder %s19, 4
    %s29 = sphi 0, %s31
    %s32 = sphi 0, %s29
    %s33 = sphi 0, %s32
    %s49 = sphi 0, %s33
    %s55 = sphi 0, %s57
    %s58 = sphi 0, %s55
    %s59 = sphi 0, %s58
    %s75 = sphi 0, %s59
    %s79 = sphi 0, %s79
    %s81 = sphi 0, %s79
    %s82 = sphi 0, %s81
    %s96 = sphi 0, %s82
    %s100 = sphi 0, %s100
    %s102 = sphi 0, %s100
    %s103 = sphi 0, %s102
    %s117 = sphi 0, %s103
    %s121 = sphi 0, %s121
    %s123 = sphi 0, %s121
    %s124 = sphi 0, %s123
    %s138 = sphi 0, %s124
    %s142 = sphi 0, %s142
    %s144 = sphi 0, %s142
    %s145 = sphi 0, %s144
    %s159 = sphi 0, %s145
    %s163 = sphi 0, %s163
    %s165 = sphi 0, %s163
    %s166 = sphi 0, %s165
    %s180 = sphi 0, %s166
    %s184 = sphi 0, %s184
    %s186 = sphi 0, %s184
    %s187 = sphi 0, %s186
    %s201 = sphi 0, %s187
    %s205 = sphi 0, %s205
    %s207 = sphi 0, %s205
    %s208 = sphi 0, %s207
    %s222 = sphi 0, %s208
    %s226 = sphi 0, %s226
    %s228 = sphi 0, %s226
    %s229 = sphi 0, %s228
    %s243 = sphi 0, %s229
    %s247 = sphi 0, %s247
    %s249 = sphi 0, %s247
    %s250 = sphi 0, %s249
    %s264 = sphi 0, %s250
    %s268 = sphi 0, %s268
    %s270 = sphi 0, %s268
    %s271 = sphi 0, %s270
    %s285 = sphi 0, %s271
    %s289 = sphi 0, %s289
    %s291 = sphi 0, %s289
    %s292 = sphi 0, %s291
    %s306 = sphi 0, %s292
    %s312 = sphi 0, %s314
    %s315 = sphi 0, %s312
    %s316 = sphi 0, %s315
    %s332 = sphi 0, %s316
  $region4: #{rnn_forward.1} parent=0 // loop_header_branch
    %22 = sbr.rel (%p20) target = $region8
  $region5: #{rnn_forward.1} parent=0 // loop_body
    %s24 = ssub.s32 %s19, 1
    %s25 = ssub.s32 %s19, 2
    %s26 = sadd.s32 %s19, 1
    %s27 = ssub.s32 %s19, %s26
    %p28 = scmp.eq.s32.totalorder %s27, 0
    %s30 = sadd.s32 %s29, 1
    %s31 = scalar_select %p28, %s29, %s30
    %p34 = pneg %p28
    %p35 = scmp.eq.s32.totalorder %s19, 1
    %p36 = por %p34, %p35
    %p37 = scmp.ne.s32.totalorder %s29, %s32
    %p38 = scmp.eq.s32.totalorder %s19, 0
    %p39 = por %p37, %p38
    %p40 = scmp.ne.s32.totalorder %s29, %s32
    %p41 = scmp.eq.s32.totalorder %s24, 1
    %p42 = por %p40, %p41
    %p43 = scmp.ne.s32.totalorder %s32, %s33
    %p44 = scmp.eq.s32.totalorder %s24, 0
    %p45 = por %p43, %p44
    %p46 = scmp.ne.s32.totalorder %s32, %s33
    %p47 = scmp.eq.s32.totalorder %s25, 1
    %p48 = por %p46, %p47
    %p50 = scmp.ne.s32.totalorder %s33, %s49
    %p51 = scmp.eq.s32.totalorder %s25, 0
    %p52 = por %p50, %p51
    %s53 = ssub.s32 %s19, %s26
    %p54 = scmp.eq.s32.totalorder %s53, 0
    %s56 = sadd.s32 %s55, 1
    %s57 = scalar_select %p54, %s55, %s56
    %p60 = pneg %p54
    %p61 = scmp.eq.s32.totalorder %s19, 1
    %p62 = por %p60, %p61
    %p63 = scmp.ne.s32.totalorder %s55, %s58
    %p64 = scmp.eq.s32.totalorder %s19, 0
    %p65 = por %p63, %p64
    %p66 = scmp.ne.s32.totalorder %s55, %s58
    %p67 = scmp.eq.s32.totalorder %s24, 1
    %p68 = por %p66, %p67
    %p69 = scmp.ne.s32.totalorder %s58, %s59
    %p70 = scmp.eq.s32.totalorder %s24, 0
    %p71 = por %p69, %p70
    %p72 = scmp.ne.s32.totalorder %s58, %s59
    %p73 = scmp.eq.s32.totalorder %s25, 1
    %p74 = por %p72, %p73
    %p76 = scmp.ne.s32.totalorder %s59, %s75
    %p77 = scmp.eq.s32.totalorder %s25, 0
    %p78 = por %p76, %p77
    %s80 = sadd.s32 %s79, 1
    %p83 = scmp.eq.s32.totalorder %s19, 1
    %p84 = scmp.ne.s32.totalorder %s79, %s81
    %p85 = scmp.eq.s32.totalorder %s19, 0
    %p86 = por %p84, %p85
    %p87 = scmp.ne.s32.totalorder %s79, %s81
    %p88 = scmp.eq.s32.totalorder %s24, 1
    %p89 = por %p87, %p88
    %p90 = scmp.ne.s32.totalorder %s81, %s82
    %p91 = scmp.eq.s32.totalorder %s24, 0
    %p92 = por %p90, %p91
    %p93 = scmp.ne.s32.totalorder %s81, %s82
    %p94 = scmp.eq.s32.totalorder %s25, 1
    %p95 = por %p93, %p94
    %p97 = scmp.ne.s32.totalorder %s82, %s96
    %p98 = scmp.eq.s32.totalorder %s25, 0
    %p99 = por %p97, %p98
    %s101 = sadd.s32 %s100, 1
    %p104 = scmp.eq.s32.totalorder %s19, 1
    %p105 = scmp.ne.s32.totalorder %s100, %s102
    %p106 = scmp.eq.s32.totalorder %s19, 0
    %p107 = por %p105, %p106
    %p108 = scmp.ne.s32.totalorder %s100, %s102
    %p109 = scmp.eq.s32.totalorder %s24, 1
    %p110 = por %p108, %p109
    %p111 = scmp.ne.s32.totalorder %s102, %s103
    %p112 = scmp.eq.s32.totalorder %s24, 0
    %p113 = por %p111, %p112
    %p114 = scmp.ne.s32.totalorder %s102, %s103
    %p115 = scmp.eq.s32.totalorder %s25, 1
    %p116 = por %p114, %p115
    %p118 = scmp.ne.s32.totalorder %s103, %s117
    %p119 = scmp.eq.s32.totalorder %s25, 0
    %p120 = por %p118, %p119
    %s122 = sadd.s32 %s121, 1
    %p125 = scmp.eq.s32.totalorder %s19, 1
    %p126 = scmp.ne.s32.totalorder %s121, %s123
    %p127 = scmp.eq.s32.totalorder %s19, 0
    %p128 = por %p126, %p127
    %p129 = scmp.ne.s32.totalorder %s121, %s123
    %p130 = scmp.eq.s32.totalorder %s24, 1
    %p131 = por %p129, %p130
    %p132 = scmp.ne.s32.totalorder %s123, %s124
    %p133 = scmp.eq.s32.totalorder %s24, 0
    %p134 = por %p132, %p133
    %p135 = scmp.ne.s32.totalorder %s123, %s124
    %p136 = scmp.eq.s32.totalorder %s25, 1
    %p137 = por %p135, %p136
    %p139 = scmp.ne.s32.totalorder %s124, %s138
    %p140 = scmp.eq.s32.totalorder %s25, 0
    %p141 = por %p139, %p140
    %s143 = sadd.s32 %s142, 1
    %p146 = scmp.eq.s32.totalorder %s19, 1
    %p147 = scmp.ne.s32.totalorder %s142, %s144
    %p148 = scmp.eq.s32.totalorder %s19, 0
    %p149 = por %p147, %p148
    %p150 = scmp.ne.s32.totalorder %s142, %s144
    %p151 = scmp.eq.s32.totalorder %s24, 1
    %p152 = por %p150, %p151
    %p153 = scmp.ne.s32.totalorder %s144, %s145
    %p154 = scmp.eq.s32.totalorder %s24, 0
    %p155 = por %p153, %p154
    %p156 = scmp.ne.s32.totalorder %s144, %s145
    %p157 = scmp.eq.s32.totalorder %s25, 1
    %p158 = por %p156, %p157
    %p160 = scmp.ne.s32.totalorder %s145, %s159
    %p161 = scmp.eq.s32.totalorder %s25, 0
    %p162 = por %p160, %p161
    %s164 = sadd.s32 %s163, 1
    %p167 = scmp.eq.s32.totalorder %s19, 1
    %p168 = scmp.ne.s32.totalorder %s163, %s165
    %p169 = scmp.eq.s32.totalorder %s19, 0
    %p170 = por %p168, %p169
    %p171 = scmp.ne.s32.totalorder %s163, %s165
    %p172 = scmp.eq.s32.totalorder %s24, 1
    %p173 = por %p171, %p172
    %p174 = scmp.ne.s32.totalorder %s165, %s166
    %p175 = scmp.eq.s32.totalorder %s24, 0
    %p176 = por %p174, %p175
    %p177 = scmp.ne.s32.totalorder %s165, %s166
    %p178 = scmp.eq.s32.totalorder %s25, 1
    %p179 = por %p177, %p178
    %p181 = scmp.ne.s32.totalorder %s166, %s180
    %p182 = scmp.eq.s32.totalorder %s25, 0
    %p183 = por %p181, %p182
    %s185 = sadd.s32 %s184, 1
    %p188 = scmp.eq.s32.totalorder %s19, 1
    %p189 = scmp.ne.s32.totalorder %s184, %s186
    %p190 = scmp.eq.s32.totalorder %s19, 0
    %p191 = por %p189, %p190
    %p192 = scmp.ne.s32.totalorder %s184, %s186
    %p193 = scmp.eq.s32.totalorder %s24, 1
    %p194 = por %p192, %p193
    %p195 = scmp.ne.s32.totalorder %s186, %s187
    %p196 = scmp.eq.s32.totalorder %s24, 0
    %p197 = por %p195, %p196
    %p198 = scmp.ne.s32.totalorder %s186, %s187
    %p199 = scmp.eq.s32.totalorder %s25, 1
    %p200 = por %p198, %p199
    %p202 = scmp.ne.s32.totalorder %s187, %s201
    %p203 = scmp.eq.s32.totalorder %s25, 0
    %p204 = por %p202, %p203
    %s206 = sadd.s32 %s205, 1
    %p209 = scmp.eq.s32.totalorder %s19, 1
    %p210 = scmp.ne.s32.totalorder %s205, %s207
    %p211 = scmp.eq.s32.totalorder %s19, 0
    %p212 = por %p210, %p211
    %p213 = scmp.ne.s32.totalorder %s205, %s207
    %p214 = scmp.eq.s32.totalorder %s24, 1
    %p215 = por %p213, %p214
    %p216 = scmp.ne.s32.totalorder %s207, %s208
    %p217 = scmp.eq.s32.totalorder %s24, 0
    %p218 = por %p216, %p217
    %p219 = scmp.ne.s32.totalorder %s207, %s208
    %p220 = scmp.eq.s32.totalorder %s25, 1
    %p221 = por %p219, %p220
    %p223 = scmp.ne.s32.totalorder %s208, %s222
    %p224 = scmp.eq.s32.totalorder %s25, 0
    %p225 = por %p223, %p224
    %s227 = sadd.s32 %s226, 1
    %p230 = scmp.eq.s32.totalorder %s19, 1
    %p231 = scmp.ne.s32.totalorder %s226, %s228
    %p232 = scmp.eq.s32.totalorder %s19, 0
    %p233 = por %p231, %p232
    %p234 = scmp.ne.s32.totalorder %s226, %s228
    %p235 = scmp.eq.s32.totalorder %s24, 1
    %p236 = por %p234, %p235
    %p237 = scmp.ne.s32.totalorder %s228, %s229
    %p238 = scmp.eq.s32.totalorder %s24, 0
    %p239 = por %p237, %p238
    %p240 = scmp.ne.s32.totalorder %s228, %s229
    %p241 = scmp.eq.s32.totalorder %s25, 1
    %p242 = por %p240, %p241
    %p244 = scmp.ne.s32.totalorder %s229, %s243
    %p245 = scmp.eq.s32.totalorder %s25, 0
    %p246 = por %p244, %p245
    %s248 = sadd.s32 %s247, 1
    %p251 = scmp.eq.s32.totalorder %s19, 1
    %p252 = scmp.ne.s32.totalorder %s247, %s249
    %p253 = scmp.eq.s32.totalorder %s19, 0
    %p254 = por %p252, %p253
    %p255 = scmp.ne.s32.totalorder %s247, %s249
    %p256 = scmp.eq.s32.totalorder %s24, 1
    %p257 = por %p255, %p256
    %p258 = scmp.ne.s32.totalorder %s249, %s250
    %p259 = scmp.eq.s32.totalorder %s24, 0
    %p260 = por %p258, %p259
    %p261 = scmp.ne.s32.totalorder %s249, %s250
    %p262 = scmp.eq.s32.totalorder %s25, 1
    %p263 = por %p261, %p262
    %p265 = scmp.ne.s32.totalorder %s250, %s264
    %p266 = scmp.eq.s32.totalorder %s25, 0
    %p267 = por %p265, %p266
    %s269 = sadd.s32 %s268, 1
    %p272 = scmp.eq.s32.totalorder %s19, 1
    %p273 = scmp.ne.s32.totalorder %s268, %s270
    %p274 = scmp.eq.s32.totalorder %s19, 0
    %p275 = por %p273, %p274
    %p276 = scmp.ne.s32.totalorder %s268, %s270
    %p277 = scmp.eq.s32.totalorder %s24, 1
    %p278 = por %p276, %p277
    %p279 = scmp.ne.s32.totalorder %s270, %s271
    %p280 = scmp.eq.s32.totalorder %s24, 0
    %p281 = por %p279, %p280
    %p282 = scmp.ne.s32.totalorder %s270, %s271
    %p283 = scmp.eq.s32.totalorder %s25, 1
    %p284 = por %p282, %p283
    %p286 = scmp.ne.s32.totalorder %s271, %s285
    %p287 = scmp.eq.s32.totalorder %s25, 0
    %p288 = por %p286, %p287
    %s290 = sadd.s32 %s289, 1
    %p293 = scmp.eq.s32.totalorder %s19, 1
    %p294 = scmp.ne.s32.totalorder %s289, %s291
    %p295 = scmp.eq.s32.totalorder %s19, 0
    %p296 = por %p294, %p295
    %p297 = scmp.ne.s32.totalorder %s289, %s291
    %p298 = scmp.eq.s32.totalorder %s24, 1
    %p299 = por %p297, %p298
    %p300 = scmp.ne.s32.totalorder %s291, %s292
    %p301 = scmp.eq.s32.totalorder %s24, 0
    %p302 = por %p300, %p301
    %p303 = scmp.ne.s32.totalorder %s291, %s292
    %p304 = scmp.eq.s32.totalorder %s25, 1
    %p305 = por %p303, %p304
    %p307 = scmp.ne.s32.totalorder %s292, %s306
    %p308 = scmp.eq.s32.totalorder %s25, 0
    %p309 = por %p307, %p308
    %s310 = ssub.s32 %s19, %s26
    %p311 = scmp.eq.s32.totalorder %s310, 0
    %s313 = sadd.s32 %s312, 1
    %s314 = scalar_select %p311, %s312, %s313
    %p317 = pneg %p311
    %p318 = scmp.eq.s32.totalorder %s19, 1
    %p319 = por %p317, %p318
    %p320 = scmp.ne.s32.totalorder %s312, %s315
    %p321 = scmp.eq.s32.totalorder %s19, 0
    %p322 = por %p320, %p321
    %p323 = scmp.ne.s32.totalorder %s312, %s315
    %p324 = scmp.eq.s32.totalorder %s24, 1
    %p325 = por %p323, %p324
    %p326 = scmp.ne.s32.totalorder %s315, %s316
    %p327 = scmp.eq.s32.totalorder %s24, 0
    %p328 = por %p326, %p327
    %p329 = scmp.ne.s32.totalorder %s315, %s316
    %p330 = scmp.eq.s32.totalorder %s25, 1
    %p331 = por %p329, %p330
    %p333 = scmp.ne.s32.totalorder %s316, %s332
    %p334 = scmp.eq.s32.totalorder %s25, 0
    %p335 = por %p333, %p334
    %p336 = scmp.le.s32.totalorder 1, %s19
    %p337 = scmp.lt.s32.totalorder %s19, 3
    %p338 = pnand %p336, %p337
    %p339 = pneg %p338
    // Predicated region
    $region9: #{rnn_forward.1} parent=5 // pred_check
      _
    $region10: #{rnn_forward.1} parent=5 // pred_check_branch
      %341 = sbr.rel (%p338) target = $region12
    $region11: #{rnn_forward.1} parent=5 // pred_region
      %s342 = ssub.s32 %s19, 1
      // Predicated region
      $region13: #{rnn_forward.1} parent=11 // pred_check
        %p343 = pneg %p92
      $region14: #{rnn_forward.1} parent=11 // pred_check_branch
        %345 = sbr.rel (%p343) target = $region16
      $region15: #{rnn_forward.1} parent=11 // pred_region
        _
      $region16: #{rnn_forward.1} parent=11 // pred_fallthru
        _
      // Predicated region
      $region17: #{rnn_forward.1} parent=11 // pred_check
        %p346 = pneg %p113
      $region18: #{rnn_forward.1} parent=11 // pred_check_branch
        %348 = sbr.rel (%p346) target = $region20
      $region19: #{rnn_forward.1} parent=11 // pred_region
        _
      $region20: #{rnn_forward.1} parent=11 // pred_fallthru
        _
      // Predicated region
      $region21: #{rnn_forward.1} parent=11 // pred_check
        %p349 = pneg %p134
      $region22: #{rnn_forward.1} parent=11 // pred_check_branch
        %351 = sbr.rel (%p349) target = $region24
      $region23: #{rnn_forward.1} parent=11 // pred_region
        _
      $region24: #{rnn_forward.1} parent=11 // pred_fallthru
        _
      // Predicated region
      $region25: #{rnn_forward.1} parent=11 // pred_check
        %p352 = pneg %p155
      $region26: #{rnn_forward.1} parent=11 // pred_check_branch
        %354 = sbr.rel (%p352) target = $region28
      $region27: #{rnn_forward.1} parent=11 // pred_region
        _
      $region28: #{rnn_forward.1} parent=11 // pred_fallthru
        _
      // Predicated region
      $region29: #{rnn_forward.1} parent=11 // pred_check
        %p355 = pneg %p176
      $region30: #{rnn_forward.1} parent=11 // pred_check_branch
        %357 = sbr.rel (%p355) target = $region32
      $region31: #{rnn_forward.1} parent=11 // pred_region
        _
      $region32: #{rnn_forward.1} parent=11 // pred_fallthru
        _
      // Predicated region
      $region33: #{rnn_forward.1} parent=11 // pred_check
        %p358 = pneg %p197
      $region34: #{rnn_forward.1} parent=11 // pred_check_branch
        %360 = sbr.rel (%p358) target = $region36
      $region35: #{rnn_forward.1} parent=11 // pred_region
        _
      $region36: #{rnn_forward.1} parent=11 // pred_fallthru
        _
      // Predicated region
      $region37: #{rnn_forward.1} parent=11 // pred_check
        %p361 = pneg %p218
      $region38: #{rnn_forward.1} parent=11 // pred_check_branch
        %363 = sbr.rel (%p361) target = $region40
      $region39: #{rnn_forward.1} parent=11 // pred_region
        _
      $region40: #{rnn_forward.1} parent=11 // pred_fallthru
        _
      // Predicated region
      $region41: #{rnn_forward.1} parent=11 // pred_check
        %p364 = pneg %p239
      $region42: #{rnn_forward.1} parent=11 // pred_check_branch
        %366 = sbr.rel (%p364) target = $region44
      $region43: #{rnn_forward.1} parent=11 // pred_region
        _
      $region44: #{rnn_forward.1} parent=11 // pred_fallthru
        _
      // Predicated region
      $region45: #{rnn_forward.1} parent=11 // pred_check
        %p367 = pneg %p260
      $region46: #{rnn_forward.1} parent=11 // pred_check_branch
        %369 = sbr.rel (%p367) target = $region48
      $region47: #{rnn_forward.1} parent=11 // pred_region
        _
      $region48: #{rnn_forward.1} parent=11 // pred_fallthru
        _
      // Predicated region
      $region49: #{rnn_forward.1} parent=11 // pred_check
        %p370 = pneg %p281
      $region50: #{rnn_forward.1} parent=11 // pred_check_branch
        %372 = sbr.rel (%p370) target = $region52
      $region51: #{rnn_forward.1} parent=11 // pred_region
        _
      $region52: #{rnn_forward.1} parent=11 // pred_fallthru
        _
      // Predicated region
      $region53: #{rnn_forward.1} parent=11 // pred_check
        %p373 = pneg %p302
      $region54: #{rnn_forward.1} parent=11 // pred_check_branch
        %375 = sbr.rel (%p373) target = $region56
      $region55: #{rnn_forward.1} parent=11 // pred_region
        _
      $region56: #{rnn_forward.1} parent=11 // pred_fallthru
        _
    $region12: #{rnn_forward.1} parent=5 // pred_fallthru
      _
    %p376 = scmp.lt.s32.totalorder %s19, 2
    // Predicated region
    $region57: #{rnn_forward.1} parent=5 // pred_check
      %p377 = pneg %p376
    $region58: #{rnn_forward.1} parent=5 // pred_check_branch
      %379 = sbr.rel (%p377) target = $region60
    $region59: #{rnn_forward.1} parent=5 // pred_region
      // Predicated region
      $region61: #{rnn_forward.1} parent=59 // pred_check
        %p380 = pneg %p39
      $region62: #{rnn_forward.1} parent=59 // pred_check_branch
        %382 = sbr.rel (%p380) target = $region64
      $region63: #{rnn_forward.1} parent=59 // pred_region
        %s383 = smul.u32 8, %s19
        %p384 = scmp.lt.s32.totalorder %s383, 15
        %s385 = scalar_select %p384, %s383, 15
        %s386 = smul.addr %s385, 8
        %s387 = scalar_lea.vmem %s0, %s386
        %s388 = smul.u32 8, %s19
      $region64: #{rnn_forward.1} parent=59 // pred_fallthru
        _
      // Predicated region
      $region65: #{rnn_forward.1} parent=59 // pred_check
        %p389 = pneg %p65
      $region66: #{rnn_forward.1} parent=59 // pred_check_branch
        %391 = sbr.rel (%p389) target = $region68
      $region67: #{rnn_forward.1} parent=59 // pred_region
        %p392 = scmp.lt.s32.totalorder %s19, 1
        %s393 = scalar_select %p392, %s19, 1
        %s394 = smul.addr %s393, 8
        %s395 = scalar_lea.vmem %s1, %s394
      $region68: #{rnn_forward.1} parent=59 // pred_fallthru
        _
    $region60: #{rnn_forward.1} parent=5 // pred_fallthru
      _
    %p396 = scmp.le.s32.totalorder 1, %s19
    %p397 = scmp.lt.s32.totalorder %s19, 3
    %p398 = pnand %p396, %p397
    %p399 = pneg %p398
    // Predicated region
    $region69: #{rnn_forward.1} parent=5 // pred_check
      _
    $region70: #{rnn_forward.1} parent=5 // pred_check_branch
      %401 = sbr.rel (%p398) target = $region72
    $region71: #{rnn_forward.1} parent=5 // pred_region
      %s402 = ssub.s32 %s19, 1
      %s403 = smul.u32 8, %s24
      %p404 = scmp.lt.s32.totalorder %s403, 15
      %s405 = scalar_select %p404, %s403, 15
      %s406 = smul.addr %s405, 8
      %s407 = scalar_lea.vmem %s0, %s406
      %p408 = pneg %p45
      %p409 = pneg %p42
      %p410 = scmp.lt.s32.totalorder %s24, 1
      %s411 = scalar_select %p410, %s24, 1
      %s412 = smul.addr %s411, 8
      %s413 = scalar_lea.vmem %s1, %s412
      %p414 = pneg %p71
      %p415 = pneg %p68
      %p416 = pneg %p92
      %p417 = pneg %p89
      %p418 = pneg %p113
      %p419 = pneg %p110
      %p420 = pneg %p134
      %p421 = pneg %p131
      %p422 = pneg %p155
      %p423 = pneg %p152
      %p424 = pneg %p176
      %p425 = pneg %p173
      %p426 = pneg %p197
      %p427 = pneg %p194
      %p428 = pneg %p218
      %p429 = pneg %p215
      %p430 = pneg %p239
      %p431 = pneg %p236
      %p432 = pneg %p260
      %p433 = pneg %p257
      %p434 = pneg %p281
      %p435 = pneg %p278
      %p436 = pneg %p302
      %p437 = pneg %p299
      %p438 = pneg %p328
      %p439 = pneg %p325
      %s440 = smul.u32 8, %s24
      %p441 = scmp.lt.s32.totalorder %s440, 15
      %s442 = scalar_select %p441, %s440, 15
      %s443 = smul.addr %s442, 8
      %s444 = scalar_lea.vmem %s13, %s443
      %s445 = smul.u32 8, %s24
      %p446 = scmp.lt.s32.totalorder %s445, 15
      %s447 = scalar_select %p446, %s445, 15
      %s448 = smul.addr %s447, 8
      %s449 = scalar_lea.vmem %s0, %s448
      %s450 = smul.u32 8, %s24
      %p451 = scmp.lt.s32.totalorder %s24, 1
      %s452 = scalar_select %p451, %s24, 1
      %s453 = smul.addr %s452, 8
      %s454 = scalar_lea.vmem %s1, %s453
      %s455 = smul.u32 8, %s24
      %p456 = scmp.lt.s32.totalorder %s455, 15
      %s457 = scalar_select %p456, %s455, 15
      %s458 = smul.addr %s457, 8
      %s459 = scalar_lea.vmem %s13, %s458
      %s460 = smul.u32 8, %s24
      %v462 = vld [vmem:[%s454] sm:$0xff]
      %v463 = vld [vmem:[%s449] sm:$0xff]
      %v464 = vld [vmem:[%s449 + $0x8] sm:$0xff]
      %v465 = vld [vmem:[%s449 + $0x10] sm:$0xff]
      %v466 = vld [vmem:[%s449 + $0x18] sm:$0xff]
      %v467 = vld [vmem:[%s449 + $0x20] sm:$0xff]
      %v468 = vld [vmem:[%s449 + $0x28] sm:$0xff]
      %v469 = vld [vmem:[%s449 + $0x30] sm:$0xff]
      %v470 = vld [vmem:[%s449 + $0x38] sm:$0xff]
      %v471 = vpack.c.bf16 %v463, %v463
      %v472 = vpack.c.bf16 %v464, %v464
      %v473 = vpack.c.bf16 %v465, %v465
      %v474 = vpack.c.bf16 %v466, %v466
      %v475 = vpack.c.bf16 %v467, %v467
      %v476 = vpack.c.bf16 %v468, %v468
      %v477 = vpack.c.bf16 %v469, %v469
      %v478 = vpack.c.bf16 %v470, %v470
      %v479 = vld [vmem:[%s2] sm:$0xf]
      %v480 = vld [vmem:[%s2 + $0x4] sm:$0xf]
      %v481 = vld [vmem:[%s2 + $0x8] sm:$0xf]
      %v482 = vld [vmem:[%s2 + $0xc] sm:$0xf]
      %v483 = vld [vmem:[%s4] sm:$0x1]
      %v485 = vperm.slane %v483, 0
      %v495 = vunpack.c.l.b16 %v471
      %v496 = vunpack.c.l.b16 %v472
      %v497 = vunpack.c.l.b16 %v473
      %v498 = vunpack.c.l.b16 %v474
      %v499 = vunpack.c.l.b16 %v475
      %v500 = vunpack.c.l.b16 %v476
      %v501 = vunpack.c.l.b16 %v477
      %v502 = vunpack.c.l.b16 %v478
      %v503 = vpack.c.b16 %v496, %v495
      %v504 = vpack.c.b16 %v498, %v497
      %v505 = vpack.c.b16 %v500, %v499
      %v506 = vpack.c.b16 %v502, %v501
      %v511 = vunpack.c.l.b16 %v479
      %v512 = vunpack.c.l.b16 %v480
      %v513 = vunpack.c.l.b16 %v481
      %v514 = vunpack.c.l.b16 %v482
      %v515 = vpack.c.b16 %v512, %v511
      %v516 = vpack.c.b16 %v514, %v513
      %vm519 = vcmask 261120
      %v521 = vsel %vm519, %v503, 0
      %v524 = vsel %vm519, %v504, 0
      %v527 = vsel %vm519, %v505, 0
      %v530 = vsel %vm519, %v506, 0
      %532 = vmatpush.bf16.msra.mxu0 0
      %533 = vmatpush.bf16.msra.mxu0 0
      %534 = vmatpush.bf16.msra.mxu0 0
      %535 = vmatpush.bf16.msra.mxu0 0
      %536 = vmatpush.bf16.msra.mxu0 0
      %537 = vmatpush.bf16.msra.mxu0 0
      %538 = vmatpush.bf16.msra.mxu0 %v516
      %539 = vmatpush.bf16.msra.mxu0 %v515
      %540 = vmatmul.bf16.gmra.mxu0 %v521
      %v541 = vpop.f32.mrf.mxu0
      %v542 = vadd.f32 %v485, %v541
      %v543 = vpop.f32.mrf.mxu0
      %v544 = vadd.f32 %v485, %v543
      %545 = vmatmul.bf16.gmra.mxu0 %v524
      %v546 = vpop.f32.mrf.mxu0
      %v547 = vadd.f32 %v485, %v546
      %v548 = vpop.f32.mrf.mxu0
      %v549 = vadd.f32 %v485, %v548
      %550 = vmatmul.bf16.gmra.mxu0 %v527
      %v551 = vpop.f32.mrf.mxu0
      %v552 = vadd.f32 %v485, %v551
      %v553 = vpop.f32.mrf.mxu0
      %v554 = vadd.f32 %v485, %v553
      %555 = vmatmul.bf16.gmra.mxu0 %v530
      %v556 = vpop.f32.mrf.mxu0
      %v557 = vadd.f32 %v485, %v556
      %v558 = vpop.f32.mrf.mxu0
      %v559 = vadd.f32 %v485, %v558
      %560 = vdwg.mxu0
      %v561 = vpack.c.bf16 %v542, %v542
      %v562 = vpack.c.bf16 %v544, %v544
      %v563 = vpack.c.bf16 %v547, %v547
      %v564 = vpack.c.bf16 %v549, %v549
      %v565 = vpack.c.bf16 %v552, %v552
      %v566 = vpack.c.bf16 %v554, %v554
      %v567 = vpack.c.bf16 %v557, %v557
      %v568 = vpack.c.bf16 %v559, %v559
      %v569 = vld [vmem:[%s5] sm:$0xf]
      %v570 = vld [vmem:[%s5 + $0x4] sm:$0xf]
      %v571 = vld [vmem:[%s5 + $0x8] sm:$0xf]
      %v572 = vld [vmem:[%s5 + $0xc] sm:$0xf]
      %v573 = vld [vmem:[%s7] sm:$0x1]
      %v575 = vperm.slane %v573, 0
      %v581 = vunpack.c.l.b16 %v569
      %v582 = vunpack.c.l.b16 %v570
      %v583 = vunpack.c.l.b16 %v571
      %v584 = vunpack.c.l.b16 %v572
      %v585 = vpack.c.b16 %v582, %v581
      %v586 = vpack.c.b16 %v584, %v583
      %589 = vmatpush.bf16.msra.mxu0 0
      %590 = vmatpush.bf16.msra.mxu0 0
      %591 = vmatpush.bf16.msra.mxu0 0
      %592 = vmatpush.bf16.msra.mxu0 0
      %593 = vmatpush.bf16.msra.mxu0 0
      %594 = vmatpush.bf16.msra.mxu0 0
      %595 = vmatpush.bf16.msra.mxu0 %v586
      %596 = vmatpush.bf16.msra.mxu0 %v585
      %597 = vmatmul.bf16.gmra.mxu0 %v521
      %v598 = vpop.f32.mrf.mxu0
      %v599 = vadd.f32 %v575, %v598
      %v600 = vpop.f32.mrf.mxu0
      %v601 = vadd.f32 %v575, %v600
      %602 = vmatmul.bf16.gmra.mxu0 %v524
      %v603 = vpop.f32.mrf.mxu0
      %v604 = vadd.f32 %v575, %v603
      %v605 = vpop.f32.mrf.mxu0
      %v606 = vadd.f32 %v575, %v605
      %607 = vmatmul.bf16.gmra.mxu0 %v527
      %v608 = vpop.f32.mrf.mxu0
      %v609 = vadd.f32 %v575, %v608
      %v610 = vpop.f32.mrf.mxu0
      %v611 = vadd.f32 %v575, %v610
      %612 = vmatmul.bf16.gmra.mxu0 %v530
      %v613 = vpop.f32.mrf.mxu0
      %v614 = vadd.f32 %v575, %v613
      %v615 = vpop.f32.mrf.mxu0
      %v616 = vadd.f32 %v575, %v615
      %617 = vdwg.mxu0
      %v618 = vpack.c.bf16 %v599, %v599
      %v619 = vpack.c.bf16 %v601, %v601
      %v620 = vpack.c.bf16 %v604, %v604
      %v621 = vpack.c.bf16 %v606, %v606
      %v622 = vpack.c.bf16 %v609, %v609
      %v623 = vpack.c.bf16 %v611, %v611
      %v624 = vpack.c.bf16 %v614, %v614
      %v625 = vpack.c.bf16 %v616, %v616
      %v626 = vld [vmem:[%s3] sm:$0xf]
      %v627 = vld [vmem:[%s3 + $0x4] sm:$0xf]
      %v628 = vld [vmem:[%s3 + $0x8] sm:$0xf]
      %v629 = vld [vmem:[%s3 + $0xc] sm:$0xf]
      %v634 = vunpack.c.l.b16 %v626
      %v635 = vunpack.c.l.b16 %v627
      %v636 = vunpack.c.l.b16 %v628
      %v637 = vunpack.c.l.b16 %v629
      %v638 = vpack.c.b16 %v635, %v634
      %v639 = vpack.c.b16 %v637, %v636
      %v643 = vsel %vm519, 0, 0
      %645 = vmatpush.bf16.msra.mxu0 0
      %646 = vmatpush.bf16.msra.mxu0 0
      %647 = vmatpush.bf16.msra.mxu0 0
      %648 = vmatpush.bf16.msra.mxu0 0
      %649 = vmatpush.bf16.msra.mxu0 0
      %650 = vmatpush.bf16.msra.mxu0 0
      %651 = vmatpush.bf16.msra.mxu0 %v639
      %652 = vmatpush.bf16.msra.mxu0 %v638
      %653 = vmatmul.bf16.gmra.mxu0 %v643
      %v654 = vpop.f32.mrf.mxu0
      %v655 = vadd.f32 0.0, %v654
      %v656 = vpop.f32.mrf.mxu0
      %657 = vdwg.mxu0
      %v658 = vunpack.c.l.bf16 %v561
      %v659 = vunpack.c.l.bf16 %v562
      %v660 = vunpack.c.l.bf16 %v563
      %v661 = vunpack.c.l.bf16 %v564
      %v662 = vunpack.c.l.bf16 %v565
      %v663 = vunpack.c.l.bf16 %v566
      %v664 = vunpack.c.l.bf16 %v567
      %v665 = vunpack.c.l.bf16 %v568
      %v667 = vrot.slane %v655, 1
      %v668 = vrot.slane %v655, 2
      %v669 = vrot.slane %v655, 3
      %v670 = vrot.slane %v655, 4
      %v671 = vrot.slane %v655, 5
      %v672 = vrot.slane %v655, 6
      %v673 = vrot.slane %v655, 7
      %v682 = vadd.f32 %v658, %v655
      %v683 = vadd.f32 %v659, %v667
      %v684 = vadd.f32 %v660, %v668
      %v685 = vadd.f32 %v661, %v669
      %v686 = vadd.f32 %v662, %v670
      %v687 = vadd.f32 %v663, %v671
      %v688 = vadd.f32 %v664, %v672
      %v689 = vadd.f32 %v665, %v673
      %v690 = vxor.u32 %v682, 2147483648
      %v691 = vxor.u32 %v683, 2147483648
      %v692 = vxor.u32 %v684, 2147483648
      %v693 = vxor.u32 %v685, 2147483648
      %v694 = vxor.u32 %v686, 2147483648
      %v695 = vxor.u32 %v687, 2147483648
      %v696 = vxor.u32 %v688, 2147483648
      %v697 = vxor.u32 %v689, 2147483648
      %v698 = vmul.f32 %v690, 1.442695
      %v699 = vpow.pop %v698
      %v700 = vmul.f32 %v691, 1.442695
      %v701 = vpow.pop %v700
      %v702 = vmul.f32 %v692, 1.442695
      %v703 = vpow.pop %v702
      %v704 = vmul.f32 %v693, 1.442695
      %v705 = vpow.pop %v704
      %v706 = vmul.f32 %v694, 1.442695
      %v707 = vpow.pop %v706
      %v708 = vmul.f32 %v695, 1.442695
      %v709 = vpow.pop %v708
      %v710 = vmul.f32 %v696, 1.442695
      %v711 = vpow.pop %v710
      %v712 = vmul.f32 %v697, 1.442695
      %v713 = vpow.pop %v712
      %v714 = vadd.f32 %v699, 1.0
      %v715 = vadd.f32 %v701, 1.0
      %v716 = vadd.f32 %v703, 1.0
      %v717 = vadd.f32 %v705, 1.0
      %v718 = vadd.f32 %v707, 1.0
      %v719 = vadd.f32 %v709, 1.0
      %v720 = vadd.f32 %v711, 1.0
      %v721 = vadd.f32 %v713, 1.0
      %v722 = vrcp.pop %v714
      %v723 = vmul.f32 %v714, %v722
      %v724 = vsub.f32 1.0, %v723
      %v725 = vmul.f32 %v722, %v724
      %v726 = vadd.f32 %v722, %v725
      %vm727 = vweird.f32 %v714
      %vm728 = vweird.f32 %v722
      %vm729 = vmor %vm727, %vm728
      %v730 = vsel %vm729, %v722, %v726
      %v731 = vand.u32 2147483647, %v714
      %vm732 = vcmp.eq.f32.partialorder %v731, 8.507059e+37
      %v733 = vand.u32 %v714, 2147483648
      %v734 = vor.u32 1.1754944e-38, %v733
      %v735 = vsel %vm732, %v734, %v730
      %v736 = vmul.f32 1.0, %v735
      %v737 = vrcp.pop %v715
      %v738 = vmul.f32 %v715, %v737
      %v739 = vsub.f32 1.0, %v738
      %v740 = vmul.f32 %v737, %v739
      %v741 = vadd.f32 %v737, %v740
      %vm742 = vweird.f32 %v715
      %vm743 = vweird.f32 %v737
      %vm744 = vmor %vm742, %vm743
      %v745 = vsel %vm744, %v737, %v741
      %v746 = vand.u32 2147483647, %v715
      %vm747 = vcmp.eq.f32.partialorder %v746, 8.507059e+37
      %v748 = vand.u32 %v715, 2147483648
      %v749 = vor.u32 1.1754944e-38, %v748
      %v750 = vsel %vm747, %v749, %v745
      %v751 = vmul.f32 1.0, %v750
      %v752 = vrcp.pop %v716
      %v753 = vmul.f32 %v716, %v752
      %v754 = vsub.f32 1.0, %v753
      %v755 = vmul.f32 %v752, %v754
      %v756 = vadd.f32 %v752, %v755
      %vm757 = vweird.f32 %v716
      %vm758 = vweird.f32 %v752
      %vm759 = vmor %vm757, %vm758
      %v760 = vsel %vm759, %v752, %v756
      %v761 = vand.u32 2147483647, %v716
      %vm762 = vcmp.eq.f32.partialorder %v761, 8.507059e+37
      %v763 = vand.u32 %v716, 2147483648
      %v764 = vor.u32 1.1754944e-38, %v763
      %v765 = vsel %vm762, %v764, %v760
      %v766 = vmul.f32 1.0, %v765
      %v767 = vrcp.pop %v717
      %v768 = vmul.f32 %v717, %v767
      %v769 = vsub.f32 1.0, %v768
      %v770 = vmul.f32 %v767, %v769
      %v771 = vadd.f32 %v767, %v770
      %vm772 = vweird.f32 %v717
      %vm773 = vweird.f32 %v767
      %vm774 = vmor %vm772, %vm773
      %v775 = vsel %vm774, %v767, %v771
      %v776 = vand.u32 2147483647, %v717
      %vm777 = vcmp.eq.f32.partialorder %v776, 8.507059e+37
      %v778 = vand.u32 %v717, 2147483648
      %v779 = vor.u32 1.1754944e-38, %v778
      %v780 = vsel %vm777, %v779, %v775
      %v781 = vmul.f32 1.0, %v780
      %v782 = vrcp.pop %v718
      %v783 = vmul.f32 %v718, %v782
      %v784 = vsub.f32 1.0, %v783
      %v785 = vmul.f32 %v782, %v784
      %v786 = vadd.f32 %v782, %v785
      %vm787 = vweird.f32 %v718
      %vm788 = vweird.f32 %v782
      %vm789 = vmor %vm787, %vm788
      %v790 = vsel %vm789, %v782, %v786
      %v791 = vand.u32 2147483647, %v718
      %vm792 = vcmp.eq.f32.partialorder %v791, 8.507059e+37
      %v793 = vand.u32 %v718, 2147483648
      %v794 = vor.u32 1.1754944e-38, %v793
      %v795 = vsel %vm792, %v794, %v790
      %v796 = vmul.f32 1.0, %v795
      %v797 = vrcp.pop %v719
      %v798 = vmul.f32 %v719, %v797
      %v799 = vsub.f32 1.0, %v798
      %v800 = vmul.f32 %v797, %v799
      %v801 = vadd.f32 %v797, %v800
      %vm802 = vweird.f32 %v719
      %vm803 = vweird.f32 %v797
      %vm804 = vmor %vm802, %vm803
      %v805 = vsel %vm804, %v797, %v801
      %v806 = vand.u32 2147483647, %v719
      %vm807 = vcmp.eq.f32.partialorder %v806, 8.507059e+37
      %v808 = vand.u32 %v719, 2147483648
      %v809 = vor.u32 1.1754944e-38, %v808
      %v810 = vsel %vm807, %v809, %v805
      %v811 = vmul.f32 1.0, %v810
      %v812 = vrcp.pop %v720
      %v813 = vmul.f32 %v720, %v812
      %v814 = vsub.f32 1.0, %v813
      %v815 = vmul.f32 %v812, %v814
      %v816 = vadd.f32 %v812, %v815
      %vm817 = vweird.f32 %v720
      %vm818 = vweird.f32 %v812
      %vm819 = vmor %vm817, %vm818
      %v820 = vsel %vm819, %v812, %v816
      %v821 = vand.u32 2147483647, %v720
      %vm822 = vcmp.eq.f32.partialorder %v821, 8.507059e+37
      %v823 = vand.u32 %v720, 2147483648
      %v824 = vor.u32 1.1754944e-38, %v823
      %v825 = vsel %vm822, %v824, %v820
      %v826 = vmul.f32 1.0, %v825
      %v827 = vrcp.pop %v721
      %v828 = vmul.f32 %v721, %v827
      %v829 = vsub.f32 1.0, %v828
      %v830 = vmul.f32 %v827, %v829
      %v831 = vadd.f32 %v827, %v830
      %vm832 = vweird.f32 %v721
      %vm833 = vweird.f32 %v827
      %vm834 = vmor %vm832, %vm833
      %v835 = vsel %vm834, %v827, %v831
      %v836 = vand.u32 2147483647, %v721
      %vm837 = vcmp.eq.f32.partialorder %v836, 8.507059e+37
      %v838 = vand.u32 %v721, 2147483648
      %v839 = vor.u32 1.1754944e-38, %v838
      %v840 = vsel %vm837, %v839, %v835
      %v841 = vmul.f32 1.0, %v840
      %v842 = vtanh.pop %v682
      %v843 = vtanh.pop %v683
      %v844 = vtanh.pop %v684
      %v845 = vtanh.pop %v685
      %v846 = vtanh.pop %v686
      %v847 = vtanh.pop %v687
      %v848 = vtanh.pop %v688
      %v849 = vtanh.pop %v689
      %v850 = vmul.f32 %v736, 0.0
      %v851 = vmul.f32 %v751, 0.0
      %v852 = vmul.f32 %v766, 0.0
      %v853 = vmul.f32 %v781, 0.0
      %v854 = vmul.f32 %v796, 0.0
      %v855 = vmul.f32 %v811, 0.0
      %v856 = vmul.f32 %v826, 0.0
      %v857 = vmul.f32 %v841, 0.0
      %866 = vrot.lane.b32.xlu0 %v842, 64
      %v867 = vpop.permute.xlu0 %866
      %868 = vrot.lane.b32.xlu0 %v843, 64
      %v869 = vpop.permute.xlu0 %868
      %870 = vrot.lane.b32.xlu0 %v844, 64
      %v871 = vpop.permute.xlu0 %870
      %872 = vrot.lane.b32.xlu0 %v845, 64
      %v873 = vpop.permute.xlu0 %872
      %874 = vrot.lane.b32.xlu0 %v846, 64
      %v875 = vpop.permute.xlu0 %874
      %876 = vrot.lane.b32.xlu0 %v847, 64
      %v877 = vpop.permute.xlu0 %876
      %878 = vrot.lane.b32.xlu0 %v848, 64
      %v879 = vpop.permute.xlu0 %878
      %880 = vrot.lane.b32.xlu0 %v849, 64
      %v881 = vpop.permute.xlu0 %880
      %v890 = vmul.f32 %v736, %v867
      %v891 = vmul.f32 %v751, %v869
      %v892 = vmul.f32 %v766, %v871
      %v893 = vmul.f32 %v781, %v873
      %v894 = vmul.f32 %v796, %v875
      %v895 = vmul.f32 %v811, %v877
      %v896 = vmul.f32 %v826, %v879
      %v897 = vmul.f32 %v841, %v881
      %906 = vrot.lane.b32.xlu0 %v890, 32
      %v907 = vpop.permute.xlu0 %906
      %908 = vrot.lane.b32.xlu0 %v891, 32
      %v909 = vpop.permute.xlu0 %908
      %910 = vrot.lane.b32.xlu0 %v892, 32
      %v911 = vpop.permute.xlu0 %910
      %912 = vrot.lane.b32.xlu0 %v893, 32
      %v913 = vpop.permute.xlu0 %912
      %914 = vrot.lane.b32.xlu0 %v894, 32
      %v915 = vpop.permute.xlu0 %914
      %916 = vrot.lane.b32.xlu0 %v895, 32
      %v917 = vpop.permute.xlu0 %916
      %918 = vrot.lane.b32.xlu0 %v896, 32
      %v919 = vpop.permute.xlu0 %918
      %920 = vrot.lane.b32.xlu0 %v897, 32
      %v921 = vpop.permute.xlu0 %920
      %v930 = vadd.f32 %v850, %v907
      %v931 = vadd.f32 %v851, %v909
      %v932 = vadd.f32 %v852, %v911
      %v933 = vadd.f32 %v853, %v913
      %v934 = vadd.f32 %v854, %v915
      %v935 = vadd.f32 %v855, %v917
      %v936 = vadd.f32 %v856, %v919
      %v937 = vadd.f32 %v857, %v921
      %v938 = vtanh.pop %v930
      %v939 = vtanh.pop %v931
      %v940 = vtanh.pop %v932
      %v941 = vtanh.pop %v933
      %v942 = vtanh.pop %v934
      %v943 = vtanh.pop %v935
      %v944 = vtanh.pop %v936
      %v945 = vtanh.pop %v937
      %954 = vrot.lane.b32.xlu0 %v938, 64
      %v955 = vpop.permute.xlu0 %954
      %956 = vrot.lane.b32.xlu0 %v939, 64
      %v957 = vpop.permute.xlu0 %956
      %958 = vrot.lane.b32.xlu0 %v940, 64
      %v959 = vpop.permute.xlu0 %958
      %960 = vrot.lane.b32.xlu0 %v941, 64
      %v961 = vpop.permute.xlu0 %960
      %962 = vrot.lane.b32.xlu0 %v942, 64
      %v963 = vpop.permute.xlu0 %962
      %964 = vrot.lane.b32.xlu0 %v943, 64
      %v965 = vpop.permute.xlu0 %964
      %966 = vrot.lane.b32.xlu0 %v944, 64
      %v967 = vpop.permute.xlu0 %966
      %968 = vrot.lane.b32.xlu0 %v945, 64
      %v969 = vpop.permute.xlu0 %968
      %v978 = vmul.f32 %v736, %v955
      %v979 = vmul.f32 %v751, %v957
      %v980 = vmul.f32 %v766, %v959
      %v981 = vmul.f32 %v781, %v961
      %v982 = vmul.f32 %v796, %v963
      %v983 = vmul.f32 %v811, %v965
      %v984 = vmul.f32 %v826, %v967
      %v985 = vmul.f32 %v841, %v969
      %vm986 = vcmp.gt.s32.totalorder %v462, 0
      %v987 = vsel %vm986, 1, 0
      %988 = vset.pattern.permute.xlu0 0
      %989 = vperm.xlu0 %988, %v987
      %v990 = vpop.permute.xlu0 %989
      %vm991 = vcmp.eq.s32.totalorder %v990, 1
      %v1000 = vrot.slane %v979, 7
      %vm1001 = vcmask 1041409
      %v1002 = vsel %vm1001, %v1000, %v978
      %v1003 = vrot.slane %v980, 6
      %vm1004 = vcmask 1042434
      %v1005 = vsel %vm1004, %v1003, %v1002
      %v1006 = vrot.slane %v981, 5
      %vm1007 = vcmask 1043459
      %v1008 = vsel %vm1007, %v1006, %v1005
      %v1009 = vrot.slane %v982, 4
      %vm1010 = vcmask 1044484
      %v1011 = vsel %vm1010, %v1009, %v1008
      %v1012 = vrot.slane %v983, 3
      %vm1013 = vcmask 1045509
      %v1014 = vsel %vm1013, %v1012, %v1011
      %v1015 = vrot.slane %v984, 2
      %vm1016 = vcmask 1046534
      %v1017 = vsel %vm1016, %v1015, %v1014
      %v1018 = vrot.slane %v985, 1
      %vm1019 = vcmask 1047559
      %v1020 = vsel %vm1019, %v1018, %v1017
      %1021 = vrot.lane.b32.xlu0 %v1020, 32
      %v1022 = vpop.permute.xlu0 %1021
      %v1024 = vsel %vm991, %v1022, 0.0
      %v1033 = vrot.slane %v931, 7
      %v1034 = vsel %vm1001, %v1033, %v930
      %v1035 = vrot.slane %v932, 6
      %v1036 = vsel %vm1004, %v1035, %v1034
      %v1037 = vrot.slane %v933, 5
      %v1038 = vsel %vm1007, %v1037, %v1036
      %v1039 = vrot.slane %v934, 4
      %v1040 = vsel %vm1010, %v1039, %v1038
      %v1041 = vrot.slane %v935, 3
      %v1042 = vsel %vm1013, %v1041, %v1040
      %v1043 = vrot.slane %v936, 2
      %v1044 = vsel %vm1016, %v1043, %v1042
      %v1045 = vrot.slane %v937, 1
      %v1046 = vsel %vm1019, %v1045, %v1044
      %1047 = vrot.lane.b32.xlu0 %v1046, 96
      %v1048 = vpop.permute.xlu0 %1047
      %v1050 = vsel %vm991, %v1048, 0.0
      %v1051 = vld [vmem:[%s6] sm:$0xf]
      %v1052 = vld [vmem:[%s6 + $0x4] sm:$0xf]
      %v1053 = vld [vmem:[%s6 + $0x8] sm:$0xf]
      %v1054 = vld [vmem:[%s6 + $0xc] sm:$0xf]
      %v1059 = vunpack.c.l.b16 %v1051
      %v1060 = vunpack.c.l.b16 %v1052
      %v1061 = vunpack.c.l.b16 %v1053
      %v1062 = vunpack.c.l.b16 %v1054
      %v1063 = vpack.c.b16 %v1060, %v1059
      %v1064 = vpack.c.b16 %v1062, %v1061
      %1067 = vmatpush.bf16.msra.mxu0 0
      %1068 = vmatpush.bf16.msra.mxu0 0
      %1069 = vmatpush.bf16.msra.mxu0 0
      %1070 = vmatpush.bf16.msra.mxu0 0
      %1071 = vmatpush.bf16.msra.mxu0 0
      %1072 = vmatpush.bf16.msra.mxu0 0
      %1073 = vmatpush.bf16.msra.mxu0 %v1064
      %1074 = vmatpush.bf16.msra.mxu0 %v1063
      %1075 = vmatmul.bf16.gmra.mxu0 %v643
      %v1076 = vpop.f32.mrf.mxu0
      %v1077 = vadd.f32 0.0, %v1076
      %v1078 = vpop.f32.mrf.mxu0
      %1079 = vdwg.mxu0
      %v1080 = vunpack.c.l.bf16 %v618
      %v1081 = vunpack.c.l.bf16 %v619
      %v1082 = vunpack.c.l.bf16 %v620
      %v1083 = vunpack.c.l.bf16 %v621
      %v1084 = vunpack.c.l.bf16 %v622
      %v1085 = vunpack.c.l.bf16 %v623
      %v1086 = vunpack.c.l.bf16 %v624
      %v1087 = vunpack.c.l.bf16 %v625
      %v1089 = vrot.slane %v1077, 1
      %v1090 = vrot.slane %v1077, 2
      %v1091 = vrot.slane %v1077, 3
      %v1092 = vrot.slane %v1077, 4
      %v1093 = vrot.slane %v1077, 5
      %v1094 = vrot.slane %v1077, 6
      %v1095 = vrot.slane %v1077, 7
      %v1104 = vadd.f32 %v1080, %v1089
      %v1105 = vadd.f32 %v1081, %v1090
      %v1106 = vadd.f32 %v1082, %v1091
      %v1107 = vadd.f32 %v1083, %v1092
      %v1108 = vadd.f32 %v1084, %v1093
      %v1109 = vadd.f32 %v1085, %v1094
      %v1110 = vadd.f32 %v1086, %v1095
      %v1111 = vadd.f32 %v1087, %v1077
      %v1112 = vxor.u32 %v1104, 2147483648
      %v1113 = vxor.u32 %v1105, 2147483648
      %v1114 = vxor.u32 %v1106, 2147483648
      %v1115 = vxor.u32 %v1107, 2147483648
      %v1116 = vxor.u32 %v1108, 2147483648
      %v1117 = vxor.u32 %v1109, 2147483648
      %v1118 = vxor.u32 %v1110, 2147483648
      %v1119 = vxor.u32 %v1111, 2147483648
      %v1120 = vmul.f32 %v1112, 1.442695
      %v1121 = vpow.pop %v1120
      %v1122 = vmul.f32 %v1113, 1.442695
      %v1123 = vpow.pop %v1122
      %v1124 = vmul.f32 %v1114, 1.442695
      %v1125 = vpow.pop %v1124
      %v1126 = vmul.f32 %v1115, 1.442695
      %v1127 = vpow.pop %v1126
      %v1128 = vmul.f32 %v1116, 1.442695
      %v1129 = vpow.pop %v1128
      %v1130 = vmul.f32 %v1117, 1.442695
      %v1131 = vpow.pop %v1130
      %v1132 = vmul.f32 %v1118, 1.442695
      %v1133 = vpow.pop %v1132
      %v1134 = vmul.f32 %v1119, 1.442695
      %v1135 = vpow.pop %v1134
      %v1136 = vadd.f32 %v1121, 1.0
      %v1137 = vadd.f32 %v1123, 1.0
      %v1138 = vadd.f32 %v1125, 1.0
      %v1139 = vadd.f32 %v1127, 1.0
      %v1140 = vadd.f32 %v1129, 1.0
      %v1141 = vadd.f32 %v1131, 1.0
      %v1142 = vadd.f32 %v1133, 1.0
      %v1143 = vadd.f32 %v1135, 1.0
      %v1144 = vrcp.pop %v1136
      %v1145 = vmul.f32 %v1136, %v1144
      %v1146 = vsub.f32 1.0, %v1145
      %v1147 = vmul.f32 %v1144, %v1146
      %v1148 = vadd.f32 %v1144, %v1147
      %vm1149 = vweird.f32 %v1136
      %vm1150 = vweird.f32 %v1144
      %vm1151 = vmor %vm1149, %vm1150
      %v1152 = vsel %vm1151, %v1144, %v1148
      %v1153 = vand.u32 2147483647, %v1136
      %vm1154 = vcmp.eq.f32.partialorder %v1153, 8.507059e+37
      %v1155 = vand.u32 %v1136, 2147483648
      %v1156 = vor.u32 1.1754944e-38, %v1155
      %v1157 = vsel %vm1154, %v1156, %v1152
      %v1158 = vmul.f32 1.0, %v1157
      %v1159 = vrcp.pop %v1137
      %v1160 = vmul.f32 %v1137, %v1159
      %v1161 = vsub.f32 1.0, %v1160
      %v1162 = vmul.f32 %v1159, %v1161
      %v1163 = vadd.f32 %v1159, %v1162
      %vm1164 = vweird.f32 %v1137
      %vm1165 = vweird.f32 %v1159
      %vm1166 = vmor %vm1164, %vm1165
      %v1167 = vsel %vm1166, %v1159, %v1163
      %v1168 = vand.u32 2147483647, %v1137
      %vm1169 = vcmp.eq.f32.partialorder %v1168, 8.507059e+37
      %v1170 = vand.u32 %v1137, 2147483648
      %v1171 = vor.u32 1.1754944e-38, %v1170
      %v1172 = vsel %vm1169, %v1171, %v1167
      %v1173 = vmul.f32 1.0, %v1172
      %v1174 = vrcp.pop %v1138
      %v1175 = vmul.f32 %v1138, %v1174
      %v1176 = vsub.f32 1.0, %v1175
      %v1177 = vmul.f32 %v1174, %v1176
      %v1178 = vadd.f32 %v1174, %v1177
      %vm1179 = vweird.f32 %v1138
      %vm1180 = vweird.f32 %v1174
      %vm1181 = vmor %vm1179, %vm1180
      %v1182 = vsel %vm1181, %v1174, %v1178
      %v1183 = vand.u32 2147483647, %v1138
      %vm1184 = vcmp.eq.f32.partialorder %v1183, 8.507059e+37
      %v1185 = vand.u32 %v1138, 2147483648
      %v1186 = vor.u32 1.1754944e-38, %v1185
      %v1187 = vsel %vm1184, %v1186, %v1182
      %v1188 = vmul.f32 1.0, %v1187
      %v1189 = vrcp.pop %v1139
      %v1190 = vmul.f32 %v1139, %v1189
      %v1191 = vsub.f32 1.0, %v1190
      %v1192 = vmul.f32 %v1189, %v1191
      %v1193 = vadd.f32 %v1189, %v1192
      %vm1194 = vweird.f32 %v1139
      %vm1195 = vweird.f32 %v1189
      %vm1196 = vmor %vm1194, %vm1195
      %v1197 = vsel %vm1196, %v1189, %v1193
      %v1198 = vand.u32 2147483647, %v1139
      %vm1199 = vcmp.eq.f32.partialorder %v1198, 8.507059e+37
      %v1200 = vand.u32 %v1139, 2147483648
      %v1201 = vor.u32 1.1754944e-38, %v1200
      %v1202 = vsel %vm1199, %v1201, %v1197
      %v1203 = vmul.f32 1.0, %v1202
      %v1204 = vrcp.pop %v1140
      %v1205 = vmul.f32 %v1140, %v1204
      %v1206 = vsub.f32 1.0, %v1205
      %v1207 = vmul.f32 %v1204, %v1206
      %v1208 = vadd.f32 %v1204, %v1207
      %vm1209 = vweird.f32 %v1140
      %vm1210 = vweird.f32 %v1204
      %vm1211 = vmor %vm1209, %vm1210
      %v1212 = vsel %vm1211, %v1204, %v1208
      %v1213 = vand.u32 2147483647, %v1140
      %vm1214 = vcmp.eq.f32.partialorder %v1213, 8.507059e+37
      %v1215 = vand.u32 %v1140, 2147483648
      %v1216 = vor.u32 1.1754944e-38, %v1215
      %v1217 = vsel %vm1214, %v1216, %v1212
      %v1218 = vmul.f32 1.0, %v1217
      %v1219 = vrcp.pop %v1141
      %v1220 = vmul.f32 %v1141, %v1219
      %v1221 = vsub.f32 1.0, %v1220
      %v1222 = vmul.f32 %v1219, %v1221
      %v1223 = vadd.f32 %v1219, %v1222
      %vm1224 = vweird.f32 %v1141
      %vm1225 = vweird.f32 %v1219
      %vm1226 = vmor %vm1224, %vm1225
      %v1227 = vsel %vm1226, %v1219, %v1223
      %v1228 = vand.u32 2147483647, %v1141
      %vm1229 = vcmp.eq.f32.partialorder %v1228, 8.507059e+37
      %v1230 = vand.u32 %v1141, 2147483648
      %v1231 = vor.u32 1.1754944e-38, %v1230
      %v1232 = vsel %vm1229, %v1231, %v1227
      %v1233 = vmul.f32 1.0, %v1232
      %v1234 = vrcp.pop %v1142
      %v1235 = vmul.f32 %v1142, %v1234
      %v1236 = vsub.f32 1.0, %v1235
      %v1237 = vmul.f32 %v1234, %v1236
      %v1238 = vadd.f32 %v1234, %v1237
      %vm1239 = vweird.f32 %v1142
      %vm1240 = vweird.f32 %v1234
      %vm1241 = vmor %vm1239, %vm1240
      %v1242 = vsel %vm1241, %v1234, %v1238
      %v1243 = vand.u32 2147483647, %v1142
      %vm1244 = vcmp.eq.f32.partialorder %v1243, 8.507059e+37
      %v1245 = vand.u32 %v1142, 2147483648
      %v1246 = vor.u32 1.1754944e-38, %v1245
      %v1247 = vsel %vm1244, %v1246, %v1242
      %v1248 = vmul.f32 1.0, %v1247
      %v1249 = vrcp.pop %v1143
      %v1250 = vmul.f32 %v1143, %v1249
      %v1251 = vsub.f32 1.0, %v1250
      %v1252 = vmul.f32 %v1249, %v1251
      %v1253 = vadd.f32 %v1249, %v1252
      %vm1254 = vweird.f32 %v1143
      %vm1255 = vweird.f32 %v1249
      %vm1256 = vmor %vm1254, %vm1255
      %v1257 = vsel %vm1256, %v1249, %v1253
      %v1258 = vand.u32 2147483647, %v1143
      %vm1259 = vcmp.eq.f32.partialorder %v1258, 8.507059e+37
      %v1260 = vand.u32 %v1143, 2147483648
      %v1261 = vor.u32 1.1754944e-38, %v1260
      %v1262 = vsel %vm1259, %v1261, %v1257
      %v1263 = vmul.f32 1.0, %v1262
      %v1264 = vtanh.pop %v1104
      %v1265 = vtanh.pop %v1105
      %v1266 = vtanh.pop %v1106
      %v1267 = vtanh.pop %v1107
      %v1268 = vtanh.pop %v1108
      %v1269 = vtanh.pop %v1109
      %v1270 = vtanh.pop %v1110
      %v1271 = vtanh.pop %v1111
      %v1272 = vmul.f32 %v1158, 0.0
      %v1273 = vmul.f32 %v1173, 0.0
      %v1274 = vmul.f32 %v1188, 0.0
      %v1275 = vmul.f32 %v1203, 0.0
      %v1276 = vmul.f32 %v1218, 0.0
      %v1277 = vmul.f32 %v1233, 0.0
      %v1278 = vmul.f32 %v1248, 0.0
      %v1279 = vmul.f32 %v1263, 0.0
      %1288 = vrot.lane.b32.xlu0 %v1264, 64
      %v1289 = vpop.permute.xlu0 %1288
      %1290 = vrot.lane.b32.xlu0 %v1265, 64
      %v1291 = vpop.permute.xlu0 %1290
      %1292 = vrot.lane.b32.xlu0 %v1266, 64
      %v1293 = vpop.permute.xlu0 %1292
      %1294 = vrot.lane.b32.xlu0 %v1267, 64
      %v1295 = vpop.permute.xlu0 %1294
      %1296 = vrot.lane.b32.xlu0 %v1268, 64
      %v1297 = vpop.permute.xlu0 %1296
      %1298 = vrot.lane.b32.xlu0 %v1269, 64
      %v1299 = vpop.permute.xlu0 %1298
      %1300 = vrot.lane.b32.xlu0 %v1270, 64
      %v1301 = vpop.permute.xlu0 %1300
      %1302 = vrot.lane.b32.xlu0 %v1271, 64
      %v1303 = vpop.permute.xlu0 %1302
      %v1312 = vmul.f32 %v1158, %v1289
      %v1313 = vmul.f32 %v1173, %v1291
      %v1314 = vmul.f32 %v1188, %v1293
      %v1315 = vmul.f32 %v1203, %v1295
      %v1316 = vmul.f32 %v1218, %v1297
      %v1317 = vmul.f32 %v1233, %v1299
      %v1318 = vmul.f32 %v1248, %v1301
      %v1319 = vmul.f32 %v1263, %v1303
      %1328 = vrot.lane.b32.xlu0 %v1312, 32
      %v1329 = vpop.permute.xlu0 %1328
      %1330 = vrot.lane.b32.xlu0 %v1313, 32
      %v1331 = vpop.permute.xlu0 %1330
      %1332 = vrot.lane.b32.xlu0 %v1314, 32
      %v1333 = vpop.permute.xlu0 %1332
      %1334 = vrot.lane.b32.xlu0 %v1315, 32
      %v1335 = vpop.permute.xlu0 %1334
      %1336 = vrot.lane.b32.xlu0 %v1316, 32
      %v1337 = vpop.permute.xlu0 %1336
      %1338 = vrot.lane.b32.xlu0 %v1317, 32
      %v1339 = vpop.permute.xlu0 %1338
      %1340 = vrot.lane.b32.xlu0 %v1318, 32
      %v1341 = vpop.permute.xlu0 %1340
      %1342 = vrot.lane.b32.xlu0 %v1319, 32
      %v1343 = vpop.permute.xlu0 %1342
      %v1352 = vadd.f32 %v1272, %v1329
      %v1353 = vadd.f32 %v1273, %v1331
      %v1354 = vadd.f32 %v1274, %v1333
      %v1355 = vadd.f32 %v1275, %v1335
      %v1356 = vadd.f32 %v1276, %v1337
      %v1357 = vadd.f32 %v1277, %v1339
      %v1358 = vadd.f32 %v1278, %v1341
      %v1359 = vadd.f32 %v1279, %v1343
      %v1360 = vtanh.pop %v1352
      %v1361 = vtanh.pop %v1353
      %v1362 = vtanh.pop %v1354
      %v1363 = vtanh.pop %v1355
      %v1364 = vtanh.pop %v1356
      %v1365 = vtanh.pop %v1357
      %v1366 = vtanh.pop %v1358
      %v1367 = vtanh.pop %v1359
      %1376 = vrot.lane.b32.xlu0 %v1360, 64
      %v1377 = vpop.permute.xlu0 %1376
      %1378 = vrot.lane.b32.xlu0 %v1361, 64
      %v1379 = vpop.permute.xlu0 %1378
      %1380 = vrot.lane.b32.xlu0 %v1362, 64
      %v1381 = vpop.permute.xlu0 %1380
      %1382 = vrot.lane.b32.xlu0 %v1363, 64
      %v1383 = vpop.permute.xlu0 %1382
      %1384 = vrot.lane.b32.xlu0 %v1364, 64
      %v1385 = vpop.permute.xlu0 %1384
      %1386 = vrot.lane.b32.xlu0 %v1365, 64
      %v1387 = vpop.permute.xlu0 %1386
      %1388 = vrot.lane.b32.xlu0 %v1366, 64
      %v1389 = vpop.permute.xlu0 %1388
      %1390 = vrot.lane.b32.xlu0 %v1367, 64
      %v1391 = vpop.permute.xlu0 %1390
      %v1400 = vmul.f32 %v1158, %v1377
      %v1401 = vmul.f32 %v1173, %v1379
      %v1402 = vmul.f32 %v1188, %v1381
      %v1403 = vmul.f32 %v1203, %v1383
      %v1404 = vmul.f32 %v1218, %v1385
      %v1405 = vmul.f32 %v1233, %v1387
      %v1406 = vmul.f32 %v1248, %v1389
      %v1407 = vmul.f32 %v1263, %v1391
      %vm1408 = vcmp.gt.s32.totalorder %v462, 7
      %v1409 = vsel %vm1408, 1, 0
      %1410 = vset.pattern.permute.xlu0 0
      %1411 = vperm.xlu0 %1410, %v1409
      %v1412 = vpop.permute.xlu0 %1411
      %vm1413 = vcmp.eq.s32.totalorder %v1412, 1
      %v1422 = vrot.slane %v1400, 7
      %v1423 = vrot.slane %v1401, 6
      %v1424 = vsel %vm1001, %v1423, %v1422
      %v1425 = vrot.slane %v1402, 5
      %v1426 = vsel %vm1004, %v1425, %v1424
      %v1427 = vrot.slane %v1403, 4
      %v1428 = vsel %vm1007, %v1427, %v1426
      %v1429 = vrot.slane %v1404, 3
      %v1430 = vsel %vm1010, %v1429, %v1428
      %v1431 = vrot.slane %v1405, 2
      %v1432 = vsel %vm1013, %v1431, %v1430
      %v1433 = vrot.slane %v1406, 1
      %v1434 = vsel %vm1016, %v1433, %v1432
      %v1435 = vsel %vm1019, %v1407, %v1434
      %1436 = vrot.lane.b32.xlu0 %v1435, 32
      %v1437 = vpop.permute.xlu0 %1436
      %v1439 = vsel %vm1413, %v1437, 0.0
      %v1448 = vrot.slane %v1352, 7
      %v1449 = vrot.slane %v1353, 6
      %v1450 = vsel %vm1001, %v1449, %v1448
      %v1451 = vrot.slane %v1354, 5
      %v1452 = vsel %vm1004, %v1451, %v1450
      %v1453 = vrot.slane %v1355, 4
      %v1454 = vsel %vm1007, %v1453, %v1452
      %v1455 = vrot.slane %v1356, 3
      %v1456 = vsel %vm1010, %v1455, %v1454
      %v1457 = vrot.slane %v1357, 2
      %v1458 = vsel %vm1013, %v1457, %v1456
      %v1459 = vrot.slane %v1358, 1
      %v1460 = vsel %vm1016, %v1459, %v1458
      %v1461 = vsel %vm1019, %v1359, %v1460
      %1462 = vrot.lane.b32.xlu0 %v1461, 96
      %v1463 = vpop.permute.xlu0 %1462
      %v1465 = vsel %vm1413, %v1463, 0.0
      %v1466 = vpack.c.bf16 %v1024, %v1024
      %v1468 = vsel %vm519, %v1466, 0
      %1470 = vmatpush.bf16.msra.mxu0 0
      %1471 = vmatpush.bf16.msra.mxu0 0
      %1472 = vmatpush.bf16.msra.mxu0 0
      %1473 = vmatpush.bf16.msra.mxu0 0
      %1474 = vmatpush.bf16.msra.mxu0 0
      %1475 = vmatpush.bf16.msra.mxu0 0
      %1476 = vmatpush.bf16.msra.mxu0 %v639
      %1477 = vmatpush.bf16.msra.mxu0 %v638
      %1478 = vmatmul.bf16.gmra.mxu0 %v1468
      %v1479 = vpop.f32.mrf.mxu0
      %v1480 = vadd.f32 0.0, %v1479
      %v1481 = vpop.f32.mrf.mxu0
      %1482 = vdwg.mxu0
      %v1484 = vrot.slane %v1480, 7
      %v1485 = vrot.slane %v1480, 1
      %v1486 = vrot.slane %v1480, 2
      %v1487 = vrot.slane %v1480, 3
      %v1488 = vrot.slane %v1480, 4
      %v1489 = vrot.slane %v1480, 5
      %v1490 = vrot.slane %v1480, 6
      %v1499 = vadd.f32 %v658, %v1484
      %v1500 = vadd.f32 %v659, %v1480
      %v1501 = vadd.f32 %v660, %v1485
      %v1502 = vadd.f32 %v661, %v1486
      %v1503 = vadd.f32 %v662, %v1487
      %v1504 = vadd.f32 %v663, %v1488
      %v1505 = vadd.f32 %v664, %v1489
      %v1506 = vadd.f32 %v665, %v1490
      %v1507 = vxor.u32 %v1499, 2147483648
      %v1508 = vxor.u32 %v1500, 2147483648
      %v1509 = vxor.u32 %v1501, 2147483648
      %v1510 = vxor.u32 %v1502, 2147483648
      %v1511 = vxor.u32 %v1503, 2147483648
      %v1512 = vxor.u32 %v1504, 2147483648
      %v1513 = vxor.u32 %v1505, 2147483648
      %v1514 = vxor.u32 %v1506, 2147483648
      %v1515 = vmul.f32 %v1507, 1.442695
      %v1516 = vpow.pop %v1515
      %v1517 = vmul.f32 %v1508, 1.442695
      %v1518 = vpow.pop %v1517
      %v1519 = vmul.f32 %v1509, 1.442695
      %v1520 = vpow.pop %v1519
      %v1521 = vmul.f32 %v1510, 1.442695
      %v1522 = vpow.pop %v1521
      %v1523 = vmul.f32 %v1511, 1.442695
      %v1524 = vpow.pop %v1523
      %v1525 = vmul.f32 %v1512, 1.442695
      %v1526 = vpow.pop %v1525
      %v1527 = vmul.f32 %v1513, 1.442695
      %v1528 = vpow.pop %v1527
      %v1529 = vmul.f32 %v1514, 1.442695
      %v1530 = vpow.pop %v1529
      %v1531 = vadd.f32 %v1516, 1.0
      %v1532 = vadd.f32 %v1518, 1.0
      %v1533 = vadd.f32 %v1520, 1.0
      %v1534 = vadd.f32 %v1522, 1.0
      %v1535 = vadd.f32 %v1524, 1.0
      %v1536 = vadd.f32 %v1526, 1.0
      %v1537 = vadd.f32 %v1528, 1.0
      %v1538 = vadd.f32 %v1530, 1.0
      %v1539 = vrcp.pop %v1531
      %v1540 = vmul.f32 %v1531, %v1539
      %v1541 = vsub.f32 1.0, %v1540
      %v1542 = vmul.f32 %v1539, %v1541
      %v1543 = vadd.f32 %v1539, %v1542
      %vm1544 = vweird.f32 %v1531
      %vm1545 = vweird.f32 %v1539
      %vm1546 = vmor %vm1544, %vm1545
      %v1547 = vsel %vm1546, %v1539, %v1543
      %v1548 = vand.u32 2147483647, %v1531
      %vm1549 = vcmp.eq.f32.partialorder %v1548, 8.507059e+37
      %v1550 = vand.u32 %v1531, 2147483648
      %v1551 = vor.u32 1.1754944e-38, %v1550
      %v1552 = vsel %vm1549, %v1551, %v1547
      %v1553 = vmul.f32 1.0, %v1552
      %v1554 = vrcp.pop %v1532
      %v1555 = vmul.f32 %v1532, %v1554
      %v1556 = vsub.f32 1.0, %v1555
      %v1557 = vmul.f32 %v1554, %v1556
      %v1558 = vadd.f32 %v1554, %v1557
      %vm1559 = vweird.f32 %v1532
      %vm1560 = vweird.f32 %v1554
      %vm1561 = vmor %vm1559, %vm1560
      %v1562 = vsel %vm1561, %v1554, %v1558
      %v1563 = vand.u32 2147483647, %v1532
      %vm1564 = vcmp.eq.f32.partialorder %v1563, 8.507059e+37
      %v1565 = vand.u32 %v1532, 2147483648
      %v1566 = vor.u32 1.1754944e-38, %v1565
      %v1567 = vsel %vm1564, %v1566, %v1562
      %v1568 = vmul.f32 1.0, %v1567
      %v1569 = vrcp.pop %v1533
      %v1570 = vmul.f32 %v1533, %v1569
      %v1571 = vsub.f32 1.0, %v1570
      %v1572 = vmul.f32 %v1569, %v1571
      %v1573 = vadd.f32 %v1569, %v1572
      %vm1574 = vweird.f32 %v1533
      %vm1575 = vweird.f32 %v1569
      %vm1576 = vmor %vm1574, %vm1575
      %v1577 = vsel %vm1576, %v1569, %v1573
      %v1578 = vand.u32 2147483647, %v1533
      %vm1579 = vcmp.eq.f32.partialorder %v1578, 8.507059e+37
      %v1580 = vand.u32 %v1533, 2147483648
      %v1581 = vor.u32 1.1754944e-38, %v1580
      %v1582 = vsel %vm1579, %v1581, %v1577
      %v1583 = vmul.f32 1.0, %v1582
      %v1584 = vrcp.pop %v1534
      %v1585 = vmul.f32 %v1534, %v1584
      %v1586 = vsub.f32 1.0, %v1585
      %v1587 = vmul.f32 %v1584, %v1586
      %v1588 = vadd.f32 %v1584, %v1587
      %vm1589 = vweird.f32 %v1534
      %vm1590 = vweird.f32 %v1584
      %vm1591 = vmor %vm1589, %vm1590
      %v1592 = vsel %vm1591, %v1584, %v1588
      %v1593 = vand.u32 2147483647, %v1534
      %vm1594 = vcmp.eq.f32.partialorder %v1593, 8.507059e+37
      %v1595 = vand.u32 %v1534, 2147483648
      %v1596 = vor.u32 1.1754944e-38, %v1595
      %v1597 = vsel %vm1594, %v1596, %v1592
      %v1598 = vmul.f32 1.0, %v1597
      %v1599 = vrcp.pop %v1535
      %v1600 = vmul.f32 %v1535, %v1599
      %v1601 = vsub.f32 1.0, %v1600
      %v1602 = vmul.f32 %v1599, %v1601
      %v1603 = vadd.f32 %v1599, %v1602
      %vm1604 = vweird.f32 %v1535
      %vm1605 = vweird.f32 %v1599
      %vm1606 = vmor %vm1604, %vm1605
      %v1607 = vsel %vm1606, %v1599, %v1603
      %v1608 = vand.u32 2147483647, %v1535
      %vm1609 = vcmp.eq.f32.partialorder %v1608, 8.507059e+37
      %v1610 = vand.u32 %v1535, 2147483648
      %v1611 = vor.u32 1.1754944e-38, %v1610
      %v1612 = vsel %vm1609, %v1611, %v1607
      %v1613 = vmul.f32 1.0, %v1612
      %v1614 = vrcp.pop %v1536
      %v1615 = vmul.f32 %v1536, %v1614
      %v1616 = vsub.f32 1.0, %v1615
      %v1617 = vmul.f32 %v1614, %v1616
      %v1618 = vadd.f32 %v1614, %v1617
      %vm1619 = vweird.f32 %v1536
      %vm1620 = vweird.f32 %v1614
      %vm1621 = vmor %vm1619, %vm1620
      %v1622 = vsel %vm1621, %v1614, %v1618
      %v1623 = vand.u32 2147483647, %v1536
      %vm1624 = vcmp.eq.f32.partialorder %v1623, 8.507059e+37
      %v1625 = vand.u32 %v1536, 2147483648
      %v1626 = vor.u32 1.1754944e-38, %v1625
      %v1627 = vsel %vm1624, %v1626, %v1622
      %v1628 = vmul.f32 1.0, %v1627
      %v1629 = vrcp.pop %v1537
      %v1630 = vmul.f32 %v1537, %v1629
      %v1631 = vsub.f32 1.0, %v1630
      %v1632 = vmul.f32 %v1629, %v1631
      %v1633 = vadd.f32 %v1629, %v1632
      %vm1634 = vweird.f32 %v1537
      %vm1635 = vweird.f32 %v1629
      %vm1636 = vmor %vm1634, %vm1635
      %v1637 = vsel %vm1636, %v1629, %v1633
      %v1638 = vand.u32 2147483647, %v1537
      %vm1639 = vcmp.eq.f32.partialorder %v1638, 8.507059e+37
      %v1640 = vand.u32 %v1537, 2147483648
      %v1641 = vor.u32 1.1754944e-38, %v1640
      %v1642 = vsel %vm1639, %v1641, %v1637
      %v1643 = vmul.f32 1.0, %v1642
      %v1644 = vrcp.pop %v1538
      %v1645 = vmul.f32 %v1538, %v1644
      %v1646 = vsub.f32 1.0, %v1645
      %v1647 = vmul.f32 %v1644, %v1646
      %v1648 = vadd.f32 %v1644, %v1647
      %vm1649 = vweird.f32 %v1538
      %vm1650 = vweird.f32 %v1644
      %vm1651 = vmor %vm1649, %vm1650
      %v1652 = vsel %vm1651, %v1644, %v1648
      %v1653 = vand.u32 2147483647, %v1538
      %vm1654 = vcmp.eq.f32.partialorder %v1653, 8.507059e+37
      %v1655 = vand.u32 %v1538, 2147483648
      %v1656 = vor.u32 1.1754944e-38, %v1655
      %v1657 = vsel %vm1654, %v1656, %v1652
      %v1658 = vmul.f32 1.0, %v1657
      %v1659 = vtanh.pop %v1499
      %v1660 = vtanh.pop %v1500
      %v1661 = vtanh.pop %v1501
      %v1662 = vtanh.pop %v1502
      %v1663 = vtanh.pop %v1503
      %v1664 = vtanh.pop %v1504
      %v1665 = vtanh.pop %v1505
      %v1666 = vtanh.pop %v1506
      %v1668 = vrot.slane %v1050, 7
      %v1669 = vrot.slane %v1050, 1
      %v1670 = vrot.slane %v1050, 2
      %v1671 = vrot.slane %v1050, 3
      %v1672 = vrot.slane %v1050, 4
      %v1673 = vrot.slane %v1050, 5
      %v1674 = vrot.slane %v1050, 6
      %1675 = vrot.lane.b32.xlu0 %v1668, 32
      %v1676 = vpop.permute.xlu0 %1675
      %1677 = vrot.lane.b32.xlu0 %v1050, 32
      %v1678 = vpop.permute.xlu0 %1677
      %1679 = vrot.lane.b32.xlu0 %v1669, 32
      %v1680 = vpop.permute.xlu0 %1679
      %1681 = vrot.lane.b32.xlu0 %v1670, 32
      %v1682 = vpop.permute.xlu0 %1681
      %1683 = vrot.lane.b32.xlu0 %v1671, 32
      %v1684 = vpop.permute.xlu0 %1683
      %1685 = vrot.lane.b32.xlu0 %v1672, 32
      %v1686 = vpop.permute.xlu0 %1685
      %1687 = vrot.lane.b32.xlu0 %v1673, 32
      %v1688 = vpop.permute.xlu0 %1687
      %1689 = vrot.lane.b32.xlu0 %v1674, 32
      %v1690 = vpop.permute.xlu0 %1689
      %v1699 = vmul.f32 %v1553, %v1676
      %v1700 = vmul.f32 %v1568, %v1678
      %v1701 = vmul.f32 %v1583, %v1680
      %v1702 = vmul.f32 %v1598, %v1682
      %v1703 = vmul.f32 %v1613, %v1684
      %v1704 = vmul.f32 %v1628, %v1686
      %v1705 = vmul.f32 %v1643, %v1688
      %v1706 = vmul.f32 %v1658, %v1690
      %1715 = vrot.lane.b32.xlu0 %v1659, 64
      %v1716 = vpop.permute.xlu0 %1715
      %1717 = vrot.lane.b32.xlu0 %v1660, 64
      %v1718 = vpop.permute.xlu0 %1717
      %1719 = vrot.lane.b32.xlu0 %v1661, 64
      %v1720 = vpop.permute.xlu0 %1719
      %1721 = vrot.lane.b32.xlu0 %v1662, 64
      %v1722 = vpop.permute.xlu0 %1721
      %1723 = vrot.lane.b32.xlu0 %v1663, 64
      %v1724 = vpop.permute.xlu0 %1723
      %1725 = vrot.lane.b32.xlu0 %v1664, 64
      %v1726 = vpop.permute.xlu0 %1725
      %1727 = vrot.lane.b32.xlu0 %v1665, 64
      %v1728 = vpop.permute.xlu0 %1727
      %1729 = vrot.lane.b32.xlu0 %v1666, 64
      %v1730 = vpop.permute.xlu0 %1729
      %v1739 = vmul.f32 %v1553, %v1716
      %v1740 = vmul.f32 %v1568, %v1718
      %v1741 = vmul.f32 %v1583, %v1720
      %v1742 = vmul.f32 %v1598, %v1722
      %v1743 = vmul.f32 %v1613, %v1724
      %v1744 = vmul.f32 %v1628, %v1726
      %v1745 = vmul.f32 %v1643, %v1728
      %v1746 = vmul.f32 %v1658, %v1730
      %1755 = vrot.lane.b32.xlu0 %v1739, 32
      %v1756 = vpop.permute.xlu0 %1755
      %1757 = vrot.lane.b32.xlu0 %v1740, 32
      %v1758 = vpop.permute.xlu0 %1757
      %1759 = vrot.lane.b32.xlu0 %v1741, 32
      %v1760 = vpop.permute.xlu0 %1759
      %1761 = vrot.lane.b32.xlu0 %v1742, 32
      %v1762 = vpop.permute.xlu0 %1761
      %1763 = vrot.lane.b32.xlu0 %v1743, 32
      %v1764 = vpop.permute.xlu0 %1763
      %1765 = vrot.lane.b32.xlu0 %v1744, 32
      %v1766 = vpop.permute.xlu0 %1765
      %1767 = vrot.lane.b32.xlu0 %v1745, 32
      %v1768 = vpop.permute.xlu0 %1767
      %1769 = vrot.lane.b32.xlu0 %v1746, 32
      %v1770 = vpop.permute.xlu0 %1769
      %v1779 = vadd.f32 %v1699, %v1756
      %v1780 = vadd.f32 %v1700, %v1758
      %v1781 = vadd.f32 %v1701, %v1760
      %v1782 = vadd.f32 %v1702, %v1762
      %v1783 = vadd.f32 %v1703, %v1764
      %v1784 = vadd.f32 %v1704, %v1766
      %v1785 = vadd.f32 %v1705, %v1768
      %v1786 = vadd.f32 %v1706, %v1770
      %v1787 = vtanh.pop %v1779
      %v1788 = vtanh.pop %v1780
      %v1789 = vtanh.pop %v1781
      %v1790 = vtanh.pop %v1782
      %v1791 = vtanh.pop %v1783
      %v1792 = vtanh.pop %v1784
      %v1793 = vtanh.pop %v1785
      %v1794 = vtanh.pop %v1786
      %1803 = vrot.lane.b32.xlu0 %v1787, 64
      %v1804 = vpop.permute.xlu0 %1803
      %1805 = vrot.lane.b32.xlu0 %v1788, 64
      %v1806 = vpop.permute.xlu0 %1805
      %1807 = vrot.lane.b32.xlu0 %v1789, 64
      %v1808 = vpop.permute.xlu0 %1807
      %1809 = vrot.lane.b32.xlu0 %v1790, 64
      %v1810 = vpop.permute.xlu0 %1809
      %1811 = vrot.lane.b32.xlu0 %v1791, 64
      %v1812 = vpop.permute.xlu0 %1811
      %1813 = vrot.lane.b32.xlu0 %v1792, 64
      %v1814 = vpop.permute.xlu0 %1813
      %1815 = vrot.lane.b32.xlu0 %v1793, 64
      %v1816 = vpop.permute.xlu0 %1815
      %1817 = vrot.lane.b32.xlu0 %v1794, 64
      %v1818 = vpop.permute.xlu0 %1817
      %v1827 = vmul.f32 %v1553, %v1804
      %v1828 = vmul.f32 %v1568, %v1806
      %v1829 = vmul.f32 %v1583, %v1808
      %v1830 = vmul.f32 %v1598, %v1810
      %v1831 = vmul.f32 %v1613, %v1812
      %v1832 = vmul.f32 %v1628, %v1814
      %v1833 = vmul.f32 %v1643, %v1816
      %v1834 = vmul.f32 %v1658, %v1818
      %vm1835 = vcmp.gt.s32.totalorder %v462, 1
      %v1836 = vsel %vm1835, 1, 0
      %1837 = vset.pattern.permute.xlu0 0
      %1838 = vperm.xlu0 %1837, %v1836
      %v1839 = vpop.permute.xlu0 %1838
      %vm1840 = vcmp.eq.s32.totalorder %v1839, 1
      %v1849 = vrot.slane %v1827, 1
      %v1850 = vsel %vm1001, %v1828, %v1849
      %v1851 = vrot.slane %v1829, 7
      %v1852 = vsel %vm1004, %v1851, %v1850
      %v1853 = vrot.slane %v1830, 6
      %v1854 = vsel %vm1007, %v1853, %v1852
      %v1855 = vrot.slane %v1831, 5
      %v1856 = vsel %vm1010, %v1855, %v1854
      %v1857 = vrot.slane %v1832, 4
      %v1858 = vsel %vm1013, %v1857, %v1856
      %v1859 = vrot.slane %v1833, 3
      %v1860 = vsel %vm1016, %v1859, %v1858
      %v1861 = vrot.slane %v1834, 2
      %v1862 = vsel %vm1019, %v1861, %v1860
      %1863 = vrot.lane.b32.xlu0 %v1862, 32
      %v1864 = vpop.permute.xlu0 %1863
      %v1866 = vsel %vm1840, %v1864, %v1024
      %v1875 = vrot.slane %v1779, 1
      %v1876 = vsel %vm1001, %v1780, %v1875
      %v1877 = vrot.slane %v1781, 7
      %v1878 = vsel %vm1004, %v1877, %v1876
      %v1879 = vrot.slane %v1782, 6
      %v1880 = vsel %vm1007, %v1879, %v1878
      %v1881 = vrot.slane %v1783, 5
      %v1882 = vsel %vm1010, %v1881, %v1880
      %v1883 = vrot.slane %v1784, 4
      %v1884 = vsel %vm1013, %v1883, %v1882
      %v1885 = vrot.slane %v1785, 3
      %v1886 = vsel %vm1016, %v1885, %v1884
      %v1887 = vrot.slane %v1786, 2
      %v1888 = vsel %vm1019, %v1887, %v1886
      %1889 = vrot.lane.b32.xlu0 %v1888, 96
      %v1890 = vpop.permute.xlu0 %1889
      %v1892 = vsel %vm1840, %v1890, %v1050
      %v1893 = vpack.c.bf16 %v1439, %v1439
      %v1895 = vsel %vm519, %v1893, 0
      %1897 = vmatpush.bf16.msra.mxu0 0
      %1898 = vmatpush.bf16.msra.mxu0 0
      %1899 = vmatpush.bf16.msra.mxu0 0
      %1900 = vmatpush.bf16.msra.mxu0 0
      %1901 = vmatpush.bf16.msra.mxu0 0
      %1902 = vmatpush.bf16.msra.mxu0 0
      %1903 = vmatpush.bf16.msra.mxu0 %v1064
      %1904 = vmatpush.bf16.msra.mxu0 %v1063
      %1905 = vmatmul.bf16.gmra.mxu0 %v1895
      %v1906 = vpop.f32.mrf.mxu0
      %v1907 = vadd.f32 0.0, %v1906
      %v1908 = vpop.f32.mrf.mxu0
      %1909 = vdwg.mxu0
      %v1911 = vrot.slane %v1907, 2
      %v1912 = vrot.slane %v1907, 3
      %v1913 = vrot.slane %v1907, 4
      %v1914 = vrot.slane %v1907, 5
      %v1915 = vrot.slane %v1907, 6
      %v1916 = vrot.slane %v1907, 7
      %v1917 = vrot.slane %v1907, 1
      %v1926 = vadd.f32 %v1080, %v1911
      %v1927 = vadd.f32 %v1081, %v1912
      %v1928 = vadd.f32 %v1082, %v1913
      %v1929 = vadd.f32 %v1083, %v1914
      %v1930 = vadd.f32 %v1084, %v1915
      %v1931 = vadd.f32 %v1085, %v1916
      %v1932 = vadd.f32 %v1086, %v1907
      %v1933 = vadd.f32 %v1087, %v1917
      %v1934 = vxor.u32 %v1926, 2147483648
      %v1935 = vxor.u32 %v1927, 2147483648
      %v1936 = vxor.u32 %v1928, 2147483648
      %v1937 = vxor.u32 %v1929, 2147483648
      %v1938 = vxor.u32 %v1930, 2147483648
      %v1939 = vxor.u32 %v1931, 2147483648
      %v1940 = vxor.u32 %v1932, 2147483648
      %v1941 = vxor.u32 %v1933, 2147483648
      %v1942 = vmul.f32 %v1934, 1.442695
      %v1943 = vpow.pop %v1942
      %v1944 = vmul.f32 %v1935, 1.442695
      %v1945 = vpow.pop %v1944
      %v1946 = vmul.f32 %v1936, 1.442695
      %v1947 = vpow.pop %v1946
      %v1948 = vmul.f32 %v1937, 1.442695
      %v1949 = vpow.pop %v1948
      %v1950 = vmul.f32 %v1938, 1.442695
      %v1951 = vpow.pop %v1950
      %v1952 = vmul.f32 %v1939, 1.442695
      %v1953 = vpow.pop %v1952
      %v1954 = vmul.f32 %v1940, 1.442695
      %v1955 = vpow.pop %v1954
      %v1956 = vmul.f32 %v1941, 1.442695
      %v1957 = vpow.pop %v1956
      %v1958 = vadd.f32 %v1943, 1.0
      %v1959 = vadd.f32 %v1945, 1.0
      %v1960 = vadd.f32 %v1947, 1.0
      %v1961 = vadd.f32 %v1949, 1.0
      %v1962 = vadd.f32 %v1951, 1.0
      %v1963 = vadd.f32 %v1953, 1.0
      %v1964 = vadd.f32 %v1955, 1.0
      %v1965 = vadd.f32 %v1957, 1.0
      %v1966 = vrcp.pop %v1958
      %v1967 = vmul.f32 %v1958, %v1966
      %v1968 = vsub.f32 1.0, %v1967
      %v1969 = vmul.f32 %v1966, %v1968
      %v1970 = vadd.f32 %v1966, %v1969
      %vm1971 = vweird.f32 %v1958
      %vm1972 = vweird.f32 %v1966
      %vm1973 = vmor %vm1971, %vm1972
      %v1974 = vsel %vm1973, %v1966, %v1970
      %v1975 = vand.u32 2147483647, %v1958
      %vm1976 = vcmp.eq.f32.partialorder %v1975, 8.507059e+37
      %v1977 = vand.u32 %v1958, 2147483648
      %v1978 = vor.u32 1.1754944e-38, %v1977
      %v1979 = vsel %vm1976, %v1978, %v1974
      %v1980 = vmul.f32 1.0, %v1979
      %v1981 = vrcp.pop %v1959
      %v1982 = vmul.f32 %v1959, %v1981
      %v1983 = vsub.f32 1.0, %v1982
      %v1984 = vmul.f32 %v1981, %v1983
      %v1985 = vadd.f32 %v1981, %v1984
      %vm1986 = vweird.f32 %v1959
      %vm1987 = vweird.f32 %v1981
      %vm1988 = vmor %vm1986, %vm1987
      %v1989 = vsel %vm1988, %v1981, %v1985
      %v1990 = vand.u32 2147483647, %v1959
      %vm1991 = vcmp.eq.f32.partialorder %v1990, 8.507059e+37
      %v1992 = vand.u32 %v1959, 2147483648
      %v1993 = vor.u32 1.1754944e-38, %v1992
      %v1994 = vsel %vm1991, %v1993, %v1989
      %v1995 = vmul.f32 1.0, %v1994
      %v1996 = vrcp.pop %v1960
      %v1997 = vmul.f32 %v1960, %v1996
      %v1998 = vsub.f32 1.0, %v1997
      %v1999 = vmul.f32 %v1996, %v1998
      %v2000 = vadd.f32 %v1996, %v1999
      %vm2001 = vweird.f32 %v1960
      %vm2002 = vweird.f32 %v1996
      %vm2003 = vmor %vm2001, %vm2002
      %v2004 = vsel %vm2003, %v1996, %v2000
      %v2005 = vand.u32 2147483647, %v1960
      %vm2006 = vcmp.eq.f32.partialorder %v2005, 8.507059e+37
      %v2007 = vand.u32 %v1960, 2147483648
      %v2008 = vor.u32 1.1754944e-38, %v2007
      %v2009 = vsel %vm2006, %v2008, %v2004
      %v2010 = vmul.f32 1.0, %v2009
      %v2011 = vrcp.pop %v1961
      %v2012 = vmul.f32 %v1961, %v2011
      %v2013 = vsub.f32 1.0, %v2012
      %v2014 = vmul.f32 %v2011, %v2013
      %v2015 = vadd.f32 %v2011, %v2014
      %vm2016 = vweird.f32 %v1961
      %vm2017 = vweird.f32 %v2011
      %vm2018 = vmor %vm2016, %vm2017
      %v2019 = vsel %vm2018, %v2011, %v2015
      %v2020 = vand.u32 2147483647, %v1961
      %vm2021 = vcmp.eq.f32.partialorder %v2020, 8.507059e+37
      %v2022 = vand.u32 %v1961, 2147483648
      %v2023 = vor.u32 1.1754944e-38, %v2022
      %v2024 = vsel %vm2021, %v2023, %v2019
      %v2025 = vmul.f32 1.0, %v2024
      %v2026 = vrcp.pop %v1962
      %v2027 = vmul.f32 %v1962, %v2026
      %v2028 = vsub.f32 1.0, %v2027
      %v2029 = vmul.f32 %v2026, %v2028
      %v2030 = vadd.f32 %v2026, %v2029
      %vm2031 = vweird.f32 %v1962
      %vm2032 = vweird.f32 %v2026
      %vm2033 = vmor %vm2031, %vm2032
      %v2034 = vsel %vm2033, %v2026, %v2030
      %v2035 = vand.u32 2147483647, %v1962
      %vm2036 = vcmp.eq.f32.partialorder %v2035, 8.507059e+37
      %v2037 = vand.u32 %v1962, 2147483648
      %v2038 = vor.u32 1.1754944e-38, %v2037
      %v2039 = vsel %vm2036, %v2038, %v2034
      %v2040 = vmul.f32 1.0, %v2039
      %v2041 = vrcp.pop %v1963
      %v2042 = vmul.f32 %v1963, %v2041
      %v2043 = vsub.f32 1.0, %v2042
      %v2044 = vmul.f32 %v2041, %v2043
      %v2045 = vadd.f32 %v2041, %v2044
      %vm2046 = vweird.f32 %v1963
      %vm2047 = vweird.f32 %v2041
      %vm2048 = vmor %vm2046, %vm2047
      %v2049 = vsel %vm2048, %v2041, %v2045
      %v2050 = vand.u32 2147483647, %v1963
      %vm2051 = vcmp.eq.f32.partialorder %v2050, 8.507059e+37
      %v2052 = vand.u32 %v1963, 2147483648
      %v2053 = vor.u32 1.1754944e-38, %v2052
      %v2054 = vsel %vm2051, %v2053, %v2049
      %v2055 = vmul.f32 1.0, %v2054
      %v2056 = vrcp.pop %v1964
      %v2057 = vmul.f32 %v1964, %v2056
      %v2058 = vsub.f32 1.0, %v2057
      %v2059 = vmul.f32 %v2056, %v2058
      %v2060 = vadd.f32 %v2056, %v2059
      %vm2061 = vweird.f32 %v1964
      %vm2062 = vweird.f32 %v2056
      %vm2063 = vmor %vm2061, %vm2062
      %v2064 = vsel %vm2063, %v2056, %v2060
      %v2065 = vand.u32 2147483647, %v1964
      %vm2066 = vcmp.eq.f32.partialorder %v2065, 8.507059e+37
      %v2067 = vand.u32 %v1964, 2147483648
      %v2068 = vor.u32 1.1754944e-38, %v2067
      %v2069 = vsel %vm2066, %v2068, %v2064
      %v2070 = vmul.f32 1.0, %v2069
      %v2071 = vrcp.pop %v1965
      %v2072 = vmul.f32 %v1965, %v2071
      %v2073 = vsub.f32 1.0, %v2072
      %v2074 = vmul.f32 %v2071, %v2073
      %v2075 = vadd.f32 %v2071, %v2074
      %vm2076 = vweird.f32 %v1965
      %vm2077 = vweird.f32 %v2071
      %vm2078 = vmor %vm2076, %vm2077
      %v2079 = vsel %vm2078, %v2071, %v2075
      %v2080 = vand.u32 2147483647, %v1965
      %vm2081 = vcmp.eq.f32.partialorder %v2080, 8.507059e+37
      %v2082 = vand.u32 %v1965, 2147483648
      %v2083 = vor.u32 1.1754944e-38, %v2082
      %v2084 = vsel %vm2081, %v2083, %v2079
      %v2085 = vmul.f32 1.0, %v2084
      %v2086 = vtanh.pop %v1926
      %v2087 = vtanh.pop %v1927
      %v2088 = vtanh.pop %v1928
      %v2089 = vtanh.pop %v1929
      %v2090 = vtanh.pop %v1930
      %v2091 = vtanh.pop %v1931
      %v2092 = vtanh.pop %v1932
      %v2093 = vtanh.pop %v1933
      %v2095 = vrot.slane %v1465, 2
      %v2096 = vrot.slane %v1465, 3
      %v2097 = vrot.slane %v1465, 4
      %v2098 = vrot.slane %v1465, 5
      %v2099 = vrot.slane %v1465, 6
      %v2100 = vrot.slane %v1465, 7
      %v2101 = vrot.slane %v1465, 1
      %2102 = vrot.lane.b32.xlu0 %v2095, 32
      %v2103 = vpop.permute.xlu0 %2102
      %2104 = vrot.lane.b32.xlu0 %v2096, 32
      %v2105 = vpop.permute.xlu0 %2104
      %2106 = vrot.lane.b32.xlu0 %v2097, 32
      %v2107 = vpop.permute.xlu0 %2106
      %2108 = vrot.lane.b32.xlu0 %v2098, 32
      %v2109 = vpop.permute.xlu0 %2108
      %2110 = vrot.lane.b32.xlu0 %v2099, 32
      %v2111 = vpop.permute.xlu0 %2110
      %2112 = vrot.lane.b32.xlu0 %v2100, 32
      %v2113 = vpop.permute.xlu0 %2112
      %2114 = vrot.lane.b32.xlu0 %v1465, 32
      %v2115 = vpop.permute.xlu0 %2114
      %2116 = vrot.lane.b32.xlu0 %v2101, 32
      %v2117 = vpop.permute.xlu0 %2116
      %v2126 = vmul.f32 %v1980, %v2103
      %v2127 = vmul.f32 %v1995, %v2105
      %v2128 = vmul.f32 %v2010, %v2107
      %v2129 = vmul.f32 %v2025, %v2109
      %v2130 = vmul.f32 %v2040, %v2111
      %v2131 = vmul.f32 %v2055, %v2113
      %v2132 = vmul.f32 %v2070, %v2115
      %v2133 = vmul.f32 %v2085, %v2117
      %2142 = vrot.lane.b32.xlu0 %v2086, 64
      %v2143 = vpop.permute.xlu0 %2142
      %2144 = vrot.lane.b32.xlu0 %v2087, 64
      %v2145 = vpop.permute.xlu0 %2144
      %2146 = vrot.lane.b32.xlu0 %v2088, 64
      %v2147 = vpop.permute.xlu0 %2146
      %2148 = vrot.lane.b32.xlu0 %v2089, 64
      %v2149 = vpop.permute.xlu0 %2148
      %2150 = vrot.lane.b32.xlu0 %v2090, 64
      %v2151 = vpop.permute.xlu0 %2150
      %2152 = vrot.lane.b32.xlu0 %v2091, 64
      %v2153 = vpop.permute.xlu0 %2152
      %2154 = vrot.lane.b32.xlu0 %v2092, 64
      %v2155 = vpop.permute.xlu0 %2154
      %2156 = vrot.lane.b32.xlu0 %v2093, 64
      %v2157 = vpop.permute.xlu0 %2156
      %v2166 = vmul.f32 %v1980, %v2143
      %v2167 = vmul.f32 %v1995, %v2145
      %v2168 = vmul.f32 %v2010, %v2147
      %v2169 = vmul.f32 %v2025, %v2149
      %v2170 = vmul.f32 %v2040, %v2151
      %v2171 = vmul.f32 %v2055, %v2153
      %v2172 = vmul.f32 %v2070, %v2155
      %v2173 = vmul.f32 %v2085, %v2157
      %2182 = vrot.lane.b32.xlu0 %v2166, 32
      %v2183 = vpop.permute.xlu0 %2182
      %2184 = vrot.lane.b32.xlu0 %v2167, 32
      %v2185 = vpop.permute.xlu0 %2184
      %2186 = vrot.lane.b32.xlu0 %v2168, 32
      %v2187 = vpop.permute.xlu0 %2186
      %2188 = vrot.lane.b32.xlu0 %v2169, 32
      %v2189 = vpop.permute.xlu0 %2188
      %2190 = vrot.lane.b32.xlu0 %v2170, 32
      %v2191 = vpop.permute.xlu0 %2190
      %2192 = vrot.lane.b32.xlu0 %v2171, 32
      %v2193 = vpop.permute.xlu0 %2192
      %2194 = vrot.lane.b32.xlu0 %v2172, 32
      %v2195 = vpop.permute.xlu0 %2194
      %2196 = vrot.lane.b32.xlu0 %v2173, 32
      %v2197 = vpop.permute.xlu0 %2196
      %v2206 = vadd.f32 %v2126, %v2183
      %v2207 = vadd.f32 %v2127, %v2185
      %v2208 = vadd.f32 %v2128, %v2187
      %v2209 = vadd.f32 %v2129, %v2189
      %v2210 = vadd.f32 %v2130, %v2191
      %v2211 = vadd.f32 %v2131, %v2193
      %v2212 = vadd.f32 %v2132, %v2195
      %v2213 = vadd.f32 %v2133, %v2197
      %v2214 = vtanh.pop %v2206
      %v2215 = vtanh.pop %v2207
      %v2216 = vtanh.pop %v2208
      %v2217 = vtanh.pop %v2209
      %v2218 = vtanh.pop %v2210
      %v2219 = vtanh.pop %v2211
      %v2220 = vtanh.pop %v2212
      %v2221 = vtanh.pop %v2213
      %2230 = vrot.lane.b32.xlu0 %v2214, 64
      %v2231 = vpop.permute.xlu0 %2230
      %2232 = vrot.lane.b32.xlu0 %v2215, 64
      %v2233 = vpop.permute.xlu0 %2232
      %2234 = vrot.lane.b32.xlu0 %v2216, 64
      %v2235 = vpop.permute.xlu0 %2234
      %2236 = vrot.lane.b32.xlu0 %v2217, 64
      %v2237 = vpop.permute.xlu0 %2236
      %2238 = vrot.lane.b32.xlu0 %v2218, 64
      %v2239 = vpop.permute.xlu0 %2238
      %2240 = vrot.lane.b32.xlu0 %v2219, 64
      %v2241 = vpop.permute.xlu0 %2240
      %2242 = vrot.lane.b32.xlu0 %v2220, 64
      %v2243 = vpop.permute.xlu0 %2242
      %2244 = vrot.lane.b32.xlu0 %v2221, 64
      %v2245 = vpop.permute.xlu0 %2244
      %v2254 = vmul.f32 %v1980, %v2231
      %v2255 = vmul.f32 %v1995, %v2233
      %v2256 = vmul.f32 %v2010, %v2235
      %v2257 = vmul.f32 %v2025, %v2237
      %v2258 = vmul.f32 %v2040, %v2239
      %v2259 = vmul.f32 %v2055, %v2241
      %v2260 = vmul.f32 %v2070, %v2243
      %v2261 = vmul.f32 %v2085, %v2245
      %vm2262 = vcmp.gt.s32.totalorder %v462, 6
      %v2263 = vsel %vm2262, 1, 0
      %2264 = vset.pattern.permute.xlu0 0
      %2265 = vperm.xlu0 %2264, %v2263
      %v2266 = vpop.permute.xlu0 %2265
      %vm2267 = vcmp.eq.s32.totalorder %v2266, 1
      %v2276 = vrot.slane %v2254, 6
      %v2277 = vrot.slane %v2255, 5
      %v2278 = vsel %vm1001, %v2277, %v2276
      %v2279 = vrot.slane %v2256, 4
      %v2280 = vsel %vm1004, %v2279, %v2278
      %v2281 = vrot.slane %v2257, 3
      %v2282 = vsel %vm1007, %v2281, %v2280
      %v2283 = vrot.slane %v2258, 2
      %v2284 = vsel %vm1010, %v2283, %v2282
      %v2285 = vrot.slane %v2259, 1
      %v2286 = vsel %vm1013, %v2285, %v2284
      %v2287 = vsel %vm1016, %v2260, %v2286
      %v2288 = vrot.slane %v2261, 7
      %v2289 = vsel %vm1019, %v2288, %v2287
      %2290 = vrot.lane.b32.xlu0 %v2289, 32
      %v2291 = vpop.permute.xlu0 %2290
      %v2293 = vsel %vm2267, %v2291, %v1439
      %v2302 = vrot.slane %v2206, 6
      %v2303 = vrot.slane %v2207, 5
      %v2304 = vsel %vm1001, %v2303, %v2302
      %v2305 = vrot.slane %v2208, 4
      %v2306 = vsel %vm1004, %v2305, %v2304
      %v2307 = vrot.slane %v2209, 3
      %v2308 = vsel %vm1007, %v2307, %v2306
      %v2309 = vrot.slane %v2210, 2
      %v2310 = vsel %vm1010, %v2309, %v2308
      %v2311 = vrot.slane %v2211, 1
      %v2312 = vsel %vm1013, %v2311, %v2310
      %v2313 = vsel %vm1016, %v2212, %v2312
      %v2314 = vrot.slane %v2213, 7
      %v2315 = vsel %vm1019, %v2314, %v2313
      %2316 = vrot.lane.b32.xlu0 %v2315, 96
      %v2317 = vpop.permute.xlu0 %2316
      %v2319 = vsel %vm2267, %v2317, %v1465
      %v2320 = vpack.c.bf16 %v1866, %v1866
      %v2322 = vsel %vm519, %v2320, 0
      %2324 = vmatpush.bf16.msra.mxu0 0
      %2325 = vmatpush.bf16.msra.mxu0 0
      %2326 = vmatpush.bf16.msra.mxu0 0
      %2327 = vmatpush.bf16.msra.mxu0 0
      %2328 = vmatpush.bf16.msra.mxu0 0
      %2329 = vmatpush.bf16.msra.mxu0 0
      %2330 = vmatpush.bf16.msra.mxu0 %v639
      %2331 = vmatpush.bf16.msra.mxu0 %v638
      %2332 = vmatmul.bf16.gmra.mxu0 %v2322
      %v2333 = vpop.f32.mrf.mxu0
      %v2334 = vadd.f32 0.0, %v2333
      %v2335 = vpop.f32.mrf.mxu0
      %2336 = vdwg.mxu0
      %v2338 = vrot.slane %v2334, 6
      %v2339 = vrot.slane %v2334, 7
      %v2340 = vrot.slane %v2334, 1
      %v2341 = vrot.slane %v2334, 2
      %v2342 = vrot.slane %v2334, 3
      %v2343 = vrot.slane %v2334, 4
      %v2344 = vrot.slane %v2334, 5
      %v2353 = vadd.f32 %v658, %v2338
      %v2354 = vadd.f32 %v659, %v2339
      %v2355 = vadd.f32 %v660, %v2334
      %v2356 = vadd.f32 %v661, %v2340
      %v2357 = vadd.f32 %v662, %v2341
      %v2358 = vadd.f32 %v663, %v2342
      %v2359 = vadd.f32 %v664, %v2343
      %v2360 = vadd.f32 %v665, %v2344
      %v2361 = vxor.u32 %v2353, 2147483648
      %v2362 = vxor.u32 %v2354, 2147483648
      %v2363 = vxor.u32 %v2355, 2147483648
      %v2364 = vxor.u32 %v2356, 2147483648
      %v2365 = vxor.u32 %v2357, 2147483648
      %v2366 = vxor.u32 %v2358, 2147483648
      %v2367 = vxor.u32 %v2359, 2147483648
      %v2368 = vxor.u32 %v2360, 2147483648
      %v2369 = vmul.f32 %v2361, 1.442695
      %v2370 = vpow.pop %v2369
      %v2371 = vmul.f32 %v2362, 1.442695
      %v2372 = vpow.pop %v2371
      %v2373 = vmul.f32 %v2363, 1.442695
      %v2374 = vpow.pop %v2373
      %v2375 = vmul.f32 %v2364, 1.442695
      %v2376 = vpow.pop %v2375
      %v2377 = vmul.f32 %v2365, 1.442695
      %v2378 = vpow.pop %v2377
      %v2379 = vmul.f32 %v2366, 1.442695
      %v2380 = vpow.pop %v2379
      %v2381 = vmul.f32 %v2367, 1.442695
      %v2382 = vpow.pop %v2381
      %v2383 = vmul.f32 %v2368, 1.442695
      %v2384 = vpow.pop %v2383
      %v2385 = vadd.f32 %v2370, 1.0
      %v2386 = vadd.f32 %v2372, 1.0
      %v2387 = vadd.f32 %v2374, 1.0
      %v2388 = vadd.f32 %v2376, 1.0
      %v2389 = vadd.f32 %v2378, 1.0
      %v2390 = vadd.f32 %v2380, 1.0
      %v2391 = vadd.f32 %v2382, 1.0
      %v2392 = vadd.f32 %v2384, 1.0
      %v2393 = vrcp.pop %v2385
      %v2394 = vmul.f32 %v2385, %v2393
      %v2395 = vsub.f32 1.0, %v2394
      %v2396 = vmul.f32 %v2393, %v2395
      %v2397 = vadd.f32 %v2393, %v2396
      %vm2398 = vweird.f32 %v2385
      %vm2399 = vweird.f32 %v2393
      %vm2400 = vmor %vm2398, %vm2399
      %v2401 = vsel %vm2400, %v2393, %v2397
      %v2402 = vand.u32 2147483647, %v2385
      %vm2403 = vcmp.eq.f32.partialorder %v2402, 8.507059e+37
      %v2404 = vand.u32 %v2385, 2147483648
      %v2405 = vor.u32 1.1754944e-38, %v2404
      %v2406 = vsel %vm2403, %v2405, %v2401
      %v2407 = vmul.f32 1.0, %v2406
      %v2408 = vrcp.pop %v2386
      %v2409 = vmul.f32 %v2386, %v2408
      %v2410 = vsub.f32 1.0, %v2409
      %v2411 = vmul.f32 %v2408, %v2410
      %v2412 = vadd.f32 %v2408, %v2411
      %vm2413 = vweird.f32 %v2386
      %vm2414 = vweird.f32 %v2408
      %vm2415 = vmor %vm2413, %vm2414
      %v2416 = vsel %vm2415, %v2408, %v2412
      %v2417 = vand.u32 2147483647, %v2386
      %vm2418 = vcmp.eq.f32.partialorder %v2417, 8.507059e+37
      %v2419 = vand.u32 %v2386, 2147483648
      %v2420 = vor.u32 1.1754944e-38, %v2419
      %v2421 = vsel %vm2418, %v2420, %v2416
      %v2422 = vmul.f32 1.0, %v2421
      %v2423 = vrcp.pop %v2387
      %v2424 = vmul.f32 %v2387, %v2423
      %v2425 = vsub.f32 1.0, %v2424
      %v2426 = vmul.f32 %v2423, %v2425
      %v2427 = vadd.f32 %v2423, %v2426
      %vm2428 = vweird.f32 %v2387
      %vm2429 = vweird.f32 %v2423
      %vm2430 = vmor %vm2428, %vm2429
      %v2431 = vsel %vm2430, %v2423, %v2427
      %v2432 = vand.u32 2147483647, %v2387
      %vm2433 = vcmp.eq.f32.partialorder %v2432, 8.507059e+37
      %v2434 = vand.u32 %v2387, 2147483648
      %v2435 = vor.u32 1.1754944e-38, %v2434
      %v2436 = vsel %vm2433, %v2435, %v2431
      %v2437 = vmul.f32 1.0, %v2436
      %v2438 = vrcp.pop %v2388
      %v2439 = vmul.f32 %v2388, %v2438
      %v2440 = vsub.f32 1.0, %v2439
      %v2441 = vmul.f32 %v2438, %v2440
      %v2442 = vadd.f32 %v2438, %v2441
      %vm2443 = vweird.f32 %v2388
      %vm2444 = vweird.f32 %v2438
      %vm2445 = vmor %vm2443, %vm2444
      %v2446 = vsel %vm2445, %v2438, %v2442
      %v2447 = vand.u32 2147483647, %v2388
      %vm2448 = vcmp.eq.f32.partialorder %v2447, 8.507059e+37
      %v2449 = vand.u32 %v2388, 2147483648
      %v2450 = vor.u32 1.1754944e-38, %v2449
      %v2451 = vsel %vm2448, %v2450, %v2446
      %v2452 = vmul.f32 1.0, %v2451
      %v2453 = vrcp.pop %v2389
      %v2454 = vmul.f32 %v2389, %v2453
      %v2455 = vsub.f32 1.0, %v2454
      %v2456 = vmul.f32 %v2453, %v2455
      %v2457 = vadd.f32 %v2453, %v2456
      %vm2458 = vweird.f32 %v2389
      %vm2459 = vweird.f32 %v2453
      %vm2460 = vmor %vm2458, %vm2459
      %v2461 = vsel %vm2460, %v2453, %v2457
      %v2462 = vand.u32 2147483647, %v2389
      %vm2463 = vcmp.eq.f32.partialorder %v2462, 8.507059e+37
      %v2464 = vand.u32 %v2389, 2147483648
      %v2465 = vor.u32 1.1754944e-38, %v2464
      %v2466 = vsel %vm2463, %v2465, %v2461
      %v2467 = vmul.f32 1.0, %v2466
      %v2468 = vrcp.pop %v2390
      %v2469 = vmul.f32 %v2390, %v2468
      %v2470 = vsub.f32 1.0, %v2469
      %v2471 = vmul.f32 %v2468, %v2470
      %v2472 = vadd.f32 %v2468, %v2471
      %vm2473 = vweird.f32 %v2390
      %vm2474 = vweird.f32 %v2468
      %vm2475 = vmor %vm2473, %vm2474
      %v2476 = vsel %vm2475, %v2468, %v2472
      %v2477 = vand.u32 2147483647, %v2390
      %vm2478 = vcmp.eq.f32.partialorder %v2477, 8.507059e+37
      %v2479 = vand.u32 %v2390, 2147483648
      %v2480 = vor.u32 1.1754944e-38, %v2479
      %v2481 = vsel %vm2478, %v2480, %v2476
      %v2482 = vmul.f32 1.0, %v2481
      %v2483 = vrcp.pop %v2391
      %v2484 = vmul.f32 %v2391, %v2483
      %v2485 = vsub.f32 1.0, %v2484
      %v2486 = vmul.f32 %v2483, %v2485
      %v2487 = vadd.f32 %v2483, %v2486
      %vm2488 = vweird.f32 %v2391
      %vm2489 = vweird.f32 %v2483
      %vm2490 = vmor %vm2488, %vm2489
      %v2491 = vsel %vm2490, %v2483, %v2487
      %v2492 = vand.u32 2147483647, %v2391
      %vm2493 = vcmp.eq.f32.partialorder %v2492, 8.507059e+37
      %v2494 = vand.u32 %v2391, 2147483648
      %v2495 = vor.u32 1.1754944e-38, %v2494
      %v2496 = vsel %vm2493, %v2495, %v2491
      %v2497 = vmul.f32 1.0, %v2496
      %v2498 = vrcp.pop %v2392
      %v2499 = vmul.f32 %v2392, %v2498
      %v2500 = vsub.f32 1.0, %v2499
      %v2501 = vmul.f32 %v2498, %v2500
      %v2502 = vadd.f32 %v2498, %v2501
      %vm2503 = vweird.f32 %v2392
      %vm2504 = vweird.f32 %v2498
      %vm2505 = vmor %vm2503, %vm2504
      %v2506 = vsel %vm2505, %v2498, %v2502
      %v2507 = vand.u32 2147483647, %v2392
      %vm2508 = vcmp.eq.f32.partialorder %v2507, 8.507059e+37
      %v2509 = vand.u32 %v2392, 2147483648
      %v2510 = vor.u32 1.1754944e-38, %v2509
      %v2511 = vsel %vm2508, %v2510, %v2506
      %v2512 = vmul.f32 1.0, %v2511
      %v2513 = vtanh.pop %v2353
      %v2514 = vtanh.pop %v2354
      %v2515 = vtanh.pop %v2355
      %v2516 = vtanh.pop %v2356
      %v2517 = vtanh.pop %v2357
      %v2518 = vtanh.pop %v2358
      %v2519 = vtanh.pop %v2359
      %v2520 = vtanh.pop %v2360
      %v2522 = vrot.slane %v1892, 6
      %v2523 = vrot.slane %v1892, 7
      %v2524 = vrot.slane %v1892, 1
      %v2525 = vrot.slane %v1892, 2
      %v2526 = vrot.slane %v1892, 3
      %v2527 = vrot.slane %v1892, 4
      %v2528 = vrot.slane %v1892, 5
      %2529 = vrot.lane.b32.xlu0 %v2522, 32
      %v2530 = vpop.permute.xlu0 %2529
      %2531 = vrot.lane.b32.xlu0 %v2523, 32
      %v2532 = vpop.permute.xlu0 %2531
      %2533 = vrot.lane.b32.xlu0 %v1892, 32
      %v2534 = vpop.permute.xlu0 %2533
      %2535 = vrot.lane.b32.xlu0 %v2524, 32
      %v2536 = vpop.permute.xlu0 %2535
      %2537 = vrot.lane.b32.xlu0 %v2525, 32
      %v2538 = vpop.permute.xlu0 %2537
      %2539 = vrot.lane.b32.xlu0 %v2526, 32
      %v2540 = vpop.permute.xlu0 %2539
      %2541 = vrot.lane.b32.xlu0 %v2527, 32
      %v2542 = vpop.permute.xlu0 %2541
      %2543 = vrot.lane.b32.xlu0 %v2528, 32
      %v2544 = vpop.permute.xlu0 %2543
      %v2553 = vmul.f32 %v2407, %v2530
      %v2554 = vmul.f32 %v2422, %v2532
      %v2555 = vmul.f32 %v2437, %v2534
      %v2556 = vmul.f32 %v2452, %v2536
      %v2557 = vmul.f32 %v2467, %v2538
      %v2558 = vmul.f32 %v2482, %v2540
      %v2559 = vmul.f32 %v2497, %v2542
      %v2560 = vmul.f32 %v2512, %v2544
      %2569 = vrot.lane.b32.xlu0 %v2513, 64
      %v2570 = vpop.permute.xlu0 %2569
      %2571 = vrot.lane.b32.xlu0 %v2514, 64
      %v2572 = vpop.permute.xlu0 %2571
      %2573 = vrot.lane.b32.xlu0 %v2515, 64
      %v2574 = vpop.permute.xlu0 %2573
      %2575 = vrot.lane.b32.xlu0 %v2516, 64
      %v2576 = vpop.permute.xlu0 %2575
      %2577 = vrot.lane.b32.xlu0 %v2517, 64
      %v2578 = vpop.permute.xlu0 %2577
      %2579 = vrot.lane.b32.xlu0 %v2518, 64
      %v2580 = vpop.permute.xlu0 %2579
      %2581 = vrot.lane.b32.xlu0 %v2519, 64
      %v2582 = vpop.permute.xlu0 %2581
      %2583 = vrot.lane.b32.xlu0 %v2520, 64
      %v2584 = vpop.permute.xlu0 %2583
      %v2593 = vmul.f32 %v2407, %v2570
      %v2594 = vmul.f32 %v2422, %v2572
      %v2595 = vmul.f32 %v2437, %v2574
      %v2596 = vmul.f32 %v2452, %v2576
      %v2597 = vmul.f32 %v2467, %v2578
      %v2598 = vmul.f32 %v2482, %v2580
      %v2599 = vmul.f32 %v2497, %v2582
      %v2600 = vmul.f32 %v2512, %v2584
      %2609 = vrot.lane.b32.xlu0 %v2593, 32
      %v2610 = vpop.permute.xlu0 %2609
      %2611 = vrot.lane.b32.xlu0 %v2594, 32
      %v2612 = vpop.permute.xlu0 %2611
      %2613 = vrot.lane.b32.xlu0 %v2595, 32
      %v2614 = vpop.permute.xlu0 %2613
      %2615 = vrot.lane.b32.xlu0 %v2596, 32
      %v2616 = vpop.permute.xlu0 %2615
      %2617 = vrot.lane.b32.xlu0 %v2597, 32
      %v2618 = vpop.permute.xlu0 %2617
      %2619 = vrot.lane.b32.xlu0 %v2598, 32
      %v2620 = vpop.permute.xlu0 %2619
      %2621 = vrot.lane.b32.xlu0 %v2599, 32
      %v2622 = vpop.permute.xlu0 %2621
      %2623 = vrot.lane.b32.xlu0 %v2600, 32
      %v2624 = vpop.permute.xlu0 %2623
      %v2633 = vadd.f32 %v2553, %v2610
      %v2634 = vadd.f32 %v2554, %v2612
      %v2635 = vadd.f32 %v2555, %v2614
      %v2636 = vadd.f32 %v2556, %v2616
      %v2637 = vadd.f32 %v2557, %v2618
      %v2638 = vadd.f32 %v2558, %v2620
      %v2639 = vadd.f32 %v2559, %v2622
      %v2640 = vadd.f32 %v2560, %v2624
      %v2641 = vtanh.pop %v2633
      %v2642 = vtanh.pop %v2634
      %v2643 = vtanh.pop %v2635
      %v2644 = vtanh.pop %v2636
      %v2645 = vtanh.pop %v2637
      %v2646 = vtanh.pop %v2638
      %v2647 = vtanh.pop %v2639
      %v2648 = vtanh.pop %v2640
      %2657 = vrot.lane.b32.xlu0 %v2641, 64
      %v2658 = vpop.permute.xlu0 %2657
      %2659 = vrot.lane.b32.xlu0 %v2642, 64
      %v2660 = vpop.permute.xlu0 %2659
      %2661 = vrot.lane.b32.xlu0 %v2643, 64
      %v2662 = vpop.permute.xlu0 %2661
      %2663 = vrot.lane.b32.xlu0 %v2644, 64
      %v2664 = vpop.permute.xlu0 %2663
      %2665 = vrot.lane.b32.xlu0 %v2645, 64
      %v2666 = vpop.permute.xlu0 %2665
      %2667 = vrot.lane.b32.xlu0 %v2646, 64
      %v2668 = vpop.permute.xlu0 %2667
      %2669 = vrot.lane.b32.xlu0 %v2647, 64
      %v2670 = vpop.permute.xlu0 %2669
      %2671 = vrot.lane.b32.xlu0 %v2648, 64
      %v2672 = vpop.permute.xlu0 %2671
      %v2681 = vmul.f32 %v2407, %v2658
      %v2682 = vmul.f32 %v2422, %v2660
      %v2683 = vmul.f32 %v2437, %v2662
      %v2684 = vmul.f32 %v2452, %v2664
      %v2685 = vmul.f32 %v2467, %v2666
      %v2686 = vmul.f32 %v2482, %v2668
      %v2687 = vmul.f32 %v2497, %v2670
      %v2688 = vmul.f32 %v2512, %v2672
      %vm2689 = vcmp.gt.s32.totalorder %v462, 2
      %v2690 = vsel %vm2689, 1, 0
      %2691 = vset.pattern.permute.xlu0 0
      %2692 = vperm.xlu0 %2691, %v2690
      %v2693 = vpop.permute.xlu0 %2692
      %vm2694 = vcmp.eq.s32.totalorder %v2693, 1
      %v2703 = vrot.slane %v2681, 2
      %v2704 = vrot.slane %v2682, 1
      %v2705 = vsel %vm1001, %v2704, %v2703
      %v2706 = vsel %vm1004, %v2683, %v2705
      %v2707 = vrot.slane %v2684, 7
      %v2708 = vsel %vm1007, %v2707, %v2706
      %v2709 = vrot.slane %v2685, 6
      %v2710 = vsel %vm1010, %v2709, %v2708
      %v2711 = vrot.slane %v2686, 5
      %v2712 = vsel %vm1013, %v2711, %v2710
      %v2713 = vrot.slane %v2687, 4
      %v2714 = vsel %vm1016, %v2713, %v2712
      %v2715 = vrot.slane %v2688, 3
      %v2716 = vsel %vm1019, %v2715, %v2714
      %2717 = vrot.lane.b32.xlu0 %v2716, 32
      %v2718 = vpop.permute.xlu0 %2717
      %v2720 = vsel %vm2694, %v2718, %v1866
      %v2729 = vrot.slane %v2633, 2
      %v2730 = vrot.slane %v2634, 1
      %v2731 = vsel %vm1001, %v2730, %v2729
      %v2732 = vsel %vm1004, %v2635, %v2731
      %v2733 = vrot.slane %v2636, 7
      %v2734 = vsel %vm1007, %v2733, %v2732
      %v2735 = vrot.slane %v2637, 6
      %v2736 = vsel %vm1010, %v2735, %v2734
      %v2737 = vrot.slane %v2638, 5
      %v2738 = vsel %vm1013, %v2737, %v2736
      %v2739 = vrot.slane %v2639, 4
      %v2740 = vsel %vm1016, %v2739, %v2738
      %v2741 = vrot.slane %v2640, 3
      %v2742 = vsel %vm1019, %v2741, %v2740
      %2743 = vrot.lane.b32.xlu0 %v2742, 96
      %v2744 = vpop.permute.xlu0 %2743
      %v2746 = vsel %vm2694, %v2744, %v1892
      %v2747 = vpack.c.bf16 %v2293, %v2293
      %v2749 = vsel %vm519, %v2747, 0
      %2751 = vmatpush.bf16.msra.mxu0 0
      %2752 = vmatpush.bf16.msra.mxu0 0
      %2753 = vmatpush.bf16.msra.mxu0 0
      %2754 = vmatpush.bf16.msra.mxu0 0
      %2755 = vmatpush.bf16.msra.mxu0 0
      %2756 = vmatpush.bf16.msra.mxu0 0
      %2757 = vmatpush.bf16.msra.mxu0 %v1064
      %2758 = vmatpush.bf16.msra.mxu0 %v1063
      %2759 = vmatmul.bf16.gmra.mxu0 %v2749
      %v2760 = vpop.f32.mrf.mxu0
      %v2761 = vadd.f32 0.0, %v2760
      %v2762 = vpop.f32.mrf.mxu0
      %2763 = vdwg.mxu0
      %v2765 = vrot.slane %v2761, 3
      %v2766 = vrot.slane %v2761, 4
      %v2767 = vrot.slane %v2761, 5
      %v2768 = vrot.slane %v2761, 6
      %v2769 = vrot.slane %v2761, 7
      %v2770 = vrot.slane %v2761, 1
      %v2771 = vrot.slane %v2761, 2
      %v2780 = vadd.f32 %v1080, %v2765
      %v2781 = vadd.f32 %v1081, %v2766
      %v2782 = vadd.f32 %v1082, %v2767
      %v2783 = vadd.f32 %v1083, %v2768
      %v2784 = vadd.f32 %v1084, %v2769
      %v2785 = vadd.f32 %v1085, %v2761
      %v2786 = vadd.f32 %v1086, %v2770
      %v2787 = vadd.f32 %v1087, %v2771
      %v2788 = vxor.u32 %v2780, 2147483648
      %v2789 = vxor.u32 %v2781, 2147483648
      %v2790 = vxor.u32 %v2782, 2147483648
      %v2791 = vxor.u32 %v2783, 2147483648
      %v2792 = vxor.u32 %v2784, 2147483648
      %v2793 = vxor.u32 %v2785, 2147483648
      %v2794 = vxor.u32 %v2786, 2147483648
      %v2795 = vxor.u32 %v2787, 2147483648
      %v2796 = vmul.f32 %v2788, 1.442695
      %v2797 = vpow.pop %v2796
      %v2798 = vmul.f32 %v2789, 1.442695
      %v2799 = vpow.pop %v2798
      %v2800 = vmul.f32 %v2790, 1.442695
      %v2801 = vpow.pop %v2800
      %v2802 = vmul.f32 %v2791, 1.442695
      %v2803 = vpow.pop %v2802
      %v2804 = vmul.f32 %v2792, 1.442695
      %v2805 = vpow.pop %v2804
      %v2806 = vmul.f32 %v2793, 1.442695
      %v2807 = vpow.pop %v2806
      %v2808 = vmul.f32 %v2794, 1.442695
      %v2809 = vpow.pop %v2808
      %v2810 = vmul.f32 %v2795, 1.442695
      %v2811 = vpow.pop %v2810
      %v2812 = vadd.f32 %v2797, 1.0
      %v2813 = vadd.f32 %v2799, 1.0
      %v2814 = vadd.f32 %v2801, 1.0
      %v2815 = vadd.f32 %v2803, 1.0
      %v2816 = vadd.f32 %v2805, 1.0
      %v2817 = vadd.f32 %v2807, 1.0
      %v2818 = vadd.f32 %v2809, 1.0
      %v2819 = vadd.f32 %v2811, 1.0
      %v2820 = vrcp.pop %v2812
      %v2821 = vmul.f32 %v2812, %v2820
      %v2822 = vsub.f32 1.0, %v2821
      %v2823 = vmul.f32 %v2820, %v2822
      %v2824 = vadd.f32 %v2820, %v2823
      %vm2825 = vweird.f32 %v2812
      %vm2826 = vweird.f32 %v2820
      %vm2827 = vmor %vm2825, %vm2826
      %v2828 = vsel %vm2827, %v2820, %v2824
      %v2829 = vand.u32 2147483647, %v2812
      %vm2830 = vcmp.eq.f32.partialorder %v2829, 8.507059e+37
      %v2831 = vand.u32 %v2812, 2147483648
      %v2832 = vor.u32 1.1754944e-38, %v2831
      %v2833 = vsel %vm2830, %v2832, %v2828
      %v2834 = vmul.f32 1.0, %v2833
      %v2835 = vrcp.pop %v2813
      %v2836 = vmul.f32 %v2813, %v2835
      %v2837 = vsub.f32 1.0, %v2836
      %v2838 = vmul.f32 %v2835, %v2837
      %v2839 = vadd.f32 %v2835, %v2838
      %vm2840 = vweird.f32 %v2813
      %vm2841 = vweird.f32 %v2835
      %vm2842 = vmor %vm2840, %vm2841
      %v2843 = vsel %vm2842, %v2835, %v2839
      %v2844 = vand.u32 2147483647, %v2813
      %vm2845 = vcmp.eq.f32.partialorder %v2844, 8.507059e+37
      %v2846 = vand.u32 %v2813, 2147483648
      %v2847 = vor.u32 1.1754944e-38, %v2846
      %v2848 = vsel %vm2845, %v2847, %v2843
      %v2849 = vmul.f32 1.0, %v2848
      %v2850 = vrcp.pop %v2814
      %v2851 = vmul.f32 %v2814, %v2850
      %v2852 = vsub.f32 1.0, %v2851
      %v2853 = vmul.f32 %v2850, %v2852
      %v2854 = vadd.f32 %v2850, %v2853
      %vm2855 = vweird.f32 %v2814
      %vm2856 = vweird.f32 %v2850
      %vm2857 = vmor %vm2855, %vm2856
      %v2858 = vsel %vm2857, %v2850, %v2854
      %v2859 = vand.u32 2147483647, %v2814
      %vm2860 = vcmp.eq.f32.partialorder %v2859, 8.507059e+37
      %v2861 = vand.u32 %v2814, 2147483648
      %v2862 = vor.u32 1.1754944e-38, %v2861
      %v2863 = vsel %vm2860, %v2862, %v2858
      %v2864 = vmul.f32 1.0, %v2863
      %v2865 = vrcp.pop %v2815
      %v2866 = vmul.f32 %v2815, %v2865
      %v2867 = vsub.f32 1.0, %v2866
      %v2868 = vmul.f32 %v2865, %v2867
      %v2869 = vadd.f32 %v2865, %v2868
      %vm2870 = vweird.f32 %v2815
      %vm2871 = vweird.f32 %v2865
      %vm2872 = vmor %vm2870, %vm2871
      %v2873 = vsel %vm2872, %v2865, %v2869
      %v2874 = vand.u32 2147483647, %v2815
      %vm2875 = vcmp.eq.f32.partialorder %v2874, 8.507059e+37
      %v2876 = vand.u32 %v2815, 2147483648
      %v2877 = vor.u32 1.1754944e-38, %v2876
      %v2878 = vsel %vm2875, %v2877, %v2873
      %v2879 = vmul.f32 1.0, %v2878
      %v2880 = vrcp.pop %v2816
      %v2881 = vmul.f32 %v2816, %v2880
      %v2882 = vsub.f32 1.0, %v2881
      %v2883 = vmul.f32 %v2880, %v2882
      %v2884 = vadd.f32 %v2880, %v2883
      %vm2885 = vweird.f32 %v2816
      %vm2886 = vweird.f32 %v2880
      %vm2887 = vmor %vm2885, %vm2886
      %v2888 = vsel %vm2887, %v2880, %v2884
      %v2889 = vand.u32 2147483647, %v2816
      %vm2890 = vcmp.eq.f32.partialorder %v2889, 8.507059e+37
      %v2891 = vand.u32 %v2816, 2147483648
      %v2892 = vor.u32 1.1754944e-38, %v2891
      %v2893 = vsel %vm2890, %v2892, %v2888
      %v2894 = vmul.f32 1.0, %v2893
      %v2895 = vrcp.pop %v2817
      %v2896 = vmul.f32 %v2817, %v2895
      %v2897 = vsub.f32 1.0, %v2896
      %v2898 = vmul.f32 %v2895, %v2897
      %v2899 = vadd.f32 %v2895, %v2898
      %vm2900 = vweird.f32 %v2817
      %vm2901 = vweird.f32 %v2895
      %vm2902 = vmor %vm2900, %vm2901
      %v2903 = vsel %vm2902, %v2895, %v2899
      %v2904 = vand.u32 2147483647, %v2817
      %vm2905 = vcmp.eq.f32.partialorder %v2904, 8.507059e+37
      %v2906 = vand.u32 %v2817, 2147483648
      %v2907 = vor.u32 1.1754944e-38, %v2906
      %v2908 = vsel %vm2905, %v2907, %v2903
      %v2909 = vmul.f32 1.0, %v2908
      %v2910 = vrcp.pop %v2818
      %v2911 = vmul.f32 %v2818, %v2910
      %v2912 = vsub.f32 1.0, %v2911
      %v2913 = vmul.f32 %v2910, %v2912
      %v2914 = vadd.f32 %v2910, %v2913
      %vm2915 = vweird.f32 %v2818
      %vm2916 = vweird.f32 %v2910
      %vm2917 = vmor %vm2915, %vm2916
      %v2918 = vsel %vm2917, %v2910, %v2914
      %v2919 = vand.u32 2147483647, %v2818
      %vm2920 = vcmp.eq.f32.partialorder %v2919, 8.507059e+37
      %v2921 = vand.u32 %v2818, 2147483648
      %v2922 = vor.u32 1.1754944e-38, %v2921
      %v2923 = vsel %vm2920, %v2922, %v2918
      %v2924 = vmul.f32 1.0, %v2923
      %v2925 = vrcp.pop %v2819
      %v2926 = vmul.f32 %v2819, %v2925
      %v2927 = vsub.f32 1.0, %v2926
      %v2928 = vmul.f32 %v2925, %v2927
      %v2929 = vadd.f32 %v2925, %v2928
      %vm2930 = vweird.f32 %v2819
      %vm2931 = vweird.f32 %v2925
      %vm2932 = vmor %vm2930, %vm2931
      %v2933 = vsel %vm2932, %v2925, %v2929
      %v2934 = vand.u32 2147483647, %v2819
      %vm2935 = vcmp.eq.f32.partialorder %v2934, 8.507059e+37
      %v2936 = vand.u32 %v2819, 2147483648
      %v2937 = vor.u32 1.1754944e-38, %v2936
      %v2938 = vsel %vm2935, %v2937, %v2933
      %v2939 = vmul.f32 1.0, %v2938
      %v2940 = vtanh.pop %v2780
      %v2941 = vtanh.pop %v2781
      %v2942 = vtanh.pop %v2782
      %v2943 = vtanh.pop %v2783
      %v2944 = vtanh.pop %v2784
      %v2945 = vtanh.pop %v2785
      %v2946 = vtanh.pop %v2786
      %v2947 = vtanh.pop %v2787
      %v2949 = vrot.slane %v2319, 3
      %v2950 = vrot.slane %v2319, 4
      %v2951 = vrot.slane %v2319, 5
      %v2952 = vrot.slane %v2319, 6
      %v2953 = vrot.slane %v2319, 7
      %v2954 = vrot.slane %v2319, 1
      %v2955 = vrot.slane %v2319, 2
      %2956 = vrot.lane.b32.xlu0 %v2949, 32
      %v2957 = vpop.permute.xlu0 %2956
      %2958 = vrot.lane.b32.xlu0 %v2950, 32
      %v2959 = vpop.permute.xlu0 %2958
      %2960 = vrot.lane.b32.xlu0 %v2951, 32
      %v2961 = vpop.permute.xlu0 %2960
      %2962 = vrot.lane.b32.xlu0 %v2952, 32
      %v2963 = vpop.permute.xlu0 %2962
      %2964 = vrot.lane.b32.xlu0 %v2953, 32
      %v2965 = vpop.permute.xlu0 %2964
      %2966 = vrot.lane.b32.xlu0 %v2319, 32
      %v2967 = vpop.permute.xlu0 %2966
      %2968 = vrot.lane.b32.xlu0 %v2954, 32
      %v2969 = vpop.permute.xlu0 %2968
      %2970 = vrot.lane.b32.xlu0 %v2955, 32
      %v2971 = vpop.permute.xlu0 %2970
      %v2980 = vmul.f32 %v2834, %v2957
      %v2981 = vmul.f32 %v2849, %v2959
      %v2982 = vmul.f32 %v2864, %v2961
      %v2983 = vmul.f32 %v2879, %v2963
      %v2984 = vmul.f32 %v2894, %v2965
      %v2985 = vmul.f32 %v2909, %v2967
      %v2986 = vmul.f32 %v2924, %v2969
      %v2987 = vmul.f32 %v2939, %v2971
      %2996 = vrot.lane.b32.xlu0 %v2940, 64
      %v2997 = vpop.permute.xlu0 %2996
      %2998 = vrot.lane.b32.xlu0 %v2941, 64
      %v2999 = vpop.permute.xlu0 %2998
      %3000 = vrot.lane.b32.xlu0 %v2942, 64
      %v3001 = vpop.permute.xlu0 %3000
      %3002 = vrot.lane.b32.xlu0 %v2943, 64
      %v3003 = vpop.permute.xlu0 %3002
      %3004 = vrot.lane.b32.xlu0 %v2944, 64
      %v3005 = vpop.permute.xlu0 %3004
      %3006 = vrot.lane.b32.xlu0 %v2945, 64
      %v3007 = vpop.permute.xlu0 %3006
      %3008 = vrot.lane.b32.xlu0 %v2946, 64
      %v3009 = vpop.permute.xlu0 %3008
      %3010 = vrot.lane.b32.xlu0 %v2947, 64
      %v3011 = vpop.permute.xlu0 %3010
      %v3020 = vmul.f32 %v2834, %v2997
      %v3021 = vmul.f32 %v2849, %v2999
      %v3022 = vmul.f32 %v2864, %v3001
      %v3023 = vmul.f32 %v2879, %v3003
      %v3024 = vmul.f32 %v2894, %v3005
      %v3025 = vmul.f32 %v2909, %v3007
      %v3026 = vmul.f32 %v2924, %v3009
      %v3027 = vmul.f32 %v2939, %v3011
      %3036 = vrot.lane.b32.xlu0 %v3020, 32
      %v3037 = vpop.permute.xlu0 %3036
      %3038 = vrot.lane.b32.xlu0 %v3021, 32
      %v3039 = vpop.permute.xlu0 %3038
      %3040 = vrot.lane.b32.xlu0 %v3022, 32
      %v3041 = vpop.permute.xlu0 %3040
      %3042 = vrot.lane.b32.xlu0 %v3023, 32
      %v3043 = vpop.permute.xlu0 %3042
      %3044 = vrot.lane.b32.xlu0 %v3024, 32
      %v3045 = vpop.permute.xlu0 %3044
      %3046 = vrot.lane.b32.xlu0 %v3025, 32
      %v3047 = vpop.permute.xlu0 %3046
      %3048 = vrot.lane.b32.xlu0 %v3026, 32
      %v3049 = vpop.permute.xlu0 %3048
      %3050 = vrot.lane.b32.xlu0 %v3027, 32
      %v3051 = vpop.permute.xlu0 %3050
      %v3060 = vadd.f32 %v2980, %v3037
      %v3061 = vadd.f32 %v2981, %v3039
      %v3062 = vadd.f32 %v2982, %v3041
      %v3063 = vadd.f32 %v2983, %v3043
      %v3064 = vadd.f32 %v2984, %v3045
      %v3065 = vadd.f32 %v2985, %v3047
      %v3066 = vadd.f32 %v2986, %v3049
      %v3067 = vadd.f32 %v2987, %v3051
      %v3068 = vtanh.pop %v3060
      %v3069 = vtanh.pop %v3061
      %v3070 = vtanh.pop %v3062
      %v3071 = vtanh.pop %v3063
      %v3072 = vtanh.pop %v3064
      %v3073 = vtanh.pop %v3065
      %v3074 = vtanh.pop %v3066
      %v3075 = vtanh.pop %v3067
      %3084 = vrot.lane.b32.xlu0 %v3068, 64
      %v3085 = vpop.permute.xlu0 %3084
      %3086 = vrot.lane.b32.xlu0 %v3069, 64
      %v3087 = vpop.permute.xlu0 %3086
      %3088 = vrot.lane.b32.xlu0 %v3070, 64
      %v3089 = vpop.permute.xlu0 %3088
      %3090 = vrot.lane.b32.xlu0 %v3071, 64
      %v3091 = vpop.permute.xlu0 %3090
      %3092 = vrot.lane.b32.xlu0 %v3072, 64
      %v3093 = vpop.permute.xlu0 %3092
      %3094 = vrot.lane.b32.xlu0 %v3073, 64
      %v3095 = vpop.permute.xlu0 %3094
      %3096 = vrot.lane.b32.xlu0 %v3074, 64
      %v3097 = vpop.permute.xlu0 %3096
      %3098 = vrot.lane.b32.xlu0 %v3075, 64
      %v3099 = vpop.permute.xlu0 %3098
      %v3108 = vmul.f32 %v2834, %v3085
      %v3109 = vmul.f32 %v2849, %v3087
      %v3110 = vmul.f32 %v2864, %v3089
      %v3111 = vmul.f32 %v2879, %v3091
      %v3112 = vmul.f32 %v2894, %v3093
      %v3113 = vmul.f32 %v2909, %v3095
      %v3114 = vmul.f32 %v2924, %v3097
      %v3115 = vmul.f32 %v2939, %v3099
      %vm3116 = vcmp.gt.s32.totalorder %v462, 5
      %v3117 = vsel %vm3116, 1, 0
      %3118 = vset.pattern.permute.xlu0 0
      %3119 = vperm.xlu0 %3118, %v3117
      %v3120 = vpop.permute.xlu0 %3119
      %vm3121 = vcmp.eq.s32.totalorder %v3120, 1
      %v3130 = vrot.slane %v3108, 5
      %v3131 = vrot.slane %v3109, 4
      %v3132 = vsel %vm1001, %v3131, %v3130
      %v3133 = vrot.slane %v3110, 3
      %v3134 = vsel %vm1004, %v3133, %v3132
      %v3135 = vrot.slane %v3111, 2
      %v3136 = vsel %vm1007, %v3135, %v3134
      %v3137 = vrot.slane %v3112, 1
      %v3138 = vsel %vm1010, %v3137, %v3136
      %v3139 = vsel %vm1013, %v3113, %v3138
      %v3140 = vrot.slane %v3114, 7
      %v3141 = vsel %vm1016, %v3140, %v3139
      %v3142 = vrot.slane %v3115, 6
      %v3143 = vsel %vm1019, %v3142, %v3141
      %3144 = vrot.lane.b32.xlu0 %v3143, 32
      %v3145 = vpop.permute.xlu0 %3144
      %v3147 = vsel %vm3121, %v3145, %v2293
      %v3156 = vrot.slane %v3060, 5
      %v3157 = vrot.slane %v3061, 4
      %v3158 = vsel %vm1001, %v3157, %v3156
      %v3159 = vrot.slane %v3062, 3
      %v3160 = vsel %vm1004, %v3159, %v3158
      %v3161 = vrot.slane %v3063, 2
      %v3162 = vsel %vm1007, %v3161, %v3160
      %v3163 = vrot.slane %v3064, 1
      %v3164 = vsel %vm1010, %v3163, %v3162
      %v3165 = vsel %vm1013, %v3065, %v3164
      %v3166 = vrot.slane %v3066, 7
      %v3167 = vsel %vm1016, %v3166, %v3165
      %v3168 = vrot.slane %v3067, 6
      %v3169 = vsel %vm1019, %v3168, %v3167
      %3170 = vrot.lane.b32.xlu0 %v3169, 96
      %v3171 = vpop.permute.xlu0 %3170
      %v3173 = vsel %vm3121, %v3171, %v2319
      %v3174 = vpack.c.bf16 %v2720, %v2720
      %v3176 = vsel %vm519, %v3174, 0
      %3178 = vmatpush.bf16.msra.mxu0 0
      %3179 = vmatpush.bf16.msra.mxu0 0
      %3180 = vmatpush.bf16.msra.mxu0 0
      %3181 = vmatpush.bf16.msra.mxu0 0
      %3182 = vmatpush.bf16.msra.mxu0 0
      %3183 = vmatpush.bf16.msra.mxu0 0
      %3184 = vmatpush.bf16.msra.mxu0 %v639
      %3185 = vmatpush.bf16.msra.mxu0 %v638
      %3186 = vmatmul.bf16.gmra.mxu0 %v3176
      %v3187 = vpop.f32.mrf.mxu0
      %v3188 = vadd.f32 0.0, %v3187
      %v3189 = vpop.f32.mrf.mxu0
      %3190 = vdwg.mxu0
      %v3192 = vrot.slane %v3188, 5
      %v3193 = vrot.slane %v3188, 6
      %v3194 = vrot.slane %v3188, 7
      %v3195 = vrot.slane %v3188, 1
      %v3196 = vrot.slane %v3188, 2
      %v3197 = vrot.slane %v3188, 3
      %v3198 = vrot.slane %v3188, 4
      %v3207 = vadd.f32 %v658, %v3192
      %v3208 = vadd.f32 %v659, %v3193
      %v3209 = vadd.f32 %v660, %v3194
      %v3210 = vadd.f32 %v661, %v3188
      %v3211 = vadd.f32 %v662, %v3195
      %v3212 = vadd.f32 %v663, %v3196
      %v3213 = vadd.f32 %v664, %v3197
      %v3214 = vadd.f32 %v665, %v3198
      %v3215 = vxor.u32 %v3207, 2147483648
      %v3216 = vxor.u32 %v3208, 2147483648
      %v3217 = vxor.u32 %v3209, 2147483648
      %v3218 = vxor.u32 %v3210, 2147483648
      %v3219 = vxor.u32 %v3211, 2147483648
      %v3220 = vxor.u32 %v3212, 2147483648
      %v3221 = vxor.u32 %v3213, 2147483648
      %v3222 = vxor.u32 %v3214, 2147483648
      %v3223 = vmul.f32 %v3215, 1.442695
      %v3224 = vpow.pop %v3223
      %v3225 = vmul.f32 %v3216, 1.442695
      %v3226 = vpow.pop %v3225
      %v3227 = vmul.f32 %v3217, 1.442695
      %v3228 = vpow.pop %v3227
      %v3229 = vmul.f32 %v3218, 1.442695
      %v3230 = vpow.pop %v3229
      %v3231 = vmul.f32 %v3219, 1.442695
      %v3232 = vpow.pop %v3231
      %v3233 = vmul.f32 %v3220, 1.442695
      %v3234 = vpow.pop %v3233
      %v3235 = vmul.f32 %v3221, 1.442695
      %v3236 = vpow.pop %v3235
      %v3237 = vmul.f32 %v3222, 1.442695
      %v3238 = vpow.pop %v3237
      %v3239 = vadd.f32 %v3224, 1.0
      %v3240 = vadd.f32 %v3226, 1.0
      %v3241 = vadd.f32 %v3228, 1.0
      %v3242 = vadd.f32 %v3230, 1.0
      %v3243 = vadd.f32 %v3232, 1.0
      %v3244 = vadd.f32 %v3234, 1.0
      %v3245 = vadd.f32 %v3236, 1.0
      %v3246 = vadd.f32 %v3238, 1.0
      %v3247 = vrcp.pop %v3239
      %v3248 = vmul.f32 %v3239, %v3247
      %v3249 = vsub.f32 1.0, %v3248
      %v3250 = vmul.f32 %v3247, %v3249
      %v3251 = vadd.f32 %v3247, %v3250
      %vm3252 = vweird.f32 %v3239
      %vm3253 = vweird.f32 %v3247
      %vm3254 = vmor %vm3252, %vm3253
      %v3255 = vsel %vm3254, %v3247, %v3251
      %v3256 = vand.u32 2147483647, %v3239
      %vm3257 = vcmp.eq.f32.partialorder %v3256, 8.507059e+37
      %v3258 = vand.u32 %v3239, 2147483648
      %v3259 = vor.u32 1.1754944e-38, %v3258
      %v3260 = vsel %vm3257, %v3259, %v3255
      %v3261 = vmul.f32 1.0, %v3260
      %v3262 = vrcp.pop %v3240
      %v3263 = vmul.f32 %v3240, %v3262
      %v3264 = vsub.f32 1.0, %v3263
      %v3265 = vmul.f32 %v3262, %v3264
      %v3266 = vadd.f32 %v3262, %v3265
      %vm3267 = vweird.f32 %v3240
      %vm3268 = vweird.f32 %v3262
      %vm3269 = vmor %vm3267, %vm3268
      %v3270 = vsel %vm3269, %v3262, %v3266
      %v3271 = vand.u32 2147483647, %v3240
      %vm3272 = vcmp.eq.f32.partialorder %v3271, 8.507059e+37
      %v3273 = vand.u32 %v3240, 2147483648
      %v3274 = vor.u32 1.1754944e-38, %v3273
      %v3275 = vsel %vm3272, %v3274, %v3270
      %v3276 = vmul.f32 1.0, %v3275
      %v3277 = vrcp.pop %v3241
      %v3278 = vmul.f32 %v3241, %v3277
      %v3279 = vsub.f32 1.0, %v3278
      %v3280 = vmul.f32 %v3277, %v3279
      %v3281 = vadd.f32 %v3277, %v3280
      %vm3282 = vweird.f32 %v3241
      %vm3283 = vweird.f32 %v3277
      %vm3284 = vmor %vm3282, %vm3283
      %v3285 = vsel %vm3284, %v3277, %v3281
      %v3286 = vand.u32 2147483647, %v3241
      %vm3287 = vcmp.eq.f32.partialorder %v3286, 8.507059e+37
      %v3288 = vand.u32 %v3241, 2147483648
      %v3289 = vor.u32 1.1754944e-38, %v3288
      %v3290 = vsel %vm3287, %v3289, %v3285
      %v3291 = vmul.f32 1.0, %v3290
      %v3292 = vrcp.pop %v3242
      %v3293 = vmul.f32 %v3242, %v3292
      %v3294 = vsub.f32 1.0, %v3293
      %v3295 = vmul.f32 %v3292, %v3294
      %v3296 = vadd.f32 %v3292, %v3295
      %vm3297 = vweird.f32 %v3242
      %vm3298 = vweird.f32 %v3292
      %vm3299 = vmor %vm3297, %vm3298
      %v3300 = vsel %vm3299, %v3292, %v3296
      %v3301 = vand.u32 2147483647, %v3242
      %vm3302 = vcmp.eq.f32.partialorder %v3301, 8.507059e+37
      %v3303 = vand.u32 %v3242, 2147483648
      %v3304 = vor.u32 1.1754944e-38, %v3303
      %v3305 = vsel %vm3302, %v3304, %v3300
      %v3306 = vmul.f32 1.0, %v3305
      %v3307 = vrcp.pop %v3243
      %v3308 = vmul.f32 %v3243, %v3307
      %v3309 = vsub.f32 1.0, %v3308
      %v3310 = vmul.f32 %v3307, %v3309
      %v3311 = vadd.f32 %v3307, %v3310
      %vm3312 = vweird.f32 %v3243
      %vm3313 = vweird.f32 %v3307
      %vm3314 = vmor %vm3312, %vm3313
      %v3315 = vsel %vm3314, %v3307, %v3311
      %v3316 = vand.u32 2147483647, %v3243
      %vm3317 = vcmp.eq.f32.partialorder %v3316, 8.507059e+37
      %v3318 = vand.u32 %v3243, 2147483648
      %v3319 = vor.u32 1.1754944e-38, %v3318
      %v3320 = vsel %vm3317, %v3319, %v3315
      %v3321 = vmul.f32 1.0, %v3320
      %v3322 = vrcp.pop %v3244
      %v3323 = vmul.f32 %v3244, %v3322
      %v3324 = vsub.f32 1.0, %v3323
      %v3325 = vmul.f32 %v3322, %v3324
      %v3326 = vadd.f32 %v3322, %v3325
      %vm3327 = vweird.f32 %v3244
      %vm3328 = vweird.f32 %v3322
      %vm3329 = vmor %vm3327, %vm3328
      %v3330 = vsel %vm3329, %v3322, %v3326
      %v3331 = vand.u32 2147483647, %v3244
      %vm3332 = vcmp.eq.f32.partialorder %v3331, 8.507059e+37
      %v3333 = vand.u32 %v3244, 2147483648
      %v3334 = vor.u32 1.1754944e-38, %v3333
      %v3335 = vsel %vm3332, %v3334, %v3330
      %v3336 = vmul.f32 1.0, %v3335
      %v3337 = vrcp.pop %v3245
      %v3338 = vmul.f32 %v3245, %v3337
      %v3339 = vsub.f32 1.0, %v3338
      %v3340 = vmul.f32 %v3337, %v3339
      %v3341 = vadd.f32 %v3337, %v3340
      %vm3342 = vweird.f32 %v3245
      %vm3343 = vweird.f32 %v3337
      %vm3344 = vmor %vm3342, %vm3343
      %v3345 = vsel %vm3344, %v3337, %v3341
      %v3346 = vand.u32 2147483647, %v3245
      %vm3347 = vcmp.eq.f32.partialorder %v3346, 8.507059e+37
      %v3348 = vand.u32 %v3245, 2147483648
      %v3349 = vor.u32 1.1754944e-38, %v3348
      %v3350 = vsel %vm3347, %v3349, %v3345
      %v3351 = vmul.f32 1.0, %v3350
      %v3352 = vrcp.pop %v3246
      %v3353 = vmul.f32 %v3246, %v3352
      %v3354 = vsub.f32 1.0, %v3353
      %v3355 = vmul.f32 %v3352, %v3354
      %v3356 = vadd.f32 %v3352, %v3355
      %vm3357 = vweird.f32 %v3246
      %vm3358 = vweird.f32 %v3352
      %vm3359 = vmor %vm3357, %vm3358
      %v3360 = vsel %vm3359, %v3352, %v3356
      %v3361 = vand.u32 2147483647, %v3246
      %vm3362 = vcmp.eq.f32.partialorder %v3361, 8.507059e+37
      %v3363 = vand.u32 %v3246, 2147483648
      %v3364 = vor.u32 1.1754944e-38, %v3363
      %v3365 = vsel %vm3362, %v3364, %v3360
      %v3366 = vmul.f32 1.0, %v3365
      %v3367 = vtanh.pop %v3207
      %v3368 = vtanh.pop %v3208
      %v3369 = vtanh.pop %v3209
      %v3370 = vtanh.pop %v3210
      %v3371 = vtanh.pop %v3211
      %v3372 = vtanh.pop %v3212
      %v3373 = vtanh.pop %v3213
      %v3374 = vtanh.pop %v3214
      %v3376 = vrot.slane %v2746, 5
      %v3377 = vrot.slane %v2746, 6
      %v3378 = vrot.slane %v2746, 7
      %v3379 = vrot.slane %v2746, 1
      %v3380 = vrot.slane %v2746, 2
      %v3381 = vrot.slane %v2746, 3
      %v3382 = vrot.slane %v2746, 4
      %3383 = vrot.lane.b32.xlu0 %v3376, 32
      %v3384 = vpop.permute.xlu0 %3383
      %3385 = vrot.lane.b32.xlu0 %v3377, 32
      %v3386 = vpop.permute.xlu0 %3385
      %3387 = vrot.lane.b32.xlu0 %v3378, 32
      %v3388 = vpop.permute.xlu0 %3387
      %3389 = vrot.lane.b32.xlu0 %v2746, 32
      %v3390 = vpop.permute.xlu0 %3389
      %3391 = vrot.lane.b32.xlu0 %v3379, 32
      %v3392 = vpop.permute.xlu0 %3391
      %3393 = vrot.lane.b32.xlu0 %v3380, 32
      %v3394 = vpop.permute.xlu0 %3393
      %3395 = vrot.lane.b32.xlu0 %v3381, 32
      %v3396 = vpop.permute.xlu0 %3395
      %3397 = vrot.lane.b32.xlu0 %v3382, 32
      %v3398 = vpop.permute.xlu0 %3397
      %v3407 = vmul.f32 %v3261, %v3384
      %v3408 = vmul.f32 %v3276, %v3386
      %v3409 = vmul.f32 %v3291, %v3388
      %v3410 = vmul.f32 %v3306, %v3390
      %v3411 = vmul.f32 %v3321, %v3392
      %v3412 = vmul.f32 %v3336, %v3394
      %v3413 = vmul.f32 %v3351, %v3396
      %v3414 = vmul.f32 %v3366, %v3398
      %3423 = vrot.lane.b32.xlu0 %v3367, 64
      %v3424 = vpop.permute.xlu0 %3423
      %3425 = vrot.lane.b32.xlu0 %v3368, 64
      %v3426 = vpop.permute.xlu0 %3425
      %3427 = vrot.lane.b32.xlu0 %v3369, 64
      %v3428 = vpop.permute.xlu0 %3427
      %3429 = vrot.lane.b32.xlu0 %v3370, 64
      %v3430 = vpop.permute.xlu0 %3429
      %3431 = vrot.lane.b32.xlu0 %v3371, 64
      %v3432 = vpop.permute.xlu0 %3431
      %3433 = vrot.lane.b32.xlu0 %v3372, 64
      %v3434 = vpop.permute.xlu0 %3433
      %3435 = vrot.lane.b32.xlu0 %v3373, 64
      %v3436 = vpop.permute.xlu0 %3435
      %3437 = vrot.lane.b32.xlu0 %v3374, 64
      %v3438 = vpop.permute.xlu0 %3437
      %v3447 = vmul.f32 %v3261, %v3424
      %v3448 = vmul.f32 %v3276, %v3426
      %v3449 = vmul.f32 %v3291, %v3428
      %v3450 = vmul.f32 %v3306, %v3430
      %v3451 = vmul.f32 %v3321, %v3432
      %v3452 = vmul.f32 %v3336, %v3434
      %v3453 = vmul.f32 %v3351, %v3436
      %v3454 = vmul.f32 %v3366, %v3438
      %3463 = vrot.lane.b32.xlu0 %v3447, 32
      %v3464 = vpop.permute.xlu0 %3463
      %3465 = vrot.lane.b32.xlu0 %v3448, 32
      %v3466 = vpop.permute.xlu0 %3465
      %3467 = vrot.lane.b32.xlu0 %v3449, 32
      %v3468 = vpop.permute.xlu0 %3467
      %3469 = vrot.lane.b32.xlu0 %v3450, 32
      %v3470 = vpop.permute.xlu0 %3469
      %3471 = vrot.lane.b32.xlu0 %v3451, 32
      %v3472 = vpop.permute.xlu0 %3471
      %3473 = vrot.lane.b32.xlu0 %v3452, 32
      %v3474 = vpop.permute.xlu0 %3473
      %3475 = vrot.lane.b32.xlu0 %v3453, 32
      %v3476 = vpop.permute.xlu0 %3475
      %3477 = vrot.lane.b32.xlu0 %v3454, 32
      %v3478 = vpop.permute.xlu0 %3477
      %v3487 = vadd.f32 %v3407, %v3464
      %v3488 = vadd.f32 %v3408, %v3466
      %v3489 = vadd.f32 %v3409, %v3468
      %v3490 = vadd.f32 %v3410, %v3470
      %v3491 = vadd.f32 %v3411, %v3472
      %v3492 = vadd.f32 %v3412, %v3474
      %v3493 = vadd.f32 %v3413, %v3476
      %v3494 = vadd.f32 %v3414, %v3478
      %v3495 = vtanh.pop %v3487
      %v3496 = vtanh.pop %v3488
      %v3497 = vtanh.pop %v3489
      %v3498 = vtanh.pop %v3490
      %v3499 = vtanh.pop %v3491
      %v3500 = vtanh.pop %v3492
      %v3501 = vtanh.pop %v3493
      %v3502 = vtanh.pop %v3494
      %3511 = vrot.lane.b32.xlu0 %v3495, 64
      %v3512 = vpop.permute.xlu0 %3511
      %3513 = vrot.lane.b32.xlu0 %v3496, 64
      %v3514 = vpop.permute.xlu0 %3513
      %3515 = vrot.lane.b32.xlu0 %v3497, 64
      %v3516 = vpop.permute.xlu0 %3515
      %3517 = vrot.lane.b32.xlu0 %v3498, 64
      %v3518 = vpop.permute.xlu0 %3517
      %3519 = vrot.lane.b32.xlu0 %v3499, 64
      %v3520 = vpop.permute.xlu0 %3519
      %3521 = vrot.lane.b32.xlu0 %v3500, 64
      %v3522 = vpop.permute.xlu0 %3521
      %3523 = vrot.lane.b32.xlu0 %v3501, 64
      %v3524 = vpop.permute.xlu0 %3523
      %3525 = vrot.lane.b32.xlu0 %v3502, 64
      %v3526 = vpop.permute.xlu0 %3525
      %v3535 = vmul.f32 %v3261, %v3512
      %v3536 = vmul.f32 %v3276, %v3514
      %v3537 = vmul.f32 %v3291, %v3516
      %v3538 = vmul.f32 %v3306, %v3518
      %v3539 = vmul.f32 %v3321, %v3520
      %v3540 = vmul.f32 %v3336, %v3522
      %v3541 = vmul.f32 %v3351, %v3524
      %v3542 = vmul.f32 %v3366, %v3526
      %vm3543 = vcmp.gt.s32.totalorder %v462, 3
      %v3544 = vsel %vm3543, 1, 0
      %3545 = vset.pattern.permute.xlu0 0
      %3546 = vperm.xlu0 %3545, %v3544
      %v3547 = vpop.permute.xlu0 %3546
      %vm3548 = vcmp.eq.s32.totalorder %v3547, 1
      %v3557 = vrot.slane %v3535, 3
      %v3558 = vrot.slane %v3536, 2
      %v3559 = vsel %vm1001, %v3558, %v3557
      %v3560 = vrot.slane %v3537, 1
      %v3561 = vsel %vm1004, %v3560, %v3559
      %v3562 = vsel %vm1007, %v3538, %v3561
      %v3563 = vrot.slane %v3539, 7
      %v3564 = vsel %vm1010, %v3563, %v3562
      %v3565 = vrot.slane %v3540, 6
      %v3566 = vsel %vm1013, %v3565, %v3564
      %v3567 = vrot.slane %v3541, 5
      %v3568 = vsel %vm1016, %v3567, %v3566
      %v3569 = vrot.slane %v3542, 4
      %v3570 = vsel %vm1019, %v3569, %v3568
      %3571 = vrot.lane.b32.xlu0 %v3570, 32
      %v3572 = vpop.permute.xlu0 %3571
      %v3574 = vsel %vm3548, %v3572, %v2720
      %v3583 = vrot.slane %v3487, 3
      %v3584 = vrot.slane %v3488, 2
      %v3585 = vsel %vm1001, %v3584, %v3583
      %v3586 = vrot.slane %v3489, 1
      %v3587 = vsel %vm1004, %v3586, %v3585
      %v3588 = vsel %vm1007, %v3490, %v3587
      %v3589 = vrot.slane %v3491, 7
      %v3590 = vsel %vm1010, %v3589, %v3588
      %v3591 = vrot.slane %v3492, 6
      %v3592 = vsel %vm1013, %v3591, %v3590
      %v3593 = vrot.slane %v3493, 5
      %v3594 = vsel %vm1016, %v3593, %v3592
      %v3595 = vrot.slane %v3494, 4
      %v3596 = vsel %vm1019, %v3595, %v3594
      %3597 = vrot.lane.b32.xlu0 %v3596, 96
      %v3598 = vpop.permute.xlu0 %3597
      %v3600 = vsel %vm3548, %v3598, %v2746
      %v3601 = vpack.c.bf16 %v3147, %v3147
      %v3603 = vsel %vm519, %v3601, 0
      %3605 = vmatpush.bf16.msra.mxu0 0
      %3606 = vmatpush.bf16.msra.mxu0 0
      %3607 = vmatpush.bf16.msra.mxu0 0
      %3608 = vmatpush.bf16.msra.mxu0 0
      %3609 = vmatpush.bf16.msra.mxu0 0
      %3610 = vmatpush.bf16.msra.mxu0 0
      %3611 = vmatpush.bf16.msra.mxu0 %v1064
      %3612 = vmatpush.bf16.msra.mxu0 %v1063
      %3613 = vmatmul.bf16.gmra.mxu0 %v3603
      %v3614 = vpop.f32.mrf.mxu0
      %v3615 = vadd.f32 0.0, %v3614
      %v3616 = vpop.f32.mrf.mxu0
      %3617 = vdwg.mxu0
      %v3619 = vrot.slane %v3615, 4
      %v3620 = vrot.slane %v3615, 5
      %v3621 = vrot.slane %v3615, 6
      %v3622 = vrot.slane %v3615, 7
      %v3623 = vrot.slane %v3615, 1
      %v3624 = vrot.slane %v3615, 2
      %v3625 = vrot.slane %v3615, 3
      %v3634 = vadd.f32 %v1080, %v3619
      %v3635 = vadd.f32 %v1081, %v3620
      %v3636 = vadd.f32 %v1082, %v3621
      %v3637 = vadd.f32 %v1083, %v3622
      %v3638 = vadd.f32 %v1084, %v3615
      %v3639 = vadd.f32 %v1085, %v3623
      %v3640 = vadd.f32 %v1086, %v3624
      %v3641 = vadd.f32 %v1087, %v3625
      %v3642 = vxor.u32 %v3634, 2147483648
      %v3643 = vxor.u32 %v3635, 2147483648
      %v3644 = vxor.u32 %v3636, 2147483648
      %v3645 = vxor.u32 %v3637, 2147483648
      %v3646 = vxor.u32 %v3638, 2147483648
      %v3647 = vxor.u32 %v3639, 2147483648
      %v3648 = vxor.u32 %v3640, 2147483648
      %v3649 = vxor.u32 %v3641, 2147483648
      %v3650 = vmul.f32 %v3642, 1.442695
      %v3651 = vpow.pop %v3650
      %v3652 = vmul.f32 %v3643, 1.442695
      %v3653 = vpow.pop %v3652
      %v3654 = vmul.f32 %v3644, 1.442695
      %v3655 = vpow.pop %v3654
      %v3656 = vmul.f32 %v3645, 1.442695
      %v3657 = vpow.pop %v3656
      %v3658 = vmul.f32 %v3646, 1.442695
      %v3659 = vpow.pop %v3658
      %v3660 = vmul.f32 %v3647, 1.442695
      %v3661 = vpow.pop %v3660
      %v3662 = vmul.f32 %v3648, 1.442695
      %v3663 = vpow.pop %v3662
      %v3664 = vmul.f32 %v3649, 1.442695
      %v3665 = vpow.pop %v3664
      %v3666 = vadd.f32 %v3651, 1.0
      %v3667 = vadd.f32 %v3653, 1.0
      %v3668 = vadd.f32 %v3655, 1.0
      %v3669 = vadd.f32 %v3657, 1.0
      %v3670 = vadd.f32 %v3659, 1.0
      %v3671 = vadd.f32 %v3661, 1.0
      %v3672 = vadd.f32 %v3663, 1.0
      %v3673 = vadd.f32 %v3665, 1.0
      %v3674 = vrcp.pop %v3666
      %v3675 = vmul.f32 %v3666, %v3674
      %v3676 = vsub.f32 1.0, %v3675
      %v3677 = vmul.f32 %v3674, %v3676
      %v3678 = vadd.f32 %v3674, %v3677
      %vm3679 = vweird.f32 %v3666
      %vm3680 = vweird.f32 %v3674
      %vm3681 = vmor %vm3679, %vm3680
      %v3682 = vsel %vm3681, %v3674, %v3678
      %v3683 = vand.u32 2147483647, %v3666
      %vm3684 = vcmp.eq.f32.partialorder %v3683, 8.507059e+37
      %v3685 = vand.u32 %v3666, 2147483648
      %v3686 = vor.u32 1.1754944e-38, %v3685
      %v3687 = vsel %vm3684, %v3686, %v3682
      %v3688 = vmul.f32 1.0, %v3687
      %v3689 = vrcp.pop %v3667
      %v3690 = vmul.f32 %v3667, %v3689
      %v3691 = vsub.f32 1.0, %v3690
      %v3692 = vmul.f32 %v3689, %v3691
      %v3693 = vadd.f32 %v3689, %v3692
      %vm3694 = vweird.f32 %v3667
      %vm3695 = vweird.f32 %v3689
      %vm3696 = vmor %vm3694, %vm3695
      %v3697 = vsel %vm3696, %v3689, %v3693
      %v3698 = vand.u32 2147483647, %v3667
      %vm3699 = vcmp.eq.f32.partialorder %v3698, 8.507059e+37
      %v3700 = vand.u32 %v3667, 2147483648
      %v3701 = vor.u32 1.1754944e-38, %v3700
      %v3702 = vsel %vm3699, %v3701, %v3697
      %v3703 = vmul.f32 1.0, %v3702
      %v3704 = vrcp.pop %v3668
      %v3705 = vmul.f32 %v3668, %v3704
      %v3706 = vsub.f32 1.0, %v3705
      %v3707 = vmul.f32 %v3704, %v3706
      %v3708 = vadd.f32 %v3704, %v3707
      %vm3709 = vweird.f32 %v3668
      %vm3710 = vweird.f32 %v3704
      %vm3711 = vmor %vm3709, %vm3710
      %v3712 = vsel %vm3711, %v3704, %v3708
      %v3713 = vand.u32 2147483647, %v3668
      %vm3714 = vcmp.eq.f32.partialorder %v3713, 8.507059e+37
      %v3715 = vand.u32 %v3668, 2147483648
      %v3716 = vor.u32 1.1754944e-38, %v3715
      %v3717 = vsel %vm3714, %v3716, %v3712
      %v3718 = vmul.f32 1.0, %v3717
      %v3719 = vrcp.pop %v3669
      %v3720 = vmul.f32 %v3669, %v3719
      %v3721 = vsub.f32 1.0, %v3720
      %v3722 = vmul.f32 %v3719, %v3721
      %v3723 = vadd.f32 %v3719, %v3722
      %vm3724 = vweird.f32 %v3669
      %vm3725 = vweird.f32 %v3719
      %vm3726 = vmor %vm3724, %vm3725
      %v3727 = vsel %vm3726, %v3719, %v3723
      %v3728 = vand.u32 2147483647, %v3669
      %vm3729 = vcmp.eq.f32.partialorder %v3728, 8.507059e+37
      %v3730 = vand.u32 %v3669, 2147483648
      %v3731 = vor.u32 1.1754944e-38, %v3730
      %v3732 = vsel %vm3729, %v3731, %v3727
      %v3733 = vmul.f32 1.0, %v3732
      %v3734 = vrcp.pop %v3670
      %v3735 = vmul.f32 %v3670, %v3734
      %v3736 = vsub.f32 1.0, %v3735
      %v3737 = vmul.f32 %v3734, %v3736
      %v3738 = vadd.f32 %v3734, %v3737
      %vm3739 = vweird.f32 %v3670
      %vm3740 = vweird.f32 %v3734
      %vm3741 = vmor %vm3739, %vm3740
      %v3742 = vsel %vm3741, %v3734, %v3738
      %v3743 = vand.u32 2147483647, %v3670
      %vm3744 = vcmp.eq.f32.partialorder %v3743, 8.507059e+37
      %v3745 = vand.u32 %v3670, 2147483648
      %v3746 = vor.u32 1.1754944e-38, %v3745
      %v3747 = vsel %vm3744, %v3746, %v3742
      %v3748 = vmul.f32 1.0, %v3747
      %v3749 = vrcp.pop %v3671
      %v3750 = vmul.f32 %v3671, %v3749
      %v3751 = vsub.f32 1.0, %v3750
      %v3752 = vmul.f32 %v3749, %v3751
      %v3753 = vadd.f32 %v3749, %v3752
      %vm3754 = vweird.f32 %v3671
      %vm3755 = vweird.f32 %v3749
      %vm3756 = vmor %vm3754, %vm3755
      %v3757 = vsel %vm3756, %v3749, %v3753
      %v3758 = vand.u32 2147483647, %v3671
      %vm3759 = vcmp.eq.f32.partialorder %v3758, 8.507059e+37
      %v3760 = vand.u32 %v3671, 2147483648
      %v3761 = vor.u32 1.1754944e-38, %v3760
      %v3762 = vsel %vm3759, %v3761, %v3757
      %v3763 = vmul.f32 1.0, %v3762
      %v3764 = vrcp.pop %v3672
      %v3765 = vmul.f32 %v3672, %v3764
      %v3766 = vsub.f32 1.0, %v3765
      %v3767 = vmul.f32 %v3764, %v3766
      %v3768 = vadd.f32 %v3764, %v3767
      %vm3769 = vweird.f32 %v3672
      %vm3770 = vweird.f32 %v3764
      %vm3771 = vmor %vm3769, %vm3770
      %v3772 = vsel %vm3771, %v3764, %v3768
      %v3773 = vand.u32 2147483647, %v3672
      %vm3774 = vcmp.eq.f32.partialorder %v3773, 8.507059e+37
      %v3775 = vand.u32 %v3672, 2147483648
      %v3776 = vor.u32 1.1754944e-38, %v3775
      %v3777 = vsel %vm3774, %v3776, %v3772
      %v3778 = vmul.f32 1.0, %v3777
      %v3779 = vrcp.pop %v3673
      %v3780 = vmul.f32 %v3673, %v3779
      %v3781 = vsub.f32 1.0, %v3780
      %v3782 = vmul.f32 %v3779, %v3781
      %v3783 = vadd.f32 %v3779, %v3782
      %vm3784 = vweird.f32 %v3673
      %vm3785 = vweird.f32 %v3779
      %vm3786 = vmor %vm3784, %vm3785
      %v3787 = vsel %vm3786, %v3779, %v3783
      %v3788 = vand.u32 2147483647, %v3673
      %vm3789 = vcmp.eq.f32.partialorder %v3788, 8.507059e+37
      %v3790 = vand.u32 %v3673, 2147483648
      %v3791 = vor.u32 1.1754944e-38, %v3790
      %v3792 = vsel %vm3789, %v3791, %v3787
      %v3793 = vmul.f32 1.0, %v3792
      %v3794 = vtanh.pop %v3634
      %v3795 = vtanh.pop %v3635
      %v3796 = vtanh.pop %v3636
      %v3797 = vtanh.pop %v3637
      %v3798 = vtanh.pop %v3638
      %v3799 = vtanh.pop %v3639
      %v3800 = vtanh.pop %v3640
      %v3801 = vtanh.pop %v3641
      %v3803 = vrot.slane %v3173, 4
      %v3804 = vrot.slane %v3173, 5
      %v3805 = vrot.slane %v3173, 6
      %v3806 = vrot.slane %v3173, 7
      %v3807 = vrot.slane %v3173, 1
      %v3808 = vrot.slane %v3173, 2
      %v3809 = vrot.slane %v3173, 3
      %3810 = vrot.lane.b32.xlu0 %v3803, 32
      %v3811 = vpop.permute.xlu0 %3810
      %3812 = vrot.lane.b32.xlu0 %v3804, 32
      %v3813 = vpop.permute.xlu0 %3812
      %3814 = vrot.lane.b32.xlu0 %v3805, 32
      %v3815 = vpop.permute.xlu0 %3814
      %3816 = vrot.lane.b32.xlu0 %v3806, 32
      %v3817 = vpop.permute.xlu0 %3816
      %3818 = vrot.lane.b32.xlu0 %v3173, 32
      %v3819 = vpop.permute.xlu0 %3818
      %3820 = vrot.lane.b32.xlu0 %v3807, 32
      %v3821 = vpop.permute.xlu0 %3820
      %3822 = vrot.lane.b32.xlu0 %v3808, 32
      %v3823 = vpop.permute.xlu0 %3822
      %3824 = vrot.lane.b32.xlu0 %v3809, 32
      %v3825 = vpop.permute.xlu0 %3824
      %v3834 = vmul.f32 %v3688, %v3811
      %v3835 = vmul.f32 %v3703, %v3813
      %v3836 = vmul.f32 %v3718, %v3815
      %v3837 = vmul.f32 %v3733, %v3817
      %v3838 = vmul.f32 %v3748, %v3819
      %v3839 = vmul.f32 %v3763, %v3821
      %v3840 = vmul.f32 %v3778, %v3823
      %v3841 = vmul.f32 %v3793, %v3825
      %3850 = vrot.lane.b32.xlu0 %v3794, 64
      %v3851 = vpop.permute.xlu0 %3850
      %3852 = vrot.lane.b32.xlu0 %v3795, 64
      %v3853 = vpop.permute.xlu0 %3852
      %3854 = vrot.lane.b32.xlu0 %v3796, 64
      %v3855 = vpop.permute.xlu0 %3854
      %3856 = vrot.lane.b32.xlu0 %v3797, 64
      %v3857 = vpop.permute.xlu0 %3856
      %3858 = vrot.lane.b32.xlu0 %v3798, 64
      %v3859 = vpop.permute.xlu0 %3858
      %3860 = vrot.lane.b32.xlu0 %v3799, 64
      %v3861 = vpop.permute.xlu0 %3860
      %3862 = vrot.lane.b32.xlu0 %v3800, 64
      %v3863 = vpop.permute.xlu0 %3862
      %3864 = vrot.lane.b32.xlu0 %v3801, 64
      %v3865 = vpop.permute.xlu0 %3864
      %v3874 = vmul.f32 %v3688, %v3851
      %v3875 = vmul.f32 %v3703, %v3853
      %v3876 = vmul.f32 %v3718, %v3855
      %v3877 = vmul.f32 %v3733, %v3857
      %v3878 = vmul.f32 %v3748, %v3859
      %v3879 = vmul.f32 %v3763, %v3861
      %v3880 = vmul.f32 %v3778, %v3863
      %v3881 = vmul.f32 %v3793, %v3865
      %3890 = vrot.lane.b32.xlu0 %v3874, 32
      %v3891 = vpop.permute.xlu0 %3890
      %3892 = vrot.lane.b32.xlu0 %v3875, 32
      %v3893 = vpop.permute.xlu0 %3892
      %3894 = vrot.lane.b32.xlu0 %v3876, 32
      %v3895 = vpop.permute.xlu0 %3894
      %3896 = vrot.lane.b32.xlu0 %v3877, 32
      %v3897 = vpop.permute.xlu0 %3896
      %3898 = vrot.lane.b32.xlu0 %v3878, 32
      %v3899 = vpop.permute.xlu0 %3898
      %3900 = vrot.lane.b32.xlu0 %v3879, 32
      %v3901 = vpop.permute.xlu0 %3900
      %3902 = vrot.lane.b32.xlu0 %v3880, 32
      %v3903 = vpop.permute.xlu0 %3902
      %3904 = vrot.lane.b32.xlu0 %v3881, 32
      %v3905 = vpop.permute.xlu0 %3904
      %v3914 = vadd.f32 %v3834, %v3891
      %v3915 = vadd.f32 %v3835, %v3893
      %v3916 = vadd.f32 %v3836, %v3895
      %v3917 = vadd.f32 %v3837, %v3897
      %v3918 = vadd.f32 %v3838, %v3899
      %v3919 = vadd.f32 %v3839, %v3901
      %v3920 = vadd.f32 %v3840, %v3903
      %v3921 = vadd.f32 %v3841, %v3905
      %v3922 = vtanh.pop %v3914
      %v3923 = vtanh.pop %v3915
      %v3924 = vtanh.pop %v3916
      %v3925 = vtanh.pop %v3917
      %v3926 = vtanh.pop %v3918
      %v3927 = vtanh.pop %v3919
      %v3928 = vtanh.pop %v3920
      %v3929 = vtanh.pop %v3921
      %3938 = vrot.lane.b32.xlu0 %v3922, 64
      %v3939 = vpop.permute.xlu0 %3938
      %3940 = vrot.lane.b32.xlu0 %v3923, 64
      %v3941 = vpop.permute.xlu0 %3940
      %3942 = vrot.lane.b32.xlu0 %v3924, 64
      %v3943 = vpop.permute.xlu0 %3942
      %3944 = vrot.lane.b32.xlu0 %v3925, 64
      %v3945 = vpop.permute.xlu0 %3944
      %3946 = vrot.lane.b32.xlu0 %v3926, 64
      %v3947 = vpop.permute.xlu0 %3946
      %3948 = vrot.lane.b32.xlu0 %v3927, 64
      %v3949 = vpop.permute.xlu0 %3948
      %3950 = vrot.lane.b32.xlu0 %v3928, 64
      %v3951 = vpop.permute.xlu0 %3950
      %3952 = vrot.lane.b32.xlu0 %v3929, 64
      %v3953 = vpop.permute.xlu0 %3952
      %v3962 = vmul.f32 %v3688, %v3939
      %v3963 = vmul.f32 %v3703, %v3941
      %v3964 = vmul.f32 %v3718, %v3943
      %v3965 = vmul.f32 %v3733, %v3945
      %v3966 = vmul.f32 %v3748, %v3947
      %v3967 = vmul.f32 %v3763, %v3949
      %v3968 = vmul.f32 %v3778, %v3951
      %v3969 = vmul.f32 %v3793, %v3953
      %vm3970 = vcmp.gt.s32.totalorder %v462, 4
      %v3971 = vsel %vm3970, 1, 0
      %3972 = vset.pattern.permute.xlu0 0
      %3973 = vperm.xlu0 %3972, %v3971
      %v3974 = vpop.permute.xlu0 %3973
      %vm3975 = vcmp.eq.s32.totalorder %v3974, 1
      %v3984 = vrot.slane %v3962, 4
      %v3985 = vrot.slane %v3963, 3
      %v3986 = vsel %vm1001, %v3985, %v3984
      %v3987 = vrot.slane %v3964, 2
      %v3988 = vsel %vm1004, %v3987, %v3986
      %v3989 = vrot.slane %v3965, 1
      %v3990 = vsel %vm1007, %v3989, %v3988
      %v3991 = vsel %vm1010, %v3966, %v3990
      %v3992 = vrot.slane %v3967, 7
      %v3993 = vsel %vm1013, %v3992, %v3991
      %v3994 = vrot.slane %v3968, 6
      %v3995 = vsel %vm1016, %v3994, %v3993
      %v3996 = vrot.slane %v3969, 5
      %v3997 = vsel %vm1019, %v3996, %v3995
      %3998 = vrot.lane.b32.xlu0 %v3997, 32
      %v3999 = vpop.permute.xlu0 %3998
      %v4001 = vsel %vm3975, %v3999, %v3147
      %v4010 = vrot.slane %v3914, 4
      %v4011 = vrot.slane %v3915, 3
      %v4012 = vsel %vm1001, %v4011, %v4010
      %v4013 = vrot.slane %v3916, 2
      %v4014 = vsel %vm1004, %v4013, %v4012
      %v4015 = vrot.slane %v3917, 1
      %v4016 = vsel %vm1007, %v4015, %v4014
      %v4017 = vsel %vm1010, %v3918, %v4016
      %v4018 = vrot.slane %v3919, 7
      %v4019 = vsel %vm1013, %v4018, %v4017
      %v4020 = vrot.slane %v3920, 6
      %v4021 = vsel %vm1016, %v4020, %v4019
      %v4022 = vrot.slane %v3921, 5
      %v4023 = vsel %vm1019, %v4022, %v4021
      %4024 = vrot.lane.b32.xlu0 %v4023, 96
      %v4025 = vpop.permute.xlu0 %4024
      %v4027 = vsel %vm3975, %v4025, %v3173
      %v4028 = vpack.c.bf16 %v3574, %v3574
      %v4030 = vsel %vm519, %v4028, 0
      %4032 = vmatpush.bf16.msra.mxu0 0
      %4033 = vmatpush.bf16.msra.mxu0 0
      %4034 = vmatpush.bf16.msra.mxu0 0
      %4035 = vmatpush.bf16.msra.mxu0 0
      %4036 = vmatpush.bf16.msra.mxu0 0
      %4037 = vmatpush.bf16.msra.mxu0 0
      %4038 = vmatpush.bf16.msra.mxu0 %v639
      %4039 = vmatpush.bf16.msra.mxu0 %v638
      %4040 = vmatmul.bf16.gmra.mxu0 %v4030
      %v4041 = vpop.f32.mrf.mxu0
      %v4042 = vadd.f32 0.0, %v4041
      %v4043 = vpop.f32.mrf.mxu0
      %4044 = vdwg.mxu0
      %v4046 = vrot.slane %v4042, 4
      %v4047 = vrot.slane %v4042, 5
      %v4048 = vrot.slane %v4042, 6
      %v4049 = vrot.slane %v4042, 7
      %v4050 = vrot.slane %v4042, 1
      %v4051 = vrot.slane %v4042, 2
      %v4052 = vrot.slane %v4042, 3
      %v4061 = vadd.f32 %v658, %v4046
      %v4062 = vadd.f32 %v659, %v4047
      %v4063 = vadd.f32 %v660, %v4048
      %v4064 = vadd.f32 %v661, %v4049
      %v4065 = vadd.f32 %v662, %v4042
      %v4066 = vadd.f32 %v663, %v4050
      %v4067 = vadd.f32 %v664, %v4051
      %v4068 = vadd.f32 %v665, %v4052
      %v4069 = vxor.u32 %v4061, 2147483648
      %v4070 = vxor.u32 %v4062, 2147483648
      %v4071 = vxor.u32 %v4063, 2147483648
      %v4072 = vxor.u32 %v4064, 2147483648
      %v4073 = vxor.u32 %v4065, 2147483648
      %v4074 = vxor.u32 %v4066, 2147483648
      %v4075 = vxor.u32 %v4067, 2147483648
      %v4076 = vxor.u32 %v4068, 2147483648
      %v4077 = vmul.f32 %v4069, 1.442695
      %v4078 = vpow.pop %v4077
      %v4079 = vmul.f32 %v4070, 1.442695
      %v4080 = vpow.pop %v4079
      %v4081 = vmul.f32 %v4071, 1.442695
      %v4082 = vpow.pop %v4081
      %v4083 = vmul.f32 %v4072, 1.442695
      %v4084 = vpow.pop %v4083
      %v4085 = vmul.f32 %v4073, 1.442695
      %v4086 = vpow.pop %v4085
      %v4087 = vmul.f32 %v4074, 1.442695
      %v4088 = vpow.pop %v4087
      %v4089 = vmul.f32 %v4075, 1.442695
      %v4090 = vpow.pop %v4089
      %v4091 = vmul.f32 %v4076, 1.442695
      %v4092 = vpow.pop %v4091
      %v4093 = vadd.f32 %v4078, 1.0
      %v4094 = vadd.f32 %v4080, 1.0
      %v4095 = vadd.f32 %v4082, 1.0
      %v4096 = vadd.f32 %v4084, 1.0
      %v4097 = vadd.f32 %v4086, 1.0
      %v4098 = vadd.f32 %v4088, 1.0
      %v4099 = vadd.f32 %v4090, 1.0
      %v4100 = vadd.f32 %v4092, 1.0
      %v4101 = vrcp.pop %v4093
      %v4102 = vmul.f32 %v4093, %v4101
      %v4103 = vsub.f32 1.0, %v4102
      %v4104 = vmul.f32 %v4101, %v4103
      %v4105 = vadd.f32 %v4101, %v4104
      %vm4106 = vweird.f32 %v4093
      %vm4107 = vweird.f32 %v4101
      %vm4108 = vmor %vm4106, %vm4107
      %v4109 = vsel %vm4108, %v4101, %v4105
      %v4110 = vand.u32 2147483647, %v4093
      %vm4111 = vcmp.eq.f32.partialorder %v4110, 8.507059e+37
      %v4112 = vand.u32 %v4093, 2147483648
      %v4113 = vor.u32 1.1754944e-38, %v4112
      %v4114 = vsel %vm4111, %v4113, %v4109
      %v4115 = vmul.f32 1.0, %v4114
      %v4116 = vrcp.pop %v4094
      %v4117 = vmul.f32 %v4094, %v4116
      %v4118 = vsub.f32 1.0, %v4117
      %v4119 = vmul.f32 %v4116, %v4118
      %v4120 = vadd.f32 %v4116, %v4119
      %vm4121 = vweird.f32 %v4094
      %vm4122 = vweird.f32 %v4116
      %vm4123 = vmor %vm4121, %vm4122
      %v4124 = vsel %vm4123, %v4116, %v4120
      %v4125 = vand.u32 2147483647, %v4094
      %vm4126 = vcmp.eq.f32.partialorder %v4125, 8.507059e+37
      %v4127 = vand.u32 %v4094, 2147483648
      %v4128 = vor.u32 1.1754944e-38, %v4127
      %v4129 = vsel %vm4126, %v4128, %v4124
      %v4130 = vmul.f32 1.0, %v4129
      %v4131 = vrcp.pop %v4095
      %v4132 = vmul.f32 %v4095, %v4131
      %v4133 = vsub.f32 1.0, %v4132
      %v4134 = vmul.f32 %v4131, %v4133
      %v4135 = vadd.f32 %v4131, %v4134
      %vm4136 = vweird.f32 %v4095
      %vm4137 = vweird.f32 %v4131
      %vm4138 = vmor %vm4136, %vm4137
      %v4139 = vsel %vm4138, %v4131, %v4135
      %v4140 = vand.u32 2147483647, %v4095
      %vm4141 = vcmp.eq.f32.partialorder %v4140, 8.507059e+37
      %v4142 = vand.u32 %v4095, 2147483648
      %v4143 = vor.u32 1.1754944e-38, %v4142
      %v4144 = vsel %vm4141, %v4143, %v4139
      %v4145 = vmul.f32 1.0, %v4144
      %v4146 = vrcp.pop %v4096
      %v4147 = vmul.f32 %v4096, %v4146
      %v4148 = vsub.f32 1.0, %v4147
      %v4149 = vmul.f32 %v4146, %v4148
      %v4150 = vadd.f32 %v4146, %v4149
      %vm4151 = vweird.f32 %v4096
      %vm4152 = vweird.f32 %v4146
      %vm4153 = vmor %vm4151, %vm4152
      %v4154 = vsel %vm4153, %v4146, %v4150
      %v4155 = vand.u32 2147483647, %v4096
      %vm4156 = vcmp.eq.f32.partialorder %v4155, 8.507059e+37
      %v4157 = vand.u32 %v4096, 2147483648
      %v4158 = vor.u32 1.1754944e-38, %v4157
      %v4159 = vsel %vm4156, %v4158, %v4154
      %v4160 = vmul.f32 1.0, %v4159
      %v4161 = vrcp.pop %v4097
      %v4162 = vmul.f32 %v4097, %v4161
      %v4163 = vsub.f32 1.0, %v4162
      %v4164 = vmul.f32 %v4161, %v4163
      %v4165 = vadd.f32 %v4161, %v4164
      %vm4166 = vweird.f32 %v4097
      %vm4167 = vweird.f32 %v4161
      %vm4168 = vmor %vm4166, %vm4167
      %v4169 = vsel %vm4168, %v4161, %v4165
      %v4170 = vand.u32 2147483647, %v4097
      %vm4171 = vcmp.eq.f32.partialorder %v4170, 8.507059e+37
      %v4172 = vand.u32 %v4097, 2147483648
      %v4173 = vor.u32 1.1754944e-38, %v4172
      %v4174 = vsel %vm4171, %v4173, %v4169
      %v4175 = vmul.f32 1.0, %v4174
      %v4176 = vrcp.pop %v4098
      %v4177 = vmul.f32 %v4098, %v4176
      %v4178 = vsub.f32 1.0, %v4177
      %v4179 = vmul.f32 %v4176, %v4178
      %v4180 = vadd.f32 %v4176, %v4179
      %vm4181 = vweird.f32 %v4098
      %vm4182 = vweird.f32 %v4176
      %vm4183 = vmor %vm4181, %vm4182
      %v4184 = vsel %vm4183, %v4176, %v4180
      %v4185 = vand.u32 2147483647, %v4098
      %vm4186 = vcmp.eq.f32.partialorder %v4185, 8.507059e+37
      %v4187 = vand.u32 %v4098, 2147483648
      %v4188 = vor.u32 1.1754944e-38, %v4187
      %v4189 = vsel %vm4186, %v4188, %v4184
      %v4190 = vmul.f32 1.0, %v4189
      %v4191 = vrcp.pop %v4099
      %v4192 = vmul.f32 %v4099, %v4191
      %v4193 = vsub.f32 1.0, %v4192
      %v4194 = vmul.f32 %v4191, %v4193
      %v4195 = vadd.f32 %v4191, %v4194
      %vm4196 = vweird.f32 %v4099
      %vm4197 = vweird.f32 %v4191
      %vm4198 = vmor %vm4196, %vm4197
      %v4199 = vsel %vm4198, %v4191, %v4195
      %v4200 = vand.u32 2147483647, %v4099
      %vm4201 = vcmp.eq.f32.partialorder %v4200, 8.507059e+37
      %v4202 = vand.u32 %v4099, 2147483648
      %v4203 = vor.u32 1.1754944e-38, %v4202
      %v4204 = vsel %vm4201, %v4203, %v4199
      %v4205 = vmul.f32 1.0, %v4204
      %v4206 = vrcp.pop %v4100
      %v4207 = vmul.f32 %v4100, %v4206
      %v4208 = vsub.f32 1.0, %v4207
      %v4209 = vmul.f32 %v4206, %v4208
      %v4210 = vadd.f32 %v4206, %v4209
      %vm4211 = vweird.f32 %v4100
      %vm4212 = vweird.f32 %v4206
      %vm4213 = vmor %vm4211, %vm4212
      %v4214 = vsel %vm4213, %v4206, %v4210
      %v4215 = vand.u32 2147483647, %v4100
      %vm4216 = vcmp.eq.f32.partialorder %v4215, 8.507059e+37
      %v4217 = vand.u32 %v4100, 2147483648
      %v4218 = vor.u32 1.1754944e-38, %v4217
      %v4219 = vsel %vm4216, %v4218, %v4214
      %v4220 = vmul.f32 1.0, %v4219
      %v4221 = vtanh.pop %v4061
      %v4222 = vtanh.pop %v4062
      %v4223 = vtanh.pop %v4063
      %v4224 = vtanh.pop %v4064
      %v4225 = vtanh.pop %v4065
      %v4226 = vtanh.pop %v4066
      %v4227 = vtanh.pop %v4067
      %v4228 = vtanh.pop %v4068
      %v4230 = vrot.slane %v3600, 4
      %v4231 = vrot.slane %v3600, 5
      %v4232 = vrot.slane %v3600, 6
      %v4233 = vrot.slane %v3600, 7
      %v4234 = vrot.slane %v3600, 1
      %v4235 = vrot.slane %v3600, 2
      %v4236 = vrot.slane %v3600, 3
      %4237 = vrot.lane.b32.xlu0 %v4230, 32
      %v4238 = vpop.permute.xlu0 %4237
      %4239 = vrot.lane.b32.xlu0 %v4231, 32
      %v4240 = vpop.permute.xlu0 %4239
      %4241 = vrot.lane.b32.xlu0 %v4232, 32
      %v4242 = vpop.permute.xlu0 %4241
      %4243 = vrot.lane.b32.xlu0 %v4233, 32
      %v4244 = vpop.permute.xlu0 %4243
      %4245 = vrot.lane.b32.xlu0 %v3600, 32
      %v4246 = vpop.permute.xlu0 %4245
      %4247 = vrot.lane.b32.xlu0 %v4234, 32
      %v4248 = vpop.permute.xlu0 %4247
      %4249 = vrot.lane.b32.xlu0 %v4235, 32
      %v4250 = vpop.permute.xlu0 %4249
      %4251 = vrot.lane.b32.xlu0 %v4236, 32
      %v4252 = vpop.permute.xlu0 %4251
      %v4261 = vmul.f32 %v4115, %v4238
      %v4262 = vmul.f32 %v4130, %v4240
      %v4263 = vmul.f32 %v4145, %v4242
      %v4264 = vmul.f32 %v4160, %v4244
      %v4265 = vmul.f32 %v4175, %v4246
      %v4266 = vmul.f32 %v4190, %v4248
      %v4267 = vmul.f32 %v4205, %v4250
      %v4268 = vmul.f32 %v4220, %v4252
      %4277 = vrot.lane.b32.xlu0 %v4221, 64
      %v4278 = vpop.permute.xlu0 %4277
      %4279 = vrot.lane.b32.xlu0 %v4222, 64
      %v4280 = vpop.permute.xlu0 %4279
      %4281 = vrot.lane.b32.xlu0 %v4223, 64
      %v4282 = vpop.permute.xlu0 %4281
      %4283 = vrot.lane.b32.xlu0 %v4224, 64
      %v4284 = vpop.permute.xlu0 %4283
      %4285 = vrot.lane.b32.xlu0 %v4225, 64
      %v4286 = vpop.permute.xlu0 %4285
      %4287 = vrot.lane.b32.xlu0 %v4226, 64
      %v4288 = vpop.permute.xlu0 %4287
      %4289 = vrot.lane.b32.xlu0 %v4227, 64
      %v4290 = vpop.permute.xlu0 %4289
      %4291 = vrot.lane.b32.xlu0 %v4228, 64
      %v4292 = vpop.permute.xlu0 %4291
      %v4301 = vmul.f32 %v4115, %v4278
      %v4302 = vmul.f32 %v4130, %v4280
      %v4303 = vmul.f32 %v4145, %v4282
      %v4304 = vmul.f32 %v4160, %v4284
      %v4305 = vmul.f32 %v4175, %v4286
      %v4306 = vmul.f32 %v4190, %v4288
      %v4307 = vmul.f32 %v4205, %v4290
      %v4308 = vmul.f32 %v4220, %v4292
      %4317 = vrot.lane.b32.xlu0 %v4301, 32
      %v4318 = vpop.permute.xlu0 %4317
      %4319 = vrot.lane.b32.xlu0 %v4302, 32
      %v4320 = vpop.permute.xlu0 %4319
      %4321 = vrot.lane.b32.xlu0 %v4303, 32
      %v4322 = vpop.permute.xlu0 %4321
      %4323 = vrot.lane.b32.xlu0 %v4304, 32
      %v4324 = vpop.permute.xlu0 %4323
      %4325 = vrot.lane.b32.xlu0 %v4305, 32
      %v4326 = vpop.permute.xlu0 %4325
      %4327 = vrot.lane.b32.xlu0 %v4306, 32
      %v4328 = vpop.permute.xlu0 %4327
      %4329 = vrot.lane.b32.xlu0 %v4307, 32
      %v4330 = vpop.permute.xlu0 %4329
      %4331 = vrot.lane.b32.xlu0 %v4308, 32
      %v4332 = vpop.permute.xlu0 %4331
      %v4341 = vadd.f32 %v4261, %v4318
      %v4342 = vadd.f32 %v4262, %v4320
      %v4343 = vadd.f32 %v4263, %v4322
      %v4344 = vadd.f32 %v4264, %v4324
      %v4345 = vadd.f32 %v4265, %v4326
      %v4346 = vadd.f32 %v4266, %v4328
      %v4347 = vadd.f32 %v4267, %v4330
      %v4348 = vadd.f32 %v4268, %v4332
      %v4349 = vtanh.pop %v4341
      %v4350 = vtanh.pop %v4342
      %v4351 = vtanh.pop %v4343
      %v4352 = vtanh.pop %v4344
      %v4353 = vtanh.pop %v4345
      %v4354 = vtanh.pop %v4346
      %v4355 = vtanh.pop %v4347
      %v4356 = vtanh.pop %v4348
      %4365 = vrot.lane.b32.xlu0 %v4349, 64
      %v4366 = vpop.permute.xlu0 %4365
      %4367 = vrot.lane.b32.xlu0 %v4350, 64
      %v4368 = vpop.permute.xlu0 %4367
      %4369 = vrot.lane.b32.xlu0 %v4351, 64
      %v4370 = vpop.permute.xlu0 %4369
      %4371 = vrot.lane.b32.xlu0 %v4352, 64
      %v4372 = vpop.permute.xlu0 %4371
      %4373 = vrot.lane.b32.xlu0 %v4353, 64
      %v4374 = vpop.permute.xlu0 %4373
      %4375 = vrot.lane.b32.xlu0 %v4354, 64
      %v4376 = vpop.permute.xlu0 %4375
      %4377 = vrot.lane.b32.xlu0 %v4355, 64
      %v4378 = vpop.permute.xlu0 %4377
      %4379 = vrot.lane.b32.xlu0 %v4356, 64
      %v4380 = vpop.permute.xlu0 %4379
      %v4389 = vmul.f32 %v4115, %v4366
      %v4390 = vmul.f32 %v4130, %v4368
      %v4391 = vmul.f32 %v4145, %v4370
      %v4392 = vmul.f32 %v4160, %v4372
      %v4393 = vmul.f32 %v4175, %v4374
      %v4394 = vmul.f32 %v4190, %v4376
      %v4395 = vmul.f32 %v4205, %v4378
      %v4396 = vmul.f32 %v4220, %v4380
      %v4405 = vrot.slane %v4389, 4
      %v4406 = vrot.slane %v4390, 3
      %v4407 = vsel %vm1001, %v4406, %v4405
      %v4408 = vrot.slane %v4391, 2
      %v4409 = vsel %vm1004, %v4408, %v4407
      %v4410 = vrot.slane %v4392, 1
      %v4411 = vsel %vm1007, %v4410, %v4409
      %v4412 = vsel %vm1010, %v4393, %v4411
      %v4413 = vrot.slane %v4394, 7
      %v4414 = vsel %vm1013, %v4413, %v4412
      %v4415 = vrot.slane %v4395, 6
      %v4416 = vsel %vm1016, %v4415, %v4414
      %v4417 = vrot.slane %v4396, 5
      %v4418 = vsel %vm1019, %v4417, %v4416
      %4419 = vrot.lane.b32.xlu0 %v4418, 32
      %v4420 = vpop.permute.xlu0 %4419
      %v4422 = vsel %vm3975, %v4420, %v3574
      %v4431 = vrot.slane %v4341, 4
      %v4432 = vrot.slane %v4342, 3
      %v4433 = vsel %vm1001, %v4432, %v4431
      %v4434 = vrot.slane %v4343, 2
      %v4435 = vsel %vm1004, %v4434, %v4433
      %v4436 = vrot.slane %v4344, 1
      %v4437 = vsel %vm1007, %v4436, %v4435
      %v4438 = vsel %vm1010, %v4345, %v4437
      %v4439 = vrot.slane %v4346, 7
      %v4440 = vsel %vm1013, %v4439, %v4438
      %v4441 = vrot.slane %v4347, 6
      %v4442 = vsel %vm1016, %v4441, %v4440
      %v4443 = vrot.slane %v4348, 5
      %v4444 = vsel %vm1019, %v4443, %v4442
      %4445 = vrot.lane.b32.xlu0 %v4444, 96
      %v4446 = vpop.permute.xlu0 %4445
      %v4448 = vsel %vm3975, %v4446, %v3600
      %v4449 = vpack.c.bf16 %v4001, %v4001
      %v4451 = vsel %vm519, %v4449, 0
      %4453 = vmatpush.bf16.msra.mxu0 0
      %4454 = vmatpush.bf16.msra.mxu0 0
      %4455 = vmatpush.bf16.msra.mxu0 0
      %4456 = vmatpush.bf16.msra.mxu0 0
      %4457 = vmatpush.bf16.msra.mxu0 0
      %4458 = vmatpush.bf16.msra.mxu0 0
      %4459 = vmatpush.bf16.msra.mxu0 %v1064
      %4460 = vmatpush.bf16.msra.mxu0 %v1063
      %4461 = vmatmul.bf16.gmra.mxu0 %v4451
      %v4462 = vpop.f32.mrf.mxu0
      %v4463 = vadd.f32 0.0, %v4462
      %v4464 = vpop.f32.mrf.mxu0
      %4465 = vdwg.mxu0
      %v4467 = vrot.slane %v4463, 5
      %v4468 = vrot.slane %v4463, 6
      %v4469 = vrot.slane %v4463, 7
      %v4470 = vrot.slane %v4463, 1
      %v4471 = vrot.slane %v4463, 2
      %v4472 = vrot.slane %v4463, 3
      %v4473 = vrot.slane %v4463, 4
      %v4482 = vadd.f32 %v1080, %v4467
      %v4483 = vadd.f32 %v1081, %v4468
      %v4484 = vadd.f32 %v1082, %v4469
      %v4485 = vadd.f32 %v1083, %v4463
      %v4486 = vadd.f32 %v1084, %v4470
      %v4487 = vadd.f32 %v1085, %v4471
      %v4488 = vadd.f32 %v1086, %v4472
      %v4489 = vadd.f32 %v1087, %v4473
      %v4490 = vxor.u32 %v4482, 2147483648
      %v4491 = vxor.u32 %v4483, 2147483648
      %v4492 = vxor.u32 %v4484, 2147483648
      %v4493 = vxor.u32 %v4485, 2147483648
      %v4494 = vxor.u32 %v4486, 2147483648
      %v4495 = vxor.u32 %v4487, 2147483648
      %v4496 = vxor.u32 %v4488, 2147483648
      %v4497 = vxor.u32 %v4489, 2147483648
      %v4498 = vmul.f32 %v4490, 1.442695
      %v4499 = vpow.pop %v4498
      %v4500 = vmul.f32 %v4491, 1.442695
      %v4501 = vpow.pop %v4500
      %v4502 = vmul.f32 %v4492, 1.442695
      %v4503 = vpow.pop %v4502
      %v4504 = vmul.f32 %v4493, 1.442695
      %v4505 = vpow.pop %v4504
      %v4506 = vmul.f32 %v4494, 1.442695
      %v4507 = vpow.pop %v4506
      %v4508 = vmul.f32 %v4495, 1.442695
      %v4509 = vpow.pop %v4508
      %v4510 = vmul.f32 %v4496, 1.442695
      %v4511 = vpow.pop %v4510
      %v4512 = vmul.f32 %v4497, 1.442695
      %v4513 = vpow.pop %v4512
      %v4514 = vadd.f32 %v4499, 1.0
      %v4515 = vadd.f32 %v4501, 1.0
      %v4516 = vadd.f32 %v4503, 1.0
      %v4517 = vadd.f32 %v4505, 1.0
      %v4518 = vadd.f32 %v4507, 1.0
      %v4519 = vadd.f32 %v4509, 1.0
      %v4520 = vadd.f32 %v4511, 1.0
      %v4521 = vadd.f32 %v4513, 1.0
      %v4522 = vrcp.pop %v4514
      %v4523 = vmul.f32 %v4514, %v4522
      %v4524 = vsub.f32 1.0, %v4523
      %v4525 = vmul.f32 %v4522, %v4524
      %v4526 = vadd.f32 %v4522, %v4525
      %vm4527 = vweird.f32 %v4514
      %vm4528 = vweird.f32 %v4522
      %vm4529 = vmor %vm4527, %vm4528
      %v4530 = vsel %vm4529, %v4522, %v4526
      %v4531 = vand.u32 2147483647, %v4514
      %vm4532 = vcmp.eq.f32.partialorder %v4531, 8.507059e+37
      %v4533 = vand.u32 %v4514, 2147483648
      %v4534 = vor.u32 1.1754944e-38, %v4533
      %v4535 = vsel %vm4532, %v4534, %v4530
      %v4536 = vmul.f32 1.0, %v4535
      %v4537 = vrcp.pop %v4515
      %v4538 = vmul.f32 %v4515, %v4537
      %v4539 = vsub.f32 1.0, %v4538
      %v4540 = vmul.f32 %v4537, %v4539
      %v4541 = vadd.f32 %v4537, %v4540
      %vm4542 = vweird.f32 %v4515
      %vm4543 = vweird.f32 %v4537
      %vm4544 = vmor %vm4542, %vm4543
      %v4545 = vsel %vm4544, %v4537, %v4541
      %v4546 = vand.u32 2147483647, %v4515
      %vm4547 = vcmp.eq.f32.partialorder %v4546, 8.507059e+37
      %v4548 = vand.u32 %v4515, 2147483648
      %v4549 = vor.u32 1.1754944e-38, %v4548
      %v4550 = vsel %vm4547, %v4549, %v4545
      %v4551 = vmul.f32 1.0, %v4550
      %v4552 = vrcp.pop %v4516
      %v4553 = vmul.f32 %v4516, %v4552
      %v4554 = vsub.f32 1.0, %v4553
      %v4555 = vmul.f32 %v4552, %v4554
      %v4556 = vadd.f32 %v4552, %v4555
      %vm4557 = vweird.f32 %v4516
      %vm4558 = vweird.f32 %v4552
      %vm4559 = vmor %vm4557, %vm4558
      %v4560 = vsel %vm4559, %v4552, %v4556
      %v4561 = vand.u32 2147483647, %v4516
      %vm4562 = vcmp.eq.f32.partialorder %v4561, 8.507059e+37
      %v4563 = vand.u32 %v4516, 2147483648
      %v4564 = vor.u32 1.1754944e-38, %v4563
      %v4565 = vsel %vm4562, %v4564, %v4560
      %v4566 = vmul.f32 1.0, %v4565
      %v4567 = vrcp.pop %v4517
      %v4568 = vmul.f32 %v4517, %v4567
      %v4569 = vsub.f32 1.0, %v4568
      %v4570 = vmul.f32 %v4567, %v4569
      %v4571 = vadd.f32 %v4567, %v4570
      %vm4572 = vweird.f32 %v4517
      %vm4573 = vweird.f32 %v4567
      %vm4574 = vmor %vm4572, %vm4573
      %v4575 = vsel %vm4574, %v4567, %v4571
      %v4576 = vand.u32 2147483647, %v4517
      %vm4577 = vcmp.eq.f32.partialorder %v4576, 8.507059e+37
      %v4578 = vand.u32 %v4517, 2147483648
      %v4579 = vor.u32 1.1754944e-38, %v4578
      %v4580 = vsel %vm4577, %v4579, %v4575
      %v4581 = vmul.f32 1.0, %v4580
      %v4582 = vrcp.pop %v4518
      %v4583 = vmul.f32 %v4518, %v4582
      %v4584 = vsub.f32 1.0, %v4583
      %v4585 = vmul.f32 %v4582, %v4584
      %v4586 = vadd.f32 %v4582, %v4585
      %vm4587 = vweird.f32 %v4518
      %vm4588 = vweird.f32 %v4582
      %vm4589 = vmor %vm4587, %vm4588
      %v4590 = vsel %vm4589, %v4582, %v4586
      %v4591 = vand.u32 2147483647, %v4518
      %vm4592 = vcmp.eq.f32.partialorder %v4591, 8.507059e+37
      %v4593 = vand.u32 %v4518, 2147483648
      %v4594 = vor.u32 1.1754944e-38, %v4593
      %v4595 = vsel %vm4592, %v4594, %v4590
      %v4596 = vmul.f32 1.0, %v4595
      %v4597 = vrcp.pop %v4519
      %v4598 = vmul.f32 %v4519, %v4597
      %v4599 = vsub.f32 1.0, %v4598
      %v4600 = vmul.f32 %v4597, %v4599
      %v4601 = vadd.f32 %v4597, %v4600
      %vm4602 = vweird.f32 %v4519
      %vm4603 = vweird.f32 %v4597
      %vm4604 = vmor %vm4602, %vm4603
      %v4605 = vsel %vm4604, %v4597, %v4601
      %v4606 = vand.u32 2147483647, %v4519
      %vm4607 = vcmp.eq.f32.partialorder %v4606, 8.507059e+37
      %v4608 = vand.u32 %v4519, 2147483648
      %v4609 = vor.u32 1.1754944e-38, %v4608
      %v4610 = vsel %vm4607, %v4609, %v4605
      %v4611 = vmul.f32 1.0, %v4610
      %v4612 = vrcp.pop %v4520
      %v4613 = vmul.f32 %v4520, %v4612
      %v4614 = vsub.f32 1.0, %v4613
      %v4615 = vmul.f32 %v4612, %v4614
      %v4616 = vadd.f32 %v4612, %v4615
      %vm4617 = vweird.f32 %v4520
      %vm4618 = vweird.f32 %v4612
      %vm4619 = vmor %vm4617, %vm4618
      %v4620 = vsel %vm4619, %v4612, %v4616
      %v4621 = vand.u32 2147483647, %v4520
      %vm4622 = vcmp.eq.f32.partialorder %v4621, 8.507059e+37
      %v4623 = vand.u32 %v4520, 2147483648
      %v4624 = vor.u32 1.1754944e-38, %v4623
      %v4625 = vsel %vm4622, %v4624, %v4620
      %v4626 = vmul.f32 1.0, %v4625
      %v4627 = vrcp.pop %v4521
      %v4628 = vmul.f32 %v4521, %v4627
      %v4629 = vsub.f32 1.0, %v4628
      %v4630 = vmul.f32 %v4627, %v4629
      %v4631 = vadd.f32 %v4627, %v4630
      %vm4632 = vweird.f32 %v4521
      %vm4633 = vweird.f32 %v4627
      %vm4634 = vmor %vm4632, %vm4633
      %v4635 = vsel %vm4634, %v4627, %v4631
      %v4636 = vand.u32 2147483647, %v4521
      %vm4637 = vcmp.eq.f32.partialorder %v4636, 8.507059e+37
      %v4638 = vand.u32 %v4521, 2147483648
      %v4639 = vor.u32 1.1754944e-38, %v4638
      %v4640 = vsel %vm4637, %v4639, %v4635
      %v4641 = vmul.f32 1.0, %v4640
      %v4642 = vtanh.pop %v4482
      %v4643 = vtanh.pop %v4483
      %v4644 = vtanh.pop %v4484
      %v4645 = vtanh.pop %v4485
      %v4646 = vtanh.pop %v4486
      %v4647 = vtanh.pop %v4487
      %v4648 = vtanh.pop %v4488
      %v4649 = vtanh.pop %v4489
      %v4651 = vrot.slane %v4027, 5
      %v4652 = vrot.slane %v4027, 6
      %v4653 = vrot.slane %v4027, 7
      %v4654 = vrot.slane %v4027, 1
      %v4655 = vrot.slane %v4027, 2
      %v4656 = vrot.slane %v4027, 3
      %v4657 = vrot.slane %v4027, 4
      %4658 = vrot.lane.b32.xlu0 %v4651, 32
      %v4659 = vpop.permute.xlu0 %4658
      %4660 = vrot.lane.b32.xlu0 %v4652, 32
      %v4661 = vpop.permute.xlu0 %4660
      %4662 = vrot.lane.b32.xlu0 %v4653, 32
      %v4663 = vpop.permute.xlu0 %4662
      %4664 = vrot.lane.b32.xlu0 %v4027, 32
      %v4665 = vpop.permute.xlu0 %4664
      %4666 = vrot.lane.b32.xlu0 %v4654, 32
      %v4667 = vpop.permute.xlu0 %4666
      %4668 = vrot.lane.b32.xlu0 %v4655, 32
      %v4669 = vpop.permute.xlu0 %4668
      %4670 = vrot.lane.b32.xlu0 %v4656, 32
      %v4671 = vpop.permute.xlu0 %4670
      %4672 = vrot.lane.b32.xlu0 %v4657, 32
      %v4673 = vpop.permute.xlu0 %4672
      %v4682 = vmul.f32 %v4536, %v4659
      %v4683 = vmul.f32 %v4551, %v4661
      %v4684 = vmul.f32 %v4566, %v4663
      %v4685 = vmul.f32 %v4581, %v4665
      %v4686 = vmul.f32 %v4596, %v4667
      %v4687 = vmul.f32 %v4611, %v4669
      %v4688 = vmul.f32 %v4626, %v4671
      %v4689 = vmul.f32 %v4641, %v4673
      %4698 = vrot.lane.b32.xlu0 %v4642, 64
      %v4699 = vpop.permute.xlu0 %4698
      %4700 = vrot.lane.b32.xlu0 %v4643, 64
      %v4701 = vpop.permute.xlu0 %4700
      %4702 = vrot.lane.b32.xlu0 %v4644, 64
      %v4703 = vpop.permute.xlu0 %4702
      %4704 = vrot.lane.b32.xlu0 %v4645, 64
      %v4705 = vpop.permute.xlu0 %4704
      %4706 = vrot.lane.b32.xlu0 %v4646, 64
      %v4707 = vpop.permute.xlu0 %4706
      %4708 = vrot.lane.b32.xlu0 %v4647, 64
      %v4709 = vpop.permute.xlu0 %4708
      %4710 = vrot.lane.b32.xlu0 %v4648, 64
      %v4711 = vpop.permute.xlu0 %4710
      %4712 = vrot.lane.b32.xlu0 %v4649, 64
      %v4713 = vpop.permute.xlu0 %4712
      %v4722 = vmul.f32 %v4536, %v4699
      %v4723 = vmul.f32 %v4551, %v4701
      %v4724 = vmul.f32 %v4566, %v4703
      %v4725 = vmul.f32 %v4581, %v4705
      %v4726 = vmul.f32 %v4596, %v4707
      %v4727 = vmul.f32 %v4611, %v4709
      %v4728 = vmul.f32 %v4626, %v4711
      %v4729 = vmul.f32 %v4641, %v4713
      %4738 = vrot.lane.b32.xlu0 %v4722, 32
      %v4739 = vpop.permute.xlu0 %4738
      %4740 = vrot.lane.b32.xlu0 %v4723, 32
      %v4741 = vpop.permute.xlu0 %4740
      %4742 = vrot.lane.b32.xlu0 %v4724, 32
      %v4743 = vpop.permute.xlu0 %4742
      %4744 = vrot.lane.b32.xlu0 %v4725, 32
      %v4745 = vpop.permute.xlu0 %4744
      %4746 = vrot.lane.b32.xlu0 %v4726, 32
      %v4747 = vpop.permute.xlu0 %4746
      %4748 = vrot.lane.b32.xlu0 %v4727, 32
      %v4749 = vpop.permute.xlu0 %4748
      %4750 = vrot.lane.b32.xlu0 %v4728, 32
      %v4751 = vpop.permute.xlu0 %4750
      %4752 = vrot.lane.b32.xlu0 %v4729, 32
      %v4753 = vpop.permute.xlu0 %4752
      %v4762 = vadd.f32 %v4682, %v4739
      %v4763 = vadd.f32 %v4683, %v4741
      %v4764 = vadd.f32 %v4684, %v4743
      %v4765 = vadd.f32 %v4685, %v4745
      %v4766 = vadd.f32 %v4686, %v4747
      %v4767 = vadd.f32 %v4687, %v4749
      %v4768 = vadd.f32 %v4688, %v4751
      %v4769 = vadd.f32 %v4689, %v4753
      %v4770 = vtanh.pop %v4762
      %v4771 = vtanh.pop %v4763
      %v4772 = vtanh.pop %v4764
      %v4773 = vtanh.pop %v4765
      %v4774 = vtanh.pop %v4766
      %v4775 = vtanh.pop %v4767
      %v4776 = vtanh.pop %v4768
      %v4777 = vtanh.pop %v4769
      %4786 = vrot.lane.b32.xlu0 %v4770, 64
      %v4787 = vpop.permute.xlu0 %4786
      %4788 = vrot.lane.b32.xlu0 %v4771, 64
      %v4789 = vpop.permute.xlu0 %4788
      %4790 = vrot.lane.b32.xlu0 %v4772, 64
      %v4791 = vpop.permute.xlu0 %4790
      %4792 = vrot.lane.b32.xlu0 %v4773, 64
      %v4793 = vpop.permute.xlu0 %4792
      %4794 = vrot.lane.b32.xlu0 %v4774, 64
      %v4795 = vpop.permute.xlu0 %4794
      %4796 = vrot.lane.b32.xlu0 %v4775, 64
      %v4797 = vpop.permute.xlu0 %4796
      %4798 = vrot.lane.b32.xlu0 %v4776, 64
      %v4799 = vpop.permute.xlu0 %4798
      %4800 = vrot.lane.b32.xlu0 %v4777, 64
      %v4801 = vpop.permute.xlu0 %4800
      %v4810 = vmul.f32 %v4536, %v4787
      %v4811 = vmul.f32 %v4551, %v4789
      %v4812 = vmul.f32 %v4566, %v4791
      %v4813 = vmul.f32 %v4581, %v4793
      %v4814 = vmul.f32 %v4596, %v4795
      %v4815 = vmul.f32 %v4611, %v4797
      %v4816 = vmul.f32 %v4626, %v4799
      %v4817 = vmul.f32 %v4641, %v4801
      %v4826 = vrot.slane %v4810, 3
      %v4827 = vrot.slane %v4811, 2
      %v4828 = vsel %vm1001, %v4827, %v4826
      %v4829 = vrot.slane %v4812, 1
      %v4830 = vsel %vm1004, %v4829, %v4828
      %v4831 = vsel %vm1007, %v4813, %v4830
      %v4832 = vrot.slane %v4814, 7
      %v4833 = vsel %vm1010, %v4832, %v4831
      %v4834 = vrot.slane %v4815, 6
      %v4835 = vsel %vm1013, %v4834, %v4833
      %v4836 = vrot.slane %v4816, 5
      %v4837 = vsel %vm1016, %v4836, %v4835
      %v4838 = vrot.slane %v4817, 4
      %v4839 = vsel %vm1019, %v4838, %v4837
      %4840 = vrot.lane.b32.xlu0 %v4839, 32
      %v4841 = vpop.permute.xlu0 %4840
      %v4843 = vsel %vm3548, %v4841, %v4001
      %v4852 = vrot.slane %v4762, 3
      %v4853 = vrot.slane %v4763, 2
      %v4854 = vsel %vm1001, %v4853, %v4852
      %v4855 = vrot.slane %v4764, 1
      %v4856 = vsel %vm1004, %v4855, %v4854
      %v4857 = vsel %vm1007, %v4765, %v4856
      %v4858 = vrot.slane %v4766, 7
      %v4859 = vsel %vm1010, %v4858, %v4857
      %v4860 = vrot.slane %v4767, 6
      %v4861 = vsel %vm1013, %v4860, %v4859
      %v4862 = vrot.slane %v4768, 5
      %v4863 = vsel %vm1016, %v4862, %v4861
      %v4864 = vrot.slane %v4769, 4
      %v4865 = vsel %vm1019, %v4864, %v4863
      %4866 = vrot.lane.b32.xlu0 %v4865, 96
      %v4867 = vpop.permute.xlu0 %4866
      %v4869 = vsel %vm3548, %v4867, %v4027
      %v4870 = vpack.c.bf16 %v4422, %v4422
      %v4872 = vsel %vm519, %v4870, 0
      %4874 = vmatpush.bf16.msra.mxu0 0
      %4875 = vmatpush.bf16.msra.mxu0 0
      %4876 = vmatpush.bf16.msra.mxu0 0
      %4877 = vmatpush.bf16.msra.mxu0 0
      %4878 = vmatpush.bf16.msra.mxu0 0
      %4879 = vmatpush.bf16.msra.mxu0 0
      %4880 = vmatpush.bf16.msra.mxu0 %v639
      %4881 = vmatpush.bf16.msra.mxu0 %v638
      %4882 = vmatmul.bf16.gmra.mxu0 %v4872
      %v4883 = vpop.f32.mrf.mxu0
      %v4884 = vadd.f32 0.0, %v4883
      %v4885 = vpop.f32.mrf.mxu0
      %4886 = vdwg.mxu0
      %v4888 = vrot.slane %v4884, 3
      %v4889 = vrot.slane %v4884, 4
      %v4890 = vrot.slane %v4884, 5
      %v4891 = vrot.slane %v4884, 6
      %v4892 = vrot.slane %v4884, 7
      %v4893 = vrot.slane %v4884, 1
      %v4894 = vrot.slane %v4884, 2
      %v4903 = vadd.f32 %v658, %v4888
      %v4904 = vadd.f32 %v659, %v4889
      %v4905 = vadd.f32 %v660, %v4890
      %v4906 = vadd.f32 %v661, %v4891
      %v4907 = vadd.f32 %v662, %v4892
      %v4908 = vadd.f32 %v663, %v4884
      %v4909 = vadd.f32 %v664, %v4893
      %v4910 = vadd.f32 %v665, %v4894
      %v4911 = vxor.u32 %v4903, 2147483648
      %v4912 = vxor.u32 %v4904, 2147483648
      %v4913 = vxor.u32 %v4905, 2147483648
      %v4914 = vxor.u32 %v4906, 2147483648
      %v4915 = vxor.u32 %v4907, 2147483648
      %v4916 = vxor.u32 %v4908, 2147483648
      %v4917 = vxor.u32 %v4909, 2147483648
      %v4918 = vxor.u32 %v4910, 2147483648
      %v4919 = vmul.f32 %v4911, 1.442695
      %v4920 = vpow.pop %v4919
      %v4921 = vmul.f32 %v4912, 1.442695
      %v4922 = vpow.pop %v4921
      %v4923 = vmul.f32 %v4913, 1.442695
      %v4924 = vpow.pop %v4923
      %v4925 = vmul.f32 %v4914, 1.442695
      %v4926 = vpow.pop %v4925
      %v4927 = vmul.f32 %v4915, 1.442695
      %v4928 = vpow.pop %v4927
      %v4929 = vmul.f32 %v4916, 1.442695
      %v4930 = vpow.pop %v4929
      %v4931 = vmul.f32 %v4917, 1.442695
      %v4932 = vpow.pop %v4931
      %v4933 = vmul.f32 %v4918, 1.442695
      %v4934 = vpow.pop %v4933
      %v4935 = vadd.f32 %v4920, 1.0
      %v4936 = vadd.f32 %v4922, 1.0
      %v4937 = vadd.f32 %v4924, 1.0
      %v4938 = vadd.f32 %v4926, 1.0
      %v4939 = vadd.f32 %v4928, 1.0
      %v4940 = vadd.f32 %v4930, 1.0
      %v4941 = vadd.f32 %v4932, 1.0
      %v4942 = vadd.f32 %v4934, 1.0
      %v4943 = vrcp.pop %v4935
      %v4944 = vmul.f32 %v4935, %v4943
      %v4945 = vsub.f32 1.0, %v4944
      %v4946 = vmul.f32 %v4943, %v4945
      %v4947 = vadd.f32 %v4943, %v4946
      %vm4948 = vweird.f32 %v4935
      %vm4949 = vweird.f32 %v4943
      %vm4950 = vmor %vm4948, %vm4949
      %v4951 = vsel %vm4950, %v4943, %v4947
      %v4952 = vand.u32 2147483647, %v4935
      %vm4953 = vcmp.eq.f32.partialorder %v4952, 8.507059e+37
      %v4954 = vand.u32 %v4935, 2147483648
      %v4955 = vor.u32 1.1754944e-38, %v4954
      %v4956 = vsel %vm4953, %v4955, %v4951
      %v4957 = vmul.f32 1.0, %v4956
      %v4958 = vrcp.pop %v4936
      %v4959 = vmul.f32 %v4936, %v4958
      %v4960 = vsub.f32 1.0, %v4959
      %v4961 = vmul.f32 %v4958, %v4960
      %v4962 = vadd.f32 %v4958, %v4961
      %vm4963 = vweird.f32 %v4936
      %vm4964 = vweird.f32 %v4958
      %vm4965 = vmor %vm4963, %vm4964
      %v4966 = vsel %vm4965, %v4958, %v4962
      %v4967 = vand.u32 2147483647, %v4936
      %vm4968 = vcmp.eq.f32.partialorder %v4967, 8.507059e+37
      %v4969 = vand.u32 %v4936, 2147483648
      %v4970 = vor.u32 1.1754944e-38, %v4969
      %v4971 = vsel %vm4968, %v4970, %v4966
      %v4972 = vmul.f32 1.0, %v4971
      %v4973 = vrcp.pop %v4937
      %v4974 = vmul.f32 %v4937, %v4973
      %v4975 = vsub.f32 1.0, %v4974
      %v4976 = vmul.f32 %v4973, %v4975
      %v4977 = vadd.f32 %v4973, %v4976
      %vm4978 = vweird.f32 %v4937
      %vm4979 = vweird.f32 %v4973
      %vm4980 = vmor %vm4978, %vm4979
      %v4981 = vsel %vm4980, %v4973, %v4977
      %v4982 = vand.u32 2147483647, %v4937
      %vm4983 = vcmp.eq.f32.partialorder %v4982, 8.507059e+37
      %v4984 = vand.u32 %v4937, 2147483648
      %v4985 = vor.u32 1.1754944e-38, %v4984
      %v4986 = vsel %vm4983, %v4985, %v4981
      %v4987 = vmul.f32 1.0, %v4986
      %v4988 = vrcp.pop %v4938
      %v4989 = vmul.f32 %v4938, %v4988
      %v4990 = vsub.f32 1.0, %v4989
      %v4991 = vmul.f32 %v4988, %v4990
      %v4992 = vadd.f32 %v4988, %v4991
      %vm4993 = vweird.f32 %v4938
      %vm4994 = vweird.f32 %v4988
      %vm4995 = vmor %vm4993, %vm4994
      %v4996 = vsel %vm4995, %v4988, %v4992
      %v4997 = vand.u32 2147483647, %v4938
      %vm4998 = vcmp.eq.f32.partialorder %v4997, 8.507059e+37
      %v4999 = vand.u32 %v4938, 2147483648
      %v5000 = vor.u32 1.1754944e-38, %v4999
      %v5001 = vsel %vm4998, %v5000, %v4996
      %v5002 = vmul.f32 1.0, %v5001
      %v5003 = vrcp.pop %v4939
      %v5004 = vmul.f32 %v4939, %v5003
      %v5005 = vsub.f32 1.0, %v5004
      %v5006 = vmul.f32 %v5003, %v5005
      %v5007 = vadd.f32 %v5003, %v5006
      %vm5008 = vweird.f32 %v4939
      %vm5009 = vweird.f32 %v5003
      %vm5010 = vmor %vm5008, %vm5009
      %v5011 = vsel %vm5010, %v5003, %v5007
      %v5012 = vand.u32 2147483647, %v4939
      %vm5013 = vcmp.eq.f32.partialorder %v5012, 8.507059e+37
      %v5014 = vand.u32 %v4939, 2147483648
      %v5015 = vor.u32 1.1754944e-38, %v5014
      %v5016 = vsel %vm5013, %v5015, %v5011
      %v5017 = vmul.f32 1.0, %v5016
      %v5018 = vrcp.pop %v4940
      %v5019 = vmul.f32 %v4940, %v5018
      %v5020 = vsub.f32 1.0, %v5019
      %v5021 = vmul.f32 %v5018, %v5020
      %v5022 = vadd.f32 %v5018, %v5021
      %vm5023 = vweird.f32 %v4940
      %vm5024 = vweird.f32 %v5018
      %vm5025 = vmor %vm5023, %vm5024
      %v5026 = vsel %vm5025, %v5018, %v5022
      %v5027 = vand.u32 2147483647, %v4940
      %vm5028 = vcmp.eq.f32.partialorder %v5027, 8.507059e+37
      %v5029 = vand.u32 %v4940, 2147483648
      %v5030 = vor.u32 1.1754944e-38, %v5029
      %v5031 = vsel %vm5028, %v5030, %v5026
      %v5032 = vmul.f32 1.0, %v5031
      %v5033 = vrcp.pop %v4941
      %v5034 = vmul.f32 %v4941, %v5033
      %v5035 = vsub.f32 1.0, %v5034
      %v5036 = vmul.f32 %v5033, %v5035
      %v5037 = vadd.f32 %v5033, %v5036
      %vm5038 = vweird.f32 %v4941
      %vm5039 = vweird.f32 %v5033
      %vm5040 = vmor %vm5038, %vm5039
      %v5041 = vsel %vm5040, %v5033, %v5037
      %v5042 = vand.u32 2147483647, %v4941
      %vm5043 = vcmp.eq.f32.partialorder %v5042, 8.507059e+37
      %v5044 = vand.u32 %v4941, 2147483648
      %v5045 = vor.u32 1.1754944e-38, %v5044
      %v5046 = vsel %vm5043, %v5045, %v5041
      %v5047 = vmul.f32 1.0, %v5046
      %v5048 = vrcp.pop %v4942
      %v5049 = vmul.f32 %v4942, %v5048
      %v5050 = vsub.f32 1.0, %v5049
      %v5051 = vmul.f32 %v5048, %v5050
      %v5052 = vadd.f32 %v5048, %v5051
      %vm5053 = vweird.f32 %v4942
      %vm5054 = vweird.f32 %v5048
      %vm5055 = vmor %vm5053, %vm5054
      %v5056 = vsel %vm5055, %v5048, %v5052
      %v5057 = vand.u32 2147483647, %v4942
      %vm5058 = vcmp.eq.f32.partialorder %v5057, 8.507059e+37
      %v5059 = vand.u32 %v4942, 2147483648
      %v5060 = vor.u32 1.1754944e-38, %v5059
      %v5061 = vsel %vm5058, %v5060, %v5056
      %v5062 = vmul.f32 1.0, %v5061
      %v5063 = vtanh.pop %v4903
      %v5064 = vtanh.pop %v4904
      %v5065 = vtanh.pop %v4905
      %v5066 = vtanh.pop %v4906
      %v5067 = vtanh.pop %v4907
      %v5068 = vtanh.pop %v4908
      %v5069 = vtanh.pop %v4909
      %v5070 = vtanh.pop %v4910
      %v5072 = vrot.slane %v4448, 3
      %v5073 = vrot.slane %v4448, 4
      %v5074 = vrot.slane %v4448, 5
      %v5075 = vrot.slane %v4448, 6
      %v5076 = vrot.slane %v4448, 7
      %v5077 = vrot.slane %v4448, 1
      %v5078 = vrot.slane %v4448, 2
      %5079 = vrot.lane.b32.xlu0 %v5072, 32
      %v5080 = vpop.permute.xlu0 %5079
      %5081 = vrot.lane.b32.xlu0 %v5073, 32
      %v5082 = vpop.permute.xlu0 %5081
      %5083 = vrot.lane.b32.xlu0 %v5074, 32
      %v5084 = vpop.permute.xlu0 %5083
      %5085 = vrot.lane.b32.xlu0 %v5075, 32
      %v5086 = vpop.permute.xlu0 %5085
      %5087 = vrot.lane.b32.xlu0 %v5076, 32
      %v5088 = vpop.permute.xlu0 %5087
      %5089 = vrot.lane.b32.xlu0 %v4448, 32
      %v5090 = vpop.permute.xlu0 %5089
      %5091 = vrot.lane.b32.xlu0 %v5077, 32
      %v5092 = vpop.permute.xlu0 %5091
      %5093 = vrot.lane.b32.xlu0 %v5078, 32
      %v5094 = vpop.permute.xlu0 %5093
      %v5103 = vmul.f32 %v4957, %v5080
      %v5104 = vmul.f32 %v4972, %v5082
      %v5105 = vmul.f32 %v4987, %v5084
      %v5106 = vmul.f32 %v5002, %v5086
      %v5107 = vmul.f32 %v5017, %v5088
      %v5108 = vmul.f32 %v5032, %v5090
      %v5109 = vmul.f32 %v5047, %v5092
      %v5110 = vmul.f32 %v5062, %v5094
      %5119 = vrot.lane.b32.xlu0 %v5063, 64
      %v5120 = vpop.permute.xlu0 %5119
      %5121 = vrot.lane.b32.xlu0 %v5064, 64
      %v5122 = vpop.permute.xlu0 %5121
      %5123 = vrot.lane.b32.xlu0 %v5065, 64
      %v5124 = vpop.permute.xlu0 %5123
      %5125 = vrot.lane.b32.xlu0 %v5066, 64
      %v5126 = vpop.permute.xlu0 %5125
      %5127 = vrot.lane.b32.xlu0 %v5067, 64
      %v5128 = vpop.permute.xlu0 %5127
      %5129 = vrot.lane.b32.xlu0 %v5068, 64
      %v5130 = vpop.permute.xlu0 %5129
      %5131 = vrot.lane.b32.xlu0 %v5069, 64
      %v5132 = vpop.permute.xlu0 %5131
      %5133 = vrot.lane.b32.xlu0 %v5070, 64
      %v5134 = vpop.permute.xlu0 %5133
      %v5143 = vmul.f32 %v4957, %v5120
      %v5144 = vmul.f32 %v4972, %v5122
      %v5145 = vmul.f32 %v4987, %v5124
      %v5146 = vmul.f32 %v5002, %v5126
      %v5147 = vmul.f32 %v5017, %v5128
      %v5148 = vmul.f32 %v5032, %v5130
      %v5149 = vmul.f32 %v5047, %v5132
      %v5150 = vmul.f32 %v5062, %v5134
      %5159 = vrot.lane.b32.xlu0 %v5143, 32
      %v5160 = vpop.permute.xlu0 %5159
      %5161 = vrot.lane.b32.xlu0 %v5144, 32
      %v5162 = vpop.permute.xlu0 %5161
      %5163 = vrot.lane.b32.xlu0 %v5145, 32
      %v5164 = vpop.permute.xlu0 %5163
      %5165 = vrot.lane.b32.xlu0 %v5146, 32
      %v5166 = vpop.permute.xlu0 %5165
      %5167 = vrot.lane.b32.xlu0 %v5147, 32
      %v5168 = vpop.permute.xlu0 %5167
      %5169 = vrot.lane.b32.xlu0 %v5148, 32
      %v5170 = vpop.permute.xlu0 %5169
      %5171 = vrot.lane.b32.xlu0 %v5149, 32
      %v5172 = vpop.permute.xlu0 %5171
      %5173 = vrot.lane.b32.xlu0 %v5150, 32
      %v5174 = vpop.permute.xlu0 %5173
      %v5183 = vadd.f32 %v5103, %v5160
      %v5184 = vadd.f32 %v5104, %v5162
      %v5185 = vadd.f32 %v5105, %v5164
      %v5186 = vadd.f32 %v5106, %v5166
      %v5187 = vadd.f32 %v5107, %v5168
      %v5188 = vadd.f32 %v5108, %v5170
      %v5189 = vadd.f32 %v5109, %v5172
      %v5190 = vadd.f32 %v5110, %v5174
      %v5191 = vtanh.pop %v5183
      %v5192 = vtanh.pop %v5184
      %v5193 = vtanh.pop %v5185
      %v5194 = vtanh.pop %v5186
      %v5195 = vtanh.pop %v5187
      %v5196 = vtanh.pop %v5188
      %v5197 = vtanh.pop %v5189
      %v5198 = vtanh.pop %v5190
      %5207 = vrot.lane.b32.xlu0 %v5191, 64
      %v5208 = vpop.permute.xlu0 %5207
      %5209 = vrot.lane.b32.xlu0 %v5192, 64
      %v5210 = vpop.permute.xlu0 %5209
      %5211 = vrot.lane.b32.xlu0 %v5193, 64
      %v5212 = vpop.permute.xlu0 %5211
      %5213 = vrot.lane.b32.xlu0 %v5194, 64
      %v5214 = vpop.permute.xlu0 %5213
      %5215 = vrot.lane.b32.xlu0 %v5195, 64
      %v5216 = vpop.permute.xlu0 %5215
      %5217 = vrot.lane.b32.xlu0 %v5196, 64
      %v5218 = vpop.permute.xlu0 %5217
      %5219 = vrot.lane.b32.xlu0 %v5197, 64
      %v5220 = vpop.permute.xlu0 %5219
      %5221 = vrot.lane.b32.xlu0 %v5198, 64
      %v5222 = vpop.permute.xlu0 %5221
      %v5231 = vmul.f32 %v4957, %v5208
      %v5232 = vmul.f32 %v4972, %v5210
      %v5233 = vmul.f32 %v4987, %v5212
      %v5234 = vmul.f32 %v5002, %v5214
      %v5235 = vmul.f32 %v5017, %v5216
      %v5236 = vmul.f32 %v5032, %v5218
      %v5237 = vmul.f32 %v5047, %v5220
      %v5238 = vmul.f32 %v5062, %v5222
      %v5247 = vrot.slane %v5231, 5
      %v5248 = vrot.slane %v5232, 4
      %v5249 = vsel %vm1001, %v5248, %v5247
      %v5250 = vrot.slane %v5233, 3
      %v5251 = vsel %vm1004, %v5250, %v5249
      %v5252 = vrot.slane %v5234, 2
      %v5253 = vsel %vm1007, %v5252, %v5251
      %v5254 = vrot.slane %v5235, 1
      %v5255 = vsel %vm1010, %v5254, %v5253
      %v5256 = vsel %vm1013, %v5236, %v5255
      %v5257 = vrot.slane %v5237, 7
      %v5258 = vsel %vm1016, %v5257, %v5256
      %v5259 = vrot.slane %v5238, 6
      %v5260 = vsel %vm1019, %v5259, %v5258
      %5261 = vrot.lane.b32.xlu0 %v5260, 32
      %v5262 = vpop.permute.xlu0 %5261
      %v5264 = vsel %vm3121, %v5262, %v4422
      %v5273 = vrot.slane %v5183, 5
      %v5274 = vrot.slane %v5184, 4
      %v5275 = vsel %vm1001, %v5274, %v5273
      %v5276 = vrot.slane %v5185, 3
      %v5277 = vsel %vm1004, %v5276, %v5275
      %v5278 = vrot.slane %v5186, 2
      %v5279 = vsel %vm1007, %v5278, %v5277
      %v5280 = vrot.slane %v5187, 1
      %v5281 = vsel %vm1010, %v5280, %v5279
      %v5282 = vsel %vm1013, %v5188, %v5281
      %v5283 = vrot.slane %v5189, 7
      %v5284 = vsel %vm1016, %v5283, %v5282
      %v5285 = vrot.slane %v5190, 6
      %v5286 = vsel %vm1019, %v5285, %v5284
      %5287 = vrot.lane.b32.xlu0 %v5286, 96
      %v5288 = vpop.permute.xlu0 %5287
      %v5290 = vsel %vm3121, %v5288, %v4448
      %v5291 = vpack.c.bf16 %v4843, %v4843
      %v5293 = vsel %vm519, %v5291, 0
      %5295 = vmatpush.bf16.msra.mxu0 0
      %5296 = vmatpush.bf16.msra.mxu0 0
      %5297 = vmatpush.bf16.msra.mxu0 0
      %5298 = vmatpush.bf16.msra.mxu0 0
      %5299 = vmatpush.bf16.msra.mxu0 0
      %5300 = vmatpush.bf16.msra.mxu0 0
      %5301 = vmatpush.bf16.msra.mxu0 %v1064
      %5302 = vmatpush.bf16.msra.mxu0 %v1063
      %5303 = vmatmul.bf16.gmra.mxu0 %v5293
      %v5304 = vpop.f32.mrf.mxu0
      %v5305 = vadd.f32 0.0, %v5304
      %v5306 = vpop.f32.mrf.mxu0
      %5307 = vdwg.mxu0
      %v5309 = vrot.slane %v5305, 6
      %v5310 = vrot.slane %v5305, 7
      %v5311 = vrot.slane %v5305, 1
      %v5312 = vrot.slane %v5305, 2
      %v5313 = vrot.slane %v5305, 3
      %v5314 = vrot.slane %v5305, 4
      %v5315 = vrot.slane %v5305, 5
      %v5324 = vadd.f32 %v1080, %v5309
      %v5325 = vadd.f32 %v1081, %v5310
      %v5326 = vadd.f32 %v1082, %v5305
      %v5327 = vadd.f32 %v1083, %v5311
      %v5328 = vadd.f32 %v1084, %v5312
      %v5329 = vadd.f32 %v1085, %v5313
      %v5330 = vadd.f32 %v1086, %v5314
      %v5331 = vadd.f32 %v1087, %v5315
      %v5332 = vxor.u32 %v5324, 2147483648
      %v5333 = vxor.u32 %v5325, 2147483648
      %v5334 = vxor.u32 %v5326, 2147483648
      %v5335 = vxor.u32 %v5327, 2147483648
      %v5336 = vxor.u32 %v5328, 2147483648
      %v5337 = vxor.u32 %v5329, 2147483648
      %v5338 = vxor.u32 %v5330, 2147483648
      %v5339 = vxor.u32 %v5331, 2147483648
      %v5340 = vmul.f32 %v5332, 1.442695
      %v5341 = vpow.pop %v5340
      %v5342 = vmul.f32 %v5333, 1.442695
      %v5343 = vpow.pop %v5342
      %v5344 = vmul.f32 %v5334, 1.442695
      %v5345 = vpow.pop %v5344
      %v5346 = vmul.f32 %v5335, 1.442695
      %v5347 = vpow.pop %v5346
      %v5348 = vmul.f32 %v5336, 1.442695
      %v5349 = vpow.pop %v5348
      %v5350 = vmul.f32 %v5337, 1.442695
      %v5351 = vpow.pop %v5350
      %v5352 = vmul.f32 %v5338, 1.442695
      %v5353 = vpow.pop %v5352
      %v5354 = vmul.f32 %v5339, 1.442695
      %v5355 = vpow.pop %v5354
      %v5356 = vadd.f32 %v5341, 1.0
      %v5357 = vadd.f32 %v5343, 1.0
      %v5358 = vadd.f32 %v5345, 1.0
      %v5359 = vadd.f32 %v5347, 1.0
      %v5360 = vadd.f32 %v5349, 1.0
      %v5361 = vadd.f32 %v5351, 1.0
      %v5362 = vadd.f32 %v5353, 1.0
      %v5363 = vadd.f32 %v5355, 1.0
      %v5364 = vrcp.pop %v5356
      %v5365 = vmul.f32 %v5356, %v5364
      %v5366 = vsub.f32 1.0, %v5365
      %v5367 = vmul.f32 %v5364, %v5366
      %v5368 = vadd.f32 %v5364, %v5367
      %vm5369 = vweird.f32 %v5356
      %vm5370 = vweird.f32 %v5364
      %vm5371 = vmor %vm5369, %vm5370
      %v5372 = vsel %vm5371, %v5364, %v5368
      %v5373 = vand.u32 2147483647, %v5356
      %vm5374 = vcmp.eq.f32.partialorder %v5373, 8.507059e+37
      %v5375 = vand.u32 %v5356, 2147483648
      %v5376 = vor.u32 1.1754944e-38, %v5375
      %v5377 = vsel %vm5374, %v5376, %v5372
      %v5378 = vmul.f32 1.0, %v5377
      %v5379 = vrcp.pop %v5357
      %v5380 = vmul.f32 %v5357, %v5379
      %v5381 = vsub.f32 1.0, %v5380
      %v5382 = vmul.f32 %v5379, %v5381
      %v5383 = vadd.f32 %v5379, %v5382
      %vm5384 = vweird.f32 %v5357
      %vm5385 = vweird.f32 %v5379
      %vm5386 = vmor %vm5384, %vm5385
      %v5387 = vsel %vm5386, %v5379, %v5383
      %v5388 = vand.u32 2147483647, %v5357
      %vm5389 = vcmp.eq.f32.partialorder %v5388, 8.507059e+37
      %v5390 = vand.u32 %v5357, 2147483648
      %v5391 = vor.u32 1.1754944e-38, %v5390
      %v5392 = vsel %vm5389, %v5391, %v5387
      %v5393 = vmul.f32 1.0, %v5392
      %v5394 = vrcp.pop %v5358
      %v5395 = vmul.f32 %v5358, %v5394
      %v5396 = vsub.f32 1.0, %v5395
      %v5397 = vmul.f32 %v5394, %v5396
      %v5398 = vadd.f32 %v5394, %v5397
      %vm5399 = vweird.f32 %v5358
      %vm5400 = vweird.f32 %v5394
      %vm5401 = vmor %vm5399, %vm5400
      %v5402 = vsel %vm5401, %v5394, %v5398
      %v5403 = vand.u32 2147483647, %v5358
      %vm5404 = vcmp.eq.f32.partialorder %v5403, 8.507059e+37
      %v5405 = vand.u32 %v5358, 2147483648
      %v5406 = vor.u32 1.1754944e-38, %v5405
      %v5407 = vsel %vm5404, %v5406, %v5402
      %v5408 = vmul.f32 1.0, %v5407
      %v5409 = vrcp.pop %v5359
      %v5410 = vmul.f32 %v5359, %v5409
      %v5411 = vsub.f32 1.0, %v5410
      %v5412 = vmul.f32 %v5409, %v5411
      %v5413 = vadd.f32 %v5409, %v5412
      %vm5414 = vweird.f32 %v5359
      %vm5415 = vweird.f32 %v5409
      %vm5416 = vmor %vm5414, %vm5415
      %v5417 = vsel %vm5416, %v5409, %v5413
      %v5418 = vand.u32 2147483647, %v5359
      %vm5419 = vcmp.eq.f32.partialorder %v5418, 8.507059e+37
      %v5420 = vand.u32 %v5359, 2147483648
      %v5421 = vor.u32 1.1754944e-38, %v5420
      %v5422 = vsel %vm5419, %v5421, %v5417
      %v5423 = vmul.f32 1.0, %v5422
      %v5424 = vrcp.pop %v5360
      %v5425 = vmul.f32 %v5360, %v5424
      %v5426 = vsub.f32 1.0, %v5425
      %v5427 = vmul.f32 %v5424, %v5426
      %v5428 = vadd.f32 %v5424, %v5427
      %vm5429 = vweird.f32 %v5360
      %vm5430 = vweird.f32 %v5424
      %vm5431 = vmor %vm5429, %vm5430
      %v5432 = vsel %vm5431, %v5424, %v5428
      %v5433 = vand.u32 2147483647, %v5360
      %vm5434 = vcmp.eq.f32.partialorder %v5433, 8.507059e+37
      %v5435 = vand.u32 %v5360, 2147483648
      %v5436 = vor.u32 1.1754944e-38, %v5435
      %v5437 = vsel %vm5434, %v5436, %v5432
      %v5438 = vmul.f32 1.0, %v5437
      %v5439 = vrcp.pop %v5361
      %v5440 = vmul.f32 %v5361, %v5439
      %v5441 = vsub.f32 1.0, %v5440
      %v5442 = vmul.f32 %v5439, %v5441
      %v5443 = vadd.f32 %v5439, %v5442
      %vm5444 = vweird.f32 %v5361
      %vm5445 = vweird.f32 %v5439
      %vm5446 = vmor %vm5444, %vm5445
      %v5447 = vsel %vm5446, %v5439, %v5443
      %v5448 = vand.u32 2147483647, %v5361
      %vm5449 = vcmp.eq.f32.partialorder %v5448, 8.507059e+37
      %v5450 = vand.u32 %v5361, 2147483648
      %v5451 = vor.u32 1.1754944e-38, %v5450
      %v5452 = vsel %vm5449, %v5451, %v5447
      %v5453 = vmul.f32 1.0, %v5452
      %v5454 = vrcp.pop %v5362
      %v5455 = vmul.f32 %v5362, %v5454
      %v5456 = vsub.f32 1.0, %v5455
      %v5457 = vmul.f32 %v5454, %v5456
      %v5458 = vadd.f32 %v5454, %v5457
      %vm5459 = vweird.f32 %v5362
      %vm5460 = vweird.f32 %v5454
      %vm5461 = vmor %vm5459, %vm5460
      %v5462 = vsel %vm5461, %v5454, %v5458
      %v5463 = vand.u32 2147483647, %v5362
      %vm5464 = vcmp.eq.f32.partialorder %v5463, 8.507059e+37
      %v5465 = vand.u32 %v5362, 2147483648
      %v5466 = vor.u32 1.1754944e-38, %v5465
      %v5467 = vsel %vm5464, %v5466, %v5462
      %v5468 = vmul.f32 1.0, %v5467
      %v5469 = vrcp.pop %v5363
      %v5470 = vmul.f32 %v5363, %v5469
      %v5471 = vsub.f32 1.0, %v5470
      %v5472 = vmul.f32 %v5469, %v5471
      %v5473 = vadd.f32 %v5469, %v5472
      %vm5474 = vweird.f32 %v5363
      %vm5475 = vweird.f32 %v5469
      %vm5476 = vmor %vm5474, %vm5475
      %v5477 = vsel %vm5476, %v5469, %v5473
      %v5478 = vand.u32 2147483647, %v5363
      %vm5479 = vcmp.eq.f32.partialorder %v5478, 8.507059e+37
      %v5480 = vand.u32 %v5363, 2147483648
      %v5481 = vor.u32 1.1754944e-38, %v5480
      %v5482 = vsel %vm5479, %v5481, %v5477
      %v5483 = vmul.f32 1.0, %v5482
      %v5484 = vtanh.pop %v5324
      %v5485 = vtanh.pop %v5325
      %v5486 = vtanh.pop %v5326
      %v5487 = vtanh.pop %v5327
      %v5488 = vtanh.pop %v5328
      %v5489 = vtanh.pop %v5329
      %v5490 = vtanh.pop %v5330
      %v5491 = vtanh.pop %v5331
      %v5493 = vrot.slane %v4869, 6
      %v5494 = vrot.slane %v4869, 7
      %v5495 = vrot.slane %v4869, 1
      %v5496 = vrot.slane %v4869, 2
      %v5497 = vrot.slane %v4869, 3
      %v5498 = vrot.slane %v4869, 4
      %v5499 = vrot.slane %v4869, 5
      %5500 = vrot.lane.b32.xlu0 %v5493, 32
      %v5501 = vpop.permute.xlu0 %5500
      %5502 = vrot.lane.b32.xlu0 %v5494, 32
      %v5503 = vpop.permute.xlu0 %5502
      %5504 = vrot.lane.b32.xlu0 %v4869, 32
      %v5505 = vpop.permute.xlu0 %5504
      %5506 = vrot.lane.b32.xlu0 %v5495, 32
      %v5507 = vpop.permute.xlu0 %5506
      %5508 = vrot.lane.b32.xlu0 %v5496, 32
      %v5509 = vpop.permute.xlu0 %5508
      %5510 = vrot.lane.b32.xlu0 %v5497, 32
      %v5511 = vpop.permute.xlu0 %5510
      %5512 = vrot.lane.b32.xlu0 %v5498, 32
      %v5513 = vpop.permute.xlu0 %5512
      %5514 = vrot.lane.b32.xlu0 %v5499, 32
      %v5515 = vpop.permute.xlu0 %5514
      %v5524 = vmul.f32 %v5378, %v5501
      %v5525 = vmul.f32 %v5393, %v5503
      %v5526 = vmul.f32 %v5408, %v5505
      %v5527 = vmul.f32 %v5423, %v5507
      %v5528 = vmul.f32 %v5438, %v5509
      %v5529 = vmul.f32 %v5453, %v5511
      %v5530 = vmul.f32 %v5468, %v5513
      %v5531 = vmul.f32 %v5483, %v5515
      %5540 = vrot.lane.b32.xlu0 %v5484, 64
      %v5541 = vpop.permute.xlu0 %5540
      %5542 = vrot.lane.b32.xlu0 %v5485, 64
      %v5543 = vpop.permute.xlu0 %5542
      %5544 = vrot.lane.b32.xlu0 %v5486, 64
      %v5545 = vpop.permute.xlu0 %5544
      %5546 = vrot.lane.b32.xlu0 %v5487, 64
      %v5547 = vpop.permute.xlu0 %5546
      %5548 = vrot.lane.b32.xlu0 %v5488, 64
      %v5549 = vpop.permute.xlu0 %5548
      %5550 = vrot.lane.b32.xlu0 %v5489, 64
      %v5551 = vpop.permute.xlu0 %5550
      %5552 = vrot.lane.b32.xlu0 %v5490, 64
      %v5553 = vpop.permute.xlu0 %5552
      %5554 = vrot.lane.b32.xlu0 %v5491, 64
      %v5555 = vpop.permute.xlu0 %5554
      %v5564 = vmul.f32 %v5378, %v5541
      %v5565 = vmul.f32 %v5393, %v5543
      %v5566 = vmul.f32 %v5408, %v5545
      %v5567 = vmul.f32 %v5423, %v5547
      %v5568 = vmul.f32 %v5438, %v5549
      %v5569 = vmul.f32 %v5453, %v5551
      %v5570 = vmul.f32 %v5468, %v5553
      %v5571 = vmul.f32 %v5483, %v5555
      %5580 = vrot.lane.b32.xlu0 %v5564, 32
      %v5581 = vpop.permute.xlu0 %5580
      %5582 = vrot.lane.b32.xlu0 %v5565, 32
      %v5583 = vpop.permute.xlu0 %5582
      %5584 = vrot.lane.b32.xlu0 %v5566, 32
      %v5585 = vpop.permute.xlu0 %5584
      %5586 = vrot.lane.b32.xlu0 %v5567, 32
      %v5587 = vpop.permute.xlu0 %5586
      %5588 = vrot.lane.b32.xlu0 %v5568, 32
      %v5589 = vpop.permute.xlu0 %5588
      %5590 = vrot.lane.b32.xlu0 %v5569, 32
      %v5591 = vpop.permute.xlu0 %5590
      %5592 = vrot.lane.b32.xlu0 %v5570, 32
      %v5593 = vpop.permute.xlu0 %5592
      %5594 = vrot.lane.b32.xlu0 %v5571, 32
      %v5595 = vpop.permute.xlu0 %5594
      %v5604 = vadd.f32 %v5524, %v5581
      %v5605 = vadd.f32 %v5525, %v5583
      %v5606 = vadd.f32 %v5526, %v5585
      %v5607 = vadd.f32 %v5527, %v5587
      %v5608 = vadd.f32 %v5528, %v5589
      %v5609 = vadd.f32 %v5529, %v5591
      %v5610 = vadd.f32 %v5530, %v5593
      %v5611 = vadd.f32 %v5531, %v5595
      %v5612 = vtanh.pop %v5604
      %v5613 = vtanh.pop %v5605
      %v5614 = vtanh.pop %v5606
      %v5615 = vtanh.pop %v5607
      %v5616 = vtanh.pop %v5608
      %v5617 = vtanh.pop %v5609
      %v5618 = vtanh.pop %v5610
      %v5619 = vtanh.pop %v5611
      %5628 = vrot.lane.b32.xlu0 %v5612, 64
      %v5629 = vpop.permute.xlu0 %5628
      %5630 = vrot.lane.b32.xlu0 %v5613, 64
      %v5631 = vpop.permute.xlu0 %5630
      %5632 = vrot.lane.b32.xlu0 %v5614, 64
      %v5633 = vpop.permute.xlu0 %5632
      %5634 = vrot.lane.b32.xlu0 %v5615, 64
      %v5635 = vpop.permute.xlu0 %5634
      %5636 = vrot.lane.b32.xlu0 %v5616, 64
      %v5637 = vpop.permute.xlu0 %5636
      %5638 = vrot.lane.b32.xlu0 %v5617, 64
      %v5639 = vpop.permute.xlu0 %5638
      %5640 = vrot.lane.b32.xlu0 %v5618, 64
      %v5641 = vpop.permute.xlu0 %5640
      %5642 = vrot.lane.b32.xlu0 %v5619, 64
      %v5643 = vpop.permute.xlu0 %5642
      %v5652 = vmul.f32 %v5378, %v5629
      %v5653 = vmul.f32 %v5393, %v5631
      %v5654 = vmul.f32 %v5408, %v5633
      %v5655 = vmul.f32 %v5423, %v5635
      %v5656 = vmul.f32 %v5438, %v5637
      %v5657 = vmul.f32 %v5453, %v5639
      %v5658 = vmul.f32 %v5468, %v5641
      %v5659 = vmul.f32 %v5483, %v5643
      %v5668 = vrot.slane %v5652, 2
      %v5669 = vrot.slane %v5653, 1
      %v5670 = vsel %vm1001, %v5669, %v5668
      %v5671 = vsel %vm1004, %v5654, %v5670
      %v5672 = vrot.slane %v5655, 7
      %v5673 = vsel %vm1007, %v5672, %v5671
      %v5674 = vrot.slane %v5656, 6
      %v5675 = vsel %vm1010, %v5674, %v5673
      %v5676 = vrot.slane %v5657, 5
      %v5677 = vsel %vm1013, %v5676, %v5675
      %v5678 = vrot.slane %v5658, 4
      %v5679 = vsel %vm1016, %v5678, %v5677
      %v5680 = vrot.slane %v5659, 3
      %v5681 = vsel %vm1019, %v5680, %v5679
      %5682 = vrot.lane.b32.xlu0 %v5681, 32
      %v5683 = vpop.permute.xlu0 %5682
      %v5685 = vsel %vm2694, %v5683, %v4843
      %v5694 = vrot.slane %v5604, 2
      %v5695 = vrot.slane %v5605, 1
      %v5696 = vsel %vm1001, %v5695, %v5694
      %v5697 = vsel %vm1004, %v5606, %v5696
      %v5698 = vrot.slane %v5607, 7
      %v5699 = vsel %vm1007, %v5698, %v5697
      %v5700 = vrot.slane %v5608, 6
      %v5701 = vsel %vm1010, %v5700, %v5699
      %v5702 = vrot.slane %v5609, 5
      %v5703 = vsel %vm1013, %v5702, %v5701
      %v5704 = vrot.slane %v5610, 4
      %v5705 = vsel %vm1016, %v5704, %v5703
      %v5706 = vrot.slane %v5611, 3
      %v5707 = vsel %vm1019, %v5706, %v5705
      %5708 = vrot.lane.b32.xlu0 %v5707, 96
      %v5709 = vpop.permute.xlu0 %5708
      %v5711 = vsel %vm2694, %v5709, %v4869
      %v5712 = vpack.c.bf16 %v5264, %v5264
      %v5714 = vsel %vm519, %v5712, 0
      %5716 = vmatpush.bf16.msra.mxu0 0
      %5717 = vmatpush.bf16.msra.mxu0 0
      %5718 = vmatpush.bf16.msra.mxu0 0
      %5719 = vmatpush.bf16.msra.mxu0 0
      %5720 = vmatpush.bf16.msra.mxu0 0
      %5721 = vmatpush.bf16.msra.mxu0 0
      %5722 = vmatpush.bf16.msra.mxu0 %v639
      %5723 = vmatpush.bf16.msra.mxu0 %v638
      %5724 = vmatmul.bf16.gmra.mxu0 %v5714
      %v5725 = vpop.f32.mrf.mxu0
      %v5726 = vadd.f32 0.0, %v5725
      %v5727 = vpop.f32.mrf.mxu0
      %5728 = vdwg.mxu0
      %v5730 = vrot.slane %v5726, 2
      %v5731 = vrot.slane %v5726, 3
      %v5732 = vrot.slane %v5726, 4
      %v5733 = vrot.slane %v5726, 5
      %v5734 = vrot.slane %v5726, 6
      %v5735 = vrot.slane %v5726, 7
      %v5736 = vrot.slane %v5726, 1
      %v5745 = vadd.f32 %v658, %v5730
      %v5746 = vadd.f32 %v659, %v5731
      %v5747 = vadd.f32 %v660, %v5732
      %v5748 = vadd.f32 %v661, %v5733
      %v5749 = vadd.f32 %v662, %v5734
      %v5750 = vadd.f32 %v663, %v5735
      %v5751 = vadd.f32 %v664, %v5726
      %v5752 = vadd.f32 %v665, %v5736
      %v5753 = vxor.u32 %v5745, 2147483648
      %v5754 = vxor.u32 %v5746, 2147483648
      %v5755 = vxor.u32 %v5747, 2147483648
      %v5756 = vxor.u32 %v5748, 2147483648
      %v5757 = vxor.u32 %v5749, 2147483648
      %v5758 = vxor.u32 %v5750, 2147483648
      %v5759 = vxor.u32 %v5751, 2147483648
      %v5760 = vxor.u32 %v5752, 2147483648
      %v5761 = vmul.f32 %v5753, 1.442695
      %v5762 = vpow.pop %v5761
      %v5763 = vmul.f32 %v5754, 1.442695
      %v5764 = vpow.pop %v5763
      %v5765 = vmul.f32 %v5755, 1.442695
      %v5766 = vpow.pop %v5765
      %v5767 = vmul.f32 %v5756, 1.442695
      %v5768 = vpow.pop %v5767
      %v5769 = vmul.f32 %v5757, 1.442695
      %v5770 = vpow.pop %v5769
      %v5771 = vmul.f32 %v5758, 1.442695
      %v5772 = vpow.pop %v5771
      %v5773 = vmul.f32 %v5759, 1.442695
      %v5774 = vpow.pop %v5773
      %v5775 = vmul.f32 %v5760, 1.442695
      %v5776 = vpow.pop %v5775
      %v5777 = vadd.f32 %v5762, 1.0
      %v5778 = vadd.f32 %v5764, 1.0
      %v5779 = vadd.f32 %v5766, 1.0
      %v5780 = vadd.f32 %v5768, 1.0
      %v5781 = vadd.f32 %v5770, 1.0
      %v5782 = vadd.f32 %v5772, 1.0
      %v5783 = vadd.f32 %v5774, 1.0
      %v5784 = vadd.f32 %v5776, 1.0
      %v5785 = vrcp.pop %v5777
      %v5786 = vmul.f32 %v5777, %v5785
      %v5787 = vsub.f32 1.0, %v5786
      %v5788 = vmul.f32 %v5785, %v5787
      %v5789 = vadd.f32 %v5785, %v5788
      %vm5790 = vweird.f32 %v5777
      %vm5791 = vweird.f32 %v5785
      %vm5792 = vmor %vm5790, %vm5791
      %v5793 = vsel %vm5792, %v5785, %v5789
      %v5794 = vand.u32 2147483647, %v5777
      %vm5795 = vcmp.eq.f32.partialorder %v5794, 8.507059e+37
      %v5796 = vand.u32 %v5777, 2147483648
      %v5797 = vor.u32 1.1754944e-38, %v5796
      %v5798 = vsel %vm5795, %v5797, %v5793
      %v5799 = vmul.f32 1.0, %v5798
      %v5800 = vrcp.pop %v5778
      %v5801 = vmul.f32 %v5778, %v5800
      %v5802 = vsub.f32 1.0, %v5801
      %v5803 = vmul.f32 %v5800, %v5802
      %v5804 = vadd.f32 %v5800, %v5803
      %vm5805 = vweird.f32 %v5778
      %vm5806 = vweird.f32 %v5800
      %vm5807 = vmor %vm5805, %vm5806
      %v5808 = vsel %vm5807, %v5800, %v5804
      %v5809 = vand.u32 2147483647, %v5778
      %vm5810 = vcmp.eq.f32.partialorder %v5809, 8.507059e+37
      %v5811 = vand.u32 %v5778, 2147483648
      %v5812 = vor.u32 1.1754944e-38, %v5811
      %v5813 = vsel %vm5810, %v5812, %v5808
      %v5814 = vmul.f32 1.0, %v5813
      %v5815 = vrcp.pop %v5779
      %v5816 = vmul.f32 %v5779, %v5815
      %v5817 = vsub.f32 1.0, %v5816
      %v5818 = vmul.f32 %v5815, %v5817
      %v5819 = vadd.f32 %v5815, %v5818
      %vm5820 = vweird.f32 %v5779
      %vm5821 = vweird.f32 %v5815
      %vm5822 = vmor %vm5820, %vm5821
      %v5823 = vsel %vm5822, %v5815, %v5819
      %v5824 = vand.u32 2147483647, %v5779
      %vm5825 = vcmp.eq.f32.partialorder %v5824, 8.507059e+37
      %v5826 = vand.u32 %v5779, 2147483648
      %v5827 = vor.u32 1.1754944e-38, %v5826
      %v5828 = vsel %vm5825, %v5827, %v5823
      %v5829 = vmul.f32 1.0, %v5828
      %v5830 = vrcp.pop %v5780
      %v5831 = vmul.f32 %v5780, %v5830
      %v5832 = vsub.f32 1.0, %v5831
      %v5833 = vmul.f32 %v5830, %v5832
      %v5834 = vadd.f32 %v5830, %v5833
      %vm5835 = vweird.f32 %v5780
      %vm5836 = vweird.f32 %v5830
      %vm5837 = vmor %vm5835, %vm5836
      %v5838 = vsel %vm5837, %v5830, %v5834
      %v5839 = vand.u32 2147483647, %v5780
      %vm5840 = vcmp.eq.f32.partialorder %v5839, 8.507059e+37
      %v5841 = vand.u32 %v5780, 2147483648
      %v5842 = vor.u32 1.1754944e-38, %v5841
      %v5843 = vsel %vm5840, %v5842, %v5838
      %v5844 = vmul.f32 1.0, %v5843
      %v5845 = vrcp.pop %v5781
      %v5846 = vmul.f32 %v5781, %v5845
      %v5847 = vsub.f32 1.0, %v5846
      %v5848 = vmul.f32 %v5845, %v5847
      %v5849 = vadd.f32 %v5845, %v5848
      %vm5850 = vweird.f32 %v5781
      %vm5851 = vweird.f32 %v5845
      %vm5852 = vmor %vm5850, %vm5851
      %v5853 = vsel %vm5852, %v5845, %v5849
      %v5854 = vand.u32 2147483647, %v5781
      %vm5855 = vcmp.eq.f32.partialorder %v5854, 8.507059e+37
      %v5856 = vand.u32 %v5781, 2147483648
      %v5857 = vor.u32 1.1754944e-38, %v5856
      %v5858 = vsel %vm5855, %v5857, %v5853
      %v5859 = vmul.f32 1.0, %v5858
      %v5860 = vrcp.pop %v5782
      %v5861 = vmul.f32 %v5782, %v5860
      %v5862 = vsub.f32 1.0, %v5861
      %v5863 = vmul.f32 %v5860, %v5862
      %v5864 = vadd.f32 %v5860, %v5863
      %vm5865 = vweird.f32 %v5782
      %vm5866 = vweird.f32 %v5860
      %vm5867 = vmor %vm5865, %vm5866
      %v5868 = vsel %vm5867, %v5860, %v5864
      %v5869 = vand.u32 2147483647, %v5782
      %vm5870 = vcmp.eq.f32.partialorder %v5869, 8.507059e+37
      %v5871 = vand.u32 %v5782, 2147483648
      %v5872 = vor.u32 1.1754944e-38, %v5871
      %v5873 = vsel %vm5870, %v5872, %v5868
      %v5874 = vmul.f32 1.0, %v5873
      %v5875 = vrcp.pop %v5783
      %v5876 = vmul.f32 %v5783, %v5875
      %v5877 = vsub.f32 1.0, %v5876
      %v5878 = vmul.f32 %v5875, %v5877
      %v5879 = vadd.f32 %v5875, %v5878
      %vm5880 = vweird.f32 %v5783
      %vm5881 = vweird.f32 %v5875
      %vm5882 = vmor %vm5880, %vm5881
      %v5883 = vsel %vm5882, %v5875, %v5879
      %v5884 = vand.u32 2147483647, %v5783
      %vm5885 = vcmp.eq.f32.partialorder %v5884, 8.507059e+37
      %v5886 = vand.u32 %v5783, 2147483648
      %v5887 = vor.u32 1.1754944e-38, %v5886
      %v5888 = vsel %vm5885, %v5887, %v5883
      %v5889 = vmul.f32 1.0, %v5888
      %v5890 = vrcp.pop %v5784
      %v5891 = vmul.f32 %v5784, %v5890
      %v5892 = vsub.f32 1.0, %v5891
      %v5893 = vmul.f32 %v5890, %v5892
      %v5894 = vadd.f32 %v5890, %v5893
      %vm5895 = vweird.f32 %v5784
      %vm5896 = vweird.f32 %v5890
      %vm5897 = vmor %vm5895, %vm5896
      %v5898 = vsel %vm5897, %v5890, %v5894
      %v5899 = vand.u32 2147483647, %v5784
      %vm5900 = vcmp.eq.f32.partialorder %v5899, 8.507059e+37
      %v5901 = vand.u32 %v5784, 2147483648
      %v5902 = vor.u32 1.1754944e-38, %v5901
      %v5903 = vsel %vm5900, %v5902, %v5898
      %v5904 = vmul.f32 1.0, %v5903
      %v5905 = vtanh.pop %v5745
      %v5906 = vtanh.pop %v5746
      %v5907 = vtanh.pop %v5747
      %v5908 = vtanh.pop %v5748
      %v5909 = vtanh.pop %v5749
      %v5910 = vtanh.pop %v5750
      %v5911 = vtanh.pop %v5751
      %v5912 = vtanh.pop %v5752
      %v5914 = vrot.slane %v5290, 2
      %v5915 = vrot.slane %v5290, 3
      %v5916 = vrot.slane %v5290, 4
      %v5917 = vrot.slane %v5290, 5
      %v5918 = vrot.slane %v5290, 6
      %v5919 = vrot.slane %v5290, 7
      %v5920 = vrot.slane %v5290, 1
      %5921 = vrot.lane.b32.xlu0 %v5914, 32
      %v5922 = vpop.permute.xlu0 %5921
      %5923 = vrot.lane.b32.xlu0 %v5915, 32
      %v5924 = vpop.permute.xlu0 %5923
      %5925 = vrot.lane.b32.xlu0 %v5916, 32
      %v5926 = vpop.permute.xlu0 %5925
      %5927 = vrot.lane.b32.xlu0 %v5917, 32
      %v5928 = vpop.permute.xlu0 %5927
      %5929 = vrot.lane.b32.xlu0 %v5918, 32
      %v5930 = vpop.permute.xlu0 %5929
      %5931 = vrot.lane.b32.xlu0 %v5919, 32
      %v5932 = vpop.permute.xlu0 %5931
      %5933 = vrot.lane.b32.xlu0 %v5290, 32
      %v5934 = vpop.permute.xlu0 %5933
      %5935 = vrot.lane.b32.xlu0 %v5920, 32
      %v5936 = vpop.permute.xlu0 %5935
      %v5945 = vmul.f32 %v5799, %v5922
      %v5946 = vmul.f32 %v5814, %v5924
      %v5947 = vmul.f32 %v5829, %v5926
      %v5948 = vmul.f32 %v5844, %v5928
      %v5949 = vmul.f32 %v5859, %v5930
      %v5950 = vmul.f32 %v5874, %v5932
      %v5951 = vmul.f32 %v5889, %v5934
      %v5952 = vmul.f32 %v5904, %v5936
      %5961 = vrot.lane.b32.xlu0 %v5905, 64
      %v5962 = vpop.permute.xlu0 %5961
      %5963 = vrot.lane.b32.xlu0 %v5906, 64
      %v5964 = vpop.permute.xlu0 %5963
      %5965 = vrot.lane.b32.xlu0 %v5907, 64
      %v5966 = vpop.permute.xlu0 %5965
      %5967 = vrot.lane.b32.xlu0 %v5908, 64
      %v5968 = vpop.permute.xlu0 %5967
      %5969 = vrot.lane.b32.xlu0 %v5909, 64
      %v5970 = vpop.permute.xlu0 %5969
      %5971 = vrot.lane.b32.xlu0 %v5910, 64
      %v5972 = vpop.permute.xlu0 %5971
      %5973 = vrot.lane.b32.xlu0 %v5911, 64
      %v5974 = vpop.permute.xlu0 %5973
      %5975 = vrot.lane.b32.xlu0 %v5912, 64
      %v5976 = vpop.permute.xlu0 %5975
      %v5985 = vmul.f32 %v5799, %v5962
      %v5986 = vmul.f32 %v5814, %v5964
      %v5987 = vmul.f32 %v5829, %v5966
      %v5988 = vmul.f32 %v5844, %v5968
      %v5989 = vmul.f32 %v5859, %v5970
      %v5990 = vmul.f32 %v5874, %v5972
      %v5991 = vmul.f32 %v5889, %v5974
      %v5992 = vmul.f32 %v5904, %v5976
      %6001 = vrot.lane.b32.xlu0 %v5985, 32
      %v6002 = vpop.permute.xlu0 %6001
      %6003 = vrot.lane.b32.xlu0 %v5986, 32
      %v6004 = vpop.permute.xlu0 %6003
      %6005 = vrot.lane.b32.xlu0 %v5987, 32
      %v6006 = vpop.permute.xlu0 %6005
      %6007 = vrot.lane.b32.xlu0 %v5988, 32
      %v6008 = vpop.permute.xlu0 %6007
      %6009 = vrot.lane.b32.xlu0 %v5989, 32
      %v6010 = vpop.permute.xlu0 %6009
      %6011 = vrot.lane.b32.xlu0 %v5990, 32
      %v6012 = vpop.permute.xlu0 %6011
      %6013 = vrot.lane.b32.xlu0 %v5991, 32
      %v6014 = vpop.permute.xlu0 %6013
      %6015 = vrot.lane.b32.xlu0 %v5992, 32
      %v6016 = vpop.permute.xlu0 %6015
      %v6025 = vadd.f32 %v5945, %v6002
      %v6026 = vadd.f32 %v5946, %v6004
      %v6027 = vadd.f32 %v5947, %v6006
      %v6028 = vadd.f32 %v5948, %v6008
      %v6029 = vadd.f32 %v5949, %v6010
      %v6030 = vadd.f32 %v5950, %v6012
      %v6031 = vadd.f32 %v5951, %v6014
      %v6032 = vadd.f32 %v5952, %v6016
      %v6033 = vtanh.pop %v6025
      %v6034 = vtanh.pop %v6026
      %v6035 = vtanh.pop %v6027
      %v6036 = vtanh.pop %v6028
      %v6037 = vtanh.pop %v6029
      %v6038 = vtanh.pop %v6030
      %v6039 = vtanh.pop %v6031
      %v6040 = vtanh.pop %v6032
      %6049 = vrot.lane.b32.xlu0 %v6033, 64
      %v6050 = vpop.permute.xlu0 %6049
      %6051 = vrot.lane.b32.xlu0 %v6034, 64
      %v6052 = vpop.permute.xlu0 %6051
      %6053 = vrot.lane.b32.xlu0 %v6035, 64
      %v6054 = vpop.permute.xlu0 %6053
      %6055 = vrot.lane.b32.xlu0 %v6036, 64
      %v6056 = vpop.permute.xlu0 %6055
      %6057 = vrot.lane.b32.xlu0 %v6037, 64
      %v6058 = vpop.permute.xlu0 %6057
      %6059 = vrot.lane.b32.xlu0 %v6038, 64
      %v6060 = vpop.permute.xlu0 %6059
      %6061 = vrot.lane.b32.xlu0 %v6039, 64
      %v6062 = vpop.permute.xlu0 %6061
      %6063 = vrot.lane.b32.xlu0 %v6040, 64
      %v6064 = vpop.permute.xlu0 %6063
      %v6073 = vmul.f32 %v5799, %v6050
      %v6074 = vmul.f32 %v5814, %v6052
      %v6075 = vmul.f32 %v5829, %v6054
      %v6076 = vmul.f32 %v5844, %v6056
      %v6077 = vmul.f32 %v5859, %v6058
      %v6078 = vmul.f32 %v5874, %v6060
      %v6079 = vmul.f32 %v5889, %v6062
      %v6080 = vmul.f32 %v5904, %v6064
      %v6089 = vrot.slane %v6073, 6
      %v6090 = vrot.slane %v6074, 5
      %v6091 = vsel %vm1001, %v6090, %v6089
      %v6092 = vrot.slane %v6075, 4
      %v6093 = vsel %vm1004, %v6092, %v6091
      %v6094 = vrot.slane %v6076, 3
      %v6095 = vsel %vm1007, %v6094, %v6093
      %v6096 = vrot.slane %v6077, 2
      %v6097 = vsel %vm1010, %v6096, %v6095
      %v6098 = vrot.slane %v6078, 1
      %v6099 = vsel %vm1013, %v6098, %v6097
      %v6100 = vsel %vm1016, %v6079, %v6099
      %v6101 = vrot.slane %v6080, 7
      %v6102 = vsel %vm1019, %v6101, %v6100
      %6103 = vrot.lane.b32.xlu0 %v6102, 32
      %v6104 = vpop.permute.xlu0 %6103
      %v6106 = vsel %vm2267, %v6104, %v5264
      %v6115 = vrot.slane %v6025, 6
      %v6116 = vrot.slane %v6026, 5
      %v6117 = vsel %vm1001, %v6116, %v6115
      %v6118 = vrot.slane %v6027, 4
      %v6119 = vsel %vm1004, %v6118, %v6117
      %v6120 = vrot.slane %v6028, 3
      %v6121 = vsel %vm1007, %v6120, %v6119
      %v6122 = vrot.slane %v6029, 2
      %v6123 = vsel %vm1010, %v6122, %v6121
      %v6124 = vrot.slane %v6030, 1
      %v6125 = vsel %vm1013, %v6124, %v6123
      %v6126 = vsel %vm1016, %v6031, %v6125
      %v6127 = vrot.slane %v6032, 7
      %v6128 = vsel %vm1019, %v6127, %v6126
      %6129 = vrot.lane.b32.xlu0 %v6128, 96
      %v6130 = vpop.permute.xlu0 %6129
      %v6132 = vsel %vm2267, %v6130, %v5290
      %v6133 = vpack.c.bf16 %v5685, %v5685
      %v6135 = vsel %vm519, %v6133, 0
      %6137 = vmatpush.bf16.msra.mxu0 0
      %6138 = vmatpush.bf16.msra.mxu0 0
      %6139 = vmatpush.bf16.msra.mxu0 0
      %6140 = vmatpush.bf16.msra.mxu0 0
      %6141 = vmatpush.bf16.msra.mxu0 0
      %6142 = vmatpush.bf16.msra.mxu0 0
      %6143 = vmatpush.bf16.msra.mxu0 %v1064
      %6144 = vmatpush.bf16.msra.mxu0 %v1063
      %6145 = vmatmul.bf16.gmra.mxu0 %v6135
      %v6146 = vpop.f32.mrf.mxu0
      %v6147 = vadd.f32 0.0, %v6146
      %v6148 = vpop.f32.mrf.mxu0
      %6149 = vdwg.mxu0
      %v6151 = vrot.slane %v6147, 7
      %v6152 = vrot.slane %v6147, 1
      %v6153 = vrot.slane %v6147, 2
      %v6154 = vrot.slane %v6147, 3
      %v6155 = vrot.slane %v6147, 4
      %v6156 = vrot.slane %v6147, 5
      %v6157 = vrot.slane %v6147, 6
      %v6166 = vadd.f32 %v1080, %v6151
      %v6167 = vadd.f32 %v1081, %v6147
      %v6168 = vadd.f32 %v1082, %v6152
      %v6169 = vadd.f32 %v1083, %v6153
      %v6170 = vadd.f32 %v1084, %v6154
      %v6171 = vadd.f32 %v1085, %v6155
      %v6172 = vadd.f32 %v1086, %v6156
      %v6173 = vadd.f32 %v1087, %v6157
      %v6174 = vxor.u32 %v6166, 2147483648
      %v6175 = vxor.u32 %v6167, 2147483648
      %v6176 = vxor.u32 %v6168, 2147483648
      %v6177 = vxor.u32 %v6169, 2147483648
      %v6178 = vxor.u32 %v6170, 2147483648
      %v6179 = vxor.u32 %v6171, 2147483648
      %v6180 = vxor.u32 %v6172, 2147483648
      %v6181 = vxor.u32 %v6173, 2147483648
      %v6182 = vmul.f32 %v6174, 1.442695
      %v6183 = vpow.pop %v6182
      %v6184 = vmul.f32 %v6175, 1.442695
      %v6185 = vpow.pop %v6184
      %v6186 = vmul.f32 %v6176, 1.442695
      %v6187 = vpow.pop %v6186
      %v6188 = vmul.f32 %v6177, 1.442695
      %v6189 = vpow.pop %v6188
      %v6190 = vmul.f32 %v6178, 1.442695
      %v6191 = vpow.pop %v6190
      %v6192 = vmul.f32 %v6179, 1.442695
      %v6193 = vpow.pop %v6192
      %v6194 = vmul.f32 %v6180, 1.442695
      %v6195 = vpow.pop %v6194
      %v6196 = vmul.f32 %v6181, 1.442695
      %v6197 = vpow.pop %v6196
      %v6198 = vadd.f32 %v6183, 1.0
      %v6199 = vadd.f32 %v6185, 1.0
      %v6200 = vadd.f32 %v6187, 1.0
      %v6201 = vadd.f32 %v6189, 1.0
      %v6202 = vadd.f32 %v6191, 1.0
      %v6203 = vadd.f32 %v6193, 1.0
      %v6204 = vadd.f32 %v6195, 1.0
      %v6205 = vadd.f32 %v6197, 1.0
      %v6206 = vrcp.pop %v6198
      %v6207 = vmul.f32 %v6198, %v6206
      %v6208 = vsub.f32 1.0, %v6207
      %v6209 = vmul.f32 %v6206, %v6208
      %v6210 = vadd.f32 %v6206, %v6209
      %vm6211 = vweird.f32 %v6198
      %vm6212 = vweird.f32 %v6206
      %vm6213 = vmor %vm6211, %vm6212
      %v6214 = vsel %vm6213, %v6206, %v6210
      %v6215 = vand.u32 2147483647, %v6198
      %vm6216 = vcmp.eq.f32.partialorder %v6215, 8.507059e+37
      %v6217 = vand.u32 %v6198, 2147483648
      %v6218 = vor.u32 1.1754944e-38, %v6217
      %v6219 = vsel %vm6216, %v6218, %v6214
      %v6220 = vmul.f32 1.0, %v6219
      %v6221 = vrcp.pop %v6199
      %v6222 = vmul.f32 %v6199, %v6221
      %v6223 = vsub.f32 1.0, %v6222
      %v6224 = vmul.f32 %v6221, %v6223
      %v6225 = vadd.f32 %v6221, %v6224
      %vm6226 = vweird.f32 %v6199
      %vm6227 = vweird.f32 %v6221
      %vm6228 = vmor %vm6226, %vm6227
      %v6229 = vsel %vm6228, %v6221, %v6225
      %v6230 = vand.u32 2147483647, %v6199
      %vm6231 = vcmp.eq.f32.partialorder %v6230, 8.507059e+37
      %v6232 = vand.u32 %v6199, 2147483648
      %v6233 = vor.u32 1.1754944e-38, %v6232
      %v6234 = vsel %vm6231, %v6233, %v6229
      %v6235 = vmul.f32 1.0, %v6234
      %v6236 = vrcp.pop %v6200
      %v6237 = vmul.f32 %v6200, %v6236
      %v6238 = vsub.f32 1.0, %v6237
      %v6239 = vmul.f32 %v6236, %v6238
      %v6240 = vadd.f32 %v6236, %v6239
      %vm6241 = vweird.f32 %v6200
      %vm6242 = vweird.f32 %v6236
      %vm6243 = vmor %vm6241, %vm6242
      %v6244 = vsel %vm6243, %v6236, %v6240
      %v6245 = vand.u32 2147483647, %v6200
      %vm6246 = vcmp.eq.f32.partialorder %v6245, 8.507059e+37
      %v6247 = vand.u32 %v6200, 2147483648
      %v6248 = vor.u32 1.1754944e-38, %v6247
      %v6249 = vsel %vm6246, %v6248, %v6244
      %v6250 = vmul.f32 1.0, %v6249
      %v6251 = vrcp.pop %v6201
      %v6252 = vmul.f32 %v6201, %v6251
      %v6253 = vsub.f32 1.0, %v6252
      %v6254 = vmul.f32 %v6251, %v6253
      %v6255 = vadd.f32 %v6251, %v6254
      %vm6256 = vweird.f32 %v6201
      %vm6257 = vweird.f32 %v6251
      %vm6258 = vmor %vm6256, %vm6257
      %v6259 = vsel %vm6258, %v6251, %v6255
      %v6260 = vand.u32 2147483647, %v6201
      %vm6261 = vcmp.eq.f32.partialorder %v6260, 8.507059e+37
      %v6262 = vand.u32 %v6201, 2147483648
      %v6263 = vor.u32 1.1754944e-38, %v6262
      %v6264 = vsel %vm6261, %v6263, %v6259
      %v6265 = vmul.f32 1.0, %v6264
      %v6266 = vrcp.pop %v6202
      %v6267 = vmul.f32 %v6202, %v6266
      %v6268 = vsub.f32 1.0, %v6267
      %v6269 = vmul.f32 %v6266, %v6268
      %v6270 = vadd.f32 %v6266, %v6269
      %vm6271 = vweird.f32 %v6202
      %vm6272 = vweird.f32 %v6266
      %vm6273 = vmor %vm6271, %vm6272
      %v6274 = vsel %vm6273, %v6266, %v6270
      %v6275 = vand.u32 2147483647, %v6202
      %vm6276 = vcmp.eq.f32.partialorder %v6275, 8.507059e+37
      %v6277 = vand.u32 %v6202, 2147483648
      %v6278 = vor.u32 1.1754944e-38, %v6277
      %v6279 = vsel %vm6276, %v6278, %v6274
      %v6280 = vmul.f32 1.0, %v6279
      %v6281 = vrcp.pop %v6203
      %v6282 = vmul.f32 %v6203, %v6281
      %v6283 = vsub.f32 1.0, %v6282
      %v6284 = vmul.f32 %v6281, %v6283
      %v6285 = vadd.f32 %v6281, %v6284
      %vm6286 = vweird.f32 %v6203
      %vm6287 = vweird.f32 %v6281
      %vm6288 = vmor %vm6286, %vm6287
      %v6289 = vsel %vm6288, %v6281, %v6285
      %v6290 = vand.u32 2147483647, %v6203
      %vm6291 = vcmp.eq.f32.partialorder %v6290, 8.507059e+37
      %v6292 = vand.u32 %v6203, 2147483648
      %v6293 = vor.u32 1.1754944e-38, %v6292
      %v6294 = vsel %vm6291, %v6293, %v6289
      %v6295 = vmul.f32 1.0, %v6294
      %v6296 = vrcp.pop %v6204
      %v6297 = vmul.f32 %v6204, %v6296
      %v6298 = vsub.f32 1.0, %v6297
      %v6299 = vmul.f32 %v6296, %v6298
      %v6300 = vadd.f32 %v6296, %v6299
      %vm6301 = vweird.f32 %v6204
      %vm6302 = vweird.f32 %v6296
      %vm6303 = vmor %vm6301, %vm6302
      %v6304 = vsel %vm6303, %v6296, %v6300
      %v6305 = vand.u32 2147483647, %v6204
      %vm6306 = vcmp.eq.f32.partialorder %v6305, 8.507059e+37
      %v6307 = vand.u32 %v6204, 2147483648
      %v6308 = vor.u32 1.1754944e-38, %v6307
      %v6309 = vsel %vm6306, %v6308, %v6304
      %v6310 = vmul.f32 1.0, %v6309
      %v6311 = vrcp.pop %v6205
      %v6312 = vmul.f32 %v6205, %v6311
      %v6313 = vsub.f32 1.0, %v6312
      %v6314 = vmul.f32 %v6311, %v6313
      %v6315 = vadd.f32 %v6311, %v6314
      %vm6316 = vweird.f32 %v6205
      %vm6317 = vweird.f32 %v6311
      %vm6318 = vmor %vm6316, %vm6317
      %v6319 = vsel %vm6318, %v6311, %v6315
      %v6320 = vand.u32 2147483647, %v6205
      %vm6321 = vcmp.eq.f32.partialorder %v6320, 8.507059e+37
      %v6322 = vand.u32 %v6205, 2147483648
      %v6323 = vor.u32 1.1754944e-38, %v6322
      %v6324 = vsel %vm6321, %v6323, %v6319
      %v6325 = vmul.f32 1.0, %v6324
      %v6326 = vtanh.pop %v6166
      %v6327 = vtanh.pop %v6167
      %v6328 = vtanh.pop %v6168
      %v6329 = vtanh.pop %v6169
      %v6330 = vtanh.pop %v6170
      %v6331 = vtanh.pop %v6171
      %v6332 = vtanh.pop %v6172
      %v6333 = vtanh.pop %v6173
      %v6335 = vrot.slane %v5711, 7
      %v6336 = vrot.slane %v5711, 1
      %v6337 = vrot.slane %v5711, 2
      %v6338 = vrot.slane %v5711, 3
      %v6339 = vrot.slane %v5711, 4
      %v6340 = vrot.slane %v5711, 5
      %v6341 = vrot.slane %v5711, 6
      %6342 = vrot.lane.b32.xlu0 %v6335, 32
      %v6343 = vpop.permute.xlu0 %6342
      %6344 = vrot.lane.b32.xlu0 %v5711, 32
      %v6345 = vpop.permute.xlu0 %6344
      %6346 = vrot.lane.b32.xlu0 %v6336, 32
      %v6347 = vpop.permute.xlu0 %6346
      %6348 = vrot.lane.b32.xlu0 %v6337, 32
      %v6349 = vpop.permute.xlu0 %6348
      %6350 = vrot.lane.b32.xlu0 %v6338, 32
      %v6351 = vpop.permute.xlu0 %6350
      %6352 = vrot.lane.b32.xlu0 %v6339, 32
      %v6353 = vpop.permute.xlu0 %6352
      %6354 = vrot.lane.b32.xlu0 %v6340, 32
      %v6355 = vpop.permute.xlu0 %6354
      %6356 = vrot.lane.b32.xlu0 %v6341, 32
      %v6357 = vpop.permute.xlu0 %6356
      %v6366 = vmul.f32 %v6220, %v6343
      %v6367 = vmul.f32 %v6235, %v6345
      %v6368 = vmul.f32 %v6250, %v6347
      %v6369 = vmul.f32 %v6265, %v6349
      %v6370 = vmul.f32 %v6280, %v6351
      %v6371 = vmul.f32 %v6295, %v6353
      %v6372 = vmul.f32 %v6310, %v6355
      %v6373 = vmul.f32 %v6325, %v6357
      %6382 = vrot.lane.b32.xlu0 %v6326, 64
      %v6383 = vpop.permute.xlu0 %6382
      %6384 = vrot.lane.b32.xlu0 %v6327, 64
      %v6385 = vpop.permute.xlu0 %6384
      %6386 = vrot.lane.b32.xlu0 %v6328, 64
      %v6387 = vpop.permute.xlu0 %6386
      %6388 = vrot.lane.b32.xlu0 %v6329, 64
      %v6389 = vpop.permute.xlu0 %6388
      %6390 = vrot.lane.b32.xlu0 %v6330, 64
      %v6391 = vpop.permute.xlu0 %6390
      %6392 = vrot.lane.b32.xlu0 %v6331, 64
      %v6393 = vpop.permute.xlu0 %6392
      %6394 = vrot.lane.b32.xlu0 %v6332, 64
      %v6395 = vpop.permute.xlu0 %6394
      %6396 = vrot.lane.b32.xlu0 %v6333, 64
      %v6397 = vpop.permute.xlu0 %6396
      %v6406 = vmul.f32 %v6220, %v6383
      %v6407 = vmul.f32 %v6235, %v6385
      %v6408 = vmul.f32 %v6250, %v6387
      %v6409 = vmul.f32 %v6265, %v6389
      %v6410 = vmul.f32 %v6280, %v6391
      %v6411 = vmul.f32 %v6295, %v6393
      %v6412 = vmul.f32 %v6310, %v6395
      %v6413 = vmul.f32 %v6325, %v6397
      %6422 = vrot.lane.b32.xlu0 %v6406, 32
      %v6423 = vpop.permute.xlu0 %6422
      %6424 = vrot.lane.b32.xlu0 %v6407, 32
      %v6425 = vpop.permute.xlu0 %6424
      %6426 = vrot.lane.b32.xlu0 %v6408, 32
      %v6427 = vpop.permute.xlu0 %6426
      %6428 = vrot.lane.b32.xlu0 %v6409, 32
      %v6429 = vpop.permute.xlu0 %6428
      %6430 = vrot.lane.b32.xlu0 %v6410, 32
      %v6431 = vpop.permute.xlu0 %6430
      %6432 = vrot.lane.b32.xlu0 %v6411, 32
      %v6433 = vpop.permute.xlu0 %6432
      %6434 = vrot.lane.b32.xlu0 %v6412, 32
      %v6435 = vpop.permute.xlu0 %6434
      %6436 = vrot.lane.b32.xlu0 %v6413, 32
      %v6437 = vpop.permute.xlu0 %6436
      %v6446 = vadd.f32 %v6366, %v6423
      %v6447 = vadd.f32 %v6367, %v6425
      %v6448 = vadd.f32 %v6368, %v6427
      %v6449 = vadd.f32 %v6369, %v6429
      %v6450 = vadd.f32 %v6370, %v6431
      %v6451 = vadd.f32 %v6371, %v6433
      %v6452 = vadd.f32 %v6372, %v6435
      %v6453 = vadd.f32 %v6373, %v6437
      %v6454 = vtanh.pop %v6446
      %v6455 = vtanh.pop %v6447
      %v6456 = vtanh.pop %v6448
      %v6457 = vtanh.pop %v6449
      %v6458 = vtanh.pop %v6450
      %v6459 = vtanh.pop %v6451
      %v6460 = vtanh.pop %v6452
      %v6461 = vtanh.pop %v6453
      %6470 = vrot.lane.b32.xlu0 %v6454, 64
      %v6471 = vpop.permute.xlu0 %6470
      %6472 = vrot.lane.b32.xlu0 %v6455, 64
      %v6473 = vpop.permute.xlu0 %6472
      %6474 = vrot.lane.b32.xlu0 %v6456, 64
      %v6475 = vpop.permute.xlu0 %6474
      %6476 = vrot.lane.b32.xlu0 %v6457, 64
      %v6477 = vpop.permute.xlu0 %6476
      %6478 = vrot.lane.b32.xlu0 %v6458, 64
      %v6479 = vpop.permute.xlu0 %6478
      %6480 = vrot.lane.b32.xlu0 %v6459, 64
      %v6481 = vpop.permute.xlu0 %6480
      %6482 = vrot.lane.b32.xlu0 %v6460, 64
      %v6483 = vpop.permute.xlu0 %6482
      %6484 = vrot.lane.b32.xlu0 %v6461, 64
      %v6485 = vpop.permute.xlu0 %6484
      %v6494 = vmul.f32 %v6220, %v6471
      %v6495 = vmul.f32 %v6235, %v6473
      %v6496 = vmul.f32 %v6250, %v6475
      %v6497 = vmul.f32 %v6265, %v6477
      %v6498 = vmul.f32 %v6280, %v6479
      %v6499 = vmul.f32 %v6295, %v6481
      %v6500 = vmul.f32 %v6310, %v6483
      %v6501 = vmul.f32 %v6325, %v6485
      %v6510 = vrot.slane %v6494, 1
      %v6511 = vsel %vm1001, %v6495, %v6510
      %v6512 = vrot.slane %v6496, 7
      %v6513 = vsel %vm1004, %v6512, %v6511
      %v6514 = vrot.slane %v6497, 6
      %v6515 = vsel %vm1007, %v6514, %v6513
      %v6516 = vrot.slane %v6498, 5
      %v6517 = vsel %vm1010, %v6516, %v6515
      %v6518 = vrot.slane %v6499, 4
      %v6519 = vsel %vm1013, %v6518, %v6517
      %v6520 = vrot.slane %v6500, 3
      %v6521 = vsel %vm1016, %v6520, %v6519
      %v6522 = vrot.slane %v6501, 2
      %v6523 = vsel %vm1019, %v6522, %v6521
      %6524 = vrot.lane.b32.xlu0 %v6523, 32
      %v6525 = vpop.permute.xlu0 %6524
      %v6527 = vsel %vm1840, %v6525, %v5685
      %v6536 = vrot.slane %v6446, 1
      %v6537 = vsel %vm1001, %v6447, %v6536
      %v6538 = vrot.slane %v6448, 7
      %v6539 = vsel %vm1004, %v6538, %v6537
      %v6540 = vrot.slane %v6449, 6
      %v6541 = vsel %vm1007, %v6540, %v6539
      %v6542 = vrot.slane %v6450, 5
      %v6543 = vsel %vm1010, %v6542, %v6541
      %v6544 = vrot.slane %v6451, 4
      %v6545 = vsel %vm1013, %v6544, %v6543
      %v6546 = vrot.slane %v6452, 3
      %v6547 = vsel %vm1016, %v6546, %v6545
      %v6548 = vrot.slane %v6453, 2
      %v6549 = vsel %vm1019, %v6548, %v6547
      %6550 = vrot.lane.b32.xlu0 %v6549, 96
      %v6551 = vpop.permute.xlu0 %6550
      %v6553 = vsel %vm1840, %v6551, %v5711
      %v6554 = vpack.c.bf16 %v6106, %v6106
      %v6556 = vsel %vm519, %v6554, 0
      %6558 = vmatpush.bf16.msra.mxu0 0
      %6559 = vmatpush.bf16.msra.mxu0 0
      %6560 = vmatpush.bf16.msra.mxu0 0
      %6561 = vmatpush.bf16.msra.mxu0 0
      %6562 = vmatpush.bf16.msra.mxu0 0
      %6563 = vmatpush.bf16.msra.mxu0 0
      %6564 = vmatpush.bf16.msra.mxu0 %v639
      %6565 = vmatpush.bf16.msra.mxu0 %v638
      %6566 = vmatmul.bf16.gmra.mxu0 %v6556
      %v6567 = vpop.f32.mrf.mxu0
      %v6568 = vadd.f32 0.0, %v6567
      %v6569 = vpop.f32.mrf.mxu0
      %6570 = vdwg.mxu0
      %v6572 = vrot.slane %v6568, 1
      %v6573 = vrot.slane %v6568, 2
      %v6574 = vrot.slane %v6568, 3
      %v6575 = vrot.slane %v6568, 4
      %v6576 = vrot.slane %v6568, 5
      %v6577 = vrot.slane %v6568, 6
      %v6578 = vrot.slane %v6568, 7
      %v6587 = vadd.f32 %v658, %v6572
      %v6588 = vadd.f32 %v659, %v6573
      %v6589 = vadd.f32 %v660, %v6574
      %v6590 = vadd.f32 %v661, %v6575
      %v6591 = vadd.f32 %v662, %v6576
      %v6592 = vadd.f32 %v663, %v6577
      %v6593 = vadd.f32 %v664, %v6578
      %v6594 = vadd.f32 %v665, %v6568
      %v6595 = vxor.u32 %v6587, 2147483648
      %v6596 = vxor.u32 %v6588, 2147483648
      %v6597 = vxor.u32 %v6589, 2147483648
      %v6598 = vxor.u32 %v6590, 2147483648
      %v6599 = vxor.u32 %v6591, 2147483648
      %v6600 = vxor.u32 %v6592, 2147483648
      %v6601 = vxor.u32 %v6593, 2147483648
      %v6602 = vxor.u32 %v6594, 2147483648
      %v6603 = vmul.f32 %v6595, 1.442695
      %v6604 = vpow.pop %v6603
      %v6605 = vmul.f32 %v6596, 1.442695
      %v6606 = vpow.pop %v6605
      %v6607 = vmul.f32 %v6597, 1.442695
      %v6608 = vpow.pop %v6607
      %v6609 = vmul.f32 %v6598, 1.442695
      %v6610 = vpow.pop %v6609
      %v6611 = vmul.f32 %v6599, 1.442695
      %v6612 = vpow.pop %v6611
      %v6613 = vmul.f32 %v6600, 1.442695
      %v6614 = vpow.pop %v6613
      %v6615 = vmul.f32 %v6601, 1.442695
      %v6616 = vpow.pop %v6615
      %v6617 = vmul.f32 %v6602, 1.442695
      %v6618 = vpow.pop %v6617
      %v6619 = vadd.f32 %v6604, 1.0
      %v6620 = vadd.f32 %v6606, 1.0
      %v6621 = vadd.f32 %v6608, 1.0
      %v6622 = vadd.f32 %v6610, 1.0
      %v6623 = vadd.f32 %v6612, 1.0
      %v6624 = vadd.f32 %v6614, 1.0
      %v6625 = vadd.f32 %v6616, 1.0
      %v6626 = vadd.f32 %v6618, 1.0
      %v6627 = vrcp.pop %v6619
      %v6628 = vmul.f32 %v6619, %v6627
      %v6629 = vsub.f32 1.0, %v6628
      %v6630 = vmul.f32 %v6627, %v6629
      %v6631 = vadd.f32 %v6627, %v6630
      %vm6632 = vweird.f32 %v6619
      %vm6633 = vweird.f32 %v6627
      %vm6634 = vmor %vm6632, %vm6633
      %v6635 = vsel %vm6634, %v6627, %v6631
      %v6636 = vand.u32 2147483647, %v6619
      %vm6637 = vcmp.eq.f32.partialorder %v6636, 8.507059e+37
      %v6638 = vand.u32 %v6619, 2147483648
      %v6639 = vor.u32 1.1754944e-38, %v6638
      %v6640 = vsel %vm6637, %v6639, %v6635
      %v6641 = vmul.f32 1.0, %v6640
      %v6642 = vrcp.pop %v6620
      %v6643 = vmul.f32 %v6620, %v6642
      %v6644 = vsub.f32 1.0, %v6643
      %v6645 = vmul.f32 %v6642, %v6644
      %v6646 = vadd.f32 %v6642, %v6645
      %vm6647 = vweird.f32 %v6620
      %vm6648 = vweird.f32 %v6642
      %vm6649 = vmor %vm6647, %vm6648
      %v6650 = vsel %vm6649, %v6642, %v6646
      %v6651 = vand.u32 2147483647, %v6620
      %vm6652 = vcmp.eq.f32.partialorder %v6651, 8.507059e+37
      %v6653 = vand.u32 %v6620, 2147483648
      %v6654 = vor.u32 1.1754944e-38, %v6653
      %v6655 = vsel %vm6652, %v6654, %v6650
      %v6656 = vmul.f32 1.0, %v6655
      %v6657 = vrcp.pop %v6621
      %v6658 = vmul.f32 %v6621, %v6657
      %v6659 = vsub.f32 1.0, %v6658
      %v6660 = vmul.f32 %v6657, %v6659
      %v6661 = vadd.f32 %v6657, %v6660
      %vm6662 = vweird.f32 %v6621
      %vm6663 = vweird.f32 %v6657
      %vm6664 = vmor %vm6662, %vm6663
      %v6665 = vsel %vm6664, %v6657, %v6661
      %v6666 = vand.u32 2147483647, %v6621
      %vm6667 = vcmp.eq.f32.partialorder %v6666, 8.507059e+37
      %v6668 = vand.u32 %v6621, 2147483648
      %v6669 = vor.u32 1.1754944e-38, %v6668
      %v6670 = vsel %vm6667, %v6669, %v6665
      %v6671 = vmul.f32 1.0, %v6670
      %v6672 = vrcp.pop %v6622
      %v6673 = vmul.f32 %v6622, %v6672
      %v6674 = vsub.f32 1.0, %v6673
      %v6675 = vmul.f32 %v6672, %v6674
      %v6676 = vadd.f32 %v6672, %v6675
      %vm6677 = vweird.f32 %v6622
      %vm6678 = vweird.f32 %v6672
      %vm6679 = vmor %vm6677, %vm6678
      %v6680 = vsel %vm6679, %v6672, %v6676
      %v6681 = vand.u32 2147483647, %v6622
      %vm6682 = vcmp.eq.f32.partialorder %v6681, 8.507059e+37
      %v6683 = vand.u32 %v6622, 2147483648
      %v6684 = vor.u32 1.1754944e-38, %v6683
      %v6685 = vsel %vm6682, %v6684, %v6680
      %v6686 = vmul.f32 1.0, %v6685
      %v6687 = vrcp.pop %v6623
      %v6688 = vmul.f32 %v6623, %v6687
      %v6689 = vsub.f32 1.0, %v6688
      %v6690 = vmul.f32 %v6687, %v6689
      %v6691 = vadd.f32 %v6687, %v6690
      %vm6692 = vweird.f32 %v6623
      %vm6693 = vweird.f32 %v6687
      %vm6694 = vmor %vm6692, %vm6693
      %v6695 = vsel %vm6694, %v6687, %v6691
      %v6696 = vand.u32 2147483647, %v6623
      %vm6697 = vcmp.eq.f32.partialorder %v6696, 8.507059e+37
      %v6698 = vand.u32 %v6623, 2147483648
      %v6699 = vor.u32 1.1754944e-38, %v6698
      %v6700 = vsel %vm6697, %v6699, %v6695
      %v6701 = vmul.f32 1.0, %v6700
      %v6702 = vrcp.pop %v6624
      %v6703 = vmul.f32 %v6624, %v6702
      %v6704 = vsub.f32 1.0, %v6703
      %v6705 = vmul.f32 %v6702, %v6704
      %v6706 = vadd.f32 %v6702, %v6705
      %vm6707 = vweird.f32 %v6624
      %vm6708 = vweird.f32 %v6702
      %vm6709 = vmor %vm6707, %vm6708
      %v6710 = vsel %vm6709, %v6702, %v6706
      %v6711 = vand.u32 2147483647, %v6624
      %vm6712 = vcmp.eq.f32.partialorder %v6711, 8.507059e+37
      %v6713 = vand.u32 %v6624, 2147483648
      %v6714 = vor.u32 1.1754944e-38, %v6713
      %v6715 = vsel %vm6712, %v6714, %v6710
      %v6716 = vmul.f32 1.0, %v6715
      %v6717 = vrcp.pop %v6625
      %v6718 = vmul.f32 %v6625, %v6717
      %v6719 = vsub.f32 1.0, %v6718
      %v6720 = vmul.f32 %v6717, %v6719
      %v6721 = vadd.f32 %v6717, %v6720
      %vm6722 = vweird.f32 %v6625
      %vm6723 = vweird.f32 %v6717
      %vm6724 = vmor %vm6722, %vm6723
      %v6725 = vsel %vm6724, %v6717, %v6721
      %v6726 = vand.u32 2147483647, %v6625
      %vm6727 = vcmp.eq.f32.partialorder %v6726, 8.507059e+37
      %v6728 = vand.u32 %v6625, 2147483648
      %v6729 = vor.u32 1.1754944e-38, %v6728
      %v6730 = vsel %vm6727, %v6729, %v6725
      %v6731 = vmul.f32 1.0, %v6730
      %v6732 = vrcp.pop %v6626
      %v6733 = vmul.f32 %v6626, %v6732
      %v6734 = vsub.f32 1.0, %v6733
      %v6735 = vmul.f32 %v6732, %v6734
      %v6736 = vadd.f32 %v6732, %v6735
      %vm6737 = vweird.f32 %v6626
      %vm6738 = vweird.f32 %v6732
      %vm6739 = vmor %vm6737, %vm6738
      %v6740 = vsel %vm6739, %v6732, %v6736
      %v6741 = vand.u32 2147483647, %v6626
      %vm6742 = vcmp.eq.f32.partialorder %v6741, 8.507059e+37
      %v6743 = vand.u32 %v6626, 2147483648
      %v6744 = vor.u32 1.1754944e-38, %v6743
      %v6745 = vsel %vm6742, %v6744, %v6740
      %v6746 = vmul.f32 1.0, %v6745
      %v6747 = vtanh.pop %v6587
      %v6748 = vtanh.pop %v6588
      %v6749 = vtanh.pop %v6589
      %v6750 = vtanh.pop %v6590
      %v6751 = vtanh.pop %v6591
      %v6752 = vtanh.pop %v6592
      %v6753 = vtanh.pop %v6593
      %v6754 = vtanh.pop %v6594
      %v6756 = vrot.slane %v6132, 1
      %v6757 = vrot.slane %v6132, 2
      %v6758 = vrot.slane %v6132, 3
      %v6759 = vrot.slane %v6132, 4
      %v6760 = vrot.slane %v6132, 5
      %v6761 = vrot.slane %v6132, 6
      %v6762 = vrot.slane %v6132, 7
      %6763 = vrot.lane.b32.xlu0 %v6756, 32
      %v6764 = vpop.permute.xlu0 %6763
      %6765 = vrot.lane.b32.xlu0 %v6757, 32
      %v6766 = vpop.permute.xlu0 %6765
      %6767 = vrot.lane.b32.xlu0 %v6758, 32
      %v6768 = vpop.permute.xlu0 %6767
      %6769 = vrot.lane.b32.xlu0 %v6759, 32
      %v6770 = vpop.permute.xlu0 %6769
      %6771 = vrot.lane.b32.xlu0 %v6760, 32
      %v6772 = vpop.permute.xlu0 %6771
      %6773 = vrot.lane.b32.xlu0 %v6761, 32
      %v6774 = vpop.permute.xlu0 %6773
      %6775 = vrot.lane.b32.xlu0 %v6762, 32
      %v6776 = vpop.permute.xlu0 %6775
      %6777 = vrot.lane.b32.xlu0 %v6132, 32
      %v6778 = vpop.permute.xlu0 %6777
      %v6787 = vmul.f32 %v6641, %v6764
      %v6788 = vmul.f32 %v6656, %v6766
      %v6789 = vmul.f32 %v6671, %v6768
      %v6790 = vmul.f32 %v6686, %v6770
      %v6791 = vmul.f32 %v6701, %v6772
      %v6792 = vmul.f32 %v6716, %v6774
      %v6793 = vmul.f32 %v6731, %v6776
      %v6794 = vmul.f32 %v6746, %v6778
      %6803 = vrot.lane.b32.xlu0 %v6747, 64
      %v6804 = vpop.permute.xlu0 %6803
      %6805 = vrot.lane.b32.xlu0 %v6748, 64
      %v6806 = vpop.permute.xlu0 %6805
      %6807 = vrot.lane.b32.xlu0 %v6749, 64
      %v6808 = vpop.permute.xlu0 %6807
      %6809 = vrot.lane.b32.xlu0 %v6750, 64
      %v6810 = vpop.permute.xlu0 %6809
      %6811 = vrot.lane.b32.xlu0 %v6751, 64
      %v6812 = vpop.permute.xlu0 %6811
      %6813 = vrot.lane.b32.xlu0 %v6752, 64
      %v6814 = vpop.permute.xlu0 %6813
      %6815 = vrot.lane.b32.xlu0 %v6753, 64
      %v6816 = vpop.permute.xlu0 %6815
      %6817 = vrot.lane.b32.xlu0 %v6754, 64
      %v6818 = vpop.permute.xlu0 %6817
      %v6827 = vmul.f32 %v6641, %v6804
      %v6828 = vmul.f32 %v6656, %v6806
      %v6829 = vmul.f32 %v6671, %v6808
      %v6830 = vmul.f32 %v6686, %v6810
      %v6831 = vmul.f32 %v6701, %v6812
      %v6832 = vmul.f32 %v6716, %v6814
      %v6833 = vmul.f32 %v6731, %v6816
      %v6834 = vmul.f32 %v6746, %v6818
      %6843 = vrot.lane.b32.xlu0 %v6827, 32
      %v6844 = vpop.permute.xlu0 %6843
      %6845 = vrot.lane.b32.xlu0 %v6828, 32
      %v6846 = vpop.permute.xlu0 %6845
      %6847 = vrot.lane.b32.xlu0 %v6829, 32
      %v6848 = vpop.permute.xlu0 %6847
      %6849 = vrot.lane.b32.xlu0 %v6830, 32
      %v6850 = vpop.permute.xlu0 %6849
      %6851 = vrot.lane.b32.xlu0 %v6831, 32
      %v6852 = vpop.permute.xlu0 %6851
      %6853 = vrot.lane.b32.xlu0 %v6832, 32
      %v6854 = vpop.permute.xlu0 %6853
      %6855 = vrot.lane.b32.xlu0 %v6833, 32
      %v6856 = vpop.permute.xlu0 %6855
      %6857 = vrot.lane.b32.xlu0 %v6834, 32
      %v6858 = vpop.permute.xlu0 %6857
      %v6867 = vadd.f32 %v6787, %v6844
      %v6868 = vadd.f32 %v6788, %v6846
      %v6869 = vadd.f32 %v6789, %v6848
      %v6870 = vadd.f32 %v6790, %v6850
      %v6871 = vadd.f32 %v6791, %v6852
      %v6872 = vadd.f32 %v6792, %v6854
      %v6873 = vadd.f32 %v6793, %v6856
      %v6874 = vadd.f32 %v6794, %v6858
      %v6875 = vtanh.pop %v6867
      %v6876 = vtanh.pop %v6868
      %v6877 = vtanh.pop %v6869
      %v6878 = vtanh.pop %v6870
      %v6879 = vtanh.pop %v6871
      %v6880 = vtanh.pop %v6872
      %v6881 = vtanh.pop %v6873
      %v6882 = vtanh.pop %v6874
      %6891 = vrot.lane.b32.xlu0 %v6875, 64
      %v6892 = vpop.permute.xlu0 %6891
      %6893 = vrot.lane.b32.xlu0 %v6876, 64
      %v6894 = vpop.permute.xlu0 %6893
      %6895 = vrot.lane.b32.xlu0 %v6877, 64
      %v6896 = vpop.permute.xlu0 %6895
      %6897 = vrot.lane.b32.xlu0 %v6878, 64
      %v6898 = vpop.permute.xlu0 %6897
      %6899 = vrot.lane.b32.xlu0 %v6879, 64
      %v6900 = vpop.permute.xlu0 %6899
      %6901 = vrot.lane.b32.xlu0 %v6880, 64
      %v6902 = vpop.permute.xlu0 %6901
      %6903 = vrot.lane.b32.xlu0 %v6881, 64
      %v6904 = vpop.permute.xlu0 %6903
      %6905 = vrot.lane.b32.xlu0 %v6882, 64
      %v6906 = vpop.permute.xlu0 %6905
      %v6915 = vmul.f32 %v6641, %v6892
      %v6916 = vmul.f32 %v6656, %v6894
      %v6917 = vmul.f32 %v6671, %v6896
      %v6918 = vmul.f32 %v6686, %v6898
      %v6919 = vmul.f32 %v6701, %v6900
      %v6920 = vmul.f32 %v6716, %v6902
      %v6921 = vmul.f32 %v6731, %v6904
      %v6922 = vmul.f32 %v6746, %v6906
      %v6923 = vpack.c.bf16 %v6527, %v6527
      %v6925 = vsel %vm519, %v6923, 0
      %6927 = vmatpush.bf16.msra.mxu0 0
      %6928 = vmatpush.bf16.msra.mxu0 0
      %6929 = vmatpush.bf16.msra.mxu0 0
      %6930 = vmatpush.bf16.msra.mxu0 0
      %6931 = vmatpush.bf16.msra.mxu0 0
      %6932 = vmatpush.bf16.msra.mxu0 0
      %6933 = vmatpush.bf16.msra.mxu0 %v1064
      %6934 = vmatpush.bf16.msra.mxu0 %v1063
      %6935 = vmatmul.bf16.gmra.mxu0 %v6925
      %v6936 = vpop.f32.mrf.mxu0
      %v6937 = vadd.f32 0.0, %v6936
      %v6938 = vpop.f32.mrf.mxu0
      %6939 = vdwg.mxu0
      %v6941 = vrot.slane %v6937, 1
      %v6942 = vrot.slane %v6937, 2
      %v6943 = vrot.slane %v6937, 3
      %v6944 = vrot.slane %v6937, 4
      %v6945 = vrot.slane %v6937, 5
      %v6946 = vrot.slane %v6937, 6
      %v6947 = vrot.slane %v6937, 7
      %v6956 = vadd.f32 %v1080, %v6937
      %v6957 = vadd.f32 %v1081, %v6941
      %v6958 = vadd.f32 %v1082, %v6942
      %v6959 = vadd.f32 %v1083, %v6943
      %v6960 = vadd.f32 %v1084, %v6944
      %v6961 = vadd.f32 %v1085, %v6945
      %v6962 = vadd.f32 %v1086, %v6946
      %v6963 = vadd.f32 %v1087, %v6947
      %v6964 = vxor.u32 %v6956, 2147483648
      %v6965 = vxor.u32 %v6957, 2147483648
      %v6966 = vxor.u32 %v6958, 2147483648
      %v6967 = vxor.u32 %v6959, 2147483648
      %v6968 = vxor.u32 %v6960, 2147483648
      %v6969 = vxor.u32 %v6961, 2147483648
      %v6970 = vxor.u32 %v6962, 2147483648
      %v6971 = vxor.u32 %v6963, 2147483648
      %v6972 = vmul.f32 %v6964, 1.442695
      %v6973 = vpow.pop %v6972
      %v6974 = vmul.f32 %v6965, 1.442695
      %v6975 = vpow.pop %v6974
      %v6976 = vmul.f32 %v6966, 1.442695
      %v6977 = vpow.pop %v6976
      %v6978 = vmul.f32 %v6967, 1.442695
      %v6979 = vpow.pop %v6978
      %v6980 = vmul.f32 %v6968, 1.442695
      %v6981 = vpow.pop %v6980
      %v6982 = vmul.f32 %v6969, 1.442695
      %v6983 = vpow.pop %v6982
      %v6984 = vmul.f32 %v6970, 1.442695
      %v6985 = vpow.pop %v6984
      %v6986 = vmul.f32 %v6971, 1.442695
      %v6987 = vpow.pop %v6986
      %v6988 = vadd.f32 %v6973, 1.0
      %v6989 = vadd.f32 %v6975, 1.0
      %v6990 = vadd.f32 %v6977, 1.0
      %v6991 = vadd.f32 %v6979, 1.0
      %v6992 = vadd.f32 %v6981, 1.0
      %v6993 = vadd.f32 %v6983, 1.0
      %v6994 = vadd.f32 %v6985, 1.0
      %v6995 = vadd.f32 %v6987, 1.0
      %v6996 = vrcp.pop %v6988
      %v6997 = vmul.f32 %v6988, %v6996
      %v6998 = vsub.f32 1.0, %v6997
      %v6999 = vmul.f32 %v6996, %v6998
      %v7000 = vadd.f32 %v6996, %v6999
      %vm7001 = vweird.f32 %v6988
      %vm7002 = vweird.f32 %v6996
      %vm7003 = vmor %vm7001, %vm7002
      %v7004 = vsel %vm7003, %v6996, %v7000
      %v7005 = vand.u32 2147483647, %v6988
      %vm7006 = vcmp.eq.f32.partialorder %v7005, 8.507059e+37
      %v7007 = vand.u32 %v6988, 2147483648
      %v7008 = vor.u32 1.1754944e-38, %v7007
      %v7009 = vsel %vm7006, %v7008, %v7004
      %v7010 = vmul.f32 1.0, %v7009
      %v7011 = vrcp.pop %v6989
      %v7012 = vmul.f32 %v6989, %v7011
      %v7013 = vsub.f32 1.0, %v7012
      %v7014 = vmul.f32 %v7011, %v7013
      %v7015 = vadd.f32 %v7011, %v7014
      %vm7016 = vweird.f32 %v6989
      %vm7017 = vweird.f32 %v7011
      %vm7018 = vmor %vm7016, %vm7017
      %v7019 = vsel %vm7018, %v7011, %v7015
      %v7020 = vand.u32 2147483647, %v6989
      %vm7021 = vcmp.eq.f32.partialorder %v7020, 8.507059e+37
      %v7022 = vand.u32 %v6989, 2147483648
      %v7023 = vor.u32 1.1754944e-38, %v7022
      %v7024 = vsel %vm7021, %v7023, %v7019
      %v7025 = vmul.f32 1.0, %v7024
      %v7026 = vrcp.pop %v6990
      %v7027 = vmul.f32 %v6990, %v7026
      %v7028 = vsub.f32 1.0, %v7027
      %v7029 = vmul.f32 %v7026, %v7028
      %v7030 = vadd.f32 %v7026, %v7029
      %vm7031 = vweird.f32 %v6990
      %vm7032 = vweird.f32 %v7026
      %vm7033 = vmor %vm7031, %vm7032
      %v7034 = vsel %vm7033, %v7026, %v7030
      %v7035 = vand.u32 2147483647, %v6990
      %vm7036 = vcmp.eq.f32.partialorder %v7035, 8.507059e+37
      %v7037 = vand.u32 %v6990, 2147483648
      %v7038 = vor.u32 1.1754944e-38, %v7037
      %v7039 = vsel %vm7036, %v7038, %v7034
      %v7040 = vmul.f32 1.0, %v7039
      %v7041 = vrcp.pop %v6991
      %v7042 = vmul.f32 %v6991, %v7041
      %v7043 = vsub.f32 1.0, %v7042
      %v7044 = vmul.f32 %v7041, %v7043
      %v7045 = vadd.f32 %v7041, %v7044
      %vm7046 = vweird.f32 %v6991
      %vm7047 = vweird.f32 %v7041
      %vm7048 = vmor %vm7046, %vm7047
      %v7049 = vsel %vm7048, %v7041, %v7045
      %v7050 = vand.u32 2147483647, %v6991
      %vm7051 = vcmp.eq.f32.partialorder %v7050, 8.507059e+37
      %v7052 = vand.u32 %v6991, 2147483648
      %v7053 = vor.u32 1.1754944e-38, %v7052
      %v7054 = vsel %vm7051, %v7053, %v7049
      %v7055 = vmul.f32 1.0, %v7054
      %v7056 = vrcp.pop %v6992
      %v7057 = vmul.f32 %v6992, %v7056
      %v7058 = vsub.f32 1.0, %v7057
      %v7059 = vmul.f32 %v7056, %v7058
      %v7060 = vadd.f32 %v7056, %v7059
      %vm7061 = vweird.f32 %v6992
      %vm7062 = vweird.f32 %v7056
      %vm7063 = vmor %vm7061, %vm7062
      %v7064 = vsel %vm7063, %v7056, %v7060
      %v7065 = vand.u32 2147483647, %v6992
      %vm7066 = vcmp.eq.f32.partialorder %v7065, 8.507059e+37
      %v7067 = vand.u32 %v6992, 2147483648
      %v7068 = vor.u32 1.1754944e-38, %v7067
      %v7069 = vsel %vm7066, %v7068, %v7064
      %v7070 = vmul.f32 1.0, %v7069
      %v7071 = vrcp.pop %v6993
      %v7072 = vmul.f32 %v6993, %v7071
      %v7073 = vsub.f32 1.0, %v7072
      %v7074 = vmul.f32 %v7071, %v7073
      %v7075 = vadd.f32 %v7071, %v7074
      %vm7076 = vweird.f32 %v6993
      %vm7077 = vweird.f32 %v7071
      %vm7078 = vmor %vm7076, %vm7077
      %v7079 = vsel %vm7078, %v7071, %v7075
      %v7080 = vand.u32 2147483647, %v6993
      %vm7081 = vcmp.eq.f32.partialorder %v7080, 8.507059e+37
      %v7082 = vand.u32 %v6993, 2147483648
      %v7083 = vor.u32 1.1754944e-38, %v7082
      %v7084 = vsel %vm7081, %v7083, %v7079
      %v7085 = vmul.f32 1.0, %v7084
      %v7086 = vrcp.pop %v6994
      %v7087 = vmul.f32 %v6994, %v7086
      %v7088 = vsub.f32 1.0, %v7087
      %v7089 = vmul.f32 %v7086, %v7088
      %v7090 = vadd.f32 %v7086, %v7089
      %vm7091 = vweird.f32 %v6994
      %vm7092 = vweird.f32 %v7086
      %vm7093 = vmor %vm7091, %vm7092
      %v7094 = vsel %vm7093, %v7086, %v7090
      %v7095 = vand.u32 2147483647, %v6994
      %vm7096 = vcmp.eq.f32.partialorder %v7095, 8.507059e+37
      %v7097 = vand.u32 %v6994, 2147483648
      %v7098 = vor.u32 1.1754944e-38, %v7097
      %v7099 = vsel %vm7096, %v7098, %v7094
      %v7100 = vmul.f32 1.0, %v7099
      %v7101 = vrcp.pop %v6995
      %v7102 = vmul.f32 %v6995, %v7101
      %v7103 = vsub.f32 1.0, %v7102
      %v7104 = vmul.f32 %v7101, %v7103
      %v7105 = vadd.f32 %v7101, %v7104
      %vm7106 = vweird.f32 %v6995
      %vm7107 = vweird.f32 %v7101
      %vm7108 = vmor %vm7106, %vm7107
      %v7109 = vsel %vm7108, %v7101, %v7105
      %v7110 = vand.u32 2147483647, %v6995
      %vm7111 = vcmp.eq.f32.partialorder %v7110, 8.507059e+37
      %v7112 = vand.u32 %v6995, 2147483648
      %v7113 = vor.u32 1.1754944e-38, %v7112
      %v7114 = vsel %vm7111, %v7113, %v7109
      %v7115 = vmul.f32 1.0, %v7114
      %v7116 = vtanh.pop %v6956
      %v7117 = vtanh.pop %v6957
      %v7118 = vtanh.pop %v6958
      %v7119 = vtanh.pop %v6959
      %v7120 = vtanh.pop %v6960
      %v7121 = vtanh.pop %v6961
      %v7122 = vtanh.pop %v6962
      %v7123 = vtanh.pop %v6963
      %v7125 = vrot.slane %v6553, 1
      %v7126 = vrot.slane %v6553, 2
      %v7127 = vrot.slane %v6553, 3
      %v7128 = vrot.slane %v6553, 4
      %v7129 = vrot.slane %v6553, 5
      %v7130 = vrot.slane %v6553, 6
      %v7131 = vrot.slane %v6553, 7
      %7132 = vrot.lane.b32.xlu0 %v6553, 32
      %v7133 = vpop.permute.xlu0 %7132
      %7134 = vrot.lane.b32.xlu0 %v7125, 32
      %v7135 = vpop.permute.xlu0 %7134
      %7136 = vrot.lane.b32.xlu0 %v7126, 32
      %v7137 = vpop.permute.xlu0 %7136
      %7138 = vrot.lane.b32.xlu0 %v7127, 32
      %v7139 = vpop.permute.xlu0 %7138
      %7140 = vrot.lane.b32.xlu0 %v7128, 32
      %v7141 = vpop.permute.xlu0 %7140
      %7142 = vrot.lane.b32.xlu0 %v7129, 32
      %v7143 = vpop.permute.xlu0 %7142
      %7144 = vrot.lane.b32.xlu0 %v7130, 32
      %v7145 = vpop.permute.xlu0 %7144
      %7146 = vrot.lane.b32.xlu0 %v7131, 32
      %v7147 = vpop.permute.xlu0 %7146
      %v7156 = vmul.f32 %v7010, %v7133
      %v7157 = vmul.f32 %v7025, %v7135
      %v7158 = vmul.f32 %v7040, %v7137
      %v7159 = vmul.f32 %v7055, %v7139
      %v7160 = vmul.f32 %v7070, %v7141
      %v7161 = vmul.f32 %v7085, %v7143
      %v7162 = vmul.f32 %v7100, %v7145
      %v7163 = vmul.f32 %v7115, %v7147
      %7172 = vrot.lane.b32.xlu0 %v7116, 64
      %v7173 = vpop.permute.xlu0 %7172
      %7174 = vrot.lane.b32.xlu0 %v7117, 64
      %v7175 = vpop.permute.xlu0 %7174
      %7176 = vrot.lane.b32.xlu0 %v7118, 64
      %v7177 = vpop.permute.xlu0 %7176
      %7178 = vrot.lane.b32.xlu0 %v7119, 64
      %v7179 = vpop.permute.xlu0 %7178
      %7180 = vrot.lane.b32.xlu0 %v7120, 64
      %v7181 = vpop.permute.xlu0 %7180
      %7182 = vrot.lane.b32.xlu0 %v7121, 64
      %v7183 = vpop.permute.xlu0 %7182
      %7184 = vrot.lane.b32.xlu0 %v7122, 64
      %v7185 = vpop.permute.xlu0 %7184
      %7186 = vrot.lane.b32.xlu0 %v7123, 64
      %v7187 = vpop.permute.xlu0 %7186
      %v7196 = vmul.f32 %v7010, %v7173
      %v7197 = vmul.f32 %v7025, %v7175
      %v7198 = vmul.f32 %v7040, %v7177
      %v7199 = vmul.f32 %v7055, %v7179
      %v7200 = vmul.f32 %v7070, %v7181
      %v7201 = vmul.f32 %v7085, %v7183
      %v7202 = vmul.f32 %v7100, %v7185
      %v7203 = vmul.f32 %v7115, %v7187
      %7212 = vrot.lane.b32.xlu0 %v7196, 32
      %v7213 = vpop.permute.xlu0 %7212
      %7214 = vrot.lane.b32.xlu0 %v7197, 32
      %v7215 = vpop.permute.xlu0 %7214
      %7216 = vrot.lane.b32.xlu0 %v7198, 32
      %v7217 = vpop.permute.xlu0 %7216
      %7218 = vrot.lane.b32.xlu0 %v7199, 32
      %v7219 = vpop.permute.xlu0 %7218
      %7220 = vrot.lane.b32.xlu0 %v7200, 32
      %v7221 = vpop.permute.xlu0 %7220
      %7222 = vrot.lane.b32.xlu0 %v7201, 32
      %v7223 = vpop.permute.xlu0 %7222
      %7224 = vrot.lane.b32.xlu0 %v7202, 32
      %v7225 = vpop.permute.xlu0 %7224
      %7226 = vrot.lane.b32.xlu0 %v7203, 32
      %v7227 = vpop.permute.xlu0 %7226
      %v7236 = vadd.f32 %v7156, %v7213
      %v7237 = vadd.f32 %v7157, %v7215
      %v7238 = vadd.f32 %v7158, %v7217
      %v7239 = vadd.f32 %v7159, %v7219
      %v7240 = vadd.f32 %v7160, %v7221
      %v7241 = vadd.f32 %v7161, %v7223
      %v7242 = vadd.f32 %v7162, %v7225
      %v7243 = vadd.f32 %v7163, %v7227
      %v7244 = vtanh.pop %v7236
      %v7245 = vtanh.pop %v7237
      %v7246 = vtanh.pop %v7238
      %v7247 = vtanh.pop %v7239
      %v7248 = vtanh.pop %v7240
      %v7249 = vtanh.pop %v7241
      %v7250 = vtanh.pop %v7242
      %v7251 = vtanh.pop %v7243
      %7260 = vrot.lane.b32.xlu0 %v7244, 64
      %v7261 = vpop.permute.xlu0 %7260
      %7262 = vrot.lane.b32.xlu0 %v7245, 64
      %v7263 = vpop.permute.xlu0 %7262
      %7264 = vrot.lane.b32.xlu0 %v7246, 64
      %v7265 = vpop.permute.xlu0 %7264
      %7266 = vrot.lane.b32.xlu0 %v7247, 64
      %v7267 = vpop.permute.xlu0 %7266
      %7268 = vrot.lane.b32.xlu0 %v7248, 64
      %v7269 = vpop.permute.xlu0 %7268
      %7270 = vrot.lane.b32.xlu0 %v7249, 64
      %v7271 = vpop.permute.xlu0 %7270
      %7272 = vrot.lane.b32.xlu0 %v7250, 64
      %v7273 = vpop.permute.xlu0 %7272
      %7274 = vrot.lane.b32.xlu0 %v7251, 64
      %v7275 = vpop.permute.xlu0 %7274
      %v7284 = vmul.f32 %v7010, %v7261
      %v7285 = vmul.f32 %v7025, %v7263
      %v7286 = vmul.f32 %v7040, %v7265
      %v7287 = vmul.f32 %v7055, %v7267
      %v7288 = vmul.f32 %v7070, %v7269
      %v7289 = vmul.f32 %v7085, %v7271
      %v7290 = vmul.f32 %v7100, %v7273
      %v7291 = vmul.f32 %v7115, %v7275
      %vm7292 = vcmask 1040384
      %v7293 = vsel %vm7292, %v978, %v1827
      %v7294 = vsel %vm7292, %v979, %v1828
      %v7295 = vsel %vm7292, %v980, %v1829
      %v7296 = vsel %vm7292, %v981, %v1830
      %v7297 = vsel %vm7292, %v982, %v1831
      %v7298 = vsel %vm7292, %v983, %v1832
      %v7299 = vsel %vm7292, %v984, %v1833
      %v7300 = vsel %vm7292, %v985, %v1834
      %vm7301 = vcmask 1041408
      %v7302 = vsel %vm7301, %v7293, %v2681
      %v7303 = vsel %vm7301, %v7294, %v2682
      %v7304 = vsel %vm7301, %v7295, %v2683
      %v7305 = vsel %vm7301, %v7296, %v2684
      %v7306 = vsel %vm7301, %v7297, %v2685
      %v7307 = vsel %vm7301, %v7298, %v2686
      %v7308 = vsel %vm7301, %v7299, %v2687
      %v7309 = vsel %vm7301, %v7300, %v2688
      %vm7310 = vcmask 1042432
      %v7311 = vsel %vm7310, %v7302, %v3535
      %v7312 = vsel %vm7310, %v7303, %v3536
      %v7313 = vsel %vm7310, %v7304, %v3537
      %v7314 = vsel %vm7310, %v7305, %v3538
      %v7315 = vsel %vm7310, %v7306, %v3539
      %v7316 = vsel %vm7310, %v7307, %v3540
      %v7317 = vsel %vm7310, %v7308, %v3541
      %v7318 = vsel %vm7310, %v7309, %v3542
      %vm7319 = vcmask 1043456
      %v7320 = vsel %vm7319, %v7311, %v4389
      %v7321 = vsel %vm7319, %v7312, %v4390
      %v7322 = vsel %vm7319, %v7313, %v4391
      %v7323 = vsel %vm7319, %v7314, %v4392
      %v7324 = vsel %vm7319, %v7315, %v4393
      %v7325 = vsel %vm7319, %v7316, %v4394
      %v7326 = vsel %vm7319, %v7317, %v4395
      %v7327 = vsel %vm7319, %v7318, %v4396
      %vm7328 = vcmask 1044480
      %v7329 = vsel %vm7328, %v7320, %v5231
      %v7330 = vsel %vm7328, %v7321, %v5232
      %v7331 = vsel %vm7328, %v7322, %v5233
      %v7332 = vsel %vm7328, %v7323, %v5234
      %v7333 = vsel %vm7328, %v7324, %v5235
      %v7334 = vsel %vm7328, %v7325, %v5236
      %v7335 = vsel %vm7328, %v7326, %v5237
      %v7336 = vsel %vm7328, %v7327, %v5238
      %vm7337 = vcmask 1045504
      %v7338 = vsel %vm7337, %v7329, %v6073
      %v7339 = vsel %vm7337, %v7330, %v6074
      %v7340 = vsel %vm7337, %v7331, %v6075
      %v7341 = vsel %vm7337, %v7332, %v6076
      %v7342 = vsel %vm7337, %v7333, %v6077
      %v7343 = vsel %vm7337, %v7334, %v6078
      %v7344 = vsel %vm7337, %v7335, %v6079
      %v7345 = vsel %vm7337, %v7336, %v6080
      %vm7346 = vcmask 1046528
      %v7347 = vsel %vm7346, %v7338, %v6915
      %v7348 = vsel %vm7346, %v7339, %v6916
      %v7349 = vsel %vm7346, %v7340, %v6917
      %v7350 = vsel %vm7346, %v7341, %v6918
      %v7351 = vsel %vm7346, %v7342, %v6919
      %v7352 = vsel %vm7346, %v7343, %v6920
      %v7353 = vsel %vm7346, %v7344, %v6921
      %v7354 = vsel %vm7346, %v7345, %v6922
      %v7355 = vsel %vm7292, %v7284, %v6494
      %v7356 = vsel %vm7292, %v7285, %v6495
      %v7357 = vsel %vm7292, %v7286, %v6496
      %v7358 = vsel %vm7292, %v7287, %v6497
      %v7359 = vsel %vm7292, %v7288, %v6498
      %v7360 = vsel %vm7292, %v7289, %v6499
      %v7361 = vsel %vm7292, %v7290, %v6500
      %v7362 = vsel %vm7292, %v7291, %v6501
      %v7363 = vsel %vm7301, %v7355, %v5652
      %v7364 = vsel %vm7301, %v7356, %v5653
      %v7365 = vsel %vm7301, %v7357, %v5654
      %v7366 = vsel %vm7301, %v7358, %v5655
      %v7367 = vsel %vm7301, %v7359, %v5656
      %v7368 = vsel %vm7301, %v7360, %v5657
      %v7369 = vsel %vm7301, %v7361, %v5658
      %v7370 = vsel %vm7301, %v7362, %v5659
      %v7371 = vsel %vm7310, %v7363, %v4810
      %v7372 = vsel %vm7310, %v7364, %v4811
      %v7373 = vsel %vm7310, %v7365, %v4812
      %v7374 = vsel %vm7310, %v7366, %v4813
      %v7375 = vsel %vm7310, %v7367, %v4814
      %v7376 = vsel %vm7310, %v7368, %v4815
      %v7377 = vsel %vm7310, %v7369, %v4816
      %v7378 = vsel %vm7310, %v7370, %v4817
      %v7379 = vsel %vm7319, %v7371, %v3962
      %v7380 = vsel %vm7319, %v7372, %v3963
      %v7381 = vsel %vm7319, %v7373, %v3964
      %v7382 = vsel %vm7319, %v7374, %v3965
      %v7383 = vsel %vm7319, %v7375, %v3966
      %v7384 = vsel %vm7319, %v7376, %v3967
      %v7385 = vsel %vm7319, %v7377, %v3968
      %v7386 = vsel %vm7319, %v7378, %v3969
      %v7387 = vsel %vm7328, %v7379, %v3108
      %v7388 = vsel %vm7328, %v7380, %v3109
      %v7389 = vsel %vm7328, %v7381, %v3110
      %v7390 = vsel %vm7328, %v7382, %v3111
      %v7391 = vsel %vm7328, %v7383, %v3112
      %v7392 = vsel %vm7328, %v7384, %v3113
      %v7393 = vsel %vm7328, %v7385, %v3114
      %v7394 = vsel %vm7328, %v7386, %v3115
      %v7395 = vsel %vm7337, %v7387, %v2254
      %v7396 = vsel %vm7337, %v7388, %v2255
      %v7397 = vsel %vm7337, %v7389, %v2256
      %v7398 = vsel %vm7337, %v7390, %v2257
      %v7399 = vsel %vm7337, %v7391, %v2258
      %v7400 = vsel %vm7337, %v7392, %v2259
      %v7401 = vsel %vm7337, %v7393, %v2260
      %v7402 = vsel %vm7337, %v7394, %v2261
      %v7403 = vsel %vm7346, %v7395, %v1400
      %v7404 = vsel %vm7346, %v7396, %v1401
      %v7405 = vsel %vm7346, %v7397, %v1402
      %v7406 = vsel %vm7346, %v7398, %v1403
      %v7407 = vsel %vm7346, %v7399, %v1404
      %v7408 = vsel %vm7346, %v7400, %v1405
      %v7409 = vsel %vm7346, %v7401, %v1406
      %v7410 = vsel %vm7346, %v7402, %v1407
      %v7411 = vlaneseq
      %v7412 = vshrl.u32 %v7411, 7
      %v7413 = vrot.slane %v462, 1
      %v7414 = vrot.slane %v462, 2
      %v7415 = vrot.slane %v462, 3
      %v7416 = vrot.slane %v462, 4
      %v7417 = vrot.slane %v462, 5
      %v7418 = vrot.slane %v462, 6
      %v7419 = vrot.slane %v462, 7
      %v7420 = vperm.slane %v462, 0
      %v7421 = vperm.slane %v7413, 0
      %v7422 = vperm.slane %v7414, 0
      %v7423 = vperm.slane %v7415, 0
      %v7424 = vperm.slane %v7416, 0
      %v7425 = vperm.slane %v7417, 0
      %v7426 = vperm.slane %v7418, 0
      %v7427 = vperm.slane %v7419, 0
      %vm7428 = vcmp.lt.s32.totalorder %v7412, %v7420
      %vm7429 = vcmp.lt.s32.totalorder %v7412, %v7421
      %vm7430 = vcmp.lt.s32.totalorder %v7412, %v7422
      %vm7431 = vcmp.lt.s32.totalorder %v7412, %v7423
      %vm7432 = vcmp.lt.s32.totalorder %v7412, %v7424
      %vm7433 = vcmp.lt.s32.totalorder %v7412, %v7425
      %vm7434 = vcmp.lt.s32.totalorder %v7412, %v7426
      %vm7435 = vcmp.lt.s32.totalorder %v7412, %v7427
      %v7436 = vsel %vm7428, 1, 0
      %v7437 = vsel %vm7429, 1, 0
      %v7438 = vsel %vm7430, 1, 0
      %v7439 = vsel %vm7431, 1, 0
      %v7440 = vsel %vm7432, 1, 0
      %v7441 = vsel %vm7433, 1, 0
      %v7442 = vsel %vm7434, 1, 0
      %v7443 = vsel %vm7435, 1, 0
      %7444 = vset.pattern.permute.xlu0 0
      %7445 = vperm.xlu0 %7444, %v7436
      %v7446 = vpop.permute.xlu0 %7445
      %7447 = vset.pattern.permute.xlu0 0
      %7448 = vperm.xlu0 %7447, %v7437
      %v7449 = vpop.permute.xlu0 %7448
      %7450 = vset.pattern.permute.xlu0 0
      %7451 = vperm.xlu0 %7450, %v7438
      %v7452 = vpop.permute.xlu0 %7451
      %7453 = vset.pattern.permute.xlu0 0
      %7454 = vperm.xlu0 %7453, %v7439
      %v7455 = vpop.permute.xlu0 %7454
      %7456 = vset.pattern.permute.xlu0 0
      %7457 = vperm.xlu0 %7456, %v7440
      %v7458 = vpop.permute.xlu0 %7457
      %7459 = vset.pattern.permute.xlu0 0
      %7460 = vperm.xlu0 %7459, %v7441
      %v7461 = vpop.permute.xlu0 %7460
      %7462 = vset.pattern.permute.xlu0 0
      %7463 = vperm.xlu0 %7462, %v7442
      %v7464 = vpop.permute.xlu0 %7463
      %7465 = vset.pattern.permute.xlu0 0
      %7466 = vperm.xlu0 %7465, %v7443
      %v7467 = vpop.permute.xlu0 %7466
      %vm7468 = vcmp.eq.s32.totalorder %v7446, 1
      %vm7469 = vcmp.eq.s32.totalorder %v7449, 1
      %vm7470 = vcmp.eq.s32.totalorder %v7452, 1
      %vm7471 = vcmp.eq.s32.totalorder %v7455, 1
      %vm7472 = vcmp.eq.s32.totalorder %v7458, 1
      %vm7473 = vcmp.eq.s32.totalorder %v7461, 1
      %vm7474 = vcmp.eq.s32.totalorder %v7464, 1
      %vm7475 = vcmp.eq.s32.totalorder %v7467, 1
      %v7476 = vsel %vm7468, %v7347, 0.0
      %v7477 = vsel %vm7469, %v7348, 0.0
      %v7478 = vsel %vm7470, %v7349, 0.0
      %v7479 = vsel %vm7471, %v7350, 0.0
      %v7480 = vsel %vm7472, %v7351, 0.0
      %v7481 = vsel %vm7473, %v7352, 0.0
      %v7482 = vsel %vm7474, %v7353, 0.0
      %v7483 = vsel %vm7475, %v7354, 0.0
      %v7484 = vpack.c.bf16 %v7477, %v7476
      %v7485 = vpack.c.bf16 %v7479, %v7478
      %v7486 = vpack.c.bf16 %v7481, %v7480
      %v7487 = vpack.c.bf16 %v7483, %v7482
      %v7488 = vsel %vm7468, %v7403, 0.0
      %v7489 = vsel %vm7469, %v7404, 0.0
      %v7490 = vsel %vm7470, %v7405, 0.0
      %v7491 = vsel %vm7471, %v7406, 0.0
      %v7492 = vsel %vm7472, %v7407, 0.0
      %v7493 = vsel %vm7473, %v7408, 0.0
      %v7494 = vsel %vm7474, %v7409, 0.0
      %v7495 = vsel %vm7475, %v7410, 0.0
      %v7496 = vpack.c.bf16 %v7489, %v7488
      %v7497 = vpack.c.bf16 %v7491, %v7490
      %v7498 = vpack.c.bf16 %v7493, %v7492
      %v7499 = vpack.c.bf16 %v7495, %v7494
      %v7500 = vld [vmem:[%s8] sm:$0xf]
      %v7501 = vld [vmem:[%s8 + $0x4] sm:$0xf]
      %v7502 = vld [vmem:[%s8 + $0x8] sm:$0xf]
      %v7503 = vld [vmem:[%s8 + $0xc] sm:$0xf]
      %v7504 = vld [vmem:[%s9] sm:$0xf]
      %v7505 = vld [vmem:[%s9 + $0x4] sm:$0xf]
      %v7506 = vld [vmem:[%s9 + $0x8] sm:$0xf]
      %v7507 = vld [vmem:[%s9 + $0xc] sm:$0xf]
      %7512 = vrot.lane.b32.xlu0 %v7496, 32
      %v7513 = vpop.permute.xlu0 %7512
      %7514 = vrot.lane.b32.xlu0 %v7497, 32
      %v7515 = vpop.permute.xlu0 %7514
      %7516 = vrot.lane.b32.xlu0 %v7498, 32
      %v7517 = vpop.permute.xlu0 %7516
      %7518 = vrot.lane.b32.xlu0 %v7499, 32
      %v7519 = vpop.permute.xlu0 %7518
      %v7524 = vunpack.c.l.b16 %v7504
      %v7525 = vunpack.c.l.b16 %v7505
      %v7526 = vunpack.c.l.b16 %v7506
      %v7527 = vunpack.c.l.b16 %v7507
      %v7528 = vpack.c.b16 %v7525, %v7524
      %v7529 = vpack.c.b16 %v7527, %v7526
      %v7533 = vsel %vm519, %v7513, 0
      %v7536 = vsel %vm519, %v7515, 0
      %v7539 = vsel %vm519, %v7517, 0
      %v7542 = vsel %vm519, %v7519, 0
      %7544 = vmatpush.bf16.msra.mxu0 0
      %7545 = vmatpush.bf16.msra.mxu0 0
      %7546 = vmatpush.bf16.msra.mxu0 0
      %7547 = vmatpush.bf16.msra.mxu0 0
      %7548 = vmatpush.bf16.msra.mxu0 0
      %7549 = vmatpush.bf16.msra.mxu0 0
      %7550 = vmatpush.bf16.msra.mxu0 %v7529
      %7551 = vmatpush.bf16.msra.mxu0 %v7528
      %7552 = vmatmul.bf16.gmra.mxu0 %v7533
      %v7553 = vpop.f32.mrf.mxu0
      %v7554 = vadd.f32 0.0, %v7553
      %v7555 = vpop.f32.mrf.mxu0
      %v7556 = vadd.f32 0.0, %v7555
      %7557 = vmatmul.bf16.gmra.mxu0 %v7536
      %v7558 = vpop.f32.mrf.mxu0
      %v7559 = vadd.f32 0.0, %v7558
      %v7560 = vpop.f32.mrf.mxu0
      %v7561 = vadd.f32 0.0, %v7560
      %7562 = vmatmul.bf16.gmra.mxu0 %v7539
      %v7563 = vpop.f32.mrf.mxu0
      %v7564 = vadd.f32 0.0, %v7563
      %v7565 = vpop.f32.mrf.mxu0
      %v7566 = vadd.f32 0.0, %v7565
      %7567 = vmatmul.bf16.gmra.mxu0 %v7542
      %v7568 = vpop.f32.mrf.mxu0
      %v7569 = vadd.f32 0.0, %v7568
      %v7570 = vpop.f32.mrf.mxu0
      %v7571 = vadd.f32 0.0, %v7570
      %7572 = vdwg.mxu0
      %7577 = vrot.lane.b32.xlu0 %v7484, 32
      %v7578 = vpop.permute.xlu0 %7577
      %7579 = vrot.lane.b32.xlu0 %v7485, 32
      %v7580 = vpop.permute.xlu0 %7579
      %7581 = vrot.lane.b32.xlu0 %v7486, 32
      %v7582 = vpop.permute.xlu0 %7581
      %7583 = vrot.lane.b32.xlu0 %v7487, 32
      %v7584 = vpop.permute.xlu0 %7583
      %v7589 = vunpack.c.l.b16 %v7500
      %v7590 = vunpack.c.l.b16 %v7501
      %v7591 = vunpack.c.l.b16 %v7502
      %v7592 = vunpack.c.l.b16 %v7503
      %v7593 = vpack.c.b16 %v7590, %v7589
      %v7594 = vpack.c.b16 %v7592, %v7591
      %v7598 = vsel %vm519, %v7578, 0
      %v7601 = vsel %vm519, %v7580, 0
      %v7604 = vsel %vm519, %v7582, 0
      %v7607 = vsel %vm519, %v7584, 0
      %7609 = vmatpush.bf16.msra.mxu0 0
      %7610 = vmatpush.bf16.msra.mxu0 0
      %7611 = vmatpush.bf16.msra.mxu0 0
      %7612 = vmatpush.bf16.msra.mxu0 0
      %7613 = vmatpush.bf16.msra.mxu0 0
      %7614 = vmatpush.bf16.msra.mxu0 0
      %7615 = vmatpush.bf16.msra.mxu0 %v7594
      %7616 = vmatpush.bf16.msra.mxu0 %v7593
      %7617 = vmatmul.bf16.gmra.mxu0 %v7598
      %v7618 = vpop.f32.mrf.mxu0
      %v7619 = vadd.f32 %v7554, %v7618
      %v7620 = vpop.f32.mrf.mxu0
      %v7621 = vadd.f32 %v7556, %v7620
      %7622 = vmatmul.bf16.gmra.mxu0 %v7601
      %v7623 = vpop.f32.mrf.mxu0
      %v7624 = vadd.f32 %v7559, %v7623
      %v7625 = vpop.f32.mrf.mxu0
      %v7626 = vadd.f32 %v7561, %v7625
      %7627 = vmatmul.bf16.gmra.mxu0 %v7604
      %v7628 = vpop.f32.mrf.mxu0
      %v7629 = vadd.f32 %v7564, %v7628
      %v7630 = vpop.f32.mrf.mxu0
      %v7631 = vadd.f32 %v7566, %v7630
      %7632 = vmatmul.bf16.gmra.mxu0 %v7607
      %v7633 = vpop.f32.mrf.mxu0
      %v7634 = vadd.f32 %v7569, %v7633
      %v7635 = vpop.f32.mrf.mxu0
      %v7636 = vadd.f32 %v7571, %v7635
      %7637 = vdwg.mxu0
      %v7638 = vld [vmem:[%s10] sm:$0x1]
      %v7640 = vperm.slane %v7638, 0
      %v7642 = vadd.f32 %v7619, %v7640
      %v7643 = vadd.f32 %v7621, %v7640
      %v7644 = vadd.f32 %v7624, %v7640
      %v7645 = vadd.f32 %v7626, %v7640
      %v7646 = vadd.f32 %v7629, %v7640
      %v7647 = vadd.f32 %v7631, %v7640
      %v7648 = vadd.f32 %v7634, %v7640
      %v7649 = vadd.f32 %v7636, %v7640
      %v7650 = vmax.f32 %v7642, 0.0
      %v7651 = vmax.f32 %v7643, 0.0
      %v7652 = vmax.f32 %v7644, 0.0
      %v7653 = vmax.f32 %v7645, 0.0
      %v7654 = vmax.f32 %v7646, 0.0
      %v7655 = vmax.f32 %v7647, 0.0
      %v7656 = vmax.f32 %v7648, 0.0
      %v7657 = vmax.f32 %v7649, 0.0
      %v7658 = vpack.c.bf16 %v7651, %v7650
      %v7659 = vpack.c.bf16 %v7653, %v7652
      %v7660 = vpack.c.bf16 %v7655, %v7654
      %v7661 = vpack.c.bf16 %v7657, %v7656
      %v7662 = vld [vmem:[%s11] sm:$0xf]
      %v7663 = vld [vmem:[%s11 + $0x4] sm:$0xf]
      %v7664 = vld [vmem:[%s11 + $0x8] sm:$0xf]
      %v7665 = vld [vmem:[%s11 + $0xc] sm:$0xf]
      %v7666 = vld [vmem:[%s12] sm:$0x1]
      %v7668 = vperm.slane %v7666, 0
      %v7674 = vunpack.c.l.b16 %v7662
      %v7675 = vunpack.c.l.b16 %v7663
      %v7676 = vunpack.c.l.b16 %v7664
      %v7677 = vunpack.c.l.b16 %v7665
      %v7678 = vpack.c.b16 %v7675, %v7674
      %v7679 = vpack.c.b16 %v7677, %v7676
      %v7683 = vsel %vm519, %v7658, 0
      %v7686 = vsel %vm519, %v7659, 0
      %v7689 = vsel %vm519, %v7660, 0
      %v7692 = vsel %vm519, %v7661, 0
      %7694 = vmatpush.bf16.msra.mxu0 0
      %7695 = vmatpush.bf16.msra.mxu0 0
      %7696 = vmatpush.bf16.msra.mxu0 0
      %7697 = vmatpush.bf16.msra.mxu0 0
      %7698 = vmatpush.bf16.msra.mxu0 0
      %7699 = vmatpush.bf16.msra.mxu0 0
      %7700 = vmatpush.bf16.msra.mxu0 %v7679
      %7701 = vmatpush.bf16.msra.mxu0 %v7678
      %7702 = vmatmul.bf16.gmra.mxu0 %v7683
      %v7703 = vpop.f32.mrf.mxu0
      %v7704 = vadd.f32 %v7668, %v7703
      %v7705 = vpop.f32.mrf.mxu0
      %v7706 = vadd.f32 %v7668, %v7705
      %7707 = vmatmul.bf16.gmra.mxu0 %v7686
      %v7708 = vpop.f32.mrf.mxu0
      %v7709 = vadd.f32 %v7668, %v7708
      %v7710 = vpop.f32.mrf.mxu0
      %v7711 = vadd.f32 %v7668, %v7710
      %7712 = vmatmul.bf16.gmra.mxu0 %v7689
      %v7713 = vpop.f32.mrf.mxu0
      %v7714 = vadd.f32 %v7668, %v7713
      %v7715 = vpop.f32.mrf.mxu0
      %v7716 = vadd.f32 %v7668, %v7715
      %7717 = vmatmul.bf16.gmra.mxu0 %v7692
      %v7718 = vpop.f32.mrf.mxu0
      %v7719 = vadd.f32 %v7668, %v7718
      %v7720 = vpop.f32.mrf.mxu0
      %v7721 = vadd.f32 %v7668, %v7720
      %7722 = vdwg.mxu0
      %7723 = vst [vmem:[%s459] sm:$0xff] %v7704
      %7724 = vst [vmem:[%s459 + $0x8] sm:$0xff] %v7706
      %7725 = vst [vmem:[%s459 + $0x10] sm:$0xff] %v7709
      %7726 = vst [vmem:[%s459 + $0x18] sm:$0xff] %v7711
      %7727 = vst [vmem:[%s459 + $0x20] sm:$0xff] %v7714
      %7728 = vst [vmem:[%s459 + $0x28] sm:$0xff] %v7716
      %7729 = vst [vmem:[%s459 + $0x30] sm:$0xff] %v7719
      %7730 = vst [vmem:[%s459 + $0x38] sm:$0xff] %v7721
      %s7731 = smul.u32 8, %s24
      %p7732 = scmp.lt.s32.totalorder %s7731, 15
      %s7733 = scalar_select %p7732, %s7731, 15
      %s7734 = smul.addr %s7733, 8
      %s7735 = scalar_lea.vmem %s13, %s7734
      // Predicated region
      $region73: #{rnn_forward.1} parent=71 // pred_check
        %p7736 = pneg %p325
      $region74: #{rnn_forward.1} parent=71 // pred_check_branch
        %7738 = sbr.rel (%p7736) target = $region76
      $region75: #{rnn_forward.1} parent=71 // pred_region
        %s7739 = smul.u32 8, %s24
      $region76: #{rnn_forward.1} parent=71 // pred_fallthru
        _
    $region72: #{rnn_forward.1} parent=5 // pred_fallthru
      _
    %p7740 = scmp.le.s32.totalorder 2, %s19
    // Predicated region
    $region77: #{rnn_forward.1} parent=5 // pred_check
      %p7741 = pneg %p7740
    $region78: #{rnn_forward.1} parent=5 // pred_check_branch
      %7743 = sbr.rel (%p7741) target = $region80
    $region79: #{rnn_forward.1} parent=5 // pred_region
      %s7744 = ssub.s32 %s19, 2
      // Predicated region
      $region81: #{rnn_forward.1} parent=79 // pred_check
        %p7745 = pneg %p331
      $region82: #{rnn_forward.1} parent=79 // pred_check_branch
        %7747 = sbr.rel (%p7745) target = $region84
      $region83: #{rnn_forward.1} parent=79 // pred_region
        %s7748 = smul.u32 8, %s25
        %p7749 = scmp.lt.s32.totalorder %s7748, 15
        %s7750 = scalar_select %p7749, %s7748, 15
        %s7751 = smul.addr %s7750, 8
        %s7752 = scalar_lea.vmem %s13, %s7751
      $region84: #{rnn_forward.1} parent=79 // pred_fallthru
        _
    $region80: #{rnn_forward.1} parent=5 // pred_fallthru
      _
  $region6: #{rnn_forward.1} parent=0 // loop_footer
    %s23 = sadd.s32 1, %s19
  $region7: #{rnn_forward.1} parent=0 // loop_footer_branch
    %18 = sbr.rel target = $region3
  $region8: #{rnn_forward.1} parent=0 // loop_exit
    _

</llo_original>
